<compile_context>
chip_gen: v7x
topology: tpu7x:2x2x1
jax: 0.10.0
libtpu: 0.0.40
codegen_flags: <defaults>
</compile_context>

<pallas_src>
import numpy as np
import jax
import jax.numpy as jnp
from jax.experimental import pallas as pl
from jax.experimental.pallas import tpu as pltpu

F_BINS = 352        # fixed by the module (view(..., 352), Linear(352, 88))
N_HCFP_CH = 12      # segT(input_channel=12)
OUT_CLASS = 2       # segT(out_class=2)
HIDDEN = 32         # hidden width of the placeholder segT head


def _round_up(x, m):
    return (x + m - 1) // m * m


def _pick_row_tiling(r):
    """(r_pad, tm): tm % 8 == 0, r_pad % tm == 0, always >= 2 grid steps (so v7x's
    two TensorCores are both used), modest padding, tm capped at 512 so the per-step
    working set fits every generation's default scoped VMEM."""
    if r <= 8:
        return 16, 8
    tm = min(512, _round_up((r + 1) // 2, 8))
    return _round_up(r, tm), tm


# ----------------------- Fused HCFP + segT-head kernel ------------------------- #
def _fused_kernel(x_ref, wc_ref, b1_ref, w2_ref, b2_ref, os_ref, vel_ref):
    # x_ref  : [tm, F_in]              bf16   (row tile of the flattened B*T frames)
    # wc_ref : [HIDDEN, F_in, F_BINS]  bf16   (w1 folded into HCFP matrix; resident,
    #                                          constant index_map -> DMA'd once)
    # b1_ref : [HIDDEN]     f32 SMEM    w2_ref: [OUT_CLASS, HIDDEN] f32 SMEM
    # b2_ref : [OUT_CLASS]  f32 SMEM
    # os_ref / vel_ref: [tm, F_BINS] f32     (lane-dense per-class output blocks)
    x = x_ref[...]
    os_ref[...] = jnp.zeros(os_ref.shape, jnp.float32)
    vel_ref[...] = jnp.zeros(vel_ref.shape, jnp.float32)
    for h in range(HIDDEN):                       # static unroll: 32 MXU dots / tile
        z = jnp.dot(x, wc_ref[h], preferred_element_type=jnp.float32)  # [tm, 352]
        z = jnp.maximum(z + b1_ref[h], 0.0)
        os_ref[...] += w2_ref[0, h] * z           # out_class = 2: layer-2 folded as
        vel_ref[...] += w2_ref[1, h] * z          # 2x32 scalar*vector accumulates
    os_ref[...] += b2_ref[0]
    vel_ref[...] += b2_ref[1]


def fused_hcfp_head(xs_flat, wc, b1, w2, b2, *, tm):
    r_pad, f_in = xs_flat.shape
    assert r_pad % tm == 0 and tm % 8 == 0
    smem = pl.BlockSpec(memory_space=pltpu.MemorySpace.SMEM)
    return pl.pallas_call(
        _fused_kernel,
        out_shape=(jax.ShapeDtypeStruct((r_pad, F_BINS), jnp.float32),
                   jax.ShapeDtypeStruct((r_pad, F_BINS), jnp.float32)),
        grid=(r_pad // tm,),
        in_specs=[
            pl.BlockSpec((tm, f_in), lambda i: (i, 0)),
            # Resident folded weight (~2.9 MB bf16 at F_in=128).
            # TODO(synk): for a real STFT F_in (>=1024) block the K axis with an f32
            # accumulator (or single-buffer via pipeline_mode) instead of keeping the
            # whole [HIDDEN, F_in, 352] tensor resident (v7x 64 MiB VMEM budget).
            pl.BlockSpec((HIDDEN, f_in, F_BINS), lambda i: (0, 0, 0)),
            smem, smem, smem,
        ],
        out_specs=(pl.BlockSpec((tm, F_BINS), lambda i: (i, 0)),
                   pl.BlockSpec((tm, F_BINS), lambda i: (i, 0))),
        compiler_params=pltpu.CompilerParams(
            dimension_semantics=("parallel",),
            vmem_limit_bytes=32 * 1024 * 1024,    # explicit, safe on v5e/v6e/v7x
        ),
    )(xs_flat, wc, b1, w2, b2)


# ------------------------------ Parameter setup -------------------------------- #
def make_hcfp_tensor(f_in):
    # TODO(synk): cfpLayer.stft2hcfp source is unavailable; approximate HCFP as a
    # deterministic harmonic-stacking one-hot selection (12 channels x 352 bins).
    c = np.arange(N_HCFP_CH)[:, None]
    f = np.arange(F_BINS)[None, :]
    src = ((f * (1 + (c % 4))) // 4 + (c // 4)) % f_in            # [12, 352]
    m = np.zeros((N_HCFP_CH, f_in, F_BINS), dtype=np.float32)
    cc = np.broadcast_to(c, (N_HCFP_CH, F_BINS))
    ff = np.broadcast_to(f, (N_HCFP_CH, F_BINS))
    m[cc, src, ff] = 1.0
    return jnp.asarray(m)                                         # [12, F_in, 352] f32


def make_segt_params(key):
    # TODO(synk): deeplabv3p.segT source is unavailable; approximated by a per-pixel
    # 1x1-conv MLP head 12 -> 32 -> 2 (out_class=2) carrying the matmul hot path.
    k1, k2, k3, k4 = jax.random.split(key, 4)
    w1 = jax.random.normal(k1, (HIDDEN, N_HCFP_CH), jnp.float32) / np.sqrt(N_HCFP_CH)
    b1 = 0.1 * jax.random.normal(k3, (HIDDEN,), jnp.float32)
    w2 = jax.random.normal(k2, (OUT_CLASS, HIDDEN), jnp.float32) / np.sqrt(HIDDEN)
    b2 = 0.1 * jax.random.normal(k4, (OUT_CLASS,), jnp.float32)
    return w1, b1, w2, b2


# --------------------------------- Forward ------------------------------------- #
def onvelnet_forward(xs, m_hcfp, w1, b1, w2, b2):
    # xs: [B, 1, T, F_in] STFT-magnitude-like input (NCHW, matching PyTorch layout)
    B, _, T, F_in = xs.shape
    R = B * T
    r_pad, tm = _pick_row_tiling(R)

    xs_flat = xs.reshape(R, F_in).astype(jnp.bfloat16)   # bf16 MXU operand
    if r_pad != R:                                        # pad only when unaligned
        xs_flat = jnp.pad(xs_flat, ((0, r_pad - R), (0, 0)))

    # Fold the 12->32 1x1 conv into the HCFP matrix.  Recomputed from (m_hcfp, w1)
    # on every call so the fold can never go stale if w1 is updated (training).
    wc = jnp.einsum("hc,ckf->hkf", w1, m_hcfp).astype(jnp.bfloat16)

    os_pad, vel_pad = fused_hcfp_head(xs_flat, wc, b1, w2, b2, tm=tm)

    # os = y[:, 0].view(B, -1, 352); vel = y[:, 1].view(B, -1, 352)
    os_ = os_pad[:R].reshape(B, T, F_BINS)
    vel = vel_pad[:R].reshape(B, T, F_BINS)
    return os_, vel
    # NOTE: self.line, self.cnnLAST and self.freq2midMATF are constructed in the
    # PyTorch module but never used in OnVelNet.forward, so they are not invoked.


# -------------------------- Pure-JAX reference (check) -------------------------- #
def onvelnet_reference(xs, m_hcfp, w1, b1, w2, b2):
    B, _, T, F_in = xs.shape
    R = B * T
    x = xs.reshape(R, F_in).astype(jnp.bfloat16).astype(jnp.float32)
    h0 = jnp.einsum("rk,ckf->crf", x, m_hcfp)                    # [12, R, 352]
    z = jnp.maximum(jnp.einsum("hc,crf->hrf", w1, h0) + b1[:, None, None], 0.0)
    y = jnp.einsum("oh,hrf->orf", w2, z) + b2[:, None, None]     # [2, R, 352]
    return y[0].reshape(B, T, F_BINS), y[1].reshape(B, T, F_BINS)


if __name__ == "__main__":
    B, T, F_in = 2, 8, 128   # small demo shapes (timesteps<=512 allowed by segT cfg)
    key = jax.random.PRNGKey(0)
    kx, kp = jax.random.split(key)
    xs = jnp.abs(jax.random.normal(kx, (B, 1, T, F_in), jnp.float32))
    m_hcfp = make_hcfp_tensor(F_in)                               # [12, F_in, 352]
    w1, b1, w2, b2 = make_segt_params(kp)

    fwd = jax.jit(onvelnet_forward)
    os_, vel = fwd(xs, m_hcfp, w1, b1, w2, b2)
    jax.block_until_ready((os_, vel))

    assert os_.shape == (B, T, F_BINS) and vel.shape == (B, T, F_BINS)
    assert os_.dtype == jnp.float32 and vel.dtype == jnp.float32

    os_ref, vel_ref = onvelnet_reference(xs, m_hcfp, w1, b1, w2, b2)
    np.testing.assert_allclose(np.asarray(os_), np.asarray(os_ref), rtol=5e-2, atol=5e-2)
    np.testing.assert_allclose(np.asarray(vel), np.asarray(vel_ref), rtol=5e-2, atol=5e-2)
    print("KERNEL_OK")
</pallas_src>

<mosaic_0001>
module attributes {stable_mosaic.version = 11 : i64} {
  func.func @_fused_kernel(%arg0: i32, %arg1: memref<8x128xbf16, #tpu.memory_space<vmem>>, %arg2: memref<32x128x352xbf16, #tpu.memory_space<vmem>>, %arg3: memref<32xf32, #tpu.memory_space<smem>>, %arg4: memref<2x32xf32, #tpu.memory_space<smem>>, %arg5: memref<2xf32, #tpu.memory_space<smem>>, %arg6: memref<8x352xf32, #tpu.memory_space<vmem>>, %arg7: memref<8x352xf32, #tpu.memory_space<vmem>>) attributes {dimension_semantics = [#tpu.dimension_semantics<parallel>], iteration_bounds = array<i64: 2>, scalar_prefetch = 0 : i64, scratch_operands = 0 : i64, tpu.core_type = #tpu.core_type<tc>, window_params = [{transform_indices = @transform_0, window_bounds = array<i64: 8, 128>}, {pipeline_mode = #tpu.pipeline_mode<synchronous>, transform_indices = @transform_1, window_bounds = array<i64: 32, 128, 352>}, {transform_indices = @transform_2, window_bounds = array<i64: 32>}, {transform_indices = @transform_3, window_bounds = array<i64: 2, 32>}, {transform_indices = @transform_4, window_bounds = array<i64: 2>}, {transform_indices = @transform_5, window_bounds = array<i64: 8, 352>}, {transform_indices = @transform_6, window_bounds = array<i64: 8, 352>}]} {
    %c0 = arith.constant 0 : index
    %c0_0 = arith.constant 0 : index
    %0 = vector.load %arg1[%c0, %c0_0] : memref<8x128xbf16, #tpu.memory_space<vmem>>, vector<8x128xbf16>
    %cst = arith.constant 0.000000e+00 : f32
    %1 = vector.broadcast %cst : f32 to vector<8x352xf32>
    %c0_1 = arith.constant 0 : index
    %c0_2 = arith.constant 0 : index
    %2 = vector.load %arg6[%c0_1, %c0_2] : memref<8x352xf32, #tpu.memory_space<vmem>>, vector<8x352xf32>
    tpu.vector_store %arg6[%c0_1, %c0_2], %1 {strides = array<i32>} : memref<8x352xf32, #tpu.memory_space<vmem>>, vector<8x352xf32>,
    %cst_3 = arith.constant 0.000000e+00 : f32
    %3 = vector.broadcast %cst_3 : f32 to vector<8x352xf32>
    %c0_4 = arith.constant 0 : index
    %c0_5 = arith.constant 0 : index
    %4 = vector.load %arg7[%c0_4, %c0_5] : memref<8x352xf32, #tpu.memory_space<vmem>>, vector<8x352xf32>
    tpu.vector_store %arg7[%c0_4, %c0_5], %3 {strides = array<i32>} : memref<8x352xf32, #tpu.memory_space<vmem>>, vector<8x352xf32>,
    %c0_6 = arith.constant 0 : index
    %c0_7 = arith.constant 0 : index
    %c0_8 = arith.constant 0 : index
    %5 = vector.load %arg2[%c0_6, %c0_7, %c0_8] : memref<32x128x352xbf16, #tpu.memory_space<vmem>>, vector<1x128x352xbf16>
    %6 = vector.shape_cast %5 : vector<1x128x352xbf16> to vector<128x352xbf16>
    %cst_9 = arith.constant dense<0.000000e+00> : vector<8x352xf32>
    %7 = tpu.matmul %0, %6, %cst_9 {dimension_numbers = #tpu.dot_dimension_numbers<[1], [0], [0], [1], [0, 0, 1, 1], [], []>} : vector<8x128xbf16>, vector<128x352xbf16>, vector<8x352xf32> -> vector<8x352xf32>
    %c0_10 = arith.constant 0 : index
    %8 = memref.load %arg3[%c0_10] : memref<32xf32, #tpu.memory_space<smem>>
    %9 = vector.broadcast %8 : f32 to vector<8x352xf32>
    %10 = arith.addf %7, %9 : vector<8x352xf32>
    %cst_11 = arith.constant 0.000000e+00 : f32
    %11 = vector.broadcast %cst_11 : f32 to vector<8x352xf32>
    %12 = arith.maximumf %10, %11 : vector<8x352xf32>
    %c0_12 = arith.constant 0 : index
    %c0_13 = arith.constant 0 : index
    %13 = vector.load %arg6[%c0_12, %c0_13] : memref<8x352xf32, #tpu.memory_space<vmem>>, vector<8x352xf32>
    %c0_14 = arith.constant 0 : index
    %c0_15 = arith.constant 0 : index
    %14 = memref.load %arg4[%c0_14, %c0_15] : memref<2x32xf32, #tpu.memory_space<smem>>
    %15 = vector.broadcast %14 : f32 to vector<8x352xf32>
    %16 = arith.mulf %15, %12 : vector<8x352xf32>
    %17 = arith.addf %13, %16 : vector<8x352xf32>
    %c0_16 = arith.constant 0 : index
    %c0_17 = arith.constant 0 : index
    %18 = vector.load %arg6[%c0_16, %c0_17] : memref<8x352xf32, #tpu.memory_space<vmem>>, vector<8x352xf32>
    tpu.vector_store %arg6[%c0_16, %c0_17], %17 {strides = array<i32>} : memref<8x352xf32, #tpu.memory_space<vmem>>, vector<8x352xf32>,
    %c0_18 = arith.constant 0 : index
    %c0_19 = arith.constant 0 : index
    %19 = vector.load %arg7[%c0_18, %c0_19] : memref<8x352xf32, #tpu.memory_space<vmem>>, vector<8x352xf32>
    %c1 = arith.constant 1 : index
    %c0_20 = arith.constant 0 : index
    %20 = memref.load %arg4[%c1, %c0_20] : memref<2x32xf32, #tpu.memory_space<smem>>
    %21 = vector.broadcast %20 : f32 to vector<8x352xf32>
    %22 = arith.mulf %21, %12 : vector<8x352xf32>
    %23 = arith.addf %19, %22 : vector<8x352xf32>
    %c0_21 = arith.constant 0 : index
    %c0_22 = arith.constant 0 : index
    %24 = vector.load %arg7[%c0_21, %c0_22] : memref<8x352xf32, #tpu.memory_space<vmem>>, vector<8x352xf32>
    tpu.vector_store %arg7[%c0_21, %c0_22], %23 {strides = array<i32>} : memref<8x352xf32, #tpu.memory_space<vmem>>, vector<8x352xf32>,
    %c1_23 = arith.constant 1 : index
    %c0_24 = arith.constant 0 : index
    %c0_25 = arith.constant 0 : index
    %25 = vector.load %arg2[%c1_23, %c0_24, %c0_25] : memref<32x128x352xbf16, #tpu.memory_space<vmem>>, vector<1x128x352xbf16>
    %26 = vector.shape_cast %25 : vector<1x128x352xbf16> to vector<128x352xbf16>
    %cst_26 = arith.constant dense<0.000000e+00> : vector<8x352xf32>
    %27 = tpu.matmul %0, %26, %cst_26 {dimension_numbers = #tpu.dot_dimension_numbers<[1], [0], [0], [1], [0, 0, 1, 1], [], []>} : vector<8x128xbf16>, vector<128x352xbf16>, vector<8x352xf32> -> vector<8x352xf32>
    %c1_27 = arith.constant 1 : index
    %28 = memref.load %arg3[%c1_27] : memref<32xf32, #tpu.memory_space<smem>>
    %29 = vector.broadcast %28 : f32 to vector<8x352xf32>
    %30 = arith.addf %27, %29 : vector<8x352xf32>
    %cst_28 = arith.constant 0.000000e+00 : f32
    %31 = vector.broadcast %cst_28 : f32 to vector<8x352xf32>
    %32 = arith.maximumf %30, %31 : vector<8x352xf32>
    %c0_29 = arith.constant 0 : index
    %c0_30 = arith.constant 0 : index
    %33 = vector.load %arg6[%c0_29, %c0_30] : memref<8x352xf32, #tpu.memory_space<vmem>>, vector<8x352xf32>
    %c0_31 = arith.constant 0 : index
    %c1_32 = arith.constant 1 : index
    %34 = memref.load %arg4[%c0_31, %c1_32] : memref<2x32xf32, #tpu.memory_space<smem>>
    %35 = vector.broadcast %34 : f32 to vector<8x352xf32>
    %36 = arith.mulf %35, %32 : vector<8x352xf32>
    %37 = arith.addf %33, %36 : vector<8x352xf32>
    %c0_33 = arith.constant 0 : index
    %c0_34 = arith.constant 0 : index
    %38 = vector.load %arg6[%c0_33, %c0_34] : memref<8x352xf32, #tpu.memory_space<vmem>>, vector<8x352xf32>
    tpu.vector_store %arg6[%c0_33, %c0_34], %37 {strides = array<i32>} : memref<8x352xf32, #tpu.memory_space<vmem>>, vector<8x352xf32>,
    %c0_35 = arith.constant 0 : index
    %c0_36 = arith.constant 0 : index
    %39 = vector.load %arg7[%c0_35, %c0_36] : memref<8x352xf32, #tpu.memory_space<vmem>>, vector<8x352xf32>
    %c1_37 = arith.constant 1 : index
    %c1_38 = arith.constant 1 : index
    %40 = memref.load %arg4[%c1_37, %c1_38] : memref<2x32xf32, #tpu.memory_space<smem>>
    %41 = vector.broadcast %40 : f32 to vector<8x352xf32>
    %42 = arith.mulf %41, %32 : vector<8x352xf32>
    %43 = arith.addf %39, %42 : vector<8x352xf32>
    %c0_39 = arith.constant 0 : index
    %c0_40 = arith.constant 0 : index
    %44 = vector.load %arg7[%c0_39, %c0_40] : memref<8x352xf32, #tpu.memory_space<vmem>>, vector<8x352xf32>
    tpu.vector_store %arg7[%c0_39, %c0_40], %43 {strides = array<i32>} : memref<8x352xf32, #tpu.memory_space<vmem>>, vector<8x352xf32>,
    %c2 = arith.constant 2 : index
    %c0_41 = arith.constant 0 : index
    %c0_42 = arith.constant 0 : index
    %45 = vector.load %arg2[%c2, %c0_41, %c0_42] : memref<32x128x352xbf16, #tpu.memory_space<vmem>>, vector<1x128x352xbf16>
    %46 = vector.shape_cast %45 : vector<1x128x352xbf16> to vector<128x352xbf16>
    %cst_43 = arith.constant dense<0.000000e+00> : vector<8x352xf32>
    %47 = tpu.matmul %0, %46, %cst_43 {dimension_numbers = #tpu.dot_dimension_numbers<[1], [0], [0], [1], [0, 0, 1, 1], [], []>} : vector<8x128xbf16>, vector<128x352xbf16>, vector<8x352xf32> -> vector<8x352xf32>
    %c2_44 = arith.constant 2 : index
    %48 = memref.load %arg3[%c2_44] : memref<32xf32, #tpu.memory_space<smem>>
    %49 = vector.broadcast %48 : f32 to vector<8x352xf32>
    %50 = arith.addf %47, %49 : vector<8x352xf32>
    %cst_45 = arith.constant 0.000000e+00 : f32
    %51 = vector.broadcast %cst_45 : f32 to vector<8x352xf32>
    %52 = arith.maximumf %50, %51 : vector<8x352xf32>
    %c0_46 = arith.constant 0 : index
    %c0_47 = arith.constant 0 : index
    %53 = vector.load %arg6[%c0_46, %c0_47] : memref<8x352xf32, #tpu.memory_space<vmem>>, vector<8x352xf32>
    %c0_48 = arith.constant 0 : index
    %c2_49 = arith.constant 2 : index
    %54 = memref.load %arg4[%c0_48, %c2_49] : memref<2x32xf32, #tpu.memory_space<smem>>
    %55 = vector.broadcast %54 : f32 to vector<8x352xf32>
    %56 = arith.mulf %55, %52 : vector<8x352xf32>
    %57 = arith.addf %53, %56 : vector<8x352xf32>
    %c0_50 = arith.constant 0 : index
    %c0_51 = arith.constant 0 : index
    %58 = vector.load %arg6[%c0_50, %c0_51] : memref<8x352xf32, #tpu.memory_space<vmem>>, vector<8x352xf32>
    tpu.vector_store %arg6[%c0_50, %c0_51], %57 {strides = array<i32>} : memref<8x352xf32, #tpu.memory_space<vmem>>, vector<8x352xf32>,
    %c0_52 = arith.constant 0 : index
    %c0_53 = arith.constant 0 : index
    %59 = vector.load %arg7[%c0_52, %c0_53] : memref<8x352xf32, #tpu.memory_space<vmem>>, vector<8x352xf32>
    %c1_54 = arith.constant 1 : index
    %c2_55 = arith.constant 2 : index
    %60 = memref.load %arg4[%c1_54, %c2_55] : memref<2x32xf32, #tpu.memory_space<smem>>
    %61 = vector.broadcast %60 : f32 to vector<8x352xf32>
    %62 = arith.mulf %61, %52 : vector<8x352xf32>
    %63 = arith.addf %59, %62 : vector<8x352xf32>
    %c0_56 = arith.constant 0 : index
    %c0_57 = arith.constant 0 : index
    %64 = vector.load %arg7[%c0_56, %c0_57] : memref<8x352xf32, #tpu.memory_space<vmem>>, vector<8x352xf32>
    tpu.vector_store %arg7[%c0_56, %c0_57], %63 {strides = array<i32>} : memref<8x352xf32, #tpu.memory_space<vmem>>, vector<8x352xf32>,
    %c3 = arith.constant 3 : index
    %c0_58 = arith.constant 0 : index
    %c0_59 = arith.constant 0 : index
    %65 = vector.load %arg2[%c3, %c0_58, %c0_59] : memref<32x128x352xbf16, #tpu.memory_space<vmem>>, vector<1x128x352xbf16>
    %66 = vector.shape_cast %65 : vector<1x128x352xbf16> to vector<128x352xbf16>
    %cst_60 = arith.constant dense<0.000000e+00> : vector<8x352xf32>
    %67 = tpu.matmul %0, %66, %cst_60 {dimension_numbers = #tpu.dot_dimension_numbers<[1], [0], [0], [1], [0, 0, 1, 1], [], []>} : vector<8x128xbf16>, vector<128x352xbf16>, vector<8x352xf32> -> vector<8x352xf32>
    %c3_61 = arith.constant 3 : index
    %68 = memref.load %arg3[%c3_61] : memref<32xf32, #tpu.memory_space<smem>>
    %69 = vector.broadcast %68 : f32 to vector<8x352xf32>
    %70 = arith.addf %67, %69 : vector<8x352xf32>
    %cst_62 = arith.constant 0.000000e+00 : f32
    %71 = vector.broadcast %cst_62 : f32 to vector<8x352xf32>
    %72 = arith.maximumf %70, %71 : vector<8x352xf32>
    %c0_63 = arith.constant 0 : index
    %c0_64 = arith.constant 0 : index
    %73 = vector.load %arg6[%c0_63, %c0_64] : memref<8x352xf32, #tpu.memory_space<vmem>>, vector<8x352xf32>
    %c0_65 = arith.constant 0 : index
    %c3_66 = arith.constant 3 : index
    %74 = memref.load %arg4[%c0_65, %c3_66] : memref<2x32xf32, #tpu.memory_space<smem>>
    %75 = vector.broadcast %74 : f32 to vector<8x352xf32>
    %76 = arith.mulf %75, %72 : vector<8x352xf32>
    %77 = arith.addf %73, %76 : vector<8x352xf32>
    %c0_67 = arith.constant 0 : index
    %c0_68 = arith.constant 0 : index
    %78 = vector.load %arg6[%c0_67, %c0_68] : memref<8x352xf32, #tpu.memory_space<vmem>>, vector<8x352xf32>
    tpu.vector_store %arg6[%c0_67, %c0_68], %77 {strides = array<i32>} : memref<8x352xf32, #tpu.memory_space<vmem>>, vector<8x352xf32>,
    %c0_69 = arith.constant 0 : index
    %c0_70 = arith.constant 0 : index
    %79 = vector.load %arg7[%c0_69, %c0_70] : memref<8x352xf32, #tpu.memory_space<vmem>>, vector<8x352xf32>
    %c1_71 = arith.constant 1 : index
    %c3_72 = arith.constant 3 : index
    %80 = memref.load %arg4[%c1_71, %c3_72] : memref<2x32xf32, #tpu.memory_space<smem>>
    %81 = vector.broadcast %80 : f32 to vector<8x352xf32>
    %82 = arith.mulf %81, %72 : vector<8x352xf32>
    %83 = arith.addf %79, %82 : vector<8x352xf32>
    %c0_73 = arith.constant 0 : index
    %c0_74 = arith.constant 0 : index
    %84 = vector.load %arg7[%c0_73, %c0_74] : memref<8x352xf32, #tpu.memory_space<vmem>>, vector<8x352xf32>
    tpu.vector_store %arg7[%c0_73, %c0_74], %83 {strides = array<i32>} : memref<8x352xf32, #tpu.memory_space<vmem>>, vector<8x352xf32>,
    %c4 = arith.constant 4 : index
    %c0_75 = arith.constant 0 : index
    %c0_76 = arith.constant 0 : index
    %85 = vector.load %arg2[%c4, %c0_75, %c0_76] : memref<32x128x352xbf16, #tpu.memory_space<vmem>>, vector<1x128x352xbf16>
    %86 = vector.shape_cast %85 : vector<1x128x352xbf16> to vector<128x352xbf16>
    %cst_77 = arith.constant dense<0.000000e+00> : vector<8x352xf32>
    %87 = tpu.matmul %0, %86, %cst_77 {dimension_numbers = #tpu.dot_dimension_numbers<[1], [0], [0], [1], [0, 0, 1, 1], [], []>} : vector<8x128xbf16>, vector<128x352xbf16>, vector<8x352xf32> -> vector<8x352xf32>
    %c4_78 = arith.constant 4 : index
    %88 = memref.load %arg3[%c4_78] : memref<32xf32, #tpu.memory_space<smem>>
    %89 = vector.broadcast %88 : f32 to vector<8x352xf32>
    %90 = arith.addf %87, %89 : vector<8x352xf32>
    %cst_79 = arith.constant 0.000000e+00 : f32
    %91 = vector.broadcast %cst_79 : f32 to vector<8x352xf32>
    %92 = arith.maximumf %90, %91 : vector<8x352xf32>
    %c0_80 = arith.constant 0 : index
    %c0_81 = arith.constant 0 : index
    %93 = vector.load %arg6[%c0_80, %c0_81] : memref<8x352xf32, #tpu.memory_space<vmem>>, vector<8x352xf32>
    %c0_82 = arith.constant 0 : index
    %c4_83 = arith.constant 4 : index
    %94 = memref.load %arg4[%c0_82, %c4_83] : memref<2x32xf32, #tpu.memory_space<smem>>
    %95 = vector.broadcast %94 : f32 to vector<8x352xf32>
    %96 = arith.mulf %95, %92 : vector<8x352xf32>
    %97 = arith.addf %93, %96 : vector<8x352xf32>
    %c0_84 = arith.constant 0 : index
    %c0_85 = arith.constant 0 : index
    %98 = vector.load %arg6[%c0_84, %c0_85] : memref<8x352xf32, #tpu.memory_space<vmem>>, vector<8x352xf32>
    tpu.vector_store %arg6[%c0_84, %c0_85], %97 {strides = array<i32>} : memref<8x352xf32, #tpu.memory_space<vmem>>, vector<8x352xf32>,
    %c0_86 = arith.constant 0 : index
    %c0_87 = arith.constant 0 : index
    %99 = vector.load %arg7[%c0_86, %c0_87] : memref<8x352xf32, #tpu.memory_space<vmem>>, vector<8x352xf32>
    %c1_88 = arith.constant 1 : index
    %c4_89 = arith.constant 4 : index
    %100 = memref.load %arg4[%c1_88, %c4_89] : memref<2x32xf32, #tpu.memory_space<smem>>
    %101 = vector.broadcast %100 : f32 to vector<8x352xf32>
    %102 = arith.mulf %101, %92 : vector<8x352xf32>
    %103 = arith.addf %99, %102 : vector<8x352xf32>
    %c0_90 = arith.constant 0 : index
    %c0_91 = arith.constant 0 : index
    %104 = vector.load %arg7[%c0_90, %c0_91] : memref<8x352xf32, #tpu.memory_space<vmem>>, vector<8x352xf32>
    tpu.vector_store %arg7[%c0_90, %c0_91], %103 {strides = array<i32>} : memref<8x352xf32, #tpu.memory_space<vmem>>, vector<8x352xf32>,
    %c5 = arith.constant 5 : index
    %c0_92 = arith.constant 0 : index
    %c0_93 = arith.constant 0 : index
    %105 = vector.load %arg2[%c5, %c0_92, %c0_93] : memref<32x128x352xbf16, #tpu.memory_space<vmem>>, vector<1x128x352xbf16>
    %106 = vector.shape_cast %105 : vector<1x128x352xbf16> to vector<128x352xbf16>
    %cst_94 = arith.constant dense<0.000000e+00> : vector<8x352xf32>
    %107 = tpu.matmul %0, %106, %cst_94 {dimension_numbers = #tpu.dot_dimension_numbers<[1], [0], [0], [1], [0, 0, 1, 1], [], []>} : vector<8x128xbf16>, vector<128x352xbf16>, vector<8x352xf32> -> vector<8x352xf32>
    %c5_95 = arith.constant 5 : index
    %108 = memref.load %arg3[%c5_95] : memref<32xf32, #tpu.memory_space<smem>>
    %109 = vector.broadcast %108 : f32 to vector<8x352xf32>
    %110 = arith.addf %107, %109 : vector<8x352xf32>
    %cst_96 = arith.constant 0.000000e+00 : f32
    %111 = vector.broadcast %cst_96 : f32 to vector<8x352xf32>
    %112 = arith.maximumf %110, %111 : vector<8x352xf32>
    %c0_97 = arith.constant 0 : index
    %c0_98 = arith.constant 0 : index
    %113 = vector.load %arg6[%c0_97, %c0_98] : memref<8x352xf32, #tpu.memory_space<vmem>>, vector<8x352xf32>
    %c0_99 = arith.constant 0 : index
    %c5_100 = arith.constant 5 : index
    %114 = memref.load %arg4[%c0_99, %c5_100] : memref<2x32xf32, #tpu.memory_space<smem>>
    %115 = vector.broadcast %114 : f32 to vector<8x352xf32>
    %116 = arith.mulf %115, %112 : vector<8x352xf32>
    %117 = arith.addf %113, %116 : vector<8x352xf32>
    %c0_101 = arith.constant 0 : index
    %c0_102 = arith.constant 0 : index
    %118 = vector.load %arg6[%c0_101, %c0_102] : memref<8x352xf32, #tpu.memory_space<vmem>>, vector<8x352xf32>
    tpu.vector_store %arg6[%c0_101, %c0_102], %117 {strides = array<i32>} : memref<8x352xf32, #tpu.memory_space<vmem>>, vector<8x352xf32>,
    %c0_103 = arith.constant 0 : index
    %c0_104 = arith.constant 0 : index
    %119 = vector.load %arg7[%c0_103, %c0_104] : memref<8x352xf32, #tpu.memory_space<vmem>>, vector<8x352xf32>
    %c1_105 = arith.constant 1 : index
    %c5_106 = arith.constant 5 : index
    %120 = memref.load %arg4[%c1_105, %c5_106] : memref<2x32xf32, #tpu.memory_space<smem>>
    %121 = vector.broadcast %120 : f32 to vector<8x352xf32>
    %122 = arith.mulf %121, %112 : vector<8x352xf32>
    %123 = arith.addf %119, %122 : vector<8x352xf32>
    %c0_107 = arith.constant 0 : index
    %c0_108 = arith.constant 0 : index
    %124 = vector.load %arg7[%c0_107, %c0_108] : memref<8x352xf32, #tpu.memory_space<vmem>>, vector<8x352xf32>
    tpu.vector_store %arg7[%c0_107, %c0_108], %123 {strides = array<i32>} : memref<8x352xf32, #tpu.memory_space<vmem>>, vector<8x352xf32>,
    %c6 = arith.constant 6 : index
    %c0_109 = arith.constant 0 : index
    %c0_110 = arith.constant 0 : index
    %125 = vector.load %arg2[%c6, %c0_109, %c0_110] : memref<32x128x352xbf16, #tpu.memory_space<vmem>>, vector<1x128x352xbf16>
    %126 = vector.shape_cast %125 : vector<1x128x352xbf16> to vector<128x352xbf16>
    %cst_111 = arith.constant dense<0.000000e+00> : vector<8x352xf32>
    %127 = tpu.matmul %0, %126, %cst_111 {dimension_numbers = #tpu.dot_dimension_numbers<[1], [0], [0], [1], [0, 0, 1, 1], [], []>} : vector<8x128xbf16>, vector<128x352xbf16>, vector<8x352xf32> -> vector<8x352xf32>
    %c6_112 = arith.constant 6 : index
    %128 = memref.load %arg3[%c6_112] : memref<32xf32, #tpu.memory_space<smem>>
    %129 = vector.broadcast %128 : f32 to vector<8x352xf32>
    %130 = arith.addf %127, %129 : vector<8x352xf32>
    %cst_113 = arith.constant 0.000000e+00 : f32
    %131 = vector.broadcast %cst_113 : f32 to vector<8x352xf32>
    %132 = arith.maximumf %130, %131 : vector<8x352xf32>
    %c0_114 = arith.constant 0 : index
    %c0_115 = arith.constant 0 : index
    %133 = vector.load %arg6[%c0_114, %c0_115] : memref<8x352xf32, #tpu.memory_space<vmem>>, vector<8x352xf32>
    %c0_116 = arith.constant 0 : index
    %c6_117 = arith.constant 6 : index
    %134 = memref.load %arg4[%c0_116, %c6_117] : memref<2x32xf32, #tpu.memory_space<smem>>
    %135 = vector.broadcast %134 : f32 to vector<8x352xf32>
    %136 = arith.mulf %135, %132 : vector<8x352xf32>
    %137 = arith.addf %133, %136 : vector<8x352xf32>
    %c0_118 = arith.constant 0 : index
    %c0_119 = arith.constant 0 : index
    %138 = vector.load %arg6[%c0_118, %c0_119] : memref<8x352xf32, #tpu.memory_space<vmem>>, vector<8x352xf32>
    tpu.vector_store %arg6[%c0_118, %c0_119], %137 {strides = array<i32>} : memref<8x352xf32, #tpu.memory_space<vmem>>, vector<8x352xf32>,
    %c0_120 = arith.constant 0 : index
    %c0_121 = arith.constant 0 : index
    %139 = vector.load %arg7[%c0_120, %c0_121] : memref<8x352xf32, #tpu.memory_space<vmem>>, vector<8x352xf32>
    %c1_122 = arith.constant 1 : index
    %c6_123 = arith.constant 6 : index
    %140 = memref.load %arg4[%c1_122, %c6_123] : memref<2x32xf32, #tpu.memory_space<smem>>
    %141 = vector.broadcast %140 : f32 to vector<8x352xf32>
    %142 = arith.mulf %141, %132 : vector<8x352xf32>
    %143 = arith.addf %139, %142 : vector<8x352xf32>
    %c0_124 = arith.constant 0 : index
    %c0_125 = arith.constant 0 : index
    %144 = vector.load %arg7[%c0_124, %c0_125] : memref<8x352xf32, #tpu.memory_space<vmem>>, vector<8x352xf32>
    tpu.vector_store %arg7[%c0_124, %c0_125], %143 {strides = array<i32>} : memref<8x352xf32, #tpu.memory_space<vmem>>, vector<8x352xf32>,
    %c7 = arith.constant 7 : index
    %c0_126 = arith.constant 0 : index
    %c0_127 = arith.constant 0 : index
    %145 = vector.load %arg2[%c7, %c0_126, %c0_127] : memref<32x128x352xbf16, #tpu.memory_space<vmem>>, vector<1x128x352xbf16>
    %146 = vector.shape_cast %145 : vector<1x128x352xbf16> to vector<128x352xbf16>
    %cst_128 = arith.constant dense<0.000000e+00> : vector<8x352xf32>
    %147 = tpu.matmul %0, %146, %cst_128 {dimension_numbers = #tpu.dot_dimension_numbers<[1], [0], [0], [1], [0, 0, 1, 1], [], []>} : vector<8x128xbf16>, vector<128x352xbf16>, vector<8x352xf32> -> vector<8x352xf32>
    %c7_129 = arith.constant 7 : index
    %148 = memref.load %arg3[%c7_129] : memref<32xf32, #tpu.memory_space<smem>>
    %149 = vector.broadcast %148 : f32 to vector<8x352xf32>
    %150 = arith.addf %147, %149 : vector<8x352xf32>
    %cst_130 = arith.constant 0.000000e+00 : f32
    %151 = vector.broadcast %cst_130 : f32 to vector<8x352xf32>
    %152 = arith.maximumf %150, %151 : vector<8x352xf32>
    %c0_131 = arith.constant 0 : index
    %c0_132 = arith.constant 0 : index
    %153 = vector.load %arg6[%c0_131, %c0_132] : memref<8x352xf32, #tpu.memory_space<vmem>>, vector<8x352xf32>
    %c0_133 = arith.constant 0 : index
    %c7_134 = arith.constant 7 : index
    %154 = memref.load %arg4[%c0_133, %c7_134] : memref<2x32xf32, #tpu.memory_space<smem>>
    %155 = vector.broadcast %154 : f32 to vector<8x352xf32>
    %156 = arith.mulf %155, %152 : vector<8x352xf32>
    %157 = arith.addf %153, %156 : vector<8x352xf32>
    %c0_135 = arith.constant 0 : index
    %c0_136 = arith.constant 0 : index
    %158 = vector.load %arg6[%c0_135, %c0_136] : memref<8x352xf32, #tpu.memory_space<vmem>>, vector<8x352xf32>
    tpu.vector_store %arg6[%c0_135, %c0_136], %157 {strides = array<i32>} : memref<8x352xf32, #tpu.memory_space<vmem>>, vector<8x352xf32>,
    %c0_137 = arith.constant 0 : index
    %c0_138 = arith.constant 0 : index
    %159 = vector.load %arg7[%c0_137, %c0_138] : memref<8x352xf32, #tpu.memory_space<vmem>>, vector<8x352xf32>
    %c1_139 = arith.constant 1 : index
    %c7_140 = arith.constant 7 : index
    %160 = memref.load %arg4[%c1_139, %c7_140] : memref<2x32xf32, #tpu.memory_space<smem>>
    %161 = vector.broadcast %160 : f32 to vector<8x352xf32>
    %162 = arith.mulf %161, %152 : vector<8x352xf32>
    %163 = arith.addf %159, %162 : vector<8x352xf32>
    %c0_141 = arith.constant 0 : index
    %c0_142 = arith.constant 0 : index
    %164 = vector.load %arg7[%c0_141, %c0_142] : memref<8x352xf32, #tpu.memory_space<vmem>>, vector<8x352xf32>
    tpu.vector_store %arg7[%c0_141, %c0_142], %163 {strides = array<i32>} : memref<8x352xf32, #tpu.memory_space<vmem>>, vector<8x352xf32>,
    %c8 = arith.constant 8 : index
    %c0_143 = arith.constant 0 : index
    %c0_144 = arith.constant 0 : index
    %165 = vector.load %arg2[%c8, %c0_143, %c0_144] : memref<32x128x352xbf16, #tpu.memory_space<vmem>>, vector<1x128x352xbf16>
    %166 = vector.shape_cast %165 : vector<1x128x352xbf16> to vector<128x352xbf16>
    %cst_145 = arith.constant dense<0.000000e+00> : vector<8x352xf32>
    %167 = tpu.matmul %0, %166, %cst_145 {dimension_numbers = #tpu.dot_dimension_numbers<[1], [0], [0], [1], [0, 0, 1, 1], [], []>} : vector<8x128xbf16>, vector<128x352xbf16>, vector<8x352xf32> -> vector<8x352xf32>
    %c8_146 = arith.constant 8 : index
    %168 = memref.load %arg3[%c8_146] : memref<32xf32, #tpu.memory_space<smem>>
    %169 = vector.broadcast %168 : f32 to vector<8x352xf32>
    %170 = arith.addf %167, %169 : vector<8x352xf32>
    %cst_147 = arith.constant 0.000000e+00 : f32
    %171 = vector.broadcast %cst_147 : f32 to vector<8x352xf32>
    %172 = arith.maximumf %170, %171 : vector<8x352xf32>
    %c0_148 = arith.constant 0 : index
    %c0_149 = arith.constant 0 : index
    %173 = vector.load %arg6[%c0_148, %c0_149] : memref<8x352xf32, #tpu.memory_space<vmem>>, vector<8x352xf32>
    %c0_150 = arith.constant 0 : index
    %c8_151 = arith.constant 8 : index
    %174 = memref.load %arg4[%c0_150, %c8_151] : memref<2x32xf32, #tpu.memory_space<smem>>
    %175 = vector.broadcast %174 : f32 to vector<8x352xf32>
    %176 = arith.mulf %175, %172 : vector<8x352xf32>
    %177 = arith.addf %173, %176 : vector<8x352xf32>
    %c0_152 = arith.constant 0 : index
    %c0_153 = arith.constant 0 : index
    %178 = vector.load %arg6[%c0_152, %c0_153] : memref<8x352xf32, #tpu.memory_space<vmem>>, vector<8x352xf32>
    tpu.vector_store %arg6[%c0_152, %c0_153], %177 {strides = array<i32>} : memref<8x352xf32, #tpu.memory_space<vmem>>, vector<8x352xf32>,
    %c0_154 = arith.constant 0 : index
    %c0_155 = arith.constant 0 : index
    %179 = vector.load %arg7[%c0_154, %c0_155] : memref<8x352xf32, #tpu.memory_space<vmem>>, vector<8x352xf32>
    %c1_156 = arith.constant 1 : index
    %c8_157 = arith.constant 8 : index
    %180 = memref.load %arg4[%c1_156, %c8_157] : memref<2x32xf32, #tpu.memory_space<smem>>
    %181 = vector.broadcast %180 : f32 to vector<8x352xf32>
    %182 = arith.mulf %181, %172 : vector<8x352xf32>
    %183 = arith.addf %179, %182 : vector<8x352xf32>
    %c0_158 = arith.constant 0 : index
    %c0_159 = arith.constant 0 : index
    %184 = vector.load %arg7[%c0_158, %c0_159] : memref<8x352xf32, #tpu.memory_space<vmem>>, vector<8x352xf32>
    tpu.vector_store %arg7[%c0_158, %c0_159], %183 {strides = array<i32>} : memref<8x352xf32, #tpu.memory_space<vmem>>, vector<8x352xf32>,
    %c9 = arith.constant 9 : index
    %c0_160 = arith.constant 0 : index
    %c0_161 = arith.constant 0 : index
    %185 = vector.load %arg2[%c9, %c0_160, %c0_161] : memref<32x128x352xbf16, #tpu.memory_space<vmem>>, vector<1x128x352xbf16>
    %186 = vector.shape_cast %185 : vector<1x128x352xbf16> to vector<128x352xbf16>
    %cst_162 = arith.constant dense<0.000000e+00> : vector<8x352xf32>
    %187 = tpu.matmul %0, %186, %cst_162 {dimension_numbers = #tpu.dot_dimension_numbers<[1], [0], [0], [1], [0, 0, 1, 1], [], []>} : vector<8x128xbf16>, vector<128x352xbf16>, vector<8x352xf32> -> vector<8x352xf32>
    %c9_163 = arith.constant 9 : index
    %188 = memref.load %arg3[%c9_163] : memref<32xf32, #tpu.memory_space<smem>>
    %189 = vector.broadcast %188 : f32 to vector<8x352xf32>
    %190 = arith.addf %187, %189 : vector<8x352xf32>
    %cst_164 = arith.constant 0.000000e+00 : f32
    %191 = vector.broadcast %cst_164 : f32 to vector<8x352xf32>
    %192 = arith.maximumf %190, %191 : vector<8x352xf32>
    %c0_165 = arith.constant 0 : index
    %c0_166 = arith.constant 0 : index
    %193 = vector.load %arg6[%c0_165, %c0_166] : memref<8x352xf32, #tpu.memory_space<vmem>>, vector<8x352xf32>
    %c0_167 = arith.constant 0 : index
    %c9_168 = arith.constant 9 : index
    %194 = memref.load %arg4[%c0_167, %c9_168] : memref<2x32xf32, #tpu.memory_space<smem>>
    %195 = vector.broadcast %194 : f32 to vector<8x352xf32>
    %196 = arith.mulf %195, %192 : vector<8x352xf32>
    %197 = arith.addf %193, %196 : vector<8x352xf32>
    %c0_169 = arith.constant 0 : index
    %c0_170 = arith.constant 0 : index
    %198 = vector.load %arg6[%c0_169, %c0_170] : memref<8x352xf32, #tpu.memory_space<vmem>>, vector<8x352xf32>
    tpu.vector_store %arg6[%c0_169, %c0_170], %197 {strides = array<i32>} : memref<8x352xf32, #tpu.memory_space<vmem>>, vector<8x352xf32>,
    %c0_171 = arith.constant 0 : index
    %c0_172 = arith.constant 0 : index
    %199 = vector.load %arg7[%c0_171, %c0_172] : memref<8x352xf32, #tpu.memory_space<vmem>>, vector<8x352xf32>
    %c1_173 = arith.constant 1 : index
    %c9_174 = arith.constant 9 : index
    %200 = memref.load %arg4[%c1_173, %c9_174] : memref<2x32xf32, #tpu.memory_space<smem>>
    %201 = vector.broadcast %200 : f32 to vector<8x352xf32>
    %202 = arith.mulf %201, %192 : vector<8x352xf32>
    %203 = arith.addf %199, %202 : vector<8x352xf32>
    %c0_175 = arith.constant 0 : index
    %c0_176 = arith.constant 0 : index
    %204 = vector.load %arg7[%c0_175, %c0_176] : memref<8x352xf32, #tpu.memory_space<vmem>>, vector<8x352xf32>
    tpu.vector_store %arg7[%c0_175, %c0_176], %203 {strides = array<i32>} : memref<8x352xf32, #tpu.memory_space<vmem>>, vector<8x352xf32>,
    %c10 = arith.constant 10 : index
    %c0_177 = arith.constant 0 : index
    %c0_178 = arith.constant 0 : index
    %205 = vector.load %arg2[%c10, %c0_177, %c0_178] : memref<32x128x352xbf16, #tpu.memory_space<vmem>>, vector<1x128x352xbf16>
    %206 = vector.shape_cast %205 : vector<1x128x352xbf16> to vector<128x352xbf16>
    %cst_179 = arith.constant dense<0.000000e+00> : vector<8x352xf32>
    %207 = tpu.matmul %0, %206, %cst_179 {dimension_numbers = #tpu.dot_dimension_numbers<[1], [0], [0], [1], [0, 0, 1, 1], [], []>} : vector<8x128xbf16>, vector<128x352xbf16>, vector<8x352xf32> -> vector<8x352xf32>
    %c10_180 = arith.constant 10 : index
    %208 = memref.load %arg3[%c10_180] : memref<32xf32, #tpu.memory_space<smem>>
    %209 = vector.broadcast %208 : f32 to vector<8x352xf32>
    %210 = arith.addf %207, %209 : vector<8x352xf32>
    %cst_181 = arith.constant 0.000000e+00 : f32
    %211 = vector.broadcast %cst_181 : f32 to vector<8x352xf32>
    %212 = arith.maximumf %210, %211 : vector<8x352xf32>
    %c0_182 = arith.constant 0 : index
    %c0_183 = arith.constant 0 : index
    %213 = vector.load %arg6[%c0_182, %c0_183] : memref<8x352xf32, #tpu.memory_space<vmem>>, vector<8x352xf32>
    %c0_184 = arith.constant 0 : index
    %c10_185 = arith.constant 10 : index
    %214 = memref.load %arg4[%c0_184, %c10_185] : memref<2x32xf32, #tpu.memory_space<smem>>
    %215 = vector.broadcast %214 : f32 to vector<8x352xf32>
    %216 = arith.mulf %215, %212 : vector<8x352xf32>
    %217 = arith.addf %213, %216 : vector<8x352xf32>
    %c0_186 = arith.constant 0 : index
    %c0_187 = arith.constant 0 : index
    %218 = vector.load %arg6[%c0_186, %c0_187] : memref<8x352xf32, #tpu.memory_space<vmem>>, vector<8x352xf32>
    tpu.vector_store %arg6[%c0_186, %c0_187], %217 {strides = array<i32>} : memref<8x352xf32, #tpu.memory_space<vmem>>, vector<8x352xf32>,
    %c0_188 = arith.constant 0 : index
    %c0_189 = arith.constant 0 : index
    %219 = vector.load %arg7[%c0_188, %c0_189] : memref<8x352xf32, #tpu.memory_space<vmem>>, vector<8x352xf32>
    %c1_190 = arith.constant 1 : index
    %c10_191 = arith.constant 10 : index
    %220 = memref.load %arg4[%c1_190, %c10_191] : memref<2x32xf32, #tpu.memory_space<smem>>
    %221 = vector.broadcast %220 : f32 to vector<8x352xf32>
    %222 = arith.mulf %221, %212 : vector<8x352xf32>
    %223 = arith.addf %219, %222 : vector<8x352xf32>
    %c0_192 = arith.constant 0 : index
    %c0_193 = arith.constant 0 : index
    %224 = vector.load %arg7[%c0_192, %c0_193] : memref<8x352xf32, #tpu.memory_space<vmem>>, vector<8x352xf32>
    tpu.vector_store %arg7[%c0_192, %c0_193], %223 {strides = array<i32>} : memref<8x352xf32, #tpu.memory_space<vmem>>, vector<8x352xf32>,
    %c11 = arith.constant 11 : index
    %c0_194 = arith.constant 0 : index
    %c0_195 = arith.constant 0 : index
    %225 = vector.load %arg2[%c11, %c0_194, %c0_195] : memref<32x128x352xbf16, #tpu.memory_space<vmem>>, vector<1x128x352xbf16>
    %226 = vector.shape_cast %225 : vector<1x128x352xbf16> to vector<128x352xbf16>
    %cst_196 = arith.constant dense<0.000000e+00> : vector<8x352xf32>
    %227 = tpu.matmul %0, %226, %cst_196 {dimension_numbers = #tpu.dot_dimension_numbers<[1], [0], [0], [1], [0, 0, 1, 1], [], []>} : vector<8x128xbf16>, vector<128x352xbf16>, vector<8x352xf32> -> vector<8x352xf32>
    %c11_197 = arith.constant 11 : index
    %228 = memref.load %arg3[%c11_197] : memref<32xf32, #tpu.memory_space<smem>>
    %229 = vector.broadcast %228 : f32 to vector<8x352xf32>
    %230 = arith.addf %227, %229 : vector<8x352xf32>
    %cst_198 = arith.constant 0.000000e+00 : f32
    %231 = vector.broadcast %cst_198 : f32 to vector<8x352xf32>
    %232 = arith.maximumf %230, %231 : vector<8x352xf32>
    %c0_199 = arith.constant 0 : index
    %c0_200 = arith.constant 0 : index
    %233 = vector.load %arg6[%c0_199, %c0_200] : memref<8x352xf32, #tpu.memory_space<vmem>>, vector<8x352xf32>
    %c0_201 = arith.constant 0 : index
    %c11_202 = arith.constant 11 : index
    %234 = memref.load %arg4[%c0_201, %c11_202] : memref<2x32xf32, #tpu.memory_space<smem>>
    %235 = vector.broadcast %234 : f32 to vector<8x352xf32>
    %236 = arith.mulf %235, %232 : vector<8x352xf32>
    %237 = arith.addf %233, %236 : vector<8x352xf32>
    %c0_203 = arith.constant 0 : index
    %c0_204 = arith.constant 0 : index
    %238 = vector.load %arg6[%c0_203, %c0_204] : memref<8x352xf32, #tpu.memory_space<vmem>>, vector<8x352xf32>
    tpu.vector_store %arg6[%c0_203, %c0_204], %237 {strides = array<i32>} : memref<8x352xf32, #tpu.memory_space<vmem>>, vector<8x352xf32>,
    %c0_205 = arith.constant 0 : index
    %c0_206 = arith.constant 0 : index
    %239 = vector.load %arg7[%c0_205, %c0_206] : memref<8x352xf32, #tpu.memory_space<vmem>>, vector<8x352xf32>
    %c1_207 = arith.constant 1 : index
    %c11_208 = arith.constant 11 : index
    %240 = memref.load %arg4[%c1_207, %c11_208] : memref<2x32xf32, #tpu.memory_space<smem>>
    %241 = vector.broadcast %240 : f32 to vector<8x352xf32>
    %242 = arith.mulf %241, %232 : vector<8x352xf32>
    %243 = arith.addf %239, %242 : vector<8x352xf32>
    %c0_209 = arith.constant 0 : index
    %c0_210 = arith.constant 0 : index
    %244 = vector.load %arg7[%c0_209, %c0_210] : memref<8x352xf32, #tpu.memory_space<vmem>>, vector<8x352xf32>
    tpu.vector_store %arg7[%c0_209, %c0_210], %243 {strides = array<i32>} : memref<8x352xf32, #tpu.memory_space<vmem>>, vector<8x352xf32>,
    %c12 = arith.constant 12 : index
    %c0_211 = arith.constant 0 : index
    %c0_212 = arith.constant 0 : index
    %245 = vector.load %arg2[%c12, %c0_211, %c0_212] : memref<32x128x352xbf16, #tpu.memory_space<vmem>>, vector<1x128x352xbf16>
    %246 = vector.shape_cast %245 : vector<1x128x352xbf16> to vector<128x352xbf16>
    %cst_213 = arith.constant dense<0.000000e+00> : vector<8x352xf32>
    %247 = tpu.matmul %0, %246, %cst_213 {dimension_numbers = #tpu.dot_dimension_numbers<[1], [0], [0], [1], [0, 0, 1, 1], [], []>} : vector<8x128xbf16>, vector<128x352xbf16>, vector<8x352xf32> -> vector<8x352xf32>
    %c12_214 = arith.constant 12 : index
    %248 = memref.load %arg3[%c12_214] : memref<32xf32, #tpu.memory_space<smem>>
    %249 = vector.broadcast %248 : f32 to vector<8x352xf32>
    %250 = arith.addf %247, %249 : vector<8x352xf32>
    %cst_215 = arith.constant 0.000000e+00 : f32
    %251 = vector.broadcast %cst_215 : f32 to vector<8x352xf32>
    %252 = arith.maximumf %250, %251 : vector<8x352xf32>
    %c0_216 = arith.constant 0 : index
    %c0_217 = arith.constant 0 : index
    %253 = vector.load %arg6[%c0_216, %c0_217] : memref<8x352xf32, #tpu.memory_space<vmem>>, vector<8x352xf32>
    %c0_218 = arith.constant 0 : index
    %c12_219 = arith.constant 12 : index
    %254 = memref.load %arg4[%c0_218, %c12_219] : memref<2x32xf32, #tpu.memory_space<smem>>
    %255 = vector.broadcast %254 : f32 to vector<8x352xf32>
    %256 = arith.mulf %255, %252 : vector<8x352xf32>
    %257 = arith.addf %253, %256 : vector<8x352xf32>
    %c0_220 = arith.constant 0 : index
    %c0_221 = arith.constant 0 : index
    %258 = vector.load %arg6[%c0_220, %c0_221] : memref<8x352xf32, #tpu.memory_space<vmem>>, vector<8x352xf32>
    tpu.vector_store %arg6[%c0_220, %c0_221], %257 {strides = array<i32>} : memref<8x352xf32, #tpu.memory_space<vmem>>, vector<8x352xf32>,
    %c0_222 = arith.constant 0 : index
    %c0_223 = arith.constant 0 : index
    %259 = vector.load %arg7[%c0_222, %c0_223] : memref<8x352xf32, #tpu.memory_space<vmem>>, vector<8x352xf32>
    %c1_224 = arith.constant 1 : index
    %c12_225 = arith.constant 12 : index
    %260 = memref.load %arg4[%c1_224, %c12_225] : memref<2x32xf32, #tpu.memory_space<smem>>
    %261 = vector.broadcast %260 : f32 to vector<8x352xf32>
    %262 = arith.mulf %261, %252 : vector<8x352xf32>
    %263 = arith.addf %259, %262 : vector<8x352xf32>
    %c0_226 = arith.constant 0 : index
    %c0_227 = arith.constant 0 : index
    %264 = vector.load %arg7[%c0_226, %c0_227] : memref<8x352xf32, #tpu.memory_space<vmem>>, vector<8x352xf32>
    tpu.vector_store %arg7[%c0_226, %c0_227], %263 {strides = array<i32>} : memref<8x352xf32, #tpu.memory_space<vmem>>, vector<8x352xf32>,
    %c13 = arith.constant 13 : index
    %c0_228 = arith.constant 0 : index
    %c0_229 = arith.constant 0 : index
    %265 = vector.load %arg2[%c13, %c0_228, %c0_229] : memref<32x128x352xbf16, #tpu.memory_space<vmem>>, vector<1x128x352xbf16>
    %266 = vector.shape_cast %265 : vector<1x128x352xbf16> to vector<128x352xbf16>
    %cst_230 = arith.constant dense<0.000000e+00> : vector<8x352xf32>
    %267 = tpu.matmul %0, %266, %cst_230 {dimension_numbers = #tpu.dot_dimension_numbers<[1], [0], [0], [1], [0, 0, 1, 1], [], []>} : vector<8x128xbf16>, vector<128x352xbf16>, vector<8x352xf32> -> vector<8x352xf32>
    %c13_231 = arith.constant 13 : index
    %268 = memref.load %arg3[%c13_231] : memref<32xf32, #tpu.memory_space<smem>>
    %269 = vector.broadcast %268 : f32 to vector<8x352xf32>
    %270 = arith.addf %267, %269 : vector<8x352xf32>
    %cst_232 = arith.constant 0.000000e+00 : f32
    %271 = vector.broadcast %cst_232 : f32 to vector<8x352xf32>
    %272 = arith.maximumf %270, %271 : vector<8x352xf32>
    %c0_233 = arith.constant 0 : index
    %c0_234 = arith.constant 0 : index
    %273 = vector.load %arg6[%c0_233, %c0_234] : memref<8x352xf32, #tpu.memory_space<vmem>>, vector<8x352xf32>
    %c0_235 = arith.constant 0 : index
    %c13_236 = arith.constant 13 : index
    %274 = memref.load %arg4[%c0_235, %c13_236] : memref<2x32xf32, #tpu.memory_space<smem>>
    %275 = vector.broadcast %274 : f32 to vector<8x352xf32>
    %276 = arith.mulf %275, %272 : vector<8x352xf32>
    %277 = arith.addf %273, %276 : vector<8x352xf32>
    %c0_237 = arith.constant 0 : index
    %c0_238 = arith.constant 0 : index
    %278 = vector.load %arg6[%c0_237, %c0_238] : memref<8x352xf32, #tpu.memory_space<vmem>>, vector<8x352xf32>
    tpu.vector_store %arg6[%c0_237, %c0_238], %277 {strides = array<i32>} : memref<8x352xf32, #tpu.memory_space<vmem>>, vector<8x352xf32>,
    %c0_239 = arith.constant 0 : index
    %c0_240 = arith.constant 0 : index
    %279 = vector.load %arg7[%c0_239, %c0_240] : memref<8x352xf32, #tpu.memory_space<vmem>>, vector<8x352xf32>
    %c1_241 = arith.constant 1 : index
    %c13_242 = arith.constant 13 : index
    %280 = memref.load %arg4[%c1_241, %c13_242] : memref<2x32xf32, #tpu.memory_space<smem>>
    %281 = vector.broadcast %280 : f32 to vector<8x352xf32>
    %282 = arith.mulf %281, %272 : vector<8x352xf32>
    %283 = arith.addf %279, %282 : vector<8x352xf32>
    %c0_243 = arith.constant 0 : index
    %c0_244 = arith.constant 0 : index
    %284 = vector.load %arg7[%c0_243, %c0_244] : memref<8x352xf32, #tpu.memory_space<vmem>>, vector<8x352xf32>
    tpu.vector_store %arg7[%c0_243, %c0_244], %283 {strides = array<i32>} : memref<8x352xf32, #tpu.memory_space<vmem>>, vector<8x352xf32>,
    %c14 = arith.constant 14 : index
    %c0_245 = arith.constant 0 : index
    %c0_246 = arith.constant 0 : index
    %285 = vector.load %arg2[%c14, %c0_245, %c0_246] : memref<32x128x352xbf16, #tpu.memory_space<vmem>>, vector<1x128x352xbf16>
    %286 = vector.shape_cast %285 : vector<1x128x352xbf16> to vector<128x352xbf16>
    %cst_247 = arith.constant dense<0.000000e+00> : vector<8x352xf32>
    %287 = tpu.matmul %0, %286, %cst_247 {dimension_numbers = #tpu.dot_dimension_numbers<[1], [0], [0], [1], [0, 0, 1, 1], [], []>} : vector<8x128xbf16>, vector<128x352xbf16>, vector<8x352xf32> -> vector<8x352xf32>
    %c14_248 = arith.constant 14 : index
    %288 = memref.load %arg3[%c14_248] : memref<32xf32, #tpu.memory_space<smem>>
    %289 = vector.broadcast %288 : f32 to vector<8x352xf32>
    %290 = arith.addf %287, %289 : vector<8x352xf32>
    %cst_249 = arith.constant 0.000000e+00 : f32
    %291 = vector.broadcast %cst_249 : f32 to vector<8x352xf32>
    %292 = arith.maximumf %290, %291 : vector<8x352xf32>
    %c0_250 = arith.constant 0 : index
    %c0_251 = arith.constant 0 : index
    %293 = vector.load %arg6[%c0_250, %c0_251] : memref<8x352xf32, #tpu.memory_space<vmem>>, vector<8x352xf32>
    %c0_252 = arith.constant 0 : index
    %c14_253 = arith.constant 14 : index
    %294 = memref.load %arg4[%c0_252, %c14_253] : memref<2x32xf32, #tpu.memory_space<smem>>
    %295 = vector.broadcast %294 : f32 to vector<8x352xf32>
    %296 = arith.mulf %295, %292 : vector<8x352xf32>
    %297 = arith.addf %293, %296 : vector<8x352xf32>
    %c0_254 = arith.constant 0 : index
    %c0_255 = arith.constant 0 : index
    %298 = vector.load %arg6[%c0_254, %c0_255] : memref<8x352xf32, #tpu.memory_space<vmem>>, vector<8x352xf32>
    tpu.vector_store %arg6[%c0_254, %c0_255], %297 {strides = array<i32>} : memref<8x352xf32, #tpu.memory_space<vmem>>, vector<8x352xf32>,
    %c0_256 = arith.constant 0 : index
    %c0_257 = arith.constant 0 : index
    %299 = vector.load %arg7[%c0_256, %c0_257] : memref<8x352xf32, #tpu.memory_space<vmem>>, vector<8x352xf32>
    %c1_258 = arith.constant 1 : index
    %c14_259 = arith.constant 14 : index
    %300 = memref.load %arg4[%c1_258, %c14_259] : memref<2x32xf32, #tpu.memory_space<smem>>
    %301 = vector.broadcast %300 : f32 to vector<8x352xf32>
    %302 = arith.mulf %301, %292 : vector<8x352xf32>
    %303 = arith.addf %299, %302 : vector<8x352xf32>
    %c0_260 = arith.constant 0 : index
    %c0_261 = arith.constant 0 : index
    %304 = vector.load %arg7[%c0_260, %c0_261] : memref<8x352xf32, #tpu.memory_space<vmem>>, vector<8x352xf32>
    tpu.vector_store %arg7[%c0_260, %c0_261], %303 {strides = array<i32>} : memref<8x352xf32, #tpu.memory_space<vmem>>, vector<8x352xf32>,
    %c15 = arith.constant 15 : index
    %c0_262 = arith.constant 0 : index
    %c0_263 = arith.constant 0 : index
    %305 = vector.load %arg2[%c15, %c0_262, %c0_263] : memref<32x128x352xbf16, #tpu.memory_space<vmem>>, vector<1x128x352xbf16>
    %306 = vector.shape_cast %305 : vector<1x128x352xbf16> to vector<128x352xbf16>
    %cst_264 = arith.constant dense<0.000000e+00> : vector<8x352xf32>
    %307 = tpu.matmul %0, %306, %cst_264 {dimension_numbers = #tpu.dot_dimension_numbers<[1], [0], [0], [1], [0, 0, 1, 1], [], []>} : vector<8x128xbf16>, vector<128x352xbf16>, vector<8x352xf32> -> vector<8x352xf32>
    %c15_265 = arith.constant 15 : index
    %308 = memref.load %arg3[%c15_265] : memref<32xf32, #tpu.memory_space<smem>>
    %309 = vector.broadcast %308 : f32 to vector<8x352xf32>
    %310 = arith.addf %307, %309 : vector<8x352xf32>
    %cst_266 = arith.constant 0.000000e+00 : f32
    %311 = vector.broadcast %cst_266 : f32 to vector<8x352xf32>
    %312 = arith.maximumf %310, %311 : vector<8x352xf32>
    %c0_267 = arith.constant 0 : index
    %c0_268 = arith.constant 0 : index
    %313 = vector.load %arg6[%c0_267, %c0_268] : memref<8x352xf32, #tpu.memory_space<vmem>>, vector<8x352xf32>
    %c0_269 = arith.constant 0 : index
    %c15_270 = arith.constant 15 : index
    %314 = memref.load %arg4[%c0_269, %c15_270] : memref<2x32xf32, #tpu.memory_space<smem>>
    %315 = vector.broadcast %314 : f32 to vector<8x352xf32>
    %316 = arith.mulf %315, %312 : vector<8x352xf32>
    %317 = arith.addf %313, %316 : vector<8x352xf32>
    %c0_271 = arith.constant 0 : index
    %c0_272 = arith.constant 0 : index
    %318 = vector.load %arg6[%c0_271, %c0_272] : memref<8x352xf32, #tpu.memory_space<vmem>>, vector<8x352xf32>
    tpu.vector_store %arg6[%c0_271, %c0_272], %317 {strides = array<i32>} : memref<8x352xf32, #tpu.memory_space<vmem>>, vector<8x352xf32>,
    %c0_273 = arith.constant 0 : index
    %c0_274 = arith.constant 0 : index
    %319 = vector.load %arg7[%c0_273, %c0_274] : memref<8x352xf32, #tpu.memory_space<vmem>>, vector<8x352xf32>
    %c1_275 = arith.constant 1 : index
    %c15_276 = arith.constant 15 : index
    %320 = memref.load %arg4[%c1_275, %c15_276] : memref<2x32xf32, #tpu.memory_space<smem>>
    %321 = vector.broadcast %320 : f32 to vector<8x352xf32>
    %322 = arith.mulf %321, %312 : vector<8x352xf32>
    %323 = arith.addf %319, %322 : vector<8x352xf32>
    %c0_277 = arith.constant 0 : index
    %c0_278 = arith.constant 0 : index
    %324 = vector.load %arg7[%c0_277, %c0_278] : memref<8x352xf32, #tpu.memory_space<vmem>>, vector<8x352xf32>
    tpu.vector_store %arg7[%c0_277, %c0_278], %323 {strides = array<i32>} : memref<8x352xf32, #tpu.memory_space<vmem>>, vector<8x352xf32>,
    %c16 = arith.constant 16 : index
    %c0_279 = arith.constant 0 : index
    %c0_280 = arith.constant 0 : index
    %325 = vector.load %arg2[%c16, %c0_279, %c0_280] : memref<32x128x352xbf16, #tpu.memory_space<vmem>>, vector<1x128x352xbf16>
    %326 = vector.shape_cast %325 : vector<1x128x352xbf16> to vector<128x352xbf16>
    %cst_281 = arith.constant dense<0.000000e+00> : vector<8x352xf32>
    %327 = tpu.matmul %0, %326, %cst_281 {dimension_numbers = #tpu.dot_dimension_numbers<[1], [0], [0], [1], [0, 0, 1, 1], [], []>} : vector<8x128xbf16>, vector<128x352xbf16>, vector<8x352xf32> -> vector<8x352xf32>
    %c16_282 = arith.constant 16 : index
    %328 = memref.load %arg3[%c16_282] : memref<32xf32, #tpu.memory_space<smem>>
    %329 = vector.broadcast %328 : f32 to vector<8x352xf32>
    %330 = arith.addf %327, %329 : vector<8x352xf32>
    %cst_283 = arith.constant 0.000000e+00 : f32
    %331 = vector.broadcast %cst_283 : f32 to vector<8x352xf32>
    %332 = arith.maximumf %330, %331 : vector<8x352xf32>
    %c0_284 = arith.constant 0 : index
    %c0_285 = arith.constant 0 : index
    %333 = vector.load %arg6[%c0_284, %c0_285] : memref<8x352xf32, #tpu.memory_space<vmem>>, vector<8x352xf32>
    %c0_286 = arith.constant 0 : index
    %c16_287 = arith.constant 16 : index
    %334 = memref.load %arg4[%c0_286, %c16_287] : memref<2x32xf32, #tpu.memory_space<smem>>
    %335 = vector.broadcast %334 : f32 to vector<8x352xf32>
    %336 = arith.mulf %335, %332 : vector<8x352xf32>
    %337 = arith.addf %333, %336 : vector<8x352xf32>
    %c0_288 = arith.constant 0 : index
    %c0_289 = arith.constant 0 : index
    %338 = vector.load %arg6[%c0_288, %c0_289] : memref<8x352xf32, #tpu.memory_space<vmem>>, vector<8x352xf32>
    tpu.vector_store %arg6[%c0_288, %c0_289], %337 {strides = array<i32>} : memref<8x352xf32, #tpu.memory_space<vmem>>, vector<8x352xf32>,
    %c0_290 = arith.constant 0 : index
    %c0_291 = arith.constant 0 : index
    %339 = vector.load %arg7[%c0_290, %c0_291] : memref<8x352xf32, #tpu.memory_space<vmem>>, vector<8x352xf32>
    %c1_292 = arith.constant 1 : index
    %c16_293 = arith.constant 16 : index
    %340 = memref.load %arg4[%c1_292, %c16_293] : memref<2x32xf32, #tpu.memory_space<smem>>
    %341 = vector.broadcast %340 : f32 to vector<8x352xf32>
    %342 = arith.mulf %341, %332 : vector<8x352xf32>
    %343 = arith.addf %339, %342 : vector<8x352xf32>
    %c0_294 = arith.constant 0 : index
    %c0_295 = arith.constant 0 : index
    %344 = vector.load %arg7[%c0_294, %c0_295] : memref<8x352xf32, #tpu.memory_space<vmem>>, vector<8x352xf32>
    tpu.vector_store %arg7[%c0_294, %c0_295], %343 {strides = array<i32>} : memref<8x352xf32, #tpu.memory_space<vmem>>, vector<8x352xf32>,
    %c17 = arith.constant 17 : index
    %c0_296 = arith.constant 0 : index
    %c0_297 = arith.constant 0 : index
    %345 = vector.load %arg2[%c17, %c0_296, %c0_297] : memref<32x128x352xbf16, #tpu.memory_space<vmem>>, vector<1x128x352xbf16>
    %346 = vector.shape_cast %345 : vector<1x128x352xbf16> to vector<128x352xbf16>
    %cst_298 = arith.constant dense<0.000000e+00> : vector<8x352xf32>
    %347 = tpu.matmul %0, %346, %cst_298 {dimension_numbers = #tpu.dot_dimension_numbers<[1], [0], [0], [1], [0, 0, 1, 1], [], []>} : vector<8x128xbf16>, vector<128x352xbf16>, vector<8x352xf32> -> vector<8x352xf32>
    %c17_299 = arith.constant 17 : index
    %348 = memref.load %arg3[%c17_299] : memref<32xf32, #tpu.memory_space<smem>>
    %349 = vector.broadcast %348 : f32 to vector<8x352xf32>
    %350 = arith.addf %347, %349 : vector<8x352xf32>
    %cst_300 = arith.constant 0.000000e+00 : f32
    %351 = vector.broadcast %cst_300 : f32 to vector<8x352xf32>
    %352 = arith.maximumf %350, %351 : vector<8x352xf32>
    %c0_301 = arith.constant 0 : index
    %c0_302 = arith.constant 0 : index
    %353 = vector.load %arg6[%c0_301, %c0_302] : memref<8x352xf32, #tpu.memory_space<vmem>>, vector<8x352xf32>
    %c0_303 = arith.constant 0 : index
    %c17_304 = arith.constant 17 : index
    %354 = memref.load %arg4[%c0_303, %c17_304] : memref<2x32xf32, #tpu.memory_space<smem>>
    %355 = vector.broadcast %354 : f32 to vector<8x352xf32>
    %356 = arith.mulf %355, %352 : vector<8x352xf32>
    %357 = arith.addf %353, %356 : vector<8x352xf32>
    %c0_305 = arith.constant 0 : index
    %c0_306 = arith.constant 0 : index
    %358 = vector.load %arg6[%c0_305, %c0_306] : memref<8x352xf32, #tpu.memory_space<vmem>>, vector<8x352xf32>
    tpu.vector_store %arg6[%c0_305, %c0_306], %357 {strides = array<i32>} : memref<8x352xf32, #tpu.memory_space<vmem>>, vector<8x352xf32>,
    %c0_307 = arith.constant 0 : index
    %c0_308 = arith.constant 0 : index
    %359 = vector.load %arg7[%c0_307, %c0_308] : memref<8x352xf32, #tpu.memory_space<vmem>>, vector<8x352xf32>
    %c1_309 = arith.constant 1 : index
    %c17_310 = arith.constant 17 : index
    %360 = memref.load %arg4[%c1_309, %c17_310] : memref<2x32xf32, #tpu.memory_space<smem>>
    %361 = vector.broadcast %360 : f32 to vector<8x352xf32>
    %362 = arith.mulf %361, %352 : vector<8x352xf32>
    %363 = arith.addf %359, %362 : vector<8x352xf32>
    %c0_311 = arith.constant 0 : index
    %c0_312 = arith.constant 0 : index
    %364 = vector.load %arg7[%c0_311, %c0_312] : memref<8x352xf32, #tpu.memory_space<vmem>>, vector<8x352xf32>
    tpu.vector_store %arg7[%c0_311, %c0_312], %363 {strides = array<i32>} : memref<8x352xf32, #tpu.memory_space<vmem>>, vector<8x352xf32>,
    %c18 = arith.constant 18 : index
    %c0_313 = arith.constant 0 : index
    %c0_314 = arith.constant 0 : index
    %365 = vector.load %arg2[%c18, %c0_313, %c0_314] : memref<32x128x352xbf16, #tpu.memory_space<vmem>>, vector<1x128x352xbf16>
    %366 = vector.shape_cast %365 : vector<1x128x352xbf16> to vector<128x352xbf16>
    %cst_315 = arith.constant dense<0.000000e+00> : vector<8x352xf32>
    %367 = tpu.matmul %0, %366, %cst_315 {dimension_numbers = #tpu.dot_dimension_numbers<[1], [0], [0], [1], [0, 0, 1, 1], [], []>} : vector<8x128xbf16>, vector<128x352xbf16>, vector<8x352xf32> -> vector<8x352xf32>
    %c18_316 = arith.constant 18 : index
    %368 = memref.load %arg3[%c18_316] : memref<32xf32, #tpu.memory_space<smem>>
    %369 = vector.broadcast %368 : f32 to vector<8x352xf32>
    %370 = arith.addf %367, %369 : vector<8x352xf32>
    %cst_317 = arith.constant 0.000000e+00 : f32
    %371 = vector.broadcast %cst_317 : f32 to vector<8x352xf32>
    %372 = arith.maximumf %370, %371 : vector<8x352xf32>
    %c0_318 = arith.constant 0 : index
    %c0_319 = arith.constant 0 : index
    %373 = vector.load %arg6[%c0_318, %c0_319] : memref<8x352xf32, #tpu.memory_space<vmem>>, vector<8x352xf32>
    %c0_320 = arith.constant 0 : index
    %c18_321 = arith.constant 18 : index
    %374 = memref.load %arg4[%c0_320, %c18_321] : memref<2x32xf32, #tpu.memory_space<smem>>
    %375 = vector.broadcast %374 : f32 to vector<8x352xf32>
    %376 = arith.mulf %375, %372 : vector<8x352xf32>
    %377 = arith.addf %373, %376 : vector<8x352xf32>
    %c0_322 = arith.constant 0 : index
    %c0_323 = arith.constant 0 : index
    %378 = vector.load %arg6[%c0_322, %c0_323] : memref<8x352xf32, #tpu.memory_space<vmem>>, vector<8x352xf32>
    tpu.vector_store %arg6[%c0_322, %c0_323], %377 {strides = array<i32>} : memref<8x352xf32, #tpu.memory_space<vmem>>, vector<8x352xf32>,
    %c0_324 = arith.constant 0 : index
    %c0_325 = arith.constant 0 : index
    %379 = vector.load %arg7[%c0_324, %c0_325] : memref<8x352xf32, #tpu.memory_space<vmem>>, vector<8x352xf32>
    %c1_326 = arith.constant 1 : index
    %c18_327 = arith.constant 18 : index
    %380 = memref.load %arg4[%c1_326, %c18_327] : memref<2x32xf32, #tpu.memory_space<smem>>
    %381 = vector.broadcast %380 : f32 to vector<8x352xf32>
    %382 = arith.mulf %381, %372 : vector<8x352xf32>
    %383 = arith.addf %379, %382 : vector<8x352xf32>
    %c0_328 = arith.constant 0 : index
    %c0_329 = arith.constant 0 : index
    %384 = vector.load %arg7[%c0_328, %c0_329] : memref<8x352xf32, #tpu.memory_space<vmem>>, vector<8x352xf32>
    tpu.vector_store %arg7[%c0_328, %c0_329], %383 {strides = array<i32>} : memref<8x352xf32, #tpu.memory_space<vmem>>, vector<8x352xf32>,
    %c19 = arith.constant 19 : index
    %c0_330 = arith.constant 0 : index
    %c0_331 = arith.constant 0 : index
    %385 = vector.load %arg2[%c19, %c0_330, %c0_331] : memref<32x128x352xbf16, #tpu.memory_space<vmem>>, vector<1x128x352xbf16>
    %386 = vector.shape_cast %385 : vector<1x128x352xbf16> to vector<128x352xbf16>
    %cst_332 = arith.constant dense<0.000000e+00> : vector<8x352xf32>
    %387 = tpu.matmul %0, %386, %cst_332 {dimension_numbers = #tpu.dot_dimension_numbers<[1], [0], [0], [1], [0, 0, 1, 1], [], []>} : vector<8x128xbf16>, vector<128x352xbf16>, vector<8x352xf32> -> vector<8x352xf32>
    %c19_333 = arith.constant 19 : index
    %388 = memref.load %arg3[%c19_333] : memref<32xf32, #tpu.memory_space<smem>>
    %389 = vector.broadcast %388 : f32 to vector<8x352xf32>
    %390 = arith.addf %387, %389 : vector<8x352xf32>
    %cst_334 = arith.constant 0.000000e+00 : f32
    %391 = vector.broadcast %cst_334 : f32 to vector<8x352xf32>
    %392 = arith.maximumf %390, %391 : vector<8x352xf32>
    %c0_335 = arith.constant 0 : index
    %c0_336 = arith.constant 0 : index
    %393 = vector.load %arg6[%c0_335, %c0_336] : memref<8x352xf32, #tpu.memory_space<vmem>>, vector<8x352xf32>
    %c0_337 = arith.constant 0 : index
    %c19_338 = arith.constant 19 : index
    %394 = memref.load %arg4[%c0_337, %c19_338] : memref<2x32xf32, #tpu.memory_space<smem>>
    %395 = vector.broadcast %394 : f32 to vector<8x352xf32>
    %396 = arith.mulf %395, %392 : vector<8x352xf32>
    %397 = arith.addf %393, %396 : vector<8x352xf32>
    %c0_339 = arith.constant 0 : index
    %c0_340 = arith.constant 0 : index
    %398 = vector.load %arg6[%c0_339, %c0_340] : memref<8x352xf32, #tpu.memory_space<vmem>>, vector<8x352xf32>
    tpu.vector_store %arg6[%c0_339, %c0_340], %397 {strides = array<i32>} : memref<8x352xf32, #tpu.memory_space<vmem>>, vector<8x352xf32>,
    %c0_341 = arith.constant 0 : index
    %c0_342 = arith.constant 0 : index
    %399 = vector.load %arg7[%c0_341, %c0_342] : memref<8x352xf32, #tpu.memory_space<vmem>>, vector<8x352xf32>
    %c1_343 = arith.constant 1 : index
    %c19_344 = arith.constant 19 : index
    %400 = memref.load %arg4[%c1_343, %c19_344] : memref<2x32xf32, #tpu.memory_space<smem>>
    %401 = vector.broadcast %400 : f32 to vector<8x352xf32>
    %402 = arith.mulf %401, %392 : vector<8x352xf32>
    %403 = arith.addf %399, %402 : vector<8x352xf32>
    %c0_345 = arith.constant 0 : index
    %c0_346 = arith.constant 0 : index
    %404 = vector.load %arg7[%c0_345, %c0_346] : memref<8x352xf32, #tpu.memory_space<vmem>>, vector<8x352xf32>
    tpu.vector_store %arg7[%c0_345, %c0_346], %403 {strides = array<i32>} : memref<8x352xf32, #tpu.memory_space<vmem>>, vector<8x352xf32>,
    %c20 = arith.constant 20 : index
    %c0_347 = arith.constant 0 : index
    %c0_348 = arith.constant 0 : index
    %405 = vector.load %arg2[%c20, %c0_347, %c0_348] : memref<32x128x352xbf16, #tpu.memory_space<vmem>>, vector<1x128x352xbf16>
    %406 = vector.shape_cast %405 : vector<1x128x352xbf16> to vector<128x352xbf16>
    %cst_349 = arith.constant dense<0.000000e+00> : vector<8x352xf32>
    %407 = tpu.matmul %0, %406, %cst_349 {dimension_numbers = #tpu.dot_dimension_numbers<[1], [0], [0], [1], [0, 0, 1, 1], [], []>} : vector<8x128xbf16>, vector<128x352xbf16>, vector<8x352xf32> -> vector<8x352xf32>
    %c20_350 = arith.constant 20 : index
    %408 = memref.load %arg3[%c20_350] : memref<32xf32, #tpu.memory_space<smem>>
    %409 = vector.broadcast %408 : f32 to vector<8x352xf32>
    %410 = arith.addf %407, %409 : vector<8x352xf32>
    %cst_351 = arith.constant 0.000000e+00 : f32
    %411 = vector.broadcast %cst_351 : f32 to vector<8x352xf32>
    %412 = arith.maximumf %410, %411 : vector<8x352xf32>
    %c0_352 = arith.constant 0 : index
    %c0_353 = arith.constant 0 : index
    %413 = vector.load %arg6[%c0_352, %c0_353] : memref<8x352xf32, #tpu.memory_space<vmem>>, vector<8x352xf32>
    %c0_354 = arith.constant 0 : index
    %c20_355 = arith.constant 20 : index
    %414 = memref.load %arg4[%c0_354, %c20_355] : memref<2x32xf32, #tpu.memory_space<smem>>
    %415 = vector.broadcast %414 : f32 to vector<8x352xf32>
    %416 = arith.mulf %415, %412 : vector<8x352xf32>
    %417 = arith.addf %413, %416 : vector<8x352xf32>
    %c0_356 = arith.constant 0 : index
    %c0_357 = arith.constant 0 : index
    %418 = vector.load %arg6[%c0_356, %c0_357] : memref<8x352xf32, #tpu.memory_space<vmem>>, vector<8x352xf32>
    tpu.vector_store %arg6[%c0_356, %c0_357], %417 {strides = array<i32>} : memref<8x352xf32, #tpu.memory_space<vmem>>, vector<8x352xf32>,
    %c0_358 = arith.constant 0 : index
    %c0_359 = arith.constant 0 : index
    %419 = vector.load %arg7[%c0_358, %c0_359] : memref<8x352xf32, #tpu.memory_space<vmem>>, vector<8x352xf32>
    %c1_360 = arith.constant 1 : index
    %c20_361 = arith.constant 20 : index
    %420 = memref.load %arg4[%c1_360, %c20_361] : memref<2x32xf32, #tpu.memory_space<smem>>
    %421 = vector.broadcast %420 : f32 to vector<8x352xf32>
    %422 = arith.mulf %421, %412 : vector<8x352xf32>
    %423 = arith.addf %419, %422 : vector<8x352xf32>
    %c0_362 = arith.constant 0 : index
    %c0_363 = arith.constant 0 : index
    %424 = vector.load %arg7[%c0_362, %c0_363] : memref<8x352xf32, #tpu.memory_space<vmem>>, vector<8x352xf32>
    tpu.vector_store %arg7[%c0_362, %c0_363], %423 {strides = array<i32>} : memref<8x352xf32, #tpu.memory_space<vmem>>, vector<8x352xf32>,
    %c21 = arith.constant 21 : index
    %c0_364 = arith.constant 0 : index
    %c0_365 = arith.constant 0 : index
    %425 = vector.load %arg2[%c21, %c0_364, %c0_365] : memref<32x128x352xbf16, #tpu.memory_space<vmem>>, vector<1x128x352xbf16>
    %426 = vector.shape_cast %425 : vector<1x128x352xbf16> to vector<128x352xbf16>
    %cst_366 = arith.constant dense<0.000000e+00> : vector<8x352xf32>
    %427 = tpu.matmul %0, %426, %cst_366 {dimension_numbers = #tpu.dot_dimension_numbers<[1], [0], [0], [1], [0, 0, 1, 1], [], []>} : vector<8x128xbf16>, vector<128x352xbf16>, vector<8x352xf32> -> vector<8x352xf32>
    %c21_367 = arith.constant 21 : index
    %428 = memref.load %arg3[%c21_367] : memref<32xf32, #tpu.memory_space<smem>>
    %429 = vector.broadcast %428 : f32 to vector<8x352xf32>
    %430 = arith.addf %427, %429 : vector<8x352xf32>
    %cst_368 = arith.constant 0.000000e+00 : f32
    %431 = vector.broadcast %cst_368 : f32 to vector<8x352xf32>
    %432 = arith.maximumf %430, %431 : vector<8x352xf32>
    %c0_369 = arith.constant 0 : index
    %c0_370 = arith.constant 0 : index
    %433 = vector.load %arg6[%c0_369, %c0_370] : memref<8x352xf32, #tpu.memory_space<vmem>>, vector<8x352xf32>
    %c0_371 = arith.constant 0 : index
    %c21_372 = arith.constant 21 : index
    %434 = memref.load %arg4[%c0_371, %c21_372] : memref<2x32xf32, #tpu.memory_space<smem>>
    %435 = vector.broadcast %434 : f32 to vector<8x352xf32>
    %436 = arith.mulf %435, %432 : vector<8x352xf32>
    %437 = arith.addf %433, %436 : vector<8x352xf32>
    %c0_373 = arith.constant 0 : index
    %c0_374 = arith.constant 0 : index
    %438 = vector.load %arg6[%c0_373, %c0_374] : memref<8x352xf32, #tpu.memory_space<vmem>>, vector<8x352xf32>
    tpu.vector_store %arg6[%c0_373, %c0_374], %437 {strides = array<i32>} : memref<8x352xf32, #tpu.memory_space<vmem>>, vector<8x352xf32>,
    %c0_375 = arith.constant 0 : index
    %c0_376 = arith.constant 0 : index
    %439 = vector.load %arg7[%c0_375, %c0_376] : memref<8x352xf32, #tpu.memory_space<vmem>>, vector<8x352xf32>
    %c1_377 = arith.constant 1 : index
    %c21_378 = arith.constant 21 : index
    %440 = memref.load %arg4[%c1_377, %c21_378] : memref<2x32xf32, #tpu.memory_space<smem>>
    %441 = vector.broadcast %440 : f32 to vector<8x352xf32>
    %442 = arith.mulf %441, %432 : vector<8x352xf32>
    %443 = arith.addf %439, %442 : vector<8x352xf32>
    %c0_379 = arith.constant 0 : index
    %c0_380 = arith.constant 0 : index
    %444 = vector.load %arg7[%c0_379, %c0_380] : memref<8x352xf32, #tpu.memory_space<vmem>>, vector<8x352xf32>
    tpu.vector_store %arg7[%c0_379, %c0_380], %443 {strides = array<i32>} : memref<8x352xf32, #tpu.memory_space<vmem>>, vector<8x352xf32>,
    %c22 = arith.constant 22 : index
    %c0_381 = arith.constant 0 : index
    %c0_382 = arith.constant 0 : index
    %445 = vector.load %arg2[%c22, %c0_381, %c0_382] : memref<32x128x352xbf16, #tpu.memory_space<vmem>>, vector<1x128x352xbf16>
    %446 = vector.shape_cast %445 : vector<1x128x352xbf16> to vector<128x352xbf16>
    %cst_383 = arith.constant dense<0.000000e+00> : vector<8x352xf32>
    %447 = tpu.matmul %0, %446, %cst_383 {dimension_numbers = #tpu.dot_dimension_numbers<[1], [0], [0], [1], [0, 0, 1, 1], [], []>} : vector<8x128xbf16>, vector<128x352xbf16>, vector<8x352xf32> -> vector<8x352xf32>
    %c22_384 = arith.constant 22 : index
    %448 = memref.load %arg3[%c22_384] : memref<32xf32, #tpu.memory_space<smem>>
    %449 = vector.broadcast %448 : f32 to vector<8x352xf32>
    %450 = arith.addf %447, %449 : vector<8x352xf32>
    %cst_385 = arith.constant 0.000000e+00 : f32
    %451 = vector.broadcast %cst_385 : f32 to vector<8x352xf32>
    %452 = arith.maximumf %450, %451 : vector<8x352xf32>
    %c0_386 = arith.constant 0 : index
    %c0_387 = arith.constant 0 : index
    %453 = vector.load %arg6[%c0_386, %c0_387] : memref<8x352xf32, #tpu.memory_space<vmem>>, vector<8x352xf32>
    %c0_388 = arith.constant 0 : index
    %c22_389 = arith.constant 22 : index
    %454 = memref.load %arg4[%c0_388, %c22_389] : memref<2x32xf32, #tpu.memory_space<smem>>
    %455 = vector.broadcast %454 : f32 to vector<8x352xf32>
    %456 = arith.mulf %455, %452 : vector<8x352xf32>
    %457 = arith.addf %453, %456 : vector<8x352xf32>
    %c0_390 = arith.constant 0 : index
    %c0_391 = arith.constant 0 : index
    %458 = vector.load %arg6[%c0_390, %c0_391] : memref<8x352xf32, #tpu.memory_space<vmem>>, vector<8x352xf32>
    tpu.vector_store %arg6[%c0_390, %c0_391], %457 {strides = array<i32>} : memref<8x352xf32, #tpu.memory_space<vmem>>, vector<8x352xf32>,
    %c0_392 = arith.constant 0 : index
    %c0_393 = arith.constant 0 : index
    %459 = vector.load %arg7[%c0_392, %c0_393] : memref<8x352xf32, #tpu.memory_space<vmem>>, vector<8x352xf32>
    %c1_394 = arith.constant 1 : index
    %c22_395 = arith.constant 22 : index
    %460 = memref.load %arg4[%c1_394, %c22_395] : memref<2x32xf32, #tpu.memory_space<smem>>
    %461 = vector.broadcast %460 : f32 to vector<8x352xf32>
    %462 = arith.mulf %461, %452 : vector<8x352xf32>
    %463 = arith.addf %459, %462 : vector<8x352xf32>
    %c0_396 = arith.constant 0 : index
    %c0_397 = arith.constant 0 : index
    %464 = vector.load %arg7[%c0_396, %c0_397] : memref<8x352xf32, #tpu.memory_space<vmem>>, vector<8x352xf32>
    tpu.vector_store %arg7[%c0_396, %c0_397], %463 {strides = array<i32>} : memref<8x352xf32, #tpu.memory_space<vmem>>, vector<8x352xf32>,
    %c23 = arith.constant 23 : index
    %c0_398 = arith.constant 0 : index
    %c0_399 = arith.constant 0 : index
    %465 = vector.load %arg2[%c23, %c0_398, %c0_399] : memref<32x128x352xbf16, #tpu.memory_space<vmem>>, vector<1x128x352xbf16>
    %466 = vector.shape_cast %465 : vector<1x128x352xbf16> to vector<128x352xbf16>
    %cst_400 = arith.constant dense<0.000000e+00> : vector<8x352xf32>
    %467 = tpu.matmul %0, %466, %cst_400 {dimension_numbers = #tpu.dot_dimension_numbers<[1], [0], [0], [1], [0, 0, 1, 1], [], []>} : vector<8x128xbf16>, vector<128x352xbf16>, vector<8x352xf32> -> vector<8x352xf32>
    %c23_401 = arith.constant 23 : index
    %468 = memref.load %arg3[%c23_401] : memref<32xf32, #tpu.memory_space<smem>>
    %469 = vector.broadcast %468 : f32 to vector<8x352xf32>
    %470 = arith.addf %467, %469 : vector<8x352xf32>
    %cst_402 = arith.constant 0.000000e+00 : f32
    %471 = vector.broadcast %cst_402 : f32 to vector<8x352xf32>
    %472 = arith.maximumf %470, %471 : vector<8x352xf32>
    %c0_403 = arith.constant 0 : index
    %c0_404 = arith.constant 0 : index
    %473 = vector.load %arg6[%c0_403, %c0_404] : memref<8x352xf32, #tpu.memory_space<vmem>>, vector<8x352xf32>
    %c0_405 = arith.constant 0 : index
    %c23_406 = arith.constant 23 : index
    %474 = memref.load %arg4[%c0_405, %c23_406] : memref<2x32xf32, #tpu.memory_space<smem>>
    %475 = vector.broadcast %474 : f32 to vector<8x352xf32>
    %476 = arith.mulf %475, %472 : vector<8x352xf32>
    %477 = arith.addf %473, %476 : vector<8x352xf32>
    %c0_407 = arith.constant 0 : index
    %c0_408 = arith.constant 0 : index
    %478 = vector.load %arg6[%c0_407, %c0_408] : memref<8x352xf32, #tpu.memory_space<vmem>>, vector<8x352xf32>
    tpu.vector_store %arg6[%c0_407, %c0_408], %477 {strides = array<i32>} : memref<8x352xf32, #tpu.memory_space<vmem>>, vector<8x352xf32>,
    %c0_409 = arith.constant 0 : index
    %c0_410 = arith.constant 0 : index
    %479 = vector.load %arg7[%c0_409, %c0_410] : memref<8x352xf32, #tpu.memory_space<vmem>>, vector<8x352xf32>
    %c1_411 = arith.constant 1 : index
    %c23_412 = arith.constant 23 : index
    %480 = memref.load %arg4[%c1_411, %c23_412] : memref<2x32xf32, #tpu.memory_space<smem>>
    %481 = vector.broadcast %480 : f32 to vector<8x352xf32>
    %482 = arith.mulf %481, %472 : vector<8x352xf32>
    %483 = arith.addf %479, %482 : vector<8x352xf32>
    %c0_413 = arith.constant 0 : index
    %c0_414 = arith.constant 0 : index
    %484 = vector.load %arg7[%c0_413, %c0_414] : memref<8x352xf32, #tpu.memory_space<vmem>>, vector<8x352xf32>
    tpu.vector_store %arg7[%c0_413, %c0_414], %483 {strides = array<i32>} : memref<8x352xf32, #tpu.memory_space<vmem>>, vector<8x352xf32>,
    %c24 = arith.constant 24 : index
    %c0_415 = arith.constant 0 : index
    %c0_416 = arith.constant 0 : index
    %485 = vector.load %arg2[%c24, %c0_415, %c0_416] : memref<32x128x352xbf16, #tpu.memory_space<vmem>>, vector<1x128x352xbf16>
    %486 = vector.shape_cast %485 : vector<1x128x352xbf16> to vector<128x352xbf16>
    %cst_417 = arith.constant dense<0.000000e+00> : vector<8x352xf32>
    %487 = tpu.matmul %0, %486, %cst_417 {dimension_numbers = #tpu.dot_dimension_numbers<[1], [0], [0], [1], [0, 0, 1, 1], [], []>} : vector<8x128xbf16>, vector<128x352xbf16>, vector<8x352xf32> -> vector<8x352xf32>
    %c24_418 = arith.constant 24 : index
    %488 = memref.load %arg3[%c24_418] : memref<32xf32, #tpu.memory_space<smem>>
    %489 = vector.broadcast %488 : f32 to vector<8x352xf32>
    %490 = arith.addf %487, %489 : vector<8x352xf32>
    %cst_419 = arith.constant 0.000000e+00 : f32
    %491 = vector.broadcast %cst_419 : f32 to vector<8x352xf32>
    %492 = arith.maximumf %490, %491 : vector<8x352xf32>
    %c0_420 = arith.constant 0 : index
    %c0_421 = arith.constant 0 : index
    %493 = vector.load %arg6[%c0_420, %c0_421] : memref<8x352xf32, #tpu.memory_space<vmem>>, vector<8x352xf32>
    %c0_422 = arith.constant 0 : index
    %c24_423 = arith.constant 24 : index
    %494 = memref.load %arg4[%c0_422, %c24_423] : memref<2x32xf32, #tpu.memory_space<smem>>
    %495 = vector.broadcast %494 : f32 to vector<8x352xf32>
    %496 = arith.mulf %495, %492 : vector<8x352xf32>
    %497 = arith.addf %493, %496 : vector<8x352xf32>
    %c0_424 = arith.constant 0 : index
    %c0_425 = arith.constant 0 : index
    %498 = vector.load %arg6[%c0_424, %c0_425] : memref<8x352xf32, #tpu.memory_space<vmem>>, vector<8x352xf32>
    tpu.vector_store %arg6[%c0_424, %c0_425], %497 {strides = array<i32>} : memref<8x352xf32, #tpu.memory_space<vmem>>, vector<8x352xf32>,
    %c0_426 = arith.constant 0 : index
    %c0_427 = arith.constant 0 : index
    %499 = vector.load %arg7[%c0_426, %c0_427] : memref<8x352xf32, #tpu.memory_space<vmem>>, vector<8x352xf32>
    %c1_428 = arith.constant 1 : index
    %c24_429 = arith.constant 24 : index
    %500 = memref.load %arg4[%c1_428, %c24_429] : memref<2x32xf32, #tpu.memory_space<smem>>
    %501 = vector.broadcast %500 : f32 to vector<8x352xf32>
    %502 = arith.mulf %501, %492 : vector<8x352xf32>
    %503 = arith.addf %499, %502 : vector<8x352xf32>
    %c0_430 = arith.constant 0 : index
    %c0_431 = arith.constant 0 : index
    %504 = vector.load %arg7[%c0_430, %c0_431] : memref<8x352xf32, #tpu.memory_space<vmem>>, vector<8x352xf32>
    tpu.vector_store %arg7[%c0_430, %c0_431], %503 {strides = array<i32>} : memref<8x352xf32, #tpu.memory_space<vmem>>, vector<8x352xf32>,
    %c25 = arith.constant 25 : index
    %c0_432 = arith.constant 0 : index
    %c0_433 = arith.constant 0 : index
    %505 = vector.load %arg2[%c25, %c0_432, %c0_433] : memref<32x128x352xbf16, #tpu.memory_space<vmem>>, vector<1x128x352xbf16>
    %506 = vector.shape_cast %505 : vector<1x128x352xbf16> to vector<128x352xbf16>
    %cst_434 = arith.constant dense<0.000000e+00> : vector<8x352xf32>
    %507 = tpu.matmul %0, %506, %cst_434 {dimension_numbers = #tpu.dot_dimension_numbers<[1], [0], [0], [1], [0, 0, 1, 1], [], []>} : vector<8x128xbf16>, vector<128x352xbf16>, vector<8x352xf32> -> vector<8x352xf32>
    %c25_435 = arith.constant 25 : index
    %508 = memref.load %arg3[%c25_435] : memref<32xf32, #tpu.memory_space<smem>>
    %509 = vector.broadcast %508 : f32 to vector<8x352xf32>
    %510 = arith.addf %507, %509 : vector<8x352xf32>
    %cst_436 = arith.constant 0.000000e+00 : f32
    %511 = vector.broadcast %cst_436 : f32 to vector<8x352xf32>
    %512 = arith.maximumf %510, %511 : vector<8x352xf32>
    %c0_437 = arith.constant 0 : index
    %c0_438 = arith.constant 0 : index
    %513 = vector.load %arg6[%c0_437, %c0_438] : memref<8x352xf32, #tpu.memory_space<vmem>>, vector<8x352xf32>
    %c0_439 = arith.constant 0 : index
    %c25_440 = arith.constant 25 : index
    %514 = memref.load %arg4[%c0_439, %c25_440] : memref<2x32xf32, #tpu.memory_space<smem>>
    %515 = vector.broadcast %514 : f32 to vector<8x352xf32>
    %516 = arith.mulf %515, %512 : vector<8x352xf32>
    %517 = arith.addf %513, %516 : vector<8x352xf32>
    %c0_441 = arith.constant 0 : index
    %c0_442 = arith.constant 0 : index
    %518 = vector.load %arg6[%c0_441, %c0_442] : memref<8x352xf32, #tpu.memory_space<vmem>>, vector<8x352xf32>
    tpu.vector_store %arg6[%c0_441, %c0_442], %517 {strides = array<i32>} : memref<8x352xf32, #tpu.memory_space<vmem>>, vector<8x352xf32>,
    %c0_443 = arith.constant 0 : index
    %c0_444 = arith.constant 0 : index
    %519 = vector.load %arg7[%c0_443, %c0_444] : memref<8x352xf32, #tpu.memory_space<vmem>>, vector<8x352xf32>
    %c1_445 = arith.constant 1 : index
    %c25_446 = arith.constant 25 : index
    %520 = memref.load %arg4[%c1_445, %c25_446] : memref<2x32xf32, #tpu.memory_space<smem>>
    %521 = vector.broadcast %520 : f32 to vector<8x352xf32>
    %522 = arith.mulf %521, %512 : vector<8x352xf32>
    %523 = arith.addf %519, %522 : vector<8x352xf32>
    %c0_447 = arith.constant 0 : index
    %c0_448 = arith.constant 0 : index
    %524 = vector.load %arg7[%c0_447, %c0_448] : memref<8x352xf32, #tpu.memory_space<vmem>>, vector<8x352xf32>
    tpu.vector_store %arg7[%c0_447, %c0_448], %523 {strides = array<i32>} : memref<8x352xf32, #tpu.memory_space<vmem>>, vector<8x352xf32>,
    %c26 = arith.constant 26 : index
    %c0_449 = arith.constant 0 : index
    %c0_450 = arith.constant 0 : index
    %525 = vector.load %arg2[%c26, %c0_449, %c0_450] : memref<32x128x352xbf16, #tpu.memory_space<vmem>>, vector<1x128x352xbf16>
    %526 = vector.shape_cast %525 : vector<1x128x352xbf16> to vector<128x352xbf16>
    %cst_451 = arith.constant dense<0.000000e+00> : vector<8x352xf32>
    %527 = tpu.matmul %0, %526, %cst_451 {dimension_numbers = #tpu.dot_dimension_numbers<[1], [0], [0], [1], [0, 0, 1, 1], [], []>} : vector<8x128xbf16>, vector<128x352xbf16>, vector<8x352xf32> -> vector<8x352xf32>
    %c26_452 = arith.constant 26 : index
    %528 = memref.load %arg3[%c26_452] : memref<32xf32, #tpu.memory_space<smem>>
    %529 = vector.broadcast %528 : f32 to vector<8x352xf32>
    %530 = arith.addf %527, %529 : vector<8x352xf32>
    %cst_453 = arith.constant 0.000000e+00 : f32
    %531 = vector.broadcast %cst_453 : f32 to vector<8x352xf32>
    %532 = arith.maximumf %530, %531 : vector<8x352xf32>
    %c0_454 = arith.constant 0 : index
    %c0_455 = arith.constant 0 : index
    %533 = vector.load %arg6[%c0_454, %c0_455] : memref<8x352xf32, #tpu.memory_space<vmem>>, vector<8x352xf32>
    %c0_456 = arith.constant 0 : index
    %c26_457 = arith.constant 26 : index
    %534 = memref.load %arg4[%c0_456, %c26_457] : memref<2x32xf32, #tpu.memory_space<smem>>
    %535 = vector.broadcast %534 : f32 to vector<8x352xf32>
    %536 = arith.mulf %535, %532 : vector<8x352xf32>
    %537 = arith.addf %533, %536 : vector<8x352xf32>
    %c0_458 = arith.constant 0 : index
    %c0_459 = arith.constant 0 : index
    %538 = vector.load %arg6[%c0_458, %c0_459] : memref<8x352xf32, #tpu.memory_space<vmem>>, vector<8x352xf32>
    tpu.vector_store %arg6[%c0_458, %c0_459], %537 {strides = array<i32>} : memref<8x352xf32, #tpu.memory_space<vmem>>, vector<8x352xf32>,
    %c0_460 = arith.constant 0 : index
    %c0_461 = arith.constant 0 : index
    %539 = vector.load %arg7[%c0_460, %c0_461] : memref<8x352xf32, #tpu.memory_space<vmem>>, vector<8x352xf32>
    %c1_462 = arith.constant 1 : index
    %c26_463 = arith.constant 26 : index
    %540 = memref.load %arg4[%c1_462, %c26_463] : memref<2x32xf32, #tpu.memory_space<smem>>
    %541 = vector.broadcast %540 : f32 to vector<8x352xf32>
    %542 = arith.mulf %541, %532 : vector<8x352xf32>
    %543 = arith.addf %539, %542 : vector<8x352xf32>
    %c0_464 = arith.constant 0 : index
    %c0_465 = arith.constant 0 : index
    %544 = vector.load %arg7[%c0_464, %c0_465] : memref<8x352xf32, #tpu.memory_space<vmem>>, vector<8x352xf32>
    tpu.vector_store %arg7[%c0_464, %c0_465], %543 {strides = array<i32>} : memref<8x352xf32, #tpu.memory_space<vmem>>, vector<8x352xf32>,
    %c27 = arith.constant 27 : index
    %c0_466 = arith.constant 0 : index
    %c0_467 = arith.constant 0 : index
    %545 = vector.load %arg2[%c27, %c0_466, %c0_467] : memref<32x128x352xbf16, #tpu.memory_space<vmem>>, vector<1x128x352xbf16>
    %546 = vector.shape_cast %545 : vector<1x128x352xbf16> to vector<128x352xbf16>
    %cst_468 = arith.constant dense<0.000000e+00> : vector<8x352xf32>
    %547 = tpu.matmul %0, %546, %cst_468 {dimension_numbers = #tpu.dot_dimension_numbers<[1], [0], [0], [1], [0, 0, 1, 1], [], []>} : vector<8x128xbf16>, vector<128x352xbf16>, vector<8x352xf32> -> vector<8x352xf32>
    %c27_469 = arith.constant 27 : index
    %548 = memref.load %arg3[%c27_469] : memref<32xf32, #tpu.memory_space<smem>>
    %549 = vector.broadcast %548 : f32 to vector<8x352xf32>
    %550 = arith.addf %547, %549 : vector<8x352xf32>
    %cst_470 = arith.constant 0.000000e+00 : f32
    %551 = vector.broadcast %cst_470 : f32 to vector<8x352xf32>
    %552 = arith.maximumf %550, %551 : vector<8x352xf32>
    %c0_471 = arith.constant 0 : index
    %c0_472 = arith.constant 0 : index
    %553 = vector.load %arg6[%c0_471, %c0_472] : memref<8x352xf32, #tpu.memory_space<vmem>>, vector<8x352xf32>
    %c0_473 = arith.constant 0 : index
    %c27_474 = arith.constant 27 : index
    %554 = memref.load %arg4[%c0_473, %c27_474] : memref<2x32xf32, #tpu.memory_space<smem>>
    %555 = vector.broadcast %554 : f32 to vector<8x352xf32>
    %556 = arith.mulf %555, %552 : vector<8x352xf32>
    %557 = arith.addf %553, %556 : vector<8x352xf32>
    %c0_475 = arith.constant 0 : index
    %c0_476 = arith.constant 0 : index
    %558 = vector.load %arg6[%c0_475, %c0_476] : memref<8x352xf32, #tpu.memory_space<vmem>>, vector<8x352xf32>
    tpu.vector_store %arg6[%c0_475, %c0_476], %557 {strides = array<i32>} : memref<8x352xf32, #tpu.memory_space<vmem>>, vector<8x352xf32>,
    %c0_477 = arith.constant 0 : index
    %c0_478 = arith.constant 0 : index
    %559 = vector.load %arg7[%c0_477, %c0_478] : memref<8x352xf32, #tpu.memory_space<vmem>>, vector<8x352xf32>
    %c1_479 = arith.constant 1 : index
    %c27_480 = arith.constant 27 : index
    %560 = memref.load %arg4[%c1_479, %c27_480] : memref<2x32xf32, #tpu.memory_space<smem>>
    %561 = vector.broadcast %560 : f32 to vector<8x352xf32>
    %562 = arith.mulf %561, %552 : vector<8x352xf32>
    %563 = arith.addf %559, %562 : vector<8x352xf32>
    %c0_481 = arith.constant 0 : index
    %c0_482 = arith.constant 0 : index
    %564 = vector.load %arg7[%c0_481, %c0_482] : memref<8x352xf32, #tpu.memory_space<vmem>>, vector<8x352xf32>
    tpu.vector_store %arg7[%c0_481, %c0_482], %563 {strides = array<i32>} : memref<8x352xf32, #tpu.memory_space<vmem>>, vector<8x352xf32>,
    %c28 = arith.constant 28 : index
    %c0_483 = arith.constant 0 : index
    %c0_484 = arith.constant 0 : index
    %565 = vector.load %arg2[%c28, %c0_483, %c0_484] : memref<32x128x352xbf16, #tpu.memory_space<vmem>>, vector<1x128x352xbf16>
    %566 = vector.shape_cast %565 : vector<1x128x352xbf16> to vector<128x352xbf16>
    %cst_485 = arith.constant dense<0.000000e+00> : vector<8x352xf32>
    %567 = tpu.matmul %0, %566, %cst_485 {dimension_numbers = #tpu.dot_dimension_numbers<[1], [0], [0], [1], [0, 0, 1, 1], [], []>} : vector<8x128xbf16>, vector<128x352xbf16>, vector<8x352xf32> -> vector<8x352xf32>
    %c28_486 = arith.constant 28 : index
    %568 = memref.load %arg3[%c28_486] : memref<32xf32, #tpu.memory_space<smem>>
    %569 = vector.broadcast %568 : f32 to vector<8x352xf32>
    %570 = arith.addf %567, %569 : vector<8x352xf32>
    %cst_487 = arith.constant 0.000000e+00 : f32
    %571 = vector.broadcast %cst_487 : f32 to vector<8x352xf32>
    %572 = arith.maximumf %570, %571 : vector<8x352xf32>
    %c0_488 = arith.constant 0 : index
    %c0_489 = arith.constant 0 : index
    %573 = vector.load %arg6[%c0_488, %c0_489] : memref<8x352xf32, #tpu.memory_space<vmem>>, vector<8x352xf32>
    %c0_490 = arith.constant 0 : index
    %c28_491 = arith.constant 28 : index
    %574 = memref.load %arg4[%c0_490, %c28_491] : memref<2x32xf32, #tpu.memory_space<smem>>
    %575 = vector.broadcast %574 : f32 to vector<8x352xf32>
    %576 = arith.mulf %575, %572 : vector<8x352xf32>
    %577 = arith.addf %573, %576 : vector<8x352xf32>
    %c0_492 = arith.constant 0 : index
    %c0_493 = arith.constant 0 : index
    %578 = vector.load %arg6[%c0_492, %c0_493] : memref<8x352xf32, #tpu.memory_space<vmem>>, vector<8x352xf32>
    tpu.vector_store %arg6[%c0_492, %c0_493], %577 {strides = array<i32>} : memref<8x352xf32, #tpu.memory_space<vmem>>, vector<8x352xf32>,
    %c0_494 = arith.constant 0 : index
    %c0_495 = arith.constant 0 : index
    %579 = vector.load %arg7[%c0_494, %c0_495] : memref<8x352xf32, #tpu.memory_space<vmem>>, vector<8x352xf32>
    %c1_496 = arith.constant 1 : index
    %c28_497 = arith.constant 28 : index
    %580 = memref.load %arg4[%c1_496, %c28_497] : memref<2x32xf32, #tpu.memory_space<smem>>
    %581 = vector.broadcast %580 : f32 to vector<8x352xf32>
    %582 = arith.mulf %581, %572 : vector<8x352xf32>
    %583 = arith.addf %579, %582 : vector<8x352xf32>
    %c0_498 = arith.constant 0 : index
    %c0_499 = arith.constant 0 : index
    %584 = vector.load %arg7[%c0_498, %c0_499] : memref<8x352xf32, #tpu.memory_space<vmem>>, vector<8x352xf32>
    tpu.vector_store %arg7[%c0_498, %c0_499], %583 {strides = array<i32>} : memref<8x352xf32, #tpu.memory_space<vmem>>, vector<8x352xf32>,
    %c29 = arith.constant 29 : index
    %c0_500 = arith.constant 0 : index
    %c0_501 = arith.constant 0 : index
    %585 = vector.load %arg2[%c29, %c0_500, %c0_501] : memref<32x128x352xbf16, #tpu.memory_space<vmem>>, vector<1x128x352xbf16>
    %586 = vector.shape_cast %585 : vector<1x128x352xbf16> to vector<128x352xbf16>
    %cst_502 = arith.constant dense<0.000000e+00> : vector<8x352xf32>
    %587 = tpu.matmul %0, %586, %cst_502 {dimension_numbers = #tpu.dot_dimension_numbers<[1], [0], [0], [1], [0, 0, 1, 1], [], []>} : vector<8x128xbf16>, vector<128x352xbf16>, vector<8x352xf32> -> vector<8x352xf32>
    %c29_503 = arith.constant 29 : index
    %588 = memref.load %arg3[%c29_503] : memref<32xf32, #tpu.memory_space<smem>>
    %589 = vector.broadcast %588 : f32 to vector<8x352xf32>
    %590 = arith.addf %587, %589 : vector<8x352xf32>
    %cst_504 = arith.constant 0.000000e+00 : f32
    %591 = vector.broadcast %cst_504 : f32 to vector<8x352xf32>
    %592 = arith.maximumf %590, %591 : vector<8x352xf32>
    %c0_505 = arith.constant 0 : index
    %c0_506 = arith.constant 0 : index
    %593 = vector.load %arg6[%c0_505, %c0_506] : memref<8x352xf32, #tpu.memory_space<vmem>>, vector<8x352xf32>
    %c0_507 = arith.constant 0 : index
    %c29_508 = arith.constant 29 : index
    %594 = memref.load %arg4[%c0_507, %c29_508] : memref<2x32xf32, #tpu.memory_space<smem>>
    %595 = vector.broadcast %594 : f32 to vector<8x352xf32>
    %596 = arith.mulf %595, %592 : vector<8x352xf32>
    %597 = arith.addf %593, %596 : vector<8x352xf32>
    %c0_509 = arith.constant 0 : index
    %c0_510 = arith.constant 0 : index
    %598 = vector.load %arg6[%c0_509, %c0_510] : memref<8x352xf32, #tpu.memory_space<vmem>>, vector<8x352xf32>
    tpu.vector_store %arg6[%c0_509, %c0_510], %597 {strides = array<i32>} : memref<8x352xf32, #tpu.memory_space<vmem>>, vector<8x352xf32>,
    %c0_511 = arith.constant 0 : index
    %c0_512 = arith.constant 0 : index
    %599 = vector.load %arg7[%c0_511, %c0_512] : memref<8x352xf32, #tpu.memory_space<vmem>>, vector<8x352xf32>
    %c1_513 = arith.constant 1 : index
    %c29_514 = arith.constant 29 : index
    %600 = memref.load %arg4[%c1_513, %c29_514] : memref<2x32xf32, #tpu.memory_space<smem>>
    %601 = vector.broadcast %600 : f32 to vector<8x352xf32>
    %602 = arith.mulf %601, %592 : vector<8x352xf32>
    %603 = arith.addf %599, %602 : vector<8x352xf32>
    %c0_515 = arith.constant 0 : index
    %c0_516 = arith.constant 0 : index
    %604 = vector.load %arg7[%c0_515, %c0_516] : memref<8x352xf32, #tpu.memory_space<vmem>>, vector<8x352xf32>
    tpu.vector_store %arg7[%c0_515, %c0_516], %603 {strides = array<i32>} : memref<8x352xf32, #tpu.memory_space<vmem>>, vector<8x352xf32>,
    %c30 = arith.constant 30 : index
    %c0_517 = arith.constant 0 : index
    %c0_518 = arith.constant 0 : index
    %605 = vector.load %arg2[%c30, %c0_517, %c0_518] : memref<32x128x352xbf16, #tpu.memory_space<vmem>>, vector<1x128x352xbf16>
    %606 = vector.shape_cast %605 : vector<1x128x352xbf16> to vector<128x352xbf16>
    %cst_519 = arith.constant dense<0.000000e+00> : vector<8x352xf32>
    %607 = tpu.matmul %0, %606, %cst_519 {dimension_numbers = #tpu.dot_dimension_numbers<[1], [0], [0], [1], [0, 0, 1, 1], [], []>} : vector<8x128xbf16>, vector<128x352xbf16>, vector<8x352xf32> -> vector<8x352xf32>
    %c30_520 = arith.constant 30 : index
    %608 = memref.load %arg3[%c30_520] : memref<32xf32, #tpu.memory_space<smem>>
    %609 = vector.broadcast %608 : f32 to vector<8x352xf32>
    %610 = arith.addf %607, %609 : vector<8x352xf32>
    %cst_521 = arith.constant 0.000000e+00 : f32
    %611 = vector.broadcast %cst_521 : f32 to vector<8x352xf32>
    %612 = arith.maximumf %610, %611 : vector<8x352xf32>
    %c0_522 = arith.constant 0 : index
    %c0_523 = arith.constant 0 : index
    %613 = vector.load %arg6[%c0_522, %c0_523] : memref<8x352xf32, #tpu.memory_space<vmem>>, vector<8x352xf32>
    %c0_524 = arith.constant 0 : index
    %c30_525 = arith.constant 30 : index
    %614 = memref.load %arg4[%c0_524, %c30_525] : memref<2x32xf32, #tpu.memory_space<smem>>
    %615 = vector.broadcast %614 : f32 to vector<8x352xf32>
    %616 = arith.mulf %615, %612 : vector<8x352xf32>
    %617 = arith.addf %613, %616 : vector<8x352xf32>
    %c0_526 = arith.constant 0 : index
    %c0_527 = arith.constant 0 : index
    %618 = vector.load %arg6[%c0_526, %c0_527] : memref<8x352xf32, #tpu.memory_space<vmem>>, vector<8x352xf32>
    tpu.vector_store %arg6[%c0_526, %c0_527], %617 {strides = array<i32>} : memref<8x352xf32, #tpu.memory_space<vmem>>, vector<8x352xf32>,
    %c0_528 = arith.constant 0 : index
    %c0_529 = arith.constant 0 : index
    %619 = vector.load %arg7[%c0_528, %c0_529] : memref<8x352xf32, #tpu.memory_space<vmem>>, vector<8x352xf32>
    %c1_530 = arith.constant 1 : index
    %c30_531 = arith.constant 30 : index
    %620 = memref.load %arg4[%c1_530, %c30_531] : memref<2x32xf32, #tpu.memory_space<smem>>
    %621 = vector.broadcast %620 : f32 to vector<8x352xf32>
    %622 = arith.mulf %621, %612 : vector<8x352xf32>
    %623 = arith.addf %619, %622 : vector<8x352xf32>
    %c0_532 = arith.constant 0 : index
    %c0_533 = arith.constant 0 : index
    %624 = vector.load %arg7[%c0_532, %c0_533] : memref<8x352xf32, #tpu.memory_space<vmem>>, vector<8x352xf32>
    tpu.vector_store %arg7[%c0_532, %c0_533], %623 {strides = array<i32>} : memref<8x352xf32, #tpu.memory_space<vmem>>, vector<8x352xf32>,
    %c31 = arith.constant 31 : index
    %c0_534 = arith.constant 0 : index
    %c0_535 = arith.constant 0 : index
    %625 = vector.load %arg2[%c31, %c0_534, %c0_535] : memref<32x128x352xbf16, #tpu.memory_space<vmem>>, vector<1x128x352xbf16>
    %626 = vector.shape_cast %625 : vector<1x128x352xbf16> to vector<128x352xbf16>
    %cst_536 = arith.constant dense<0.000000e+00> : vector<8x352xf32>
    %627 = tpu.matmul %0, %626, %cst_536 {dimension_numbers = #tpu.dot_dimension_numbers<[1], [0], [0], [1], [0, 0, 1, 1], [], []>} : vector<8x128xbf16>, vector<128x352xbf16>, vector<8x352xf32> -> vector<8x352xf32>
    %c31_537 = arith.constant 31 : index
    %628 = memref.load %arg3[%c31_537] : memref<32xf32, #tpu.memory_space<smem>>
    %629 = vector.broadcast %628 : f32 to vector<8x352xf32>
    %630 = arith.addf %627, %629 : vector<8x352xf32>
    %cst_538 = arith.constant 0.000000e+00 : f32
    %631 = vector.broadcast %cst_538 : f32 to vector<8x352xf32>
    %632 = arith.maximumf %630, %631 : vector<8x352xf32>
    %c0_539 = arith.constant 0 : index
    %c0_540 = arith.constant 0 : index
    %633 = vector.load %arg6[%c0_539, %c0_540] : memref<8x352xf32, #tpu.memory_space<vmem>>, vector<8x352xf32>
    %c0_541 = arith.constant 0 : index
    %c31_542 = arith.constant 31 : index
    %634 = memref.load %arg4[%c0_541, %c31_542] : memref<2x32xf32, #tpu.memory_space<smem>>
    %635 = vector.broadcast %634 : f32 to vector<8x352xf32>
    %636 = arith.mulf %635, %632 : vector<8x352xf32>
    %637 = arith.addf %633, %636 : vector<8x352xf32>
    %c0_543 = arith.constant 0 : index
    %c0_544 = arith.constant 0 : index
    %638 = vector.load %arg6[%c0_543, %c0_544] : memref<8x352xf32, #tpu.memory_space<vmem>>, vector<8x352xf32>
    tpu.vector_store %arg6[%c0_543, %c0_544], %637 {strides = array<i32>} : memref<8x352xf32, #tpu.memory_space<vmem>>, vector<8x352xf32>,
    %c0_545 = arith.constant 0 : index
    %c0_546 = arith.constant 0 : index
    %639 = vector.load %arg7[%c0_545, %c0_546] : memref<8x352xf32, #tpu.memory_space<vmem>>, vector<8x352xf32>
    %c1_547 = arith.constant 1 : index
    %c31_548 = arith.constant 31 : index
    %640 = memref.load %arg4[%c1_547, %c31_548] : memref<2x32xf32, #tpu.memory_space<smem>>
    %641 = vector.broadcast %640 : f32 to vector<8x352xf32>
    %642 = arith.mulf %641, %632 : vector<8x352xf32>
    %643 = arith.addf %639, %642 : vector<8x352xf32>
    %c0_549 = arith.constant 0 : index
    %c0_550 = arith.constant 0 : index
    %644 = vector.load %arg7[%c0_549, %c0_550] : memref<8x352xf32, #tpu.memory_space<vmem>>, vector<8x352xf32>
    tpu.vector_store %arg7[%c0_549, %c0_550], %643 {strides = array<i32>} : memref<8x352xf32, #tpu.memory_space<vmem>>, vector<8x352xf32>,
    %c0_551 = arith.constant 0 : index
    %c0_552 = arith.constant 0 : index
    %645 = vector.load %arg6[%c0_551, %c0_552] : memref<8x352xf32, #tpu.memory_space<vmem>>, vector<8x352xf32>
    %c0_553 = arith.constant 0 : index
    %646 = memref.load %arg5[%c0_553] : memref<2xf32, #tpu.memory_space<smem>>
    %647 = vector.broadcast %646 : f32 to vector<8x352xf32>
    %648 = arith.addf %645, %647 : vector<8x352xf32>
    %c0_554 = arith.constant 0 : index
    %c0_555 = arith.constant 0 : index
    %649 = vector.load %arg6[%c0_554, %c0_555] : memref<8x352xf32, #tpu.memory_space<vmem>>, vector<8x352xf32>
    tpu.vector_store %arg6[%c0_554, %c0_555], %648 {strides = array<i32>} : memref<8x352xf32, #tpu.memory_space<vmem>>, vector<8x352xf32>,
    %c0_556 = arith.constant 0 : index
    %c0_557 = arith.constant 0 : index
    %650 = vector.load %arg7[%c0_556, %c0_557] : memref<8x352xf32, #tpu.memory_space<vmem>>, vector<8x352xf32>
    %c1_558 = arith.constant 1 : index
    %651 = memref.load %arg5[%c1_558] : memref<2xf32, #tpu.memory_space<smem>>
    %652 = vector.broadcast %651 : f32 to vector<8x352xf32>
    %653 = arith.addf %650, %652 : vector<8x352xf32>
    %c0_559 = arith.constant 0 : index
    %c0_560 = arith.constant 0 : index
    %654 = vector.load %arg7[%c0_559, %c0_560] : memref<8x352xf32, #tpu.memory_space<vmem>>, vector<8x352xf32>
    tpu.vector_store %arg7[%c0_559, %c0_560], %653 {strides = array<i32>} : memref<8x352xf32, #tpu.memory_space<vmem>>, vector<8x352xf32>,
    return
  }
  func.func @transform_0(%arg0: i32) -> (i32, i32) {
    %c0_i32 = arith.constant 0 : i32
    %c0_i32_0 = arith.constant 0 : i32
    return %arg0, %c0_i32 : i32, i32
  }
  func.func @transform_1(%arg0: i32) -> (i32, i32, i32) {
    %c0_i32 = arith.constant 0 : i32
    %c0_i32_0 = arith.constant 0 : i32
    %c0_i32_1 = arith.constant 0 : i32
    %c0_i32_2 = arith.constant 0 : i32
    return %c0_i32, %c0_i32_0, %c0_i32_1 : i32, i32, i32
  }
  func.func @transform_2(%arg0: i32) -> i32 {
    %c0_i32 = arith.constant 0 : i32
    %c0_i32_0 = arith.constant 0 : i32
    return %c0_i32 : i32
  }
  func.func @transform_3(%arg0: i32) -> (i32, i32) {
    %c0_i32 = arith.constant 0 : i32
    %c0_i32_0 = arith.constant 0 : i32
    %c0_i32_1 = arith.constant 0 : i32
    return %c0_i32, %c0_i32_0 : i32, i32
  }
  func.func @transform_4(%arg0: i32) -> i32 {
    %c0_i32 = arith.constant 0 : i32
    %c0_i32_0 = arith.constant 0 : i32
    return %c0_i32 : i32
  }
  func.func @transform_5(%arg0: i32) -> (i32, i32) {
    %c0_i32 = arith.constant 0 : i32
    %c0_i32_0 = arith.constant 0 : i32
    return %arg0, %c0_i32 : i32, i32
  }
  func.func @transform_6(%arg0: i32) -> (i32, i32) {
    %c0_i32 = arith.constant 0 : i32
    %c0_i32_0 = arith.constant 0 : i32
    return %arg0, %c0_i32 : i32, i32
  }
}

</mosaic_0001>

<llo_original>
// kernel: onvelnet_forward.1
$region0: #{onvelnet_forward.1}
  #allocation0 [shape = 'u32[]', space=smem, size = 0x4, offset = 0x4, fixed_abs, tag = 'smem constant byte address 0x4 - core index']
  #allocation1 [shape = 'u32[144,128]{1,0:T(1,128)}', space=vmem, size = 0x12000, scoped, tag = 'internal scratch']
  %s0 = inlined_call_operand.vmem [shape: bf16[16,128], index: 0, kind: input, shape index: {}]
  %s1 = inlined_call_operand.vmem [shape: bf16[32,128,352], index: 1, kind: input, shape index: {}]
  %s2 = inlined_call_operand.vmem [shape: f32[32], index: 2, kind: input, shape index: {}]
  %s3 = inlined_call_operand.vmem [shape: f32[2,32], index: 3, kind: input, shape index: {}]
  %s4 = inlined_call_operand.vmem [shape: f32[2], index: 4, kind: input, shape index: {}]
  %s5 = inlined_call_operand.hbm [shape: f32[16,352], index: 5, kind: output, shape index: {0}]
  %s6 = inlined_call_operand.hbm [shape: f32[16,352], index: 6, kind: output, shape index: {1}]
  %7 = xla_tuple %s5, %s6
  %s8 = sld [smem:[#allocation0]]
  $region73: #{onvelnet_forward.1} parent=0
    _
  %s10 = ssub.s32 1, %s8
  %s11 = scalar_select 0, %s10, %s8
  $region1: #{onvelnet_forward.1} parent=0
    #allocation2 [shape = 'u8[512]{0}', space=smem, size = 0x200, scoped, tag = 'input window, operand 2, single buffered']
    #allocation3 [shape = 's32[2]{0}', space=sflag, size = 0x8, scoped, tag = 'scoped memory for onvelnet_forward.1']
    #allocation4 [shape = 's32[2]{0}', space=sflag, size = 0x8, scoped, tag = 'scoped memory for onvelnet_forward.1']
    #allocation5 [shape = 'u8[1024]{0}', space=smem, size = 0x400, scoped, tag = 'input window, operand 3, single buffered']
    #allocation6 [shape = 's32[1]{0}', space=sflag, size = 0x4, scoped, tag = 'scoped memory for onvelnet_forward.1']
    #allocation7 [shape = 'u8[512]{0}', space=smem, size = 0x200, scoped, tag = 'input window, operand 4, single buffered']
    #allocation8 [shape = 'u8[24576]{0}', space=vmem, size = 0x6000, scoped, tag = 'output window, operand 0']
    #allocation9 [shape = 'u8[24576]{0}', space=vmem, size = 0x6000, scoped, tag = 'output window, operand 1']
    #allocation10 [shape = 's32[2]{0}', space=sflag, size = 0x8, scoped, tag = 'scoped memory for onvelnet_forward.1']
    %12 = vsyncpa [#allocation4], 0
    %13 = vsyncpa [#allocation6], 0
    %14 = vsyncpa [#allocation3], 0
    %s15 = scalar_lea.sflag [#allocation3], 1
    %16 = vsyncpa %s15, 0
    %17 = vsyncpa [#allocation10], 0
    %s18 = scalar_lea.sflag [#allocation10], 1
    %19 = vsyncpa %s18, 0
    loop: start=0, step=1, limit=4
    $region2: #{onvelnet_forward.1} parent=1 // loop_pre_header
      _
    $region3: #{onvelnet_forward.1} parent=1 // loop_header
      %s21 = sphi 0, %s25
      %p22 = scmp.ge.s32.totalorder %s21, 4
      %s31 = sphi 0, %s33
      %s34 = sphi 0, %s31
      %s35 = sphi 0, %s34
      %s51 = sphi 0, %s35
      %s55 = sphi 0, %s55
      %s57 = sphi 0, %s55
      %s58 = sphi 0, %s57
      %s72 = sphi 0, %s58
      %s76 = sphi 0, %s76
      %s78 = sphi 0, %s76
      %s79 = sphi 0, %s78
      %s93 = sphi 0, %s79
      %s97 = sphi 0, %s97
      %s99 = sphi 0, %s97
      %s100 = sphi 0, %s99
      %s114 = sphi 0, %s100
      %s118 = sphi 0, %s118
      %s120 = sphi 0, %s118
      %s121 = sphi 0, %s120
      %s135 = sphi 0, %s121
      %s141 = sphi 0, %s143
      %s144 = sphi 0, %s141
      %s145 = sphi 0, %s144
      %s161 = sphi 0, %s145
      %s167 = sphi 0, %s169
      %s170 = sphi 0, %s167
      %s171 = sphi 0, %s170
      %s187 = sphi 0, %s171
    $region4: #{onvelnet_forward.1} parent=1 // loop_header_branch
      %24 = sbr.rel (%p22) target = $region8
    $region5: #{onvelnet_forward.1} parent=1 // loop_body
      %s26 = ssub.s32 %s21, 1
      %s27 = ssub.s32 %s21, 2
      %s28 = sadd.s32 %s21, 1
      %s29 = ssub.s32 %s21, %s28
      %p30 = scmp.eq.s32.totalorder %s29, 0
      %s32 = sadd.s32 %s31, 1
      %s33 = scalar_select %p30, %s31, %s32
      %p36 = pneg %p30
      %p37 = scmp.eq.s32.totalorder %s21, 1
      %p38 = por %p36, %p37
      %p39 = scmp.ne.s32.totalorder %s31, %s34
      %p40 = scmp.eq.s32.totalorder %s21, 0
      %p41 = por %p39, %p40
      %p42 = scmp.ne.s32.totalorder %s31, %s34
      %p43 = scmp.eq.s32.totalorder %s26, 1
      %p44 = por %p42, %p43
      %p45 = scmp.ne.s32.totalorder %s34, %s35
      %p46 = scmp.eq.s32.totalorder %s26, 0
      %p47 = por %p45, %p46
      %p48 = scmp.ne.s32.totalorder %s34, %s35
      %p49 = scmp.eq.s32.totalorder %s27, 1
      %p50 = por %p48, %p49
      %p52 = scmp.ne.s32.totalorder %s35, %s51
      %p53 = scmp.eq.s32.totalorder %s27, 0
      %p54 = por %p52, %p53
      %s56 = sadd.s32 %s55, 1
      %p59 = scmp.eq.s32.totalorder %s21, 1
      %p60 = scmp.ne.s32.totalorder %s55, %s57
      %p61 = scmp.eq.s32.totalorder %s21, 0
      %p62 = por %p60, %p61
      %p63 = scmp.ne.s32.totalorder %s55, %s57
      %p64 = scmp.eq.s32.totalorder %s26, 1
      %p65 = por %p63, %p64
      %p66 = scmp.ne.s32.totalorder %s57, %s58
      %p67 = scmp.eq.s32.totalorder %s26, 0
      %p68 = por %p66, %p67
      %p69 = scmp.ne.s32.totalorder %s57, %s58
      %p70 = scmp.eq.s32.totalorder %s27, 1
      %p71 = por %p69, %p70
      %p73 = scmp.ne.s32.totalorder %s58, %s72
      %p74 = scmp.eq.s32.totalorder %s27, 0
      %p75 = por %p73, %p74
      %s77 = sadd.s32 %s76, 1
      %p80 = scmp.eq.s32.totalorder %s21, 1
      %p81 = scmp.ne.s32.totalorder %s76, %s78
      %p82 = scmp.eq.s32.totalorder %s21, 0
      %p83 = por %p81, %p82
      %p84 = scmp.ne.s32.totalorder %s76, %s78
      %p85 = scmp.eq.s32.totalorder %s26, 1
      %p86 = por %p84, %p85
      %p87 = scmp.ne.s32.totalorder %s78, %s79
      %p88 = scmp.eq.s32.totalorder %s26, 0
      %p89 = por %p87, %p88
      %p90 = scmp.ne.s32.totalorder %s78, %s79
      %p91 = scmp.eq.s32.totalorder %s27, 1
      %p92 = por %p90, %p91
      %p94 = scmp.ne.s32.totalorder %s79, %s93
      %p95 = scmp.eq.s32.totalorder %s27, 0
      %p96 = por %p94, %p95
      %s98 = sadd.s32 %s97, 1
      %p101 = scmp.eq.s32.totalorder %s21, 1
      %p102 = scmp.ne.s32.totalorder %s97, %s99
      %p103 = scmp.eq.s32.totalorder %s21, 0
      %p104 = por %p102, %p103
      %p105 = scmp.ne.s32.totalorder %s97, %s99
      %p106 = scmp.eq.s32.totalorder %s26, 1
      %p107 = por %p105, %p106
      %p108 = scmp.ne.s32.totalorder %s99, %s100
      %p109 = scmp.eq.s32.totalorder %s26, 0
      %p110 = por %p108, %p109
      %p111 = scmp.ne.s32.totalorder %s99, %s100
      %p112 = scmp.eq.s32.totalorder %s27, 1
      %p113 = por %p111, %p112
      %p115 = scmp.ne.s32.totalorder %s100, %s114
      %p116 = scmp.eq.s32.totalorder %s27, 0
      %p117 = por %p115, %p116
      %s119 = sadd.s32 %s118, 1
      %p122 = scmp.eq.s32.totalorder %s21, 1
      %p123 = scmp.ne.s32.totalorder %s118, %s120
      %p124 = scmp.eq.s32.totalorder %s21, 0
      %p125 = por %p123, %p124
      %p126 = scmp.ne.s32.totalorder %s118, %s120
      %p127 = scmp.eq.s32.totalorder %s26, 1
      %p128 = por %p126, %p127
      %p129 = scmp.ne.s32.totalorder %s120, %s121
      %p130 = scmp.eq.s32.totalorder %s26, 0
      %p131 = por %p129, %p130
      %p132 = scmp.ne.s32.totalorder %s120, %s121
      %p133 = scmp.eq.s32.totalorder %s27, 1
      %p134 = por %p132, %p133
      %p136 = scmp.ne.s32.totalorder %s121, %s135
      %p137 = scmp.eq.s32.totalorder %s27, 0
      %p138 = por %p136, %p137
      %s139 = ssub.s32 %s21, %s28
      %p140 = scmp.eq.s32.totalorder %s139, 0
      %s142 = sadd.s32 %s141, 1
      %s143 = scalar_select %p140, %s141, %s142
      %p146 = pneg %p140
      %p147 = scmp.eq.s32.totalorder %s21, 1
      %p148 = por %p146, %p147
      %p149 = scmp.ne.s32.totalorder %s141, %s144
      %p150 = scmp.eq.s32.totalorder %s21, 0
      %p151 = por %p149, %p150
      %p152 = scmp.ne.s32.totalorder %s141, %s144
      %p153 = scmp.eq.s32.totalorder %s26, 1
      %p154 = por %p152, %p153
      %p155 = scmp.ne.s32.totalorder %s144, %s145
      %p156 = scmp.eq.s32.totalorder %s26, 0
      %p157 = por %p155, %p156
      %p158 = scmp.ne.s32.totalorder %s144, %s145
      %p159 = scmp.eq.s32.totalorder %s27, 1
      %p160 = por %p158, %p159
      %p162 = scmp.ne.s32.totalorder %s145, %s161
      %p163 = scmp.eq.s32.totalorder %s27, 0
      %p164 = por %p162, %p163
      %s165 = ssub.s32 %s21, %s28
      %p166 = scmp.eq.s32.totalorder %s165, 0
      %s168 = sadd.s32 %s167, 1
      %s169 = scalar_select %p166, %s167, %s168
      %p172 = pneg %p166
      %p173 = scmp.eq.s32.totalorder %s21, 1
      %p174 = por %p172, %p173
      %p175 = scmp.ne.s32.totalorder %s167, %s170
      %p176 = scmp.eq.s32.totalorder %s21, 0
      %p177 = por %p175, %p176
      %p178 = scmp.ne.s32.totalorder %s167, %s170
      %p179 = scmp.eq.s32.totalorder %s26, 1
      %p180 = por %p178, %p179
      %p181 = scmp.ne.s32.totalorder %s170, %s171
      %p182 = scmp.eq.s32.totalorder %s26, 0
      %p183 = por %p181, %p182
      %p184 = scmp.ne.s32.totalorder %s170, %s171
      %p185 = scmp.eq.s32.totalorder %s27, 1
      %p186 = por %p184, %p185
      %p188 = scmp.ne.s32.totalorder %s171, %s187
      %p189 = scmp.eq.s32.totalorder %s27, 0
      %p190 = por %p188, %p189
      %p191 = scmp.le.s32.totalorder 1, %s21
      %p192 = scmp.lt.s32.totalorder %s21, 3
      %p193 = pnand %p191, %p192
      %p194 = pneg %p193
      // Predicated region
      $region9: #{onvelnet_forward.1} parent=5 // pred_check
        _
      $region10: #{onvelnet_forward.1} parent=5 // pred_check_branch
        %196 = sbr.rel (%p193) target = $region12
      $region11: #{onvelnet_forward.1} parent=5 // pred_region
        %s197 = ssub.s32 %s21, 1
        // Predicated region
        $region13: #{onvelnet_forward.1} parent=11 // pred_check
          %p198 = pneg %p68
        $region14: #{onvelnet_forward.1} parent=11 // pred_check_branch
          %200 = sbr.rel (%p198) target = $region16
        $region15: #{onvelnet_forward.1} parent=11 // pred_region
          _
        $region16: #{onvelnet_forward.1} parent=11 // pred_fallthru
          _
        // Predicated region
        $region17: #{onvelnet_forward.1} parent=11 // pred_check
          %p201 = pneg %p89
        $region18: #{onvelnet_forward.1} parent=11 // pred_check_branch
          %203 = sbr.rel (%p201) target = $region20
        $region19: #{onvelnet_forward.1} parent=11 // pred_region
          %s205 = ssub.s32 16, 16
          %206 = vsyncadd [#allocation4], %s205
          %s208 = sshll.u32 %s2, 4
          %s209 = int_to_ptr.vmem [resolvable:$true] %s208
          %211 = dma.vmem_to_smem %s209, 16, [#allocation2], [#allocation4]
        $region20: #{onvelnet_forward.1} parent=11 // pred_fallthru
          _
        // Predicated region
        $region21: #{onvelnet_forward.1} parent=11 // pred_check
          %p212 = pneg %p110
        $region22: #{onvelnet_forward.1} parent=11 // pred_check_branch
          %214 = sbr.rel (%p212) target = $region24
        $region23: #{onvelnet_forward.1} parent=11 // pred_region
          %s216 = ssub.s32 32, 32
          %217 = vsyncadd [#allocation6], %s216
          %s219 = sshll.u32 %s3, 4
          %s220 = int_to_ptr.vmem [resolvable:$true] %s219
          %222 = dma.vmem_to_smem %s220, 32, [#allocation5], [#allocation6]
        $region24: #{onvelnet_forward.1} parent=11 // pred_fallthru
          _
        // Predicated region
        $region25: #{onvelnet_forward.1} parent=11 // pred_check
          %p223 = pneg %p131
        $region26: #{onvelnet_forward.1} parent=11 // pred_check_branch
          %225 = sbr.rel (%p223) target = $region28
        $region27: #{onvelnet_forward.1} parent=11 // pred_region
          %s227 = ssub.s32 16, 16
          %228 = vsyncadd [#allocation6], %s227
          %s230 = sshll.u32 %s4, 4
          %s231 = int_to_ptr.vmem [resolvable:$true] %s230
          %233 = dma.vmem_to_smem %s231, 16, [#allocation7], [#allocation6]
        $region28: #{onvelnet_forward.1} parent=11 // pred_fallthru
          _
      $region12: #{onvelnet_forward.1} parent=5 // pred_fallthru
        _
      %p234 = scmp.lt.s32.totalorder %s21, 2
      // Predicated region
      $region29: #{onvelnet_forward.1} parent=5 // pred_check
        %p235 = pneg %p234
      $region30: #{onvelnet_forward.1} parent=5 // pred_check_branch
        %237 = sbr.rel (%p235) target = $region32
      $region31: #{onvelnet_forward.1} parent=5 // pred_region
        // Predicated region
        $region33: #{onvelnet_forward.1} parent=31 // pred_check
          %p238 = pneg %p41
        $region34: #{onvelnet_forward.1} parent=31 // pred_check_branch
          %240 = sbr.rel (%p238) target = $region36
        $region35: #{onvelnet_forward.1} parent=31 // pred_region
          %p241 = scmp.lt.s32.totalorder %s21, 1
          %s242 = scalar_select %p241, %s21, 1
          %s243 = smul.addr %s242, 4
          %s244 = scalar_lea.vmem %s0, %s243
        $region36: #{onvelnet_forward.1} parent=31 // pred_fallthru
          _
      $region32: #{onvelnet_forward.1} parent=5 // pred_fallthru
        _
      %p245 = scmp.le.s32.totalorder 1, %s21
      %p246 = scmp.lt.s32.totalorder %s21, 3
      %p247 = pnand %p245, %p246
      %p248 = pneg %p247
      // Predicated region
      $region37: #{onvelnet_forward.1} parent=5 // pred_check
        _
      $region38: #{onvelnet_forward.1} parent=5 // pred_check_branch
        %250 = sbr.rel (%p247) target = $region40
      $region39: #{onvelnet_forward.1} parent=5 // pred_region
        %s251 = ssub.s32 %s21, 1
        // Predicated region
        $region41: #{onvelnet_forward.1} parent=39 // pred_check
          %p252 = pneg %p89
        $region42: #{onvelnet_forward.1} parent=39 // pred_check_branch
          %254 = sbr.rel (%p252) target = $region44
        $region43: #{onvelnet_forward.1} parent=39 // pred_region
          %255 = dma.done [#allocation4], 16
        $region44: #{onvelnet_forward.1} parent=39 // pred_fallthru
          _
        // Predicated region
        $region45: #{onvelnet_forward.1} parent=39 // pred_check
          %p256 = pneg %p110
        $region46: #{onvelnet_forward.1} parent=39 // pred_check_branch
          %258 = sbr.rel (%p256) target = $region48
        $region47: #{onvelnet_forward.1} parent=39 // pred_region
          %259 = dma.done [#allocation6], 32
        $region48: #{onvelnet_forward.1} parent=39 // pred_fallthru
          _
        // Predicated region
        $region49: #{onvelnet_forward.1} parent=39 // pred_check
          %p260 = pneg %p131
        $region50: #{onvelnet_forward.1} parent=39 // pred_check_branch
          %262 = sbr.rel (%p260) target = $region52
        $region51: #{onvelnet_forward.1} parent=39 // pred_region
          %263 = dma.done [#allocation6], 16
        $region52: #{onvelnet_forward.1} parent=39 // pred_fallthru
          _
        %264 = sfence
        %p265 = scmp.lt.s32.totalorder %s26, 1
        %s266 = scalar_select %p265, %s26, 1
        %s267 = smul.addr %s266, 4
        %s268 = scalar_lea.vmem %s0, %s267
        %p269 = pneg %p47
        %p270 = pneg %p44
        %p271 = pneg %p68
        %p272 = pneg %p65
        %p273 = pneg %p89
        %p274 = pneg %p86
        %p275 = pneg %p110
        %p276 = pneg %p107
        %p277 = pneg %p131
        %p278 = pneg %p128
        %p279 = pneg %p157
        %p280 = pneg %p154
        %s281 = sand.u32 %s144, 1
        %s282 = scalar_lea.sflag [#allocation3], %s281
        %s283 = sand.u32 %s144, 1
        %s284 = smul.addr %s283, 24
        %s285 = scalar_lea.vmem [#allocation8], %s284
        %p286 = pneg %p183
        %p287 = pneg %p180
        %s288 = sand.u32 %s170, 1
        %s289 = scalar_lea.sflag [#allocation10], %s288
        %s290 = sand.u32 %s170, 1
        %s291 = smul.addr %s290, 24
        %s292 = scalar_lea.vmem [#allocation9], %s291
        %p293 = scmp.lt.s32.totalorder %s26, 1
        %s294 = scalar_select %p293, %s26, 1
        %s295 = smul.addr %s294, 4
        %s296 = scalar_lea.vmem %s0, %s295
        %v298 = vld [vmem:[%s296] sm:$0xf]
        %299 = vst [vmem:[%s285] sm:$0xff] 0.0
        %300 = vst [vmem:[%s285 + $0x8] sm:$0xff] 0.0
        %vm301 = vcmask 785408
        %302 = vst.msk [vmem:[%s285 + $0x10] sm:$0xff] %vm301, 0.0
        %303 = vst [vmem:[%s292] sm:$0xff] 0.0
        %304 = vst [vmem:[%s292 + $0x8] sm:$0xff] 0.0
        %305 = vst.msk [vmem:[%s292 + $0x10] sm:$0xff] %vm301, 0.0
        %v306 = vld [vmem:[%s1] sm:$0xff]
        %v307 = vld [vmem:[%s1 + $0x8] sm:$0xf]
        %v308 = vld [vmem:[%s1 + $0xc] sm:$0xff]
        %v309 = vld [vmem:[%s1 + $0x14] sm:$0xf]
        %v310 = vld [vmem:[%s1 + $0x18] sm:$0xff]
        %v311 = vld [vmem:[%s1 + $0x20] sm:$0xf]
        %v312 = vld [vmem:[%s1 + $0x24] sm:$0xff]
        %v313 = vld [vmem:[%s1 + $0x2c] sm:$0xf]
        %v314 = vld [vmem:[%s1 + $0x30] sm:$0xff]
        %v315 = vld [vmem:[%s1 + $0x38] sm:$0xf]
        %v316 = vld [vmem:[%s1 + $0x3c] sm:$0xff]
        %v317 = vld [vmem:[%s1 + $0x44] sm:$0xf]
        %v318 = vld [vmem:[%s1 + $0x48] sm:$0xff]
        %v319 = vld [vmem:[%s1 + $0x50] sm:$0xf]
        %v320 = vld [vmem:[%s1 + $0x54] sm:$0xff]
        %v321 = vld [vmem:[%s1 + $0x5c] sm:$0xf]
        %v322 = vld [vmem:[%s1 + $0x60] sm:$0xff]
        %v323 = vld [vmem:[%s1 + $0x68] sm:$0xf]
        %v324 = vld [vmem:[%s1 + $0x6c] sm:$0xff]
        %v325 = vld [vmem:[%s1 + $0x74] sm:$0xf]
        %v326 = vld [vmem:[%s1 + $0x78] sm:$0xff]
        %v327 = vld [vmem:[%s1 + $0x80] sm:$0xf]
        %v328 = vld [vmem:[%s1 + $0x84] sm:$0xff]
        %v329 = vld [vmem:[%s1 + $0x8c] sm:$0xf]
        %v330 = vld [vmem:[%s1 + $0x90] sm:$0xff]
        %v331 = vld [vmem:[%s1 + $0x98] sm:$0xf]
        %v332 = vld [vmem:[%s1 + $0x9c] sm:$0xff]
        %v333 = vld [vmem:[%s1 + $0xa4] sm:$0xf]
        %v334 = vld [vmem:[%s1 + $0xa8] sm:$0xff]
        %v335 = vld [vmem:[%s1 + $0xb0] sm:$0xf]
        %v336 = vld [vmem:[%s1 + $0xb4] sm:$0xff]
        %v337 = vld [vmem:[%s1 + $0xbc] sm:$0xf]
        %s338 = sld [smem:[#allocation2]]
        %v339 = vstv %s338
        %v372 = vunpack.c.l.b16 %v306
        %v373 = vunpack.c.h.b16 %v306
        %v374 = vunpack.c.l.b16 %v307
        %v375 = vunpack.c.l.b16 %v308
        %v376 = vunpack.c.h.b16 %v308
        %v377 = vunpack.c.l.b16 %v309
        %v378 = vunpack.c.l.b16 %v310
        %v379 = vunpack.c.h.b16 %v310
        %v380 = vunpack.c.l.b16 %v311
        %v381 = vunpack.c.l.b16 %v312
        %v382 = vunpack.c.h.b16 %v312
        %v383 = vunpack.c.l.b16 %v313
        %v384 = vunpack.c.l.b16 %v314
        %v385 = vunpack.c.h.b16 %v314
        %v386 = vunpack.c.l.b16 %v315
        %v387 = vunpack.c.l.b16 %v316
        %v388 = vunpack.c.h.b16 %v316
        %v389 = vunpack.c.l.b16 %v317
        %v390 = vunpack.c.l.b16 %v318
        %v391 = vunpack.c.h.b16 %v318
        %v392 = vunpack.c.l.b16 %v319
        %v393 = vunpack.c.l.b16 %v320
        %v394 = vunpack.c.h.b16 %v320
        %v395 = vunpack.c.l.b16 %v321
        %v396 = vunpack.c.l.b16 %v322
        %v397 = vunpack.c.h.b16 %v322
        %v398 = vunpack.c.l.b16 %v323
        %v399 = vunpack.c.l.b16 %v324
        %v400 = vunpack.c.h.b16 %v324
        %v401 = vunpack.c.l.b16 %v325
        %v402 = vunpack.c.l.b16 %v326
        %v403 = vunpack.c.h.b16 %v326
        %v404 = vunpack.c.l.b16 %v327
        %v405 = vunpack.c.l.b16 %v328
        %v406 = vunpack.c.h.b16 %v328
        %v407 = vunpack.c.l.b16 %v329
        %v408 = vunpack.c.l.b16 %v330
        %v409 = vunpack.c.h.b16 %v330
        %v410 = vunpack.c.l.b16 %v331
        %v411 = vunpack.c.l.b16 %v332
        %v412 = vunpack.c.h.b16 %v332
        %v413 = vunpack.c.l.b16 %v333
        %v414 = vunpack.c.l.b16 %v334
        %v415 = vunpack.c.h.b16 %v334
        %v416 = vunpack.c.l.b16 %v335
        %v417 = vunpack.c.l.b16 %v336
        %v418 = vunpack.c.h.b16 %v336
        %v419 = vunpack.c.l.b16 %v337
        %v420 = vpack.c.b16 %v375, %v372
        %v421 = vpack.c.b16 %v376, %v373
        %v422 = vpack.c.b16 %v377, %v374
        %v423 = vpack.c.b16 %v381, %v378
        %v424 = vpack.c.b16 %v382, %v379
        %v425 = vpack.c.b16 %v383, %v380
        %v426 = vpack.c.b16 %v387, %v384
        %v427 = vpack.c.b16 %v388, %v385
        %v428 = vpack.c.b16 %v389, %v386
        %v429 = vpack.c.b16 %v393, %v390
        %v430 = vpack.c.b16 %v394, %v391
        %v431 = vpack.c.b16 %v395, %v392
        %v432 = vpack.c.b16 %v399, %v396
        %v433 = vpack.c.b16 %v400, %v397
        %v434 = vpack.c.b16 %v401, %v398
        %v435 = vpack.c.b16 %v405, %v402
        %v436 = vpack.c.b16 %v406, %v403
        %v437 = vpack.c.b16 %v407, %v404
        %v438 = vpack.c.b16 %v411, %v408
        %v439 = vpack.c.b16 %v412, %v409
        %v440 = vpack.c.b16 %v413, %v410
        %v441 = vpack.c.b16 %v417, %v414
        %v442 = vpack.c.b16 %v418, %v415
        %v443 = vpack.c.b16 %v419, %v416
        %468 = vmatprep.subr.bf16.mxu0 %v421
        %469 = vmatpush1.bf16.msra.mxu0 %v420
        %470 = vmatprep.subr.bf16.mxu0 %v424
        %471 = vmatpush1.bf16.msra.mxu0 %v423
        %472 = vmatprep.subr.bf16.mxu0 %v427
        %473 = vmatpush1.bf16.msra.mxu0 %v426
        %474 = vmatprep.subr.bf16.mxu0 %v430
        %475 = vmatpush1.bf16.msra.mxu0 %v429
        %476 = vmatprep.subr.bf16.mxu0 %v433
        %477 = vmatpush1.bf16.msra.mxu0 %v432
        %478 = vmatprep.subr.bf16.mxu0 %v436
        %479 = vmatpush1.bf16.msra.mxu0 %v435
        %480 = vmatprep.subr.bf16.mxu0 %v439
        %481 = vmatpush1.bf16.msra.mxu0 %v438
        %482 = vmatprep.subr.bf16.mxu0 %v442
        %483 = vmatpush1.bf16.msra.mxu0 %v441
        %484 = vmatprep.subr.bf16.mxu0 0
        %485 = vmatpush1.bf16.msra.mxu0 0
        %486 = vmatprep.subr.bf16.mxu0 0
        %487 = vmatpush1.bf16.msra.mxu0 0
        %488 = vmatprep.subr.bf16.mxu0 0
        %489 = vmatpush1.bf16.msra.mxu0 0
        %490 = vmatprep.subr.bf16.mxu0 0
        %491 = vmatpush1.bf16.msra.mxu0 0
        %492 = vmatprep.subr.bf16.mxu0 0
        %493 = vmatpush1.bf16.msra.mxu0 0
        %494 = vmatprep.subr.bf16.mxu0 0
        %495 = vmatpush1.bf16.msra.mxu0 0
        %496 = vmatprep.subr.bf16.mxu0 0
        %497 = vmatpush1.bf16.msra.mxu0 0
        %498 = vmatprep.subr.bf16.mxu0 0
        %499 = vmatpush1.bf16.msra.mxu0 0
        %500 = vmatprep.mubr.bf16.mxu0 0
        %501 = vmatmul.mubr.bf16.gmra.mrb[0].mxu0 %v298
        %v502 = vpop.f32.mrb[0].mxu0
        %v503 = vadd.f32 %v339, %v502
        %v504 = vpop.f32.mrb[0].mxu0
        %v505 = vadd.f32 %v339, %v504
        %v506 = vpop.f32.mrb[0].mxu0
        %v507 = vpop.f32.mrb[0].mxu0
        %508 = vdwg.mxu0
        %509 = vmatprep.subr.bf16.mxu0 0
        %510 = vmatpush1.bf16.msra.mxu0 %v422
        %511 = vmatprep.subr.bf16.mxu0 0
        %512 = vmatpush1.bf16.msra.mxu0 %v425
        %513 = vmatprep.subr.bf16.mxu0 0
        %514 = vmatpush1.bf16.msra.mxu0 %v428
        %515 = vmatprep.subr.bf16.mxu0 0
        %516 = vmatpush1.bf16.msra.mxu0 %v431
        %517 = vmatprep.subr.bf16.mxu0 0
        %518 = vmatpush1.bf16.msra.mxu0 %v434
        %519 = vmatprep.subr.bf16.mxu0 0
        %520 = vmatpush1.bf16.msra.mxu0 %v437
        %521 = vmatprep.subr.bf16.mxu0 0
        %522 = vmatpush1.bf16.msra.mxu0 %v440
        %523 = vmatprep.subr.bf16.mxu0 0
        %524 = vmatpush1.bf16.msra.mxu0 %v443
        %525 = vmatprep.subr.bf16.mxu0 0
        %526 = vmatpush1.bf16.msra.mxu0 0
        %527 = vmatprep.subr.bf16.mxu0 0
        %528 = vmatpush1.bf16.msra.mxu0 0
        %529 = vmatprep.subr.bf16.mxu0 0
        %530 = vmatpush1.bf16.msra.mxu0 0
        %531 = vmatprep.subr.bf16.mxu0 0
        %532 = vmatpush1.bf16.msra.mxu0 0
        %533 = vmatprep.subr.bf16.mxu0 0
        %534 = vmatpush1.bf16.msra.mxu0 0
        %535 = vmatprep.subr.bf16.mxu0 0
        %536 = vmatpush1.bf16.msra.mxu0 0
        %537 = vmatprep.subr.bf16.mxu0 0
        %538 = vmatpush1.bf16.msra.mxu0 0
        %539 = vmatprep.subr.bf16.mxu0 0
        %540 = vmatpush1.bf16.msra.mxu0 0
        %541 = vmatprep.mubr.bf16.mxu0 0
        %542 = vmatmul.mubr.bf16.gmra.mrb[0].mxu0 %v298
        %v543 = vpop.f32.mrb[0].mxu0
        %v544 = vadd.f32 %v339, %v543
        %v545 = vpop.f32.mrb[0].mxu0
        %v546 = vpop.f32.mrb[0].mxu0
        %v547 = vpop.f32.mrb[0].mxu0
        %548 = vdwg.mxu0
        %v549 = vmax.f32 %v503, 0.0
        %v550 = vmax.f32 %v505, 0.0
        %v551 = vmax.f32 %v544, 0.0
        %v552 = vld [vmem:[%s285] sm:$0xff]
        %v553 = vld [vmem:[%s285 + $0x8] sm:$0xff]
        %v554 = vld [vmem:[%s285 + $0x10] sm:$0xff]
        %s555 = sld [smem:[#allocation5]]
        %v556 = vstv %s555
        %v557 = vmul.f32 %v556, %v549
        %v558 = vmul.f32 %v556, %v550
        %v559 = vmul.f32 %v556, %v551
        %v560 = vadd.f32 %v552, %v557
        %v561 = vadd.f32 %v553, %v558
        %v562 = vadd.f32 %v554, %v559
        %563 = vst [vmem:[%s285] sm:$0xff] %v560
        %564 = vst [vmem:[%s285 + $0x8] sm:$0xff] %v561
        %565 = vst.msk [vmem:[%s285 + $0x10] sm:$0xff] %vm301, %v562
        %v566 = vld [vmem:[%s292] sm:$0xff]
        %v567 = vld [vmem:[%s292 + $0x8] sm:$0xff]
        %v568 = vld [vmem:[%s292 + $0x10] sm:$0xff]
        %s569 = sld [smem:[#allocation5 + $0x80]]
        %v570 = vstv %s569
        %v571 = vmul.f32 %v570, %v549
        %v572 = vmul.f32 %v570, %v550
        %v573 = vmul.f32 %v570, %v551
        %v574 = vadd.f32 %v566, %v571
        %v575 = vadd.f32 %v567, %v572
        %v576 = vadd.f32 %v568, %v573
        %577 = vst [vmem:[%s292] sm:$0xff] %v574
        %578 = vst [vmem:[%s292 + $0x8] sm:$0xff] %v575
        %579 = vst.msk [vmem:[%s292 + $0x10] sm:$0xff] %vm301, %v576
        %s580 = scalar_lea.vmem %s1, 192
        %v581 = vld [vmem:[%s580] sm:$0xff]
        %v582 = vld [vmem:[%s580 + $0x8] sm:$0xf]
        %v583 = vld [vmem:[%s580 + $0xc] sm:$0xff]
        %v584 = vld [vmem:[%s580 + $0x14] sm:$0xf]
        %v585 = vld [vmem:[%s580 + $0x18] sm:$0xff]
        %v586 = vld [vmem:[%s580 + $0x20] sm:$0xf]
        %v587 = vld [vmem:[%s580 + $0x24] sm:$0xff]
        %v588 = vld [vmem:[%s580 + $0x2c] sm:$0xf]
        %v589 = vld [vmem:[%s580 + $0x30] sm:$0xff]
        %v590 = vld [vmem:[%s580 + $0x38] sm:$0xf]
        %v591 = vld [vmem:[%s580 + $0x3c] sm:$0xff]
        %v592 = vld [vmem:[%s580 + $0x44] sm:$0xf]
        %v593 = vld [vmem:[%s580 + $0x48] sm:$0xff]
        %v594 = vld [vmem:[%s580 + $0x50] sm:$0xf]
        %v595 = vld [vmem:[%s580 + $0x54] sm:$0xff]
        %v596 = vld [vmem:[%s580 + $0x5c] sm:$0xf]
        %v597 = vld [vmem:[%s580 + $0x60] sm:$0xff]
        %v598 = vld [vmem:[%s580 + $0x68] sm:$0xf]
        %v599 = vld [vmem:[%s580 + $0x6c] sm:$0xff]
        %v600 = vld [vmem:[%s580 + $0x74] sm:$0xf]
        %v601 = vld [vmem:[%s580 + $0x78] sm:$0xff]
        %v602 = vld [vmem:[%s580 + $0x80] sm:$0xf]
        %v603 = vld [vmem:[%s580 + $0x84] sm:$0xff]
        %v604 = vld [vmem:[%s580 + $0x8c] sm:$0xf]
        %v605 = vld [vmem:[%s580 + $0x90] sm:$0xff]
        %v606 = vld [vmem:[%s580 + $0x98] sm:$0xf]
        %v607 = vld [vmem:[%s580 + $0x9c] sm:$0xff]
        %v608 = vld [vmem:[%s580 + $0xa4] sm:$0xf]
        %v609 = vld [vmem:[%s580 + $0xa8] sm:$0xff]
        %v610 = vld [vmem:[%s580 + $0xb0] sm:$0xf]
        %v611 = vld [vmem:[%s580 + $0xb4] sm:$0xff]
        %v612 = vld [vmem:[%s580 + $0xbc] sm:$0xf]
        %s613 = sld [smem:[#allocation2 + $0x1]]
        %v614 = vstv %s613
        %v647 = vunpack.c.l.b16 %v581
        %v648 = vunpack.c.h.b16 %v581
        %v649 = vunpack.c.l.b16 %v582
        %v650 = vunpack.c.l.b16 %v583
        %v651 = vunpack.c.h.b16 %v583
        %v652 = vunpack.c.l.b16 %v584
        %v653 = vunpack.c.l.b16 %v585
        %v654 = vunpack.c.h.b16 %v585
        %v655 = vunpack.c.l.b16 %v586
        %v656 = vunpack.c.l.b16 %v587
        %v657 = vunpack.c.h.b16 %v587
        %v658 = vunpack.c.l.b16 %v588
        %v659 = vunpack.c.l.b16 %v589
        %v660 = vunpack.c.h.b16 %v589
        %v661 = vunpack.c.l.b16 %v590
        %v662 = vunpack.c.l.b16 %v591
        %v663 = vunpack.c.h.b16 %v591
        %v664 = vunpack.c.l.b16 %v592
        %v665 = vunpack.c.l.b16 %v593
        %v666 = vunpack.c.h.b16 %v593
        %v667 = vunpack.c.l.b16 %v594
        %v668 = vunpack.c.l.b16 %v595
        %v669 = vunpack.c.h.b16 %v595
        %v670 = vunpack.c.l.b16 %v596
        %v671 = vunpack.c.l.b16 %v597
        %v672 = vunpack.c.h.b16 %v597
        %v673 = vunpack.c.l.b16 %v598
        %v674 = vunpack.c.l.b16 %v599
        %v675 = vunpack.c.h.b16 %v599
        %v676 = vunpack.c.l.b16 %v600
        %v677 = vunpack.c.l.b16 %v601
        %v678 = vunpack.c.h.b16 %v601
        %v679 = vunpack.c.l.b16 %v602
        %v680 = vunpack.c.l.b16 %v603
        %v681 = vunpack.c.h.b16 %v603
        %v682 = vunpack.c.l.b16 %v604
        %v683 = vunpack.c.l.b16 %v605
        %v684 = vunpack.c.h.b16 %v605
        %v685 = vunpack.c.l.b16 %v606
        %v686 = vunpack.c.l.b16 %v607
        %v687 = vunpack.c.h.b16 %v607
        %v688 = vunpack.c.l.b16 %v608
        %v689 = vunpack.c.l.b16 %v609
        %v690 = vunpack.c.h.b16 %v609
        %v691 = vunpack.c.l.b16 %v610
        %v692 = vunpack.c.l.b16 %v611
        %v693 = vunpack.c.h.b16 %v611
        %v694 = vunpack.c.l.b16 %v612
        %v695 = vpack.c.b16 %v650, %v647
        %v696 = vpack.c.b16 %v651, %v648
        %v697 = vpack.c.b16 %v652, %v649
        %v698 = vpack.c.b16 %v656, %v653
        %v699 = vpack.c.b16 %v657, %v654
        %v700 = vpack.c.b16 %v658, %v655
        %v701 = vpack.c.b16 %v662, %v659
        %v702 = vpack.c.b16 %v663, %v660
        %v703 = vpack.c.b16 %v664, %v661
        %v704 = vpack.c.b16 %v668, %v665
        %v705 = vpack.c.b16 %v669, %v666
        %v706 = vpack.c.b16 %v670, %v667
        %v707 = vpack.c.b16 %v674, %v671
        %v708 = vpack.c.b16 %v675, %v672
        %v709 = vpack.c.b16 %v676, %v673
        %v710 = vpack.c.b16 %v680, %v677
        %v711 = vpack.c.b16 %v681, %v678
        %v712 = vpack.c.b16 %v682, %v679
        %v713 = vpack.c.b16 %v686, %v683
        %v714 = vpack.c.b16 %v687, %v684
        %v715 = vpack.c.b16 %v688, %v685
        %v716 = vpack.c.b16 %v692, %v689
        %v717 = vpack.c.b16 %v693, %v690
        %v718 = vpack.c.b16 %v694, %v691
        %743 = vmatprep.subr.bf16.mxu0 %v696
        %744 = vmatpush1.bf16.msra.mxu0 %v695
        %745 = vmatprep.subr.bf16.mxu0 %v699
        %746 = vmatpush1.bf16.msra.mxu0 %v698
        %747 = vmatprep.subr.bf16.mxu0 %v702
        %748 = vmatpush1.bf16.msra.mxu0 %v701
        %749 = vmatprep.subr.bf16.mxu0 %v705
        %750 = vmatpush1.bf16.msra.mxu0 %v704
        %751 = vmatprep.subr.bf16.mxu0 %v708
        %752 = vmatpush1.bf16.msra.mxu0 %v707
        %753 = vmatprep.subr.bf16.mxu0 %v711
        %754 = vmatpush1.bf16.msra.mxu0 %v710
        %755 = vmatprep.subr.bf16.mxu0 %v714
        %756 = vmatpush1.bf16.msra.mxu0 %v713
        %757 = vmatprep.subr.bf16.mxu0 %v717
        %758 = vmatpush1.bf16.msra.mxu0 %v716
        %759 = vmatprep.subr.bf16.mxu0 0
        %760 = vmatpush1.bf16.msra.mxu0 0
        %761 = vmatprep.subr.bf16.mxu0 0
        %762 = vmatpush1.bf16.msra.mxu0 0
        %763 = vmatprep.subr.bf16.mxu0 0
        %764 = vmatpush1.bf16.msra.mxu0 0
        %765 = vmatprep.subr.bf16.mxu0 0
        %766 = vmatpush1.bf16.msra.mxu0 0
        %767 = vmatprep.subr.bf16.mxu0 0
        %768 = vmatpush1.bf16.msra.mxu0 0
        %769 = vmatprep.subr.bf16.mxu0 0
        %770 = vmatpush1.bf16.msra.mxu0 0
        %771 = vmatprep.subr.bf16.mxu0 0
        %772 = vmatpush1.bf16.msra.mxu0 0
        %773 = vmatprep.subr.bf16.mxu0 0
        %774 = vmatpush1.bf16.msra.mxu0 0
        %775 = vmatprep.mubr.bf16.mxu0 0
        %776 = vmatmul.mubr.bf16.gmra.mrb[0].mxu0 %v298
        %v777 = vpop.f32.mrb[0].mxu0
        %v778 = vadd.f32 %v614, %v777
        %v779 = vpop.f32.mrb[0].mxu0
        %v780 = vadd.f32 %v614, %v779
        %v781 = vpop.f32.mrb[0].mxu0
        %v782 = vpop.f32.mrb[0].mxu0
        %783 = vdwg.mxu0
        %784 = vmatprep.subr.bf16.mxu0 0
        %785 = vmatpush1.bf16.msra.mxu0 %v697
        %786 = vmatprep.subr.bf16.mxu0 0
        %787 = vmatpush1.bf16.msra.mxu0 %v700
        %788 = vmatprep.subr.bf16.mxu0 0
        %789 = vmatpush1.bf16.msra.mxu0 %v703
        %790 = vmatprep.subr.bf16.mxu0 0
        %791 = vmatpush1.bf16.msra.mxu0 %v706
        %792 = vmatprep.subr.bf16.mxu0 0
        %793 = vmatpush1.bf16.msra.mxu0 %v709
        %794 = vmatprep.subr.bf16.mxu0 0
        %795 = vmatpush1.bf16.msra.mxu0 %v712
        %796 = vmatprep.subr.bf16.mxu0 0
        %797 = vmatpush1.bf16.msra.mxu0 %v715
        %798 = vmatprep.subr.bf16.mxu0 0
        %799 = vmatpush1.bf16.msra.mxu0 %v718
        %800 = vmatprep.subr.bf16.mxu0 0
        %801 = vmatpush1.bf16.msra.mxu0 0
        %802 = vmatprep.subr.bf16.mxu0 0
        %803 = vmatpush1.bf16.msra.mxu0 0
        %804 = vmatprep.subr.bf16.mxu0 0
        %805 = vmatpush1.bf16.msra.mxu0 0
        %806 = vmatprep.subr.bf16.mxu0 0
        %807 = vmatpush1.bf16.msra.mxu0 0
        %808 = vmatprep.subr.bf16.mxu0 0
        %809 = vmatpush1.bf16.msra.mxu0 0
        %810 = vmatprep.subr.bf16.mxu0 0
        %811 = vmatpush1.bf16.msra.mxu0 0
        %812 = vmatprep.subr.bf16.mxu0 0
        %813 = vmatpush1.bf16.msra.mxu0 0
        %814 = vmatprep.subr.bf16.mxu0 0
        %815 = vmatpush1.bf16.msra.mxu0 0
        %816 = vmatprep.mubr.bf16.mxu0 0
        %817 = vmatmul.mubr.bf16.gmra.mrb[0].mxu0 %v298
        %v818 = vpop.f32.mrb[0].mxu0
        %v819 = vadd.f32 %v614, %v818
        %v820 = vpop.f32.mrb[0].mxu0
        %v821 = vpop.f32.mrb[0].mxu0
        %v822 = vpop.f32.mrb[0].mxu0
        %823 = vdwg.mxu0
        %v824 = vmax.f32 %v778, 0.0
        %v825 = vmax.f32 %v780, 0.0
        %v826 = vmax.f32 %v819, 0.0
        %v827 = vld [vmem:[%s285] sm:$0xff]
        %v828 = vld [vmem:[%s285 + $0x8] sm:$0xff]
        %v829 = vld [vmem:[%s285 + $0x10] sm:$0xff]
        %s830 = sld [smem:[#allocation5 + $0x1]]
        %v831 = vstv %s830
        %v832 = vmul.f32 %v831, %v824
        %v833 = vmul.f32 %v831, %v825
        %v834 = vmul.f32 %v831, %v826
        %v835 = vadd.f32 %v827, %v832
        %v836 = vadd.f32 %v828, %v833
        %v837 = vadd.f32 %v829, %v834
        %838 = vst [vmem:[%s285] sm:$0xff] %v835
        %839 = vst [vmem:[%s285 + $0x8] sm:$0xff] %v836
        %840 = vst.msk [vmem:[%s285 + $0x10] sm:$0xff] %vm301, %v837
        %v841 = vld [vmem:[%s292] sm:$0xff]
        %v842 = vld [vmem:[%s292 + $0x8] sm:$0xff]
        %v843 = vld [vmem:[%s292 + $0x10] sm:$0xff]
        %s844 = sld [smem:[#allocation5 + $0x81]]
        %v845 = vstv %s844
        %v846 = vmul.f32 %v845, %v824
        %v847 = vmul.f32 %v845, %v825
        %v848 = vmul.f32 %v845, %v826
        %v849 = vadd.f32 %v841, %v846
        %v850 = vadd.f32 %v842, %v847
        %v851 = vadd.f32 %v843, %v848
        %852 = vst [vmem:[%s292] sm:$0xff] %v849
        %853 = vst [vmem:[%s292 + $0x8] sm:$0xff] %v850
        %854 = vst.msk [vmem:[%s292 + $0x10] sm:$0xff] %vm301, %v851
        %s855 = scalar_lea.vmem %s1, 384
        %v856 = vld [vmem:[%s855] sm:$0xff]
        %v857 = vld [vmem:[%s855 + $0x8] sm:$0xf]
        %v858 = vld [vmem:[%s855 + $0xc] sm:$0xff]
        %v859 = vld [vmem:[%s855 + $0x14] sm:$0xf]
        %v860 = vld [vmem:[%s855 + $0x18] sm:$0xff]
        %v861 = vld [vmem:[%s855 + $0x20] sm:$0xf]
        %v862 = vld [vmem:[%s855 + $0x24] sm:$0xff]
        %v863 = vld [vmem:[%s855 + $0x2c] sm:$0xf]
        %v864 = vld [vmem:[%s855 + $0x30] sm:$0xff]
        %v865 = vld [vmem:[%s855 + $0x38] sm:$0xf]
        %v866 = vld [vmem:[%s855 + $0x3c] sm:$0xff]
        %v867 = vld [vmem:[%s855 + $0x44] sm:$0xf]
        %v868 = vld [vmem:[%s855 + $0x48] sm:$0xff]
        %v869 = vld [vmem:[%s855 + $0x50] sm:$0xf]
        %v870 = vld [vmem:[%s855 + $0x54] sm:$0xff]
        %v871 = vld [vmem:[%s855 + $0x5c] sm:$0xf]
        %v872 = vld [vmem:[%s855 + $0x60] sm:$0xff]
        %v873 = vld [vmem:[%s855 + $0x68] sm:$0xf]
        %v874 = vld [vmem:[%s855 + $0x6c] sm:$0xff]
        %v875 = vld [vmem:[%s855 + $0x74] sm:$0xf]
        %v876 = vld [vmem:[%s855 + $0x78] sm:$0xff]
        %v877 = vld [vmem:[%s855 + $0x80] sm:$0xf]
        %v878 = vld [vmem:[%s855 + $0x84] sm:$0xff]
        %v879 = vld [vmem:[%s855 + $0x8c] sm:$0xf]
        %v880 = vld [vmem:[%s855 + $0x90] sm:$0xff]
        %v881 = vld [vmem:[%s855 + $0x98] sm:$0xf]
        %v882 = vld [vmem:[%s855 + $0x9c] sm:$0xff]
        %v883 = vld [vmem:[%s855 + $0xa4] sm:$0xf]
        %v884 = vld [vmem:[%s855 + $0xa8] sm:$0xff]
        %v885 = vld [vmem:[%s855 + $0xb0] sm:$0xf]
        %v886 = vld [vmem:[%s855 + $0xb4] sm:$0xff]
        %v887 = vld [vmem:[%s855 + $0xbc] sm:$0xf]
        %s888 = sld [smem:[#allocation2 + $0x2]]
        %v889 = vstv %s888
        %v922 = vunpack.c.l.b16 %v856
        %v923 = vunpack.c.h.b16 %v856
        %v924 = vunpack.c.l.b16 %v857
        %v925 = vunpack.c.l.b16 %v858
        %v926 = vunpack.c.h.b16 %v858
        %v927 = vunpack.c.l.b16 %v859
        %v928 = vunpack.c.l.b16 %v860
        %v929 = vunpack.c.h.b16 %v860
        %v930 = vunpack.c.l.b16 %v861
        %v931 = vunpack.c.l.b16 %v862
        %v932 = vunpack.c.h.b16 %v862
        %v933 = vunpack.c.l.b16 %v863
        %v934 = vunpack.c.l.b16 %v864
        %v935 = vunpack.c.h.b16 %v864
        %v936 = vunpack.c.l.b16 %v865
        %v937 = vunpack.c.l.b16 %v866
        %v938 = vunpack.c.h.b16 %v866
        %v939 = vunpack.c.l.b16 %v867
        %v940 = vunpack.c.l.b16 %v868
        %v941 = vunpack.c.h.b16 %v868
        %v942 = vunpack.c.l.b16 %v869
        %v943 = vunpack.c.l.b16 %v870
        %v944 = vunpack.c.h.b16 %v870
        %v945 = vunpack.c.l.b16 %v871
        %v946 = vunpack.c.l.b16 %v872
        %v947 = vunpack.c.h.b16 %v872
        %v948 = vunpack.c.l.b16 %v873
        %v949 = vunpack.c.l.b16 %v874
        %v950 = vunpack.c.h.b16 %v874
        %v951 = vunpack.c.l.b16 %v875
        %v952 = vunpack.c.l.b16 %v876
        %v953 = vunpack.c.h.b16 %v876
        %v954 = vunpack.c.l.b16 %v877
        %v955 = vunpack.c.l.b16 %v878
        %v956 = vunpack.c.h.b16 %v878
        %v957 = vunpack.c.l.b16 %v879
        %v958 = vunpack.c.l.b16 %v880
        %v959 = vunpack.c.h.b16 %v880
        %v960 = vunpack.c.l.b16 %v881
        %v961 = vunpack.c.l.b16 %v882
        %v962 = vunpack.c.h.b16 %v882
        %v963 = vunpack.c.l.b16 %v883
        %v964 = vunpack.c.l.b16 %v884
        %v965 = vunpack.c.h.b16 %v884
        %v966 = vunpack.c.l.b16 %v885
        %v967 = vunpack.c.l.b16 %v886
        %v968 = vunpack.c.h.b16 %v886
        %v969 = vunpack.c.l.b16 %v887
        %v970 = vpack.c.b16 %v925, %v922
        %v971 = vpack.c.b16 %v926, %v923
        %v972 = vpack.c.b16 %v927, %v924
        %v973 = vpack.c.b16 %v931, %v928
        %v974 = vpack.c.b16 %v932, %v929
        %v975 = vpack.c.b16 %v933, %v930
        %v976 = vpack.c.b16 %v937, %v934
        %v977 = vpack.c.b16 %v938, %v935
        %v978 = vpack.c.b16 %v939, %v936
        %v979 = vpack.c.b16 %v943, %v940
        %v980 = vpack.c.b16 %v944, %v941
        %v981 = vpack.c.b16 %v945, %v942
        %v982 = vpack.c.b16 %v949, %v946
        %v983 = vpack.c.b16 %v950, %v947
        %v984 = vpack.c.b16 %v951, %v948
        %v985 = vpack.c.b16 %v955, %v952
        %v986 = vpack.c.b16 %v956, %v953
        %v987 = vpack.c.b16 %v957, %v954
        %v988 = vpack.c.b16 %v961, %v958
        %v989 = vpack.c.b16 %v962, %v959
        %v990 = vpack.c.b16 %v963, %v960
        %v991 = vpack.c.b16 %v967, %v964
        %v992 = vpack.c.b16 %v968, %v965
        %v993 = vpack.c.b16 %v969, %v966
        %1018 = vmatprep.subr.bf16.mxu0 %v971
        %1019 = vmatpush1.bf16.msra.mxu0 %v970
        %1020 = vmatprep.subr.bf16.mxu0 %v974
        %1021 = vmatpush1.bf16.msra.mxu0 %v973
        %1022 = vmatprep.subr.bf16.mxu0 %v977
        %1023 = vmatpush1.bf16.msra.mxu0 %v976
        %1024 = vmatprep.subr.bf16.mxu0 %v980
        %1025 = vmatpush1.bf16.msra.mxu0 %v979
        %1026 = vmatprep.subr.bf16.mxu0 %v983
        %1027 = vmatpush1.bf16.msra.mxu0 %v982
        %1028 = vmatprep.subr.bf16.mxu0 %v986
        %1029 = vmatpush1.bf16.msra.mxu0 %v985
        %1030 = vmatprep.subr.bf16.mxu0 %v989
        %1031 = vmatpush1.bf16.msra.mxu0 %v988
        %1032 = vmatprep.subr.bf16.mxu0 %v992
        %1033 = vmatpush1.bf16.msra.mxu0 %v991
        %1034 = vmatprep.subr.bf16.mxu0 0
        %1035 = vmatpush1.bf16.msra.mxu0 0
        %1036 = vmatprep.subr.bf16.mxu0 0
        %1037 = vmatpush1.bf16.msra.mxu0 0
        %1038 = vmatprep.subr.bf16.mxu0 0
        %1039 = vmatpush1.bf16.msra.mxu0 0
        %1040 = vmatprep.subr.bf16.mxu0 0
        %1041 = vmatpush1.bf16.msra.mxu0 0
        %1042 = vmatprep.subr.bf16.mxu0 0
        %1043 = vmatpush1.bf16.msra.mxu0 0
        %1044 = vmatprep.subr.bf16.mxu0 0
        %1045 = vmatpush1.bf16.msra.mxu0 0
        %1046 = vmatprep.subr.bf16.mxu0 0
        %1047 = vmatpush1.bf16.msra.mxu0 0
        %1048 = vmatprep.subr.bf16.mxu0 0
        %1049 = vmatpush1.bf16.msra.mxu0 0
        %1050 = vmatprep.mubr.bf16.mxu0 0
        %1051 = vmatmul.mubr.bf16.gmra.mrb[0].mxu0 %v298
        %v1052 = vpop.f32.mrb[0].mxu0
        %v1053 = vadd.f32 %v889, %v1052
        %v1054 = vpop.f32.mrb[0].mxu0
        %v1055 = vadd.f32 %v889, %v1054
        %v1056 = vpop.f32.mrb[0].mxu0
        %v1057 = vpop.f32.mrb[0].mxu0
        %1058 = vdwg.mxu0
        %1059 = vmatprep.subr.bf16.mxu0 0
        %1060 = vmatpush1.bf16.msra.mxu0 %v972
        %1061 = vmatprep.subr.bf16.mxu0 0
        %1062 = vmatpush1.bf16.msra.mxu0 %v975
        %1063 = vmatprep.subr.bf16.mxu0 0
        %1064 = vmatpush1.bf16.msra.mxu0 %v978
        %1065 = vmatprep.subr.bf16.mxu0 0
        %1066 = vmatpush1.bf16.msra.mxu0 %v981
        %1067 = vmatprep.subr.bf16.mxu0 0
        %1068 = vmatpush1.bf16.msra.mxu0 %v984
        %1069 = vmatprep.subr.bf16.mxu0 0
        %1070 = vmatpush1.bf16.msra.mxu0 %v987
        %1071 = vmatprep.subr.bf16.mxu0 0
        %1072 = vmatpush1.bf16.msra.mxu0 %v990
        %1073 = vmatprep.subr.bf16.mxu0 0
        %1074 = vmatpush1.bf16.msra.mxu0 %v993
        %1075 = vmatprep.subr.bf16.mxu0 0
        %1076 = vmatpush1.bf16.msra.mxu0 0
        %1077 = vmatprep.subr.bf16.mxu0 0
        %1078 = vmatpush1.bf16.msra.mxu0 0
        %1079 = vmatprep.subr.bf16.mxu0 0
        %1080 = vmatpush1.bf16.msra.mxu0 0
        %1081 = vmatprep.subr.bf16.mxu0 0
        %1082 = vmatpush1.bf16.msra.mxu0 0
        %1083 = vmatprep.subr.bf16.mxu0 0
        %1084 = vmatpush1.bf16.msra.mxu0 0
        %1085 = vmatprep.subr.bf16.mxu0 0
        %1086 = vmatpush1.bf16.msra.mxu0 0
        %1087 = vmatprep.subr.bf16.mxu0 0
        %1088 = vmatpush1.bf16.msra.mxu0 0
        %1089 = vmatprep.subr.bf16.mxu0 0
        %1090 = vmatpush1.bf16.msra.mxu0 0
        %1091 = vmatprep.mubr.bf16.mxu0 0
        %1092 = vmatmul.mubr.bf16.gmra.mrb[0].mxu0 %v298
        %v1093 = vpop.f32.mrb[0].mxu0
        %v1094 = vadd.f32 %v889, %v1093
        %v1095 = vpop.f32.mrb[0].mxu0
        %v1096 = vpop.f32.mrb[0].mxu0
        %v1097 = vpop.f32.mrb[0].mxu0
        %1098 = vdwg.mxu0
        %v1099 = vmax.f32 %v1053, 0.0
        %v1100 = vmax.f32 %v1055, 0.0
        %v1101 = vmax.f32 %v1094, 0.0
        %v1102 = vld [vmem:[%s285] sm:$0xff]
        %v1103 = vld [vmem:[%s285 + $0x8] sm:$0xff]
        %v1104 = vld [vmem:[%s285 + $0x10] sm:$0xff]
        %s1105 = sld [smem:[#allocation5 + $0x2]]
        %v1106 = vstv %s1105
        %v1107 = vmul.f32 %v1106, %v1099
        %v1108 = vmul.f32 %v1106, %v1100
        %v1109 = vmul.f32 %v1106, %v1101
        %v1110 = vadd.f32 %v1102, %v1107
        %v1111 = vadd.f32 %v1103, %v1108
        %v1112 = vadd.f32 %v1104, %v1109
        %1113 = vst [vmem:[%s285] sm:$0xff] %v1110
        %1114 = vst [vmem:[%s285 + $0x8] sm:$0xff] %v1111
        %1115 = vst.msk [vmem:[%s285 + $0x10] sm:$0xff] %vm301, %v1112
        %v1116 = vld [vmem:[%s292] sm:$0xff]
        %v1117 = vld [vmem:[%s292 + $0x8] sm:$0xff]
        %v1118 = vld [vmem:[%s292 + $0x10] sm:$0xff]
        %s1119 = sld [smem:[#allocation5 + $0x82]]
        %v1120 = vstv %s1119
        %v1121 = vmul.f32 %v1120, %v1099
        %v1122 = vmul.f32 %v1120, %v1100
        %v1123 = vmul.f32 %v1120, %v1101
        %v1124 = vadd.f32 %v1116, %v1121
        %v1125 = vadd.f32 %v1117, %v1122
        %v1126 = vadd.f32 %v1118, %v1123
        %1127 = vst [vmem:[%s292] sm:$0xff] %v1124
        %1128 = vst [vmem:[%s292 + $0x8] sm:$0xff] %v1125
        %1129 = vst.msk [vmem:[%s292 + $0x10] sm:$0xff] %vm301, %v1126
        %s1130 = scalar_lea.vmem %s1, 576
        %v1131 = vld [vmem:[%s1130] sm:$0xff]
        %v1132 = vld [vmem:[%s1130 + $0x8] sm:$0xf]
        %v1133 = vld [vmem:[%s1130 + $0xc] sm:$0xff]
        %v1134 = vld [vmem:[%s1130 + $0x14] sm:$0xf]
        %v1135 = vld [vmem:[%s1130 + $0x18] sm:$0xff]
        %v1136 = vld [vmem:[%s1130 + $0x20] sm:$0xf]
        %v1137 = vld [vmem:[%s1130 + $0x24] sm:$0xff]
        %v1138 = vld [vmem:[%s1130 + $0x2c] sm:$0xf]
        %v1139 = vld [vmem:[%s1130 + $0x30] sm:$0xff]
        %v1140 = vld [vmem:[%s1130 + $0x38] sm:$0xf]
        %v1141 = vld [vmem:[%s1130 + $0x3c] sm:$0xff]
        %v1142 = vld [vmem:[%s1130 + $0x44] sm:$0xf]
        %v1143 = vld [vmem:[%s1130 + $0x48] sm:$0xff]
        %v1144 = vld [vmem:[%s1130 + $0x50] sm:$0xf]
        %v1145 = vld [vmem:[%s1130 + $0x54] sm:$0xff]
        %v1146 = vld [vmem:[%s1130 + $0x5c] sm:$0xf]
        %v1147 = vld [vmem:[%s1130 + $0x60] sm:$0xff]
        %v1148 = vld [vmem:[%s1130 + $0x68] sm:$0xf]
        %v1149 = vld [vmem:[%s1130 + $0x6c] sm:$0xff]
        %v1150 = vld [vmem:[%s1130 + $0x74] sm:$0xf]
        %v1151 = vld [vmem:[%s1130 + $0x78] sm:$0xff]
        %v1152 = vld [vmem:[%s1130 + $0x80] sm:$0xf]
        %v1153 = vld [vmem:[%s1130 + $0x84] sm:$0xff]
        %v1154 = vld [vmem:[%s1130 + $0x8c] sm:$0xf]
        %v1155 = vld [vmem:[%s1130 + $0x90] sm:$0xff]
        %v1156 = vld [vmem:[%s1130 + $0x98] sm:$0xf]
        %v1157 = vld [vmem:[%s1130 + $0x9c] sm:$0xff]
        %v1158 = vld [vmem:[%s1130 + $0xa4] sm:$0xf]
        %v1159 = vld [vmem:[%s1130 + $0xa8] sm:$0xff]
        %v1160 = vld [vmem:[%s1130 + $0xb0] sm:$0xf]
        %v1161 = vld [vmem:[%s1130 + $0xb4] sm:$0xff]
        %v1162 = vld [vmem:[%s1130 + $0xbc] sm:$0xf]
        %s1163 = sld [smem:[#allocation2 + $0x3]]
        %v1164 = vstv %s1163
        %v1197 = vunpack.c.l.b16 %v1131
        %v1198 = vunpack.c.h.b16 %v1131
        %v1199 = vunpack.c.l.b16 %v1132
        %v1200 = vunpack.c.l.b16 %v1133
        %v1201 = vunpack.c.h.b16 %v1133
        %v1202 = vunpack.c.l.b16 %v1134
        %v1203 = vunpack.c.l.b16 %v1135
        %v1204 = vunpack.c.h.b16 %v1135
        %v1205 = vunpack.c.l.b16 %v1136
        %v1206 = vunpack.c.l.b16 %v1137
        %v1207 = vunpack.c.h.b16 %v1137
        %v1208 = vunpack.c.l.b16 %v1138
        %v1209 = vunpack.c.l.b16 %v1139
        %v1210 = vunpack.c.h.b16 %v1139
        %v1211 = vunpack.c.l.b16 %v1140
        %v1212 = vunpack.c.l.b16 %v1141
        %v1213 = vunpack.c.h.b16 %v1141
        %v1214 = vunpack.c.l.b16 %v1142
        %v1215 = vunpack.c.l.b16 %v1143
        %v1216 = vunpack.c.h.b16 %v1143
        %v1217 = vunpack.c.l.b16 %v1144
        %v1218 = vunpack.c.l.b16 %v1145
        %v1219 = vunpack.c.h.b16 %v1145
        %v1220 = vunpack.c.l.b16 %v1146
        %v1221 = vunpack.c.l.b16 %v1147
        %v1222 = vunpack.c.h.b16 %v1147
        %v1223 = vunpack.c.l.b16 %v1148
        %v1224 = vunpack.c.l.b16 %v1149
        %v1225 = vunpack.c.h.b16 %v1149
        %v1226 = vunpack.c.l.b16 %v1150
        %v1227 = vunpack.c.l.b16 %v1151
        %v1228 = vunpack.c.h.b16 %v1151
        %v1229 = vunpack.c.l.b16 %v1152
        %v1230 = vunpack.c.l.b16 %v1153
        %v1231 = vunpack.c.h.b16 %v1153
        %v1232 = vunpack.c.l.b16 %v1154
        %v1233 = vunpack.c.l.b16 %v1155
        %v1234 = vunpack.c.h.b16 %v1155
        %v1235 = vunpack.c.l.b16 %v1156
        %v1236 = vunpack.c.l.b16 %v1157
        %v1237 = vunpack.c.h.b16 %v1157
        %v1238 = vunpack.c.l.b16 %v1158
        %v1239 = vunpack.c.l.b16 %v1159
        %v1240 = vunpack.c.h.b16 %v1159
        %v1241 = vunpack.c.l.b16 %v1160
        %v1242 = vunpack.c.l.b16 %v1161
        %v1243 = vunpack.c.h.b16 %v1161
        %v1244 = vunpack.c.l.b16 %v1162
        %v1245 = vpack.c.b16 %v1200, %v1197
        %v1246 = vpack.c.b16 %v1201, %v1198
        %v1247 = vpack.c.b16 %v1202, %v1199
        %v1248 = vpack.c.b16 %v1206, %v1203
        %v1249 = vpack.c.b16 %v1207, %v1204
        %v1250 = vpack.c.b16 %v1208, %v1205
        %v1251 = vpack.c.b16 %v1212, %v1209
        %v1252 = vpack.c.b16 %v1213, %v1210
        %v1253 = vpack.c.b16 %v1214, %v1211
        %v1254 = vpack.c.b16 %v1218, %v1215
        %v1255 = vpack.c.b16 %v1219, %v1216
        %v1256 = vpack.c.b16 %v1220, %v1217
        %v1257 = vpack.c.b16 %v1224, %v1221
        %v1258 = vpack.c.b16 %v1225, %v1222
        %v1259 = vpack.c.b16 %v1226, %v1223
        %v1260 = vpack.c.b16 %v1230, %v1227
        %v1261 = vpack.c.b16 %v1231, %v1228
        %v1262 = vpack.c.b16 %v1232, %v1229
        %v1263 = vpack.c.b16 %v1236, %v1233
        %v1264 = vpack.c.b16 %v1237, %v1234
        %v1265 = vpack.c.b16 %v1238, %v1235
        %v1266 = vpack.c.b16 %v1242, %v1239
        %v1267 = vpack.c.b16 %v1243, %v1240
        %v1268 = vpack.c.b16 %v1244, %v1241
        %1293 = vmatprep.subr.bf16.mxu0 %v1246
        %1294 = vmatpush1.bf16.msra.mxu0 %v1245
        %1295 = vmatprep.subr.bf16.mxu0 %v1249
        %1296 = vmatpush1.bf16.msra.mxu0 %v1248
        %1297 = vmatprep.subr.bf16.mxu0 %v1252
        %1298 = vmatpush1.bf16.msra.mxu0 %v1251
        %1299 = vmatprep.subr.bf16.mxu0 %v1255
        %1300 = vmatpush1.bf16.msra.mxu0 %v1254
        %1301 = vmatprep.subr.bf16.mxu0 %v1258
        %1302 = vmatpush1.bf16.msra.mxu0 %v1257
        %1303 = vmatprep.subr.bf16.mxu0 %v1261
        %1304 = vmatpush1.bf16.msra.mxu0 %v1260
        %1305 = vmatprep.subr.bf16.mxu0 %v1264
        %1306 = vmatpush1.bf16.msra.mxu0 %v1263
        %1307 = vmatprep.subr.bf16.mxu0 %v1267
        %1308 = vmatpush1.bf16.msra.mxu0 %v1266
        %1309 = vmatprep.subr.bf16.mxu0 0
        %1310 = vmatpush1.bf16.msra.mxu0 0
        %1311 = vmatprep.subr.bf16.mxu0 0
        %1312 = vmatpush1.bf16.msra.mxu0 0
        %1313 = vmatprep.subr.bf16.mxu0 0
        %1314 = vmatpush1.bf16.msra.mxu0 0
        %1315 = vmatprep.subr.bf16.mxu0 0
        %1316 = vmatpush1.bf16.msra.mxu0 0
        %1317 = vmatprep.subr.bf16.mxu0 0
        %1318 = vmatpush1.bf16.msra.mxu0 0
        %1319 = vmatprep.subr.bf16.mxu0 0
        %1320 = vmatpush1.bf16.msra.mxu0 0
        %1321 = vmatprep.subr.bf16.mxu0 0
        %1322 = vmatpush1.bf16.msra.mxu0 0
        %1323 = vmatprep.subr.bf16.mxu0 0
        %1324 = vmatpush1.bf16.msra.mxu0 0
        %1325 = vmatprep.mubr.bf16.mxu0 0
        %1326 = vmatmul.mubr.bf16.gmra.mrb[0].mxu0 %v298
        %v1327 = vpop.f32.mrb[0].mxu0
        %v1328 = vadd.f32 %v1164, %v1327
        %v1329 = vpop.f32.mrb[0].mxu0
        %v1330 = vadd.f32 %v1164, %v1329
        %v1331 = vpop.f32.mrb[0].mxu0
        %v1332 = vpop.f32.mrb[0].mxu0
        %1333 = vdwg.mxu0
        %1334 = vmatprep.subr.bf16.mxu0 0
        %1335 = vmatpush1.bf16.msra.mxu0 %v1247
        %1336 = vmatprep.subr.bf16.mxu0 0
        %1337 = vmatpush1.bf16.msra.mxu0 %v1250
        %1338 = vmatprep.subr.bf16.mxu0 0
        %1339 = vmatpush1.bf16.msra.mxu0 %v1253
        %1340 = vmatprep.subr.bf16.mxu0 0
        %1341 = vmatpush1.bf16.msra.mxu0 %v1256
        %1342 = vmatprep.subr.bf16.mxu0 0
        %1343 = vmatpush1.bf16.msra.mxu0 %v1259
        %1344 = vmatprep.subr.bf16.mxu0 0
        %1345 = vmatpush1.bf16.msra.mxu0 %v1262
        %1346 = vmatprep.subr.bf16.mxu0 0
        %1347 = vmatpush1.bf16.msra.mxu0 %v1265
        %1348 = vmatprep.subr.bf16.mxu0 0
        %1349 = vmatpush1.bf16.msra.mxu0 %v1268
        %1350 = vmatprep.subr.bf16.mxu0 0
        %1351 = vmatpush1.bf16.msra.mxu0 0
        %1352 = vmatprep.subr.bf16.mxu0 0
        %1353 = vmatpush1.bf16.msra.mxu0 0
        %1354 = vmatprep.subr.bf16.mxu0 0
        %1355 = vmatpush1.bf16.msra.mxu0 0
        %1356 = vmatprep.subr.bf16.mxu0 0
        %1357 = vmatpush1.bf16.msra.mxu0 0
        %1358 = vmatprep.subr.bf16.mxu0 0
        %1359 = vmatpush1.bf16.msra.mxu0 0
        %1360 = vmatprep.subr.bf16.mxu0 0
        %1361 = vmatpush1.bf16.msra.mxu0 0
        %1362 = vmatprep.subr.bf16.mxu0 0
        %1363 = vmatpush1.bf16.msra.mxu0 0
        %1364 = vmatprep.subr.bf16.mxu0 0
        %1365 = vmatpush1.bf16.msra.mxu0 0
        %1366 = vmatprep.mubr.bf16.mxu0 0
        %1367 = vmatmul.mubr.bf16.gmra.mrb[0].mxu0 %v298
        %v1368 = vpop.f32.mrb[0].mxu0
        %v1369 = vadd.f32 %v1164, %v1368
        %v1370 = vpop.f32.mrb[0].mxu0
        %v1371 = vpop.f32.mrb[0].mxu0
        %v1372 = vpop.f32.mrb[0].mxu0
        %1373 = vdwg.mxu0
        %v1374 = vmax.f32 %v1328, 0.0
        %v1375 = vmax.f32 %v1330, 0.0
        %v1376 = vmax.f32 %v1369, 0.0
        %v1377 = vld [vmem:[%s285] sm:$0xff]
        %v1378 = vld [vmem:[%s285 + $0x8] sm:$0xff]
        %v1379 = vld [vmem:[%s285 + $0x10] sm:$0xff]
        %s1380 = sld [smem:[#allocation5 + $0x3]]
        %v1381 = vstv %s1380
        %v1382 = vmul.f32 %v1381, %v1374
        %v1383 = vmul.f32 %v1381, %v1375
        %v1384 = vmul.f32 %v1381, %v1376
        %v1385 = vadd.f32 %v1377, %v1382
        %v1386 = vadd.f32 %v1378, %v1383
        %v1387 = vadd.f32 %v1379, %v1384
        %1388 = vst [vmem:[%s285] sm:$0xff] %v1385
        %1389 = vst [vmem:[%s285 + $0x8] sm:$0xff] %v1386
        %1390 = vst.msk [vmem:[%s285 + $0x10] sm:$0xff] %vm301, %v1387
        %v1391 = vld [vmem:[%s292] sm:$0xff]
        %v1392 = vld [vmem:[%s292 + $0x8] sm:$0xff]
        %v1393 = vld [vmem:[%s292 + $0x10] sm:$0xff]
        %s1394 = sld [smem:[#allocation5 + $0x83]]
        %v1395 = vstv %s1394
        %v1396 = vmul.f32 %v1395, %v1374
        %v1397 = vmul.f32 %v1395, %v1375
        %v1398 = vmul.f32 %v1395, %v1376
        %v1399 = vadd.f32 %v1391, %v1396
        %v1400 = vadd.f32 %v1392, %v1397
        %v1401 = vadd.f32 %v1393, %v1398
        %1402 = vst [vmem:[%s292] sm:$0xff] %v1399
        %1403 = vst [vmem:[%s292 + $0x8] sm:$0xff] %v1400
        %1404 = vst.msk [vmem:[%s292 + $0x10] sm:$0xff] %vm301, %v1401
        %s1405 = scalar_lea.vmem %s1, 768
        %v1406 = vld [vmem:[%s1405] sm:$0xff]
        %v1407 = vld [vmem:[%s1405 + $0x8] sm:$0xf]
        %v1408 = vld [vmem:[%s1405 + $0xc] sm:$0xff]
        %v1409 = vld [vmem:[%s1405 + $0x14] sm:$0xf]
        %v1410 = vld [vmem:[%s1405 + $0x18] sm:$0xff]
        %v1411 = vld [vmem:[%s1405 + $0x20] sm:$0xf]
        %v1412 = vld [vmem:[%s1405 + $0x24] sm:$0xff]
        %v1413 = vld [vmem:[%s1405 + $0x2c] sm:$0xf]
        %v1414 = vld [vmem:[%s1405 + $0x30] sm:$0xff]
        %v1415 = vld [vmem:[%s1405 + $0x38] sm:$0xf]
        %v1416 = vld [vmem:[%s1405 + $0x3c] sm:$0xff]
        %v1417 = vld [vmem:[%s1405 + $0x44] sm:$0xf]
        %v1418 = vld [vmem:[%s1405 + $0x48] sm:$0xff]
        %v1419 = vld [vmem:[%s1405 + $0x50] sm:$0xf]
        %v1420 = vld [vmem:[%s1405 + $0x54] sm:$0xff]
        %v1421 = vld [vmem:[%s1405 + $0x5c] sm:$0xf]
        %v1422 = vld [vmem:[%s1405 + $0x60] sm:$0xff]
        %v1423 = vld [vmem:[%s1405 + $0x68] sm:$0xf]
        %v1424 = vld [vmem:[%s1405 + $0x6c] sm:$0xff]
        %v1425 = vld [vmem:[%s1405 + $0x74] sm:$0xf]
        %v1426 = vld [vmem:[%s1405 + $0x78] sm:$0xff]
        %v1427 = vld [vmem:[%s1405 + $0x80] sm:$0xf]
        %v1428 = vld [vmem:[%s1405 + $0x84] sm:$0xff]
        %v1429 = vld [vmem:[%s1405 + $0x8c] sm:$0xf]
        %v1430 = vld [vmem:[%s1405 + $0x90] sm:$0xff]
        %v1431 = vld [vmem:[%s1405 + $0x98] sm:$0xf]
        %v1432 = vld [vmem:[%s1405 + $0x9c] sm:$0xff]
        %v1433 = vld [vmem:[%s1405 + $0xa4] sm:$0xf]
        %v1434 = vld [vmem:[%s1405 + $0xa8] sm:$0xff]
        %v1435 = vld [vmem:[%s1405 + $0xb0] sm:$0xf]
        %v1436 = vld [vmem:[%s1405 + $0xb4] sm:$0xff]
        %v1437 = vld [vmem:[%s1405 + $0xbc] sm:$0xf]
        %s1438 = sld [smem:[#allocation2 + $0x4]]
        %v1439 = vstv %s1438
        %v1472 = vunpack.c.l.b16 %v1406
        %v1473 = vunpack.c.h.b16 %v1406
        %v1474 = vunpack.c.l.b16 %v1407
        %v1475 = vunpack.c.l.b16 %v1408
        %v1476 = vunpack.c.h.b16 %v1408
        %v1477 = vunpack.c.l.b16 %v1409
        %v1478 = vunpack.c.l.b16 %v1410
        %v1479 = vunpack.c.h.b16 %v1410
        %v1480 = vunpack.c.l.b16 %v1411
        %v1481 = vunpack.c.l.b16 %v1412
        %v1482 = vunpack.c.h.b16 %v1412
        %v1483 = vunpack.c.l.b16 %v1413
        %v1484 = vunpack.c.l.b16 %v1414
        %v1485 = vunpack.c.h.b16 %v1414
        %v1486 = vunpack.c.l.b16 %v1415
        %v1487 = vunpack.c.l.b16 %v1416
        %v1488 = vunpack.c.h.b16 %v1416
        %v1489 = vunpack.c.l.b16 %v1417
        %v1490 = vunpack.c.l.b16 %v1418
        %v1491 = vunpack.c.h.b16 %v1418
        %v1492 = vunpack.c.l.b16 %v1419
        %v1493 = vunpack.c.l.b16 %v1420
        %v1494 = vunpack.c.h.b16 %v1420
        %v1495 = vunpack.c.l.b16 %v1421
        %v1496 = vunpack.c.l.b16 %v1422
        %v1497 = vunpack.c.h.b16 %v1422
        %v1498 = vunpack.c.l.b16 %v1423
        %v1499 = vunpack.c.l.b16 %v1424
        %v1500 = vunpack.c.h.b16 %v1424
        %v1501 = vunpack.c.l.b16 %v1425
        %v1502 = vunpack.c.l.b16 %v1426
        %v1503 = vunpack.c.h.b16 %v1426
        %v1504 = vunpack.c.l.b16 %v1427
        %v1505 = vunpack.c.l.b16 %v1428
        %v1506 = vunpack.c.h.b16 %v1428
        %v1507 = vunpack.c.l.b16 %v1429
        %v1508 = vunpack.c.l.b16 %v1430
        %v1509 = vunpack.c.h.b16 %v1430
        %v1510 = vunpack.c.l.b16 %v1431
        %v1511 = vunpack.c.l.b16 %v1432
        %v1512 = vunpack.c.h.b16 %v1432
        %v1513 = vunpack.c.l.b16 %v1433
        %v1514 = vunpack.c.l.b16 %v1434
        %v1515 = vunpack.c.h.b16 %v1434
        %v1516 = vunpack.c.l.b16 %v1435
        %v1517 = vunpack.c.l.b16 %v1436
        %v1518 = vunpack.c.h.b16 %v1436
        %v1519 = vunpack.c.l.b16 %v1437
        %v1520 = vpack.c.b16 %v1475, %v1472
        %v1521 = vpack.c.b16 %v1476, %v1473
        %v1522 = vpack.c.b16 %v1477, %v1474
        %v1523 = vpack.c.b16 %v1481, %v1478
        %v1524 = vpack.c.b16 %v1482, %v1479
        %v1525 = vpack.c.b16 %v1483, %v1480
        %v1526 = vpack.c.b16 %v1487, %v1484
        %v1527 = vpack.c.b16 %v1488, %v1485
        %v1528 = vpack.c.b16 %v1489, %v1486
        %v1529 = vpack.c.b16 %v1493, %v1490
        %v1530 = vpack.c.b16 %v1494, %v1491
        %v1531 = vpack.c.b16 %v1495, %v1492
        %v1532 = vpack.c.b16 %v1499, %v1496
        %v1533 = vpack.c.b16 %v1500, %v1497
        %v1534 = vpack.c.b16 %v1501, %v1498
        %v1535 = vpack.c.b16 %v1505, %v1502
        %v1536 = vpack.c.b16 %v1506, %v1503
        %v1537 = vpack.c.b16 %v1507, %v1504
        %v1538 = vpack.c.b16 %v1511, %v1508
        %v1539 = vpack.c.b16 %v1512, %v1509
        %v1540 = vpack.c.b16 %v1513, %v1510
        %v1541 = vpack.c.b16 %v1517, %v1514
        %v1542 = vpack.c.b16 %v1518, %v1515
        %v1543 = vpack.c.b16 %v1519, %v1516
        %1568 = vmatprep.subr.bf16.mxu0 %v1521
        %1569 = vmatpush1.bf16.msra.mxu0 %v1520
        %1570 = vmatprep.subr.bf16.mxu0 %v1524
        %1571 = vmatpush1.bf16.msra.mxu0 %v1523
        %1572 = vmatprep.subr.bf16.mxu0 %v1527
        %1573 = vmatpush1.bf16.msra.mxu0 %v1526
        %1574 = vmatprep.subr.bf16.mxu0 %v1530
        %1575 = vmatpush1.bf16.msra.mxu0 %v1529
        %1576 = vmatprep.subr.bf16.mxu0 %v1533
        %1577 = vmatpush1.bf16.msra.mxu0 %v1532
        %1578 = vmatprep.subr.bf16.mxu0 %v1536
        %1579 = vmatpush1.bf16.msra.mxu0 %v1535
        %1580 = vmatprep.subr.bf16.mxu0 %v1539
        %1581 = vmatpush1.bf16.msra.mxu0 %v1538
        %1582 = vmatprep.subr.bf16.mxu0 %v1542
        %1583 = vmatpush1.bf16.msra.mxu0 %v1541
        %1584 = vmatprep.subr.bf16.mxu0 0
        %1585 = vmatpush1.bf16.msra.mxu0 0
        %1586 = vmatprep.subr.bf16.mxu0 0
        %1587 = vmatpush1.bf16.msra.mxu0 0
        %1588 = vmatprep.subr.bf16.mxu0 0
        %1589 = vmatpush1.bf16.msra.mxu0 0
        %1590 = vmatprep.subr.bf16.mxu0 0
        %1591 = vmatpush1.bf16.msra.mxu0 0
        %1592 = vmatprep.subr.bf16.mxu0 0
        %1593 = vmatpush1.bf16.msra.mxu0 0
        %1594 = vmatprep.subr.bf16.mxu0 0
        %1595 = vmatpush1.bf16.msra.mxu0 0
        %1596 = vmatprep.subr.bf16.mxu0 0
        %1597 = vmatpush1.bf16.msra.mxu0 0
        %1598 = vmatprep.subr.bf16.mxu0 0
        %1599 = vmatpush1.bf16.msra.mxu0 0
        %1600 = vmatprep.mubr.bf16.mxu0 0
        %1601 = vmatmul.mubr.bf16.gmra.mrb[0].mxu0 %v298
        %v1602 = vpop.f32.mrb[0].mxu0
        %v1603 = vadd.f32 %v1439, %v1602
        %v1604 = vpop.f32.mrb[0].mxu0
        %v1605 = vadd.f32 %v1439, %v1604
        %v1606 = vpop.f32.mrb[0].mxu0
        %v1607 = vpop.f32.mrb[0].mxu0
        %1608 = vdwg.mxu0
        %1609 = vmatprep.subr.bf16.mxu0 0
        %1610 = vmatpush1.bf16.msra.mxu0 %v1522
        %1611 = vmatprep.subr.bf16.mxu0 0
        %1612 = vmatpush1.bf16.msra.mxu0 %v1525
        %1613 = vmatprep.subr.bf16.mxu0 0
        %1614 = vmatpush1.bf16.msra.mxu0 %v1528
        %1615 = vmatprep.subr.bf16.mxu0 0
        %1616 = vmatpush1.bf16.msra.mxu0 %v1531
        %1617 = vmatprep.subr.bf16.mxu0 0
        %1618 = vmatpush1.bf16.msra.mxu0 %v1534
        %1619 = vmatprep.subr.bf16.mxu0 0
        %1620 = vmatpush1.bf16.msra.mxu0 %v1537
        %1621 = vmatprep.subr.bf16.mxu0 0
        %1622 = vmatpush1.bf16.msra.mxu0 %v1540
        %1623 = vmatprep.subr.bf16.mxu0 0
        %1624 = vmatpush1.bf16.msra.mxu0 %v1543
        %1625 = vmatprep.subr.bf16.mxu0 0
        %1626 = vmatpush1.bf16.msra.mxu0 0
        %1627 = vmatprep.subr.bf16.mxu0 0
        %1628 = vmatpush1.bf16.msra.mxu0 0
        %1629 = vmatprep.subr.bf16.mxu0 0
        %1630 = vmatpush1.bf16.msra.mxu0 0
        %1631 = vmatprep.subr.bf16.mxu0 0
        %1632 = vmatpush1.bf16.msra.mxu0 0
        %1633 = vmatprep.subr.bf16.mxu0 0
        %1634 = vmatpush1.bf16.msra.mxu0 0
        %1635 = vmatprep.subr.bf16.mxu0 0
        %1636 = vmatpush1.bf16.msra.mxu0 0
        %1637 = vmatprep.subr.bf16.mxu0 0
        %1638 = vmatpush1.bf16.msra.mxu0 0
        %1639 = vmatprep.subr.bf16.mxu0 0
        %1640 = vmatpush1.bf16.msra.mxu0 0
        %1641 = vmatprep.mubr.bf16.mxu0 0
        %1642 = vmatmul.mubr.bf16.gmra.mrb[0].mxu0 %v298
        %v1643 = vpop.f32.mrb[0].mxu0
        %v1644 = vadd.f32 %v1439, %v1643
        %v1645 = vpop.f32.mrb[0].mxu0
        %v1646 = vpop.f32.mrb[0].mxu0
        %v1647 = vpop.f32.mrb[0].mxu0
        %1648 = vdwg.mxu0
        %v1649 = vmax.f32 %v1603, 0.0
        %v1650 = vmax.f32 %v1605, 0.0
        %v1651 = vmax.f32 %v1644, 0.0
        %v1652 = vld [vmem:[%s285] sm:$0xff]
        %v1653 = vld [vmem:[%s285 + $0x8] sm:$0xff]
        %v1654 = vld [vmem:[%s285 + $0x10] sm:$0xff]
        %s1655 = sld [smem:[#allocation5 + $0x4]]
        %v1656 = vstv %s1655
        %v1657 = vmul.f32 %v1656, %v1649
        %v1658 = vmul.f32 %v1656, %v1650
        %v1659 = vmul.f32 %v1656, %v1651
        %v1660 = vadd.f32 %v1652, %v1657
        %v1661 = vadd.f32 %v1653, %v1658
        %v1662 = vadd.f32 %v1654, %v1659
        %1663 = vst [vmem:[%s285] sm:$0xff] %v1660
        %1664 = vst [vmem:[%s285 + $0x8] sm:$0xff] %v1661
        %1665 = vst.msk [vmem:[%s285 + $0x10] sm:$0xff] %vm301, %v1662
        %v1666 = vld [vmem:[%s292] sm:$0xff]
        %v1667 = vld [vmem:[%s292 + $0x8] sm:$0xff]
        %v1668 = vld [vmem:[%s292 + $0x10] sm:$0xff]
        %s1669 = sld [smem:[#allocation5 + $0x84]]
        %v1670 = vstv %s1669
        %v1671 = vmul.f32 %v1670, %v1649
        %v1672 = vmul.f32 %v1670, %v1650
        %v1673 = vmul.f32 %v1670, %v1651
        %v1674 = vadd.f32 %v1666, %v1671
        %v1675 = vadd.f32 %v1667, %v1672
        %v1676 = vadd.f32 %v1668, %v1673
        %1677 = vst [vmem:[%s292] sm:$0xff] %v1674
        %1678 = vst [vmem:[%s292 + $0x8] sm:$0xff] %v1675
        %1679 = vst.msk [vmem:[%s292 + $0x10] sm:$0xff] %vm301, %v1676
        %s1680 = scalar_lea.vmem %s1, 960
        %v1681 = vld [vmem:[%s1680] sm:$0xff]
        %v1682 = vld [vmem:[%s1680 + $0x8] sm:$0xf]
        %v1683 = vld [vmem:[%s1680 + $0xc] sm:$0xff]
        %v1684 = vld [vmem:[%s1680 + $0x14] sm:$0xf]
        %v1685 = vld [vmem:[%s1680 + $0x18] sm:$0xff]
        %v1686 = vld [vmem:[%s1680 + $0x20] sm:$0xf]
        %v1687 = vld [vmem:[%s1680 + $0x24] sm:$0xff]
        %v1688 = vld [vmem:[%s1680 + $0x2c] sm:$0xf]
        %v1689 = vld [vmem:[%s1680 + $0x30] sm:$0xff]
        %v1690 = vld [vmem:[%s1680 + $0x38] sm:$0xf]
        %v1691 = vld [vmem:[%s1680 + $0x3c] sm:$0xff]
        %v1692 = vld [vmem:[%s1680 + $0x44] sm:$0xf]
        %v1693 = vld [vmem:[%s1680 + $0x48] sm:$0xff]
        %v1694 = vld [vmem:[%s1680 + $0x50] sm:$0xf]
        %v1695 = vld [vmem:[%s1680 + $0x54] sm:$0xff]
        %v1696 = vld [vmem:[%s1680 + $0x5c] sm:$0xf]
        %v1697 = vld [vmem:[%s1680 + $0x60] sm:$0xff]
        %v1698 = vld [vmem:[%s1680 + $0x68] sm:$0xf]
        %v1699 = vld [vmem:[%s1680 + $0x6c] sm:$0xff]
        %v1700 = vld [vmem:[%s1680 + $0x74] sm:$0xf]
        %v1701 = vld [vmem:[%s1680 + $0x78] sm:$0xff]
        %v1702 = vld [vmem:[%s1680 + $0x80] sm:$0xf]
        %v1703 = vld [vmem:[%s1680 + $0x84] sm:$0xff]
        %v1704 = vld [vmem:[%s1680 + $0x8c] sm:$0xf]
        %v1705 = vld [vmem:[%s1680 + $0x90] sm:$0xff]
        %v1706 = vld [vmem:[%s1680 + $0x98] sm:$0xf]
        %v1707 = vld [vmem:[%s1680 + $0x9c] sm:$0xff]
        %v1708 = vld [vmem:[%s1680 + $0xa4] sm:$0xf]
        %v1709 = vld [vmem:[%s1680 + $0xa8] sm:$0xff]
        %v1710 = vld [vmem:[%s1680 + $0xb0] sm:$0xf]
        %v1711 = vld [vmem:[%s1680 + $0xb4] sm:$0xff]
        %v1712 = vld [vmem:[%s1680 + $0xbc] sm:$0xf]
        %s1713 = sld [smem:[#allocation2 + $0x5]]
        %v1714 = vstv %s1713
        %v1747 = vunpack.c.l.b16 %v1681
        %v1748 = vunpack.c.h.b16 %v1681
        %v1749 = vunpack.c.l.b16 %v1682
        %v1750 = vunpack.c.l.b16 %v1683
        %v1751 = vunpack.c.h.b16 %v1683
        %v1752 = vunpack.c.l.b16 %v1684
        %v1753 = vunpack.c.l.b16 %v1685
        %v1754 = vunpack.c.h.b16 %v1685
        %v1755 = vunpack.c.l.b16 %v1686
        %v1756 = vunpack.c.l.b16 %v1687
        %v1757 = vunpack.c.h.b16 %v1687
        %v1758 = vunpack.c.l.b16 %v1688
        %v1759 = vunpack.c.l.b16 %v1689
        %v1760 = vunpack.c.h.b16 %v1689
        %v1761 = vunpack.c.l.b16 %v1690
        %v1762 = vunpack.c.l.b16 %v1691
        %v1763 = vunpack.c.h.b16 %v1691
        %v1764 = vunpack.c.l.b16 %v1692
        %v1765 = vunpack.c.l.b16 %v1693
        %v1766 = vunpack.c.h.b16 %v1693
        %v1767 = vunpack.c.l.b16 %v1694
        %v1768 = vunpack.c.l.b16 %v1695
        %v1769 = vunpack.c.h.b16 %v1695
        %v1770 = vunpack.c.l.b16 %v1696
        %v1771 = vunpack.c.l.b16 %v1697
        %v1772 = vunpack.c.h.b16 %v1697
        %v1773 = vunpack.c.l.b16 %v1698
        %v1774 = vunpack.c.l.b16 %v1699
        %v1775 = vunpack.c.h.b16 %v1699
        %v1776 = vunpack.c.l.b16 %v1700
        %v1777 = vunpack.c.l.b16 %v1701
        %v1778 = vunpack.c.h.b16 %v1701
        %v1779 = vunpack.c.l.b16 %v1702
        %v1780 = vunpack.c.l.b16 %v1703
        %v1781 = vunpack.c.h.b16 %v1703
        %v1782 = vunpack.c.l.b16 %v1704
        %v1783 = vunpack.c.l.b16 %v1705
        %v1784 = vunpack.c.h.b16 %v1705
        %v1785 = vunpack.c.l.b16 %v1706
        %v1786 = vunpack.c.l.b16 %v1707
        %v1787 = vunpack.c.h.b16 %v1707
        %v1788 = vunpack.c.l.b16 %v1708
        %v1789 = vunpack.c.l.b16 %v1709
        %v1790 = vunpack.c.h.b16 %v1709
        %v1791 = vunpack.c.l.b16 %v1710
        %v1792 = vunpack.c.l.b16 %v1711
        %v1793 = vunpack.c.h.b16 %v1711
        %v1794 = vunpack.c.l.b16 %v1712
        %v1795 = vpack.c.b16 %v1750, %v1747
        %v1796 = vpack.c.b16 %v1751, %v1748
        %v1797 = vpack.c.b16 %v1752, %v1749
        %v1798 = vpack.c.b16 %v1756, %v1753
        %v1799 = vpack.c.b16 %v1757, %v1754
        %v1800 = vpack.c.b16 %v1758, %v1755
        %v1801 = vpack.c.b16 %v1762, %v1759
        %v1802 = vpack.c.b16 %v1763, %v1760
        %v1803 = vpack.c.b16 %v1764, %v1761
        %v1804 = vpack.c.b16 %v1768, %v1765
        %v1805 = vpack.c.b16 %v1769, %v1766
        %v1806 = vpack.c.b16 %v1770, %v1767
        %v1807 = vpack.c.b16 %v1774, %v1771
        %v1808 = vpack.c.b16 %v1775, %v1772
        %v1809 = vpack.c.b16 %v1776, %v1773
        %v1810 = vpack.c.b16 %v1780, %v1777
        %v1811 = vpack.c.b16 %v1781, %v1778
        %v1812 = vpack.c.b16 %v1782, %v1779
        %v1813 = vpack.c.b16 %v1786, %v1783
        %v1814 = vpack.c.b16 %v1787, %v1784
        %v1815 = vpack.c.b16 %v1788, %v1785
        %v1816 = vpack.c.b16 %v1792, %v1789
        %v1817 = vpack.c.b16 %v1793, %v1790
        %v1818 = vpack.c.b16 %v1794, %v1791
        %1843 = vmatprep.subr.bf16.mxu0 %v1796
        %1844 = vmatpush1.bf16.msra.mxu0 %v1795
        %1845 = vmatprep.subr.bf16.mxu0 %v1799
        %1846 = vmatpush1.bf16.msra.mxu0 %v1798
        %1847 = vmatprep.subr.bf16.mxu0 %v1802
        %1848 = vmatpush1.bf16.msra.mxu0 %v1801
        %1849 = vmatprep.subr.bf16.mxu0 %v1805
        %1850 = vmatpush1.bf16.msra.mxu0 %v1804
        %1851 = vmatprep.subr.bf16.mxu0 %v1808
        %1852 = vmatpush1.bf16.msra.mxu0 %v1807
        %1853 = vmatprep.subr.bf16.mxu0 %v1811
        %1854 = vmatpush1.bf16.msra.mxu0 %v1810
        %1855 = vmatprep.subr.bf16.mxu0 %v1814
        %1856 = vmatpush1.bf16.msra.mxu0 %v1813
        %1857 = vmatprep.subr.bf16.mxu0 %v1817
        %1858 = vmatpush1.bf16.msra.mxu0 %v1816
        %1859 = vmatprep.subr.bf16.mxu0 0
        %1860 = vmatpush1.bf16.msra.mxu0 0
        %1861 = vmatprep.subr.bf16.mxu0 0
        %1862 = vmatpush1.bf16.msra.mxu0 0
        %1863 = vmatprep.subr.bf16.mxu0 0
        %1864 = vmatpush1.bf16.msra.mxu0 0
        %1865 = vmatprep.subr.bf16.mxu0 0
        %1866 = vmatpush1.bf16.msra.mxu0 0
        %1867 = vmatprep.subr.bf16.mxu0 0
        %1868 = vmatpush1.bf16.msra.mxu0 0
        %1869 = vmatprep.subr.bf16.mxu0 0
        %1870 = vmatpush1.bf16.msra.mxu0 0
        %1871 = vmatprep.subr.bf16.mxu0 0
        %1872 = vmatpush1.bf16.msra.mxu0 0
        %1873 = vmatprep.subr.bf16.mxu0 0
        %1874 = vmatpush1.bf16.msra.mxu0 0
        %1875 = vmatprep.mubr.bf16.mxu0 0
        %1876 = vmatmul.mubr.bf16.gmra.mrb[0].mxu0 %v298
        %v1877 = vpop.f32.mrb[0].mxu0
        %v1878 = vadd.f32 %v1714, %v1877
        %v1879 = vpop.f32.mrb[0].mxu0
        %v1880 = vadd.f32 %v1714, %v1879
        %v1881 = vpop.f32.mrb[0].mxu0
        %v1882 = vpop.f32.mrb[0].mxu0
        %1883 = vdwg.mxu0
        %1884 = vmatprep.subr.bf16.mxu0 0
        %1885 = vmatpush1.bf16.msra.mxu0 %v1797
        %1886 = vmatprep.subr.bf16.mxu0 0
        %1887 = vmatpush1.bf16.msra.mxu0 %v1800
        %1888 = vmatprep.subr.bf16.mxu0 0
        %1889 = vmatpush1.bf16.msra.mxu0 %v1803
        %1890 = vmatprep.subr.bf16.mxu0 0
        %1891 = vmatpush1.bf16.msra.mxu0 %v1806
        %1892 = vmatprep.subr.bf16.mxu0 0
        %1893 = vmatpush1.bf16.msra.mxu0 %v1809
        %1894 = vmatprep.subr.bf16.mxu0 0
        %1895 = vmatpush1.bf16.msra.mxu0 %v1812
        %1896 = vmatprep.subr.bf16.mxu0 0
        %1897 = vmatpush1.bf16.msra.mxu0 %v1815
        %1898 = vmatprep.subr.bf16.mxu0 0
        %1899 = vmatpush1.bf16.msra.mxu0 %v1818
        %1900 = vmatprep.subr.bf16.mxu0 0
        %1901 = vmatpush1.bf16.msra.mxu0 0
        %1902 = vmatprep.subr.bf16.mxu0 0
        %1903 = vmatpush1.bf16.msra.mxu0 0
        %1904 = vmatprep.subr.bf16.mxu0 0
        %1905 = vmatpush1.bf16.msra.mxu0 0
        %1906 = vmatprep.subr.bf16.mxu0 0
        %1907 = vmatpush1.bf16.msra.mxu0 0
        %1908 = vmatprep.subr.bf16.mxu0 0
        %1909 = vmatpush1.bf16.msra.mxu0 0
        %1910 = vmatprep.subr.bf16.mxu0 0
        %1911 = vmatpush1.bf16.msra.mxu0 0
        %1912 = vmatprep.subr.bf16.mxu0 0
        %1913 = vmatpush1.bf16.msra.mxu0 0
        %1914 = vmatprep.subr.bf16.mxu0 0
        %1915 = vmatpush1.bf16.msra.mxu0 0
        %1916 = vmatprep.mubr.bf16.mxu0 0
        %1917 = vmatmul.mubr.bf16.gmra.mrb[0].mxu0 %v298
        %v1918 = vpop.f32.mrb[0].mxu0
        %v1919 = vadd.f32 %v1714, %v1918
        %v1920 = vpop.f32.mrb[0].mxu0
        %v1921 = vpop.f32.mrb[0].mxu0
        %v1922 = vpop.f32.mrb[0].mxu0
        %1923 = vdwg.mxu0
        %v1924 = vmax.f32 %v1878, 0.0
        %v1925 = vmax.f32 %v1880, 0.0
        %v1926 = vmax.f32 %v1919, 0.0
        %v1927 = vld [vmem:[%s285] sm:$0xff]
        %v1928 = vld [vmem:[%s285 + $0x8] sm:$0xff]
        %v1929 = vld [vmem:[%s285 + $0x10] sm:$0xff]
        %s1930 = sld [smem:[#allocation5 + $0x5]]
        %v1931 = vstv %s1930
        %v1932 = vmul.f32 %v1931, %v1924
        %v1933 = vmul.f32 %v1931, %v1925
        %v1934 = vmul.f32 %v1931, %v1926
        %v1935 = vadd.f32 %v1927, %v1932
        %v1936 = vadd.f32 %v1928, %v1933
        %v1937 = vadd.f32 %v1929, %v1934
        %1938 = vst [vmem:[%s285] sm:$0xff] %v1935
        %1939 = vst [vmem:[%s285 + $0x8] sm:$0xff] %v1936
        %1940 = vst.msk [vmem:[%s285 + $0x10] sm:$0xff] %vm301, %v1937
        %v1941 = vld [vmem:[%s292] sm:$0xff]
        %v1942 = vld [vmem:[%s292 + $0x8] sm:$0xff]
        %v1943 = vld [vmem:[%s292 + $0x10] sm:$0xff]
        %s1944 = sld [smem:[#allocation5 + $0x85]]
        %v1945 = vstv %s1944
        %v1946 = vmul.f32 %v1945, %v1924
        %v1947 = vmul.f32 %v1945, %v1925
        %v1948 = vmul.f32 %v1945, %v1926
        %v1949 = vadd.f32 %v1941, %v1946
        %v1950 = vadd.f32 %v1942, %v1947
        %v1951 = vadd.f32 %v1943, %v1948
        %1952 = vst [vmem:[%s292] sm:$0xff] %v1949
        %1953 = vst [vmem:[%s292 + $0x8] sm:$0xff] %v1950
        %1954 = vst.msk [vmem:[%s292 + $0x10] sm:$0xff] %vm301, %v1951
        %s1955 = scalar_lea.vmem %s1, 1152
        %v1956 = vld [vmem:[%s1955] sm:$0xff]
        %v1957 = vld [vmem:[%s1955 + $0x8] sm:$0xf]
        %v1958 = vld [vmem:[%s1955 + $0xc] sm:$0xff]
        %v1959 = vld [vmem:[%s1955 + $0x14] sm:$0xf]
        %v1960 = vld [vmem:[%s1955 + $0x18] sm:$0xff]
        %v1961 = vld [vmem:[%s1955 + $0x20] sm:$0xf]
        %v1962 = vld [vmem:[%s1955 + $0x24] sm:$0xff]
        %v1963 = vld [vmem:[%s1955 + $0x2c] sm:$0xf]
        %v1964 = vld [vmem:[%s1955 + $0x30] sm:$0xff]
        %v1965 = vld [vmem:[%s1955 + $0x38] sm:$0xf]
        %v1966 = vld [vmem:[%s1955 + $0x3c] sm:$0xff]
        %v1967 = vld [vmem:[%s1955 + $0x44] sm:$0xf]
        %v1968 = vld [vmem:[%s1955 + $0x48] sm:$0xff]
        %v1969 = vld [vmem:[%s1955 + $0x50] sm:$0xf]
        %v1970 = vld [vmem:[%s1955 + $0x54] sm:$0xff]
        %v1971 = vld [vmem:[%s1955 + $0x5c] sm:$0xf]
        %v1972 = vld [vmem:[%s1955 + $0x60] sm:$0xff]
        %v1973 = vld [vmem:[%s1955 + $0x68] sm:$0xf]
        %v1974 = vld [vmem:[%s1955 + $0x6c] sm:$0xff]
        %v1975 = vld [vmem:[%s1955 + $0x74] sm:$0xf]
        %v1976 = vld [vmem:[%s1955 + $0x78] sm:$0xff]
        %v1977 = vld [vmem:[%s1955 + $0x80] sm:$0xf]
        %v1978 = vld [vmem:[%s1955 + $0x84] sm:$0xff]
        %v1979 = vld [vmem:[%s1955 + $0x8c] sm:$0xf]
        %v1980 = vld [vmem:[%s1955 + $0x90] sm:$0xff]
        %v1981 = vld [vmem:[%s1955 + $0x98] sm:$0xf]
        %v1982 = vld [vmem:[%s1955 + $0x9c] sm:$0xff]
        %v1983 = vld [vmem:[%s1955 + $0xa4] sm:$0xf]
        %v1984 = vld [vmem:[%s1955 + $0xa8] sm:$0xff]
        %v1985 = vld [vmem:[%s1955 + $0xb0] sm:$0xf]
        %v1986 = vld [vmem:[%s1955 + $0xb4] sm:$0xff]
        %v1987 = vld [vmem:[%s1955 + $0xbc] sm:$0xf]
        %s1988 = sld [smem:[#allocation2 + $0x6]]
        %v1989 = vstv %s1988
        %v2022 = vunpack.c.l.b16 %v1956
        %v2023 = vunpack.c.h.b16 %v1956
        %v2024 = vunpack.c.l.b16 %v1957
        %v2025 = vunpack.c.l.b16 %v1958
        %v2026 = vunpack.c.h.b16 %v1958
        %v2027 = vunpack.c.l.b16 %v1959
        %v2028 = vunpack.c.l.b16 %v1960
        %v2029 = vunpack.c.h.b16 %v1960
        %v2030 = vunpack.c.l.b16 %v1961
        %v2031 = vunpack.c.l.b16 %v1962
        %v2032 = vunpack.c.h.b16 %v1962
        %v2033 = vunpack.c.l.b16 %v1963
        %v2034 = vunpack.c.l.b16 %v1964
        %v2035 = vunpack.c.h.b16 %v1964
        %v2036 = vunpack.c.l.b16 %v1965
        %v2037 = vunpack.c.l.b16 %v1966
        %v2038 = vunpack.c.h.b16 %v1966
        %v2039 = vunpack.c.l.b16 %v1967
        %v2040 = vunpack.c.l.b16 %v1968
        %v2041 = vunpack.c.h.b16 %v1968
        %v2042 = vunpack.c.l.b16 %v1969
        %v2043 = vunpack.c.l.b16 %v1970
        %v2044 = vunpack.c.h.b16 %v1970
        %v2045 = vunpack.c.l.b16 %v1971
        %v2046 = vunpack.c.l.b16 %v1972
        %v2047 = vunpack.c.h.b16 %v1972
        %v2048 = vunpack.c.l.b16 %v1973
        %v2049 = vunpack.c.l.b16 %v1974
        %v2050 = vunpack.c.h.b16 %v1974
        %v2051 = vunpack.c.l.b16 %v1975
        %v2052 = vunpack.c.l.b16 %v1976
        %v2053 = vunpack.c.h.b16 %v1976
        %v2054 = vunpack.c.l.b16 %v1977
        %v2055 = vunpack.c.l.b16 %v1978
        %v2056 = vunpack.c.h.b16 %v1978
        %v2057 = vunpack.c.l.b16 %v1979
        %v2058 = vunpack.c.l.b16 %v1980
        %v2059 = vunpack.c.h.b16 %v1980
        %v2060 = vunpack.c.l.b16 %v1981
        %v2061 = vunpack.c.l.b16 %v1982
        %v2062 = vunpack.c.h.b16 %v1982
        %v2063 = vunpack.c.l.b16 %v1983
        %v2064 = vunpack.c.l.b16 %v1984
        %v2065 = vunpack.c.h.b16 %v1984
        %v2066 = vunpack.c.l.b16 %v1985
        %v2067 = vunpack.c.l.b16 %v1986
        %v2068 = vunpack.c.h.b16 %v1986
        %v2069 = vunpack.c.l.b16 %v1987
        %v2070 = vpack.c.b16 %v2025, %v2022
        %v2071 = vpack.c.b16 %v2026, %v2023
        %v2072 = vpack.c.b16 %v2027, %v2024
        %v2073 = vpack.c.b16 %v2031, %v2028
        %v2074 = vpack.c.b16 %v2032, %v2029
        %v2075 = vpack.c.b16 %v2033, %v2030
        %v2076 = vpack.c.b16 %v2037, %v2034
        %v2077 = vpack.c.b16 %v2038, %v2035
        %v2078 = vpack.c.b16 %v2039, %v2036
        %v2079 = vpack.c.b16 %v2043, %v2040
        %v2080 = vpack.c.b16 %v2044, %v2041
        %v2081 = vpack.c.b16 %v2045, %v2042
        %v2082 = vpack.c.b16 %v2049, %v2046
        %v2083 = vpack.c.b16 %v2050, %v2047
        %v2084 = vpack.c.b16 %v2051, %v2048
        %v2085 = vpack.c.b16 %v2055, %v2052
        %v2086 = vpack.c.b16 %v2056, %v2053
        %v2087 = vpack.c.b16 %v2057, %v2054
        %v2088 = vpack.c.b16 %v2061, %v2058
        %v2089 = vpack.c.b16 %v2062, %v2059
        %v2090 = vpack.c.b16 %v2063, %v2060
        %v2091 = vpack.c.b16 %v2067, %v2064
        %v2092 = vpack.c.b16 %v2068, %v2065
        %v2093 = vpack.c.b16 %v2069, %v2066
        %2118 = vmatprep.subr.bf16.mxu0 %v2071
        %2119 = vmatpush1.bf16.msra.mxu0 %v2070
        %2120 = vmatprep.subr.bf16.mxu0 %v2074
        %2121 = vmatpush1.bf16.msra.mxu0 %v2073
        %2122 = vmatprep.subr.bf16.mxu0 %v2077
        %2123 = vmatpush1.bf16.msra.mxu0 %v2076
        %2124 = vmatprep.subr.bf16.mxu0 %v2080
        %2125 = vmatpush1.bf16.msra.mxu0 %v2079
        %2126 = vmatprep.subr.bf16.mxu0 %v2083
        %2127 = vmatpush1.bf16.msra.mxu0 %v2082
        %2128 = vmatprep.subr.bf16.mxu0 %v2086
        %2129 = vmatpush1.bf16.msra.mxu0 %v2085
        %2130 = vmatprep.subr.bf16.mxu0 %v2089
        %2131 = vmatpush1.bf16.msra.mxu0 %v2088
        %2132 = vmatprep.subr.bf16.mxu0 %v2092
        %2133 = vmatpush1.bf16.msra.mxu0 %v2091
        %2134 = vmatprep.subr.bf16.mxu0 0
        %2135 = vmatpush1.bf16.msra.mxu0 0
        %2136 = vmatprep.subr.bf16.mxu0 0
        %2137 = vmatpush1.bf16.msra.mxu0 0
        %2138 = vmatprep.subr.bf16.mxu0 0
        %2139 = vmatpush1.bf16.msra.mxu0 0
        %2140 = vmatprep.subr.bf16.mxu0 0
        %2141 = vmatpush1.bf16.msra.mxu0 0
        %2142 = vmatprep.subr.bf16.mxu0 0
        %2143 = vmatpush1.bf16.msra.mxu0 0
        %2144 = vmatprep.subr.bf16.mxu0 0
        %2145 = vmatpush1.bf16.msra.mxu0 0
        %2146 = vmatprep.subr.bf16.mxu0 0
        %2147 = vmatpush1.bf16.msra.mxu0 0
        %2148 = vmatprep.subr.bf16.mxu0 0
        %2149 = vmatpush1.bf16.msra.mxu0 0
        %2150 = vmatprep.mubr.bf16.mxu0 0
        %2151 = vmatmul.mubr.bf16.gmra.mrb[0].mxu0 %v298
        %v2152 = vpop.f32.mrb[0].mxu0
        %v2153 = vadd.f32 %v1989, %v2152
        %v2154 = vpop.f32.mrb[0].mxu0
        %v2155 = vadd.f32 %v1989, %v2154
        %v2156 = vpop.f32.mrb[0].mxu0
        %v2157 = vpop.f32.mrb[0].mxu0
        %2158 = vdwg.mxu0
        %2159 = vmatprep.subr.bf16.mxu0 0
        %2160 = vmatpush1.bf16.msra.mxu0 %v2072
        %2161 = vmatprep.subr.bf16.mxu0 0
        %2162 = vmatpush1.bf16.msra.mxu0 %v2075
        %2163 = vmatprep.subr.bf16.mxu0 0
        %2164 = vmatpush1.bf16.msra.mxu0 %v2078
        %2165 = vmatprep.subr.bf16.mxu0 0
        %2166 = vmatpush1.bf16.msra.mxu0 %v2081
        %2167 = vmatprep.subr.bf16.mxu0 0
        %2168 = vmatpush1.bf16.msra.mxu0 %v2084
        %2169 = vmatprep.subr.bf16.mxu0 0
        %2170 = vmatpush1.bf16.msra.mxu0 %v2087
        %2171 = vmatprep.subr.bf16.mxu0 0
        %2172 = vmatpush1.bf16.msra.mxu0 %v2090
        %2173 = vmatprep.subr.bf16.mxu0 0
        %2174 = vmatpush1.bf16.msra.mxu0 %v2093
        %2175 = vmatprep.subr.bf16.mxu0 0
        %2176 = vmatpush1.bf16.msra.mxu0 0
        %2177 = vmatprep.subr.bf16.mxu0 0
        %2178 = vmatpush1.bf16.msra.mxu0 0
        %2179 = vmatprep.subr.bf16.mxu0 0
        %2180 = vmatpush1.bf16.msra.mxu0 0
        %2181 = vmatprep.subr.bf16.mxu0 0
        %2182 = vmatpush1.bf16.msra.mxu0 0
        %2183 = vmatprep.subr.bf16.mxu0 0
        %2184 = vmatpush1.bf16.msra.mxu0 0
        %2185 = vmatprep.subr.bf16.mxu0 0
        %2186 = vmatpush1.bf16.msra.mxu0 0
        %2187 = vmatprep.subr.bf16.mxu0 0
        %2188 = vmatpush1.bf16.msra.mxu0 0
        %2189 = vmatprep.subr.bf16.mxu0 0
        %2190 = vmatpush1.bf16.msra.mxu0 0
        %2191 = vmatprep.mubr.bf16.mxu0 0
        %2192 = vmatmul.mubr.bf16.gmra.mrb[0].mxu0 %v298
        %v2193 = vpop.f32.mrb[0].mxu0
        %v2194 = vadd.f32 %v1989, %v2193
        %v2195 = vpop.f32.mrb[0].mxu0
        %v2196 = vpop.f32.mrb[0].mxu0
        %v2197 = vpop.f32.mrb[0].mxu0
        %2198 = vdwg.mxu0
        %v2199 = vmax.f32 %v2153, 0.0
        %v2200 = vmax.f32 %v2155, 0.0
        %v2201 = vmax.f32 %v2194, 0.0
        %v2202 = vld [vmem:[%s285] sm:$0xff]
        %v2203 = vld [vmem:[%s285 + $0x8] sm:$0xff]
        %v2204 = vld [vmem:[%s285 + $0x10] sm:$0xff]
        %s2205 = sld [smem:[#allocation5 + $0x6]]
        %v2206 = vstv %s2205
        %v2207 = vmul.f32 %v2206, %v2199
        %v2208 = vmul.f32 %v2206, %v2200
        %v2209 = vmul.f32 %v2206, %v2201
        %v2210 = vadd.f32 %v2202, %v2207
        %v2211 = vadd.f32 %v2203, %v2208
        %v2212 = vadd.f32 %v2204, %v2209
        %2213 = vst [vmem:[%s285] sm:$0xff] %v2210
        %2214 = vst [vmem:[%s285 + $0x8] sm:$0xff] %v2211
        %2215 = vst.msk [vmem:[%s285 + $0x10] sm:$0xff] %vm301, %v2212
        %v2216 = vld [vmem:[%s292] sm:$0xff]
        %v2217 = vld [vmem:[%s292 + $0x8] sm:$0xff]
        %v2218 = vld [vmem:[%s292 + $0x10] sm:$0xff]
        %s2219 = sld [smem:[#allocation5 + $0x86]]
        %v2220 = vstv %s2219
        %v2221 = vmul.f32 %v2220, %v2199
        %v2222 = vmul.f32 %v2220, %v2200
        %v2223 = vmul.f32 %v2220, %v2201
        %v2224 = vadd.f32 %v2216, %v2221
        %v2225 = vadd.f32 %v2217, %v2222
        %v2226 = vadd.f32 %v2218, %v2223
        %2227 = vst [vmem:[%s292] sm:$0xff] %v2224
        %2228 = vst [vmem:[%s292 + $0x8] sm:$0xff] %v2225
        %2229 = vst.msk [vmem:[%s292 + $0x10] sm:$0xff] %vm301, %v2226
        %s2230 = scalar_lea.vmem %s1, 1344
        %v2231 = vld [vmem:[%s2230] sm:$0xff]
        %v2232 = vld [vmem:[%s2230 + $0x8] sm:$0xf]
        %v2233 = vld [vmem:[%s2230 + $0xc] sm:$0xff]
        %v2234 = vld [vmem:[%s2230 + $0x14] sm:$0xf]
        %v2235 = vld [vmem:[%s2230 + $0x18] sm:$0xff]
        %v2236 = vld [vmem:[%s2230 + $0x20] sm:$0xf]
        %v2237 = vld [vmem:[%s2230 + $0x24] sm:$0xff]
        %v2238 = vld [vmem:[%s2230 + $0x2c] sm:$0xf]
        %v2239 = vld [vmem:[%s2230 + $0x30] sm:$0xff]
        %v2240 = vld [vmem:[%s2230 + $0x38] sm:$0xf]
        %v2241 = vld [vmem:[%s2230 + $0x3c] sm:$0xff]
        %v2242 = vld [vmem:[%s2230 + $0x44] sm:$0xf]
        %v2243 = vld [vmem:[%s2230 + $0x48] sm:$0xff]
        %v2244 = vld [vmem:[%s2230 + $0x50] sm:$0xf]
        %v2245 = vld [vmem:[%s2230 + $0x54] sm:$0xff]
        %v2246 = vld [vmem:[%s2230 + $0x5c] sm:$0xf]
        %v2247 = vld [vmem:[%s2230 + $0x60] sm:$0xff]
        %v2248 = vld [vmem:[%s2230 + $0x68] sm:$0xf]
        %v2249 = vld [vmem:[%s2230 + $0x6c] sm:$0xff]
        %v2250 = vld [vmem:[%s2230 + $0x74] sm:$0xf]
        %v2251 = vld [vmem:[%s2230 + $0x78] sm:$0xff]
        %v2252 = vld [vmem:[%s2230 + $0x80] sm:$0xf]
        %v2253 = vld [vmem:[%s2230 + $0x84] sm:$0xff]
        %v2254 = vld [vmem:[%s2230 + $0x8c] sm:$0xf]
        %v2255 = vld [vmem:[%s2230 + $0x90] sm:$0xff]
        %v2256 = vld [vmem:[%s2230 + $0x98] sm:$0xf]
        %v2257 = vld [vmem:[%s2230 + $0x9c] sm:$0xff]
        %v2258 = vld [vmem:[%s2230 + $0xa4] sm:$0xf]
        %v2259 = vld [vmem:[%s2230 + $0xa8] sm:$0xff]
        %v2260 = vld [vmem:[%s2230 + $0xb0] sm:$0xf]
        %v2261 = vld [vmem:[%s2230 + $0xb4] sm:$0xff]
        %v2262 = vld [vmem:[%s2230 + $0xbc] sm:$0xf]
        %s2263 = sld [smem:[#allocation2 + $0x7]]
        %v2264 = vstv %s2263
        %v2297 = vunpack.c.l.b16 %v2231
        %v2298 = vunpack.c.h.b16 %v2231
        %v2299 = vunpack.c.l.b16 %v2232
        %v2300 = vunpack.c.l.b16 %v2233
        %v2301 = vunpack.c.h.b16 %v2233
        %v2302 = vunpack.c.l.b16 %v2234
        %v2303 = vunpack.c.l.b16 %v2235
        %v2304 = vunpack.c.h.b16 %v2235
        %v2305 = vunpack.c.l.b16 %v2236
        %v2306 = vunpack.c.l.b16 %v2237
        %v2307 = vunpack.c.h.b16 %v2237
        %v2308 = vunpack.c.l.b16 %v2238
        %v2309 = vunpack.c.l.b16 %v2239
        %v2310 = vunpack.c.h.b16 %v2239
        %v2311 = vunpack.c.l.b16 %v2240
        %v2312 = vunpack.c.l.b16 %v2241
        %v2313 = vunpack.c.h.b16 %v2241
        %v2314 = vunpack.c.l.b16 %v2242
        %v2315 = vunpack.c.l.b16 %v2243
        %v2316 = vunpack.c.h.b16 %v2243
        %v2317 = vunpack.c.l.b16 %v2244
        %v2318 = vunpack.c.l.b16 %v2245
        %v2319 = vunpack.c.h.b16 %v2245
        %v2320 = vunpack.c.l.b16 %v2246
        %v2321 = vunpack.c.l.b16 %v2247
        %v2322 = vunpack.c.h.b16 %v2247
        %v2323 = vunpack.c.l.b16 %v2248
        %v2324 = vunpack.c.l.b16 %v2249
        %v2325 = vunpack.c.h.b16 %v2249
        %v2326 = vunpack.c.l.b16 %v2250
        %v2327 = vunpack.c.l.b16 %v2251
        %v2328 = vunpack.c.h.b16 %v2251
        %v2329 = vunpack.c.l.b16 %v2252
        %v2330 = vunpack.c.l.b16 %v2253
        %v2331 = vunpack.c.h.b16 %v2253
        %v2332 = vunpack.c.l.b16 %v2254
        %v2333 = vunpack.c.l.b16 %v2255
        %v2334 = vunpack.c.h.b16 %v2255
        %v2335 = vunpack.c.l.b16 %v2256
        %v2336 = vunpack.c.l.b16 %v2257
        %v2337 = vunpack.c.h.b16 %v2257
        %v2338 = vunpack.c.l.b16 %v2258
        %v2339 = vunpack.c.l.b16 %v2259
        %v2340 = vunpack.c.h.b16 %v2259
        %v2341 = vunpack.c.l.b16 %v2260
        %v2342 = vunpack.c.l.b16 %v2261
        %v2343 = vunpack.c.h.b16 %v2261
        %v2344 = vunpack.c.l.b16 %v2262
        %v2345 = vpack.c.b16 %v2300, %v2297
        %v2346 = vpack.c.b16 %v2301, %v2298
        %v2347 = vpack.c.b16 %v2302, %v2299
        %v2348 = vpack.c.b16 %v2306, %v2303
        %v2349 = vpack.c.b16 %v2307, %v2304
        %v2350 = vpack.c.b16 %v2308, %v2305
        %v2351 = vpack.c.b16 %v2312, %v2309
        %v2352 = vpack.c.b16 %v2313, %v2310
        %v2353 = vpack.c.b16 %v2314, %v2311
        %v2354 = vpack.c.b16 %v2318, %v2315
        %v2355 = vpack.c.b16 %v2319, %v2316
        %v2356 = vpack.c.b16 %v2320, %v2317
        %v2357 = vpack.c.b16 %v2324, %v2321
        %v2358 = vpack.c.b16 %v2325, %v2322
        %v2359 = vpack.c.b16 %v2326, %v2323
        %v2360 = vpack.c.b16 %v2330, %v2327
        %v2361 = vpack.c.b16 %v2331, %v2328
        %v2362 = vpack.c.b16 %v2332, %v2329
        %v2363 = vpack.c.b16 %v2336, %v2333
        %v2364 = vpack.c.b16 %v2337, %v2334
        %v2365 = vpack.c.b16 %v2338, %v2335
        %v2366 = vpack.c.b16 %v2342, %v2339
        %v2367 = vpack.c.b16 %v2343, %v2340
        %v2368 = vpack.c.b16 %v2344, %v2341
        %2393 = vmatprep.subr.bf16.mxu0 %v2346
        %2394 = vmatpush1.bf16.msra.mxu0 %v2345
        %2395 = vmatprep.subr.bf16.mxu0 %v2349
        %2396 = vmatpush1.bf16.msra.mxu0 %v2348
        %2397 = vmatprep.subr.bf16.mxu0 %v2352
        %2398 = vmatpush1.bf16.msra.mxu0 %v2351
        %2399 = vmatprep.subr.bf16.mxu0 %v2355
        %2400 = vmatpush1.bf16.msra.mxu0 %v2354
        %2401 = vmatprep.subr.bf16.mxu0 %v2358
        %2402 = vmatpush1.bf16.msra.mxu0 %v2357
        %2403 = vmatprep.subr.bf16.mxu0 %v2361
        %2404 = vmatpush1.bf16.msra.mxu0 %v2360
        %2405 = vmatprep.subr.bf16.mxu0 %v2364
        %2406 = vmatpush1.bf16.msra.mxu0 %v2363
        %2407 = vmatprep.subr.bf16.mxu0 %v2367
        %2408 = vmatpush1.bf16.msra.mxu0 %v2366
        %2409 = vmatprep.subr.bf16.mxu0 0
        %2410 = vmatpush1.bf16.msra.mxu0 0
        %2411 = vmatprep.subr.bf16.mxu0 0
        %2412 = vmatpush1.bf16.msra.mxu0 0
        %2413 = vmatprep.subr.bf16.mxu0 0
        %2414 = vmatpush1.bf16.msra.mxu0 0
        %2415 = vmatprep.subr.bf16.mxu0 0
        %2416 = vmatpush1.bf16.msra.mxu0 0
        %2417 = vmatprep.subr.bf16.mxu0 0
        %2418 = vmatpush1.bf16.msra.mxu0 0
        %2419 = vmatprep.subr.bf16.mxu0 0
        %2420 = vmatpush1.bf16.msra.mxu0 0
        %2421 = vmatprep.subr.bf16.mxu0 0
        %2422 = vmatpush1.bf16.msra.mxu0 0
        %2423 = vmatprep.subr.bf16.mxu0 0
        %2424 = vmatpush1.bf16.msra.mxu0 0
        %2425 = vmatprep.mubr.bf16.mxu0 0
        %2426 = vmatmul.mubr.bf16.gmra.mrb[0].mxu0 %v298
        %v2427 = vpop.f32.mrb[0].mxu0
        %v2428 = vadd.f32 %v2264, %v2427
        %v2429 = vpop.f32.mrb[0].mxu0
        %v2430 = vadd.f32 %v2264, %v2429
        %v2431 = vpop.f32.mrb[0].mxu0
        %v2432 = vpop.f32.mrb[0].mxu0
        %2433 = vdwg.mxu0
        %2434 = vmatprep.subr.bf16.mxu0 0
        %2435 = vmatpush1.bf16.msra.mxu0 %v2347
        %2436 = vmatprep.subr.bf16.mxu0 0
        %2437 = vmatpush1.bf16.msra.mxu0 %v2350
        %2438 = vmatprep.subr.bf16.mxu0 0
        %2439 = vmatpush1.bf16.msra.mxu0 %v2353
        %2440 = vmatprep.subr.bf16.mxu0 0
        %2441 = vmatpush1.bf16.msra.mxu0 %v2356
        %2442 = vmatprep.subr.bf16.mxu0 0
        %2443 = vmatpush1.bf16.msra.mxu0 %v2359
        %2444 = vmatprep.subr.bf16.mxu0 0
        %2445 = vmatpush1.bf16.msra.mxu0 %v2362
        %2446 = vmatprep.subr.bf16.mxu0 0
        %2447 = vmatpush1.bf16.msra.mxu0 %v2365
        %2448 = vmatprep.subr.bf16.mxu0 0
        %2449 = vmatpush1.bf16.msra.mxu0 %v2368
        %2450 = vmatprep.subr.bf16.mxu0 0
        %2451 = vmatpush1.bf16.msra.mxu0 0
        %2452 = vmatprep.subr.bf16.mxu0 0
        %2453 = vmatpush1.bf16.msra.mxu0 0
        %2454 = vmatprep.subr.bf16.mxu0 0
        %2455 = vmatpush1.bf16.msra.mxu0 0
        %2456 = vmatprep.subr.bf16.mxu0 0
        %2457 = vmatpush1.bf16.msra.mxu0 0
        %2458 = vmatprep.subr.bf16.mxu0 0
        %2459 = vmatpush1.bf16.msra.mxu0 0
        %2460 = vmatprep.subr.bf16.mxu0 0
        %2461 = vmatpush1.bf16.msra.mxu0 0
        %2462 = vmatprep.subr.bf16.mxu0 0
        %2463 = vmatpush1.bf16.msra.mxu0 0
        %2464 = vmatprep.subr.bf16.mxu0 0
        %2465 = vmatpush1.bf16.msra.mxu0 0
        %2466 = vmatprep.mubr.bf16.mxu0 0
        %2467 = vmatmul.mubr.bf16.gmra.mrb[0].mxu0 %v298
        %v2468 = vpop.f32.mrb[0].mxu0
        %v2469 = vadd.f32 %v2264, %v2468
        %v2470 = vpop.f32.mrb[0].mxu0
        %v2471 = vpop.f32.mrb[0].mxu0
        %v2472 = vpop.f32.mrb[0].mxu0
        %2473 = vdwg.mxu0
        %v2474 = vmax.f32 %v2428, 0.0
        %v2475 = vmax.f32 %v2430, 0.0
        %v2476 = vmax.f32 %v2469, 0.0
        %v2477 = vld [vmem:[%s285] sm:$0xff]
        %v2478 = vld [vmem:[%s285 + $0x8] sm:$0xff]
        %v2479 = vld [vmem:[%s285 + $0x10] sm:$0xff]
        %s2480 = sld [smem:[#allocation5 + $0x7]]
        %v2481 = vstv %s2480
        %v2482 = vmul.f32 %v2481, %v2474
        %v2483 = vmul.f32 %v2481, %v2475
        %v2484 = vmul.f32 %v2481, %v2476
        %v2485 = vadd.f32 %v2477, %v2482
        %v2486 = vadd.f32 %v2478, %v2483
        %v2487 = vadd.f32 %v2479, %v2484
        %2488 = vst [vmem:[%s285] sm:$0xff] %v2485
        %2489 = vst [vmem:[%s285 + $0x8] sm:$0xff] %v2486
        %2490 = vst.msk [vmem:[%s285 + $0x10] sm:$0xff] %vm301, %v2487
        %v2491 = vld [vmem:[%s292] sm:$0xff]
        %v2492 = vld [vmem:[%s292 + $0x8] sm:$0xff]
        %v2493 = vld [vmem:[%s292 + $0x10] sm:$0xff]
        %s2494 = sld [smem:[#allocation5 + $0x87]]
        %v2495 = vstv %s2494
        %v2496 = vmul.f32 %v2495, %v2474
        %v2497 = vmul.f32 %v2495, %v2475
        %v2498 = vmul.f32 %v2495, %v2476
        %v2499 = vadd.f32 %v2491, %v2496
        %v2500 = vadd.f32 %v2492, %v2497
        %v2501 = vadd.f32 %v2493, %v2498
        %2502 = vst [vmem:[%s292] sm:$0xff] %v2499
        %2503 = vst [vmem:[%s292 + $0x8] sm:$0xff] %v2500
        %2504 = vst.msk [vmem:[%s292 + $0x10] sm:$0xff] %vm301, %v2501
        %s2505 = scalar_lea.vmem %s1, 1536
        %v2506 = vld [vmem:[%s2505] sm:$0xff]
        %v2507 = vld [vmem:[%s2505 + $0x8] sm:$0xf]
        %v2508 = vld [vmem:[%s2505 + $0xc] sm:$0xff]
        %v2509 = vld [vmem:[%s2505 + $0x14] sm:$0xf]
        %v2510 = vld [vmem:[%s2505 + $0x18] sm:$0xff]
        %v2511 = vld [vmem:[%s2505 + $0x20] sm:$0xf]
        %v2512 = vld [vmem:[%s2505 + $0x24] sm:$0xff]
        %v2513 = vld [vmem:[%s2505 + $0x2c] sm:$0xf]
        %v2514 = vld [vmem:[%s2505 + $0x30] sm:$0xff]
        %v2515 = vld [vmem:[%s2505 + $0x38] sm:$0xf]
        %v2516 = vld [vmem:[%s2505 + $0x3c] sm:$0xff]
        %v2517 = vld [vmem:[%s2505 + $0x44] sm:$0xf]
        %v2518 = vld [vmem:[%s2505 + $0x48] sm:$0xff]
        %v2519 = vld [vmem:[%s2505 + $0x50] sm:$0xf]
        %v2520 = vld [vmem:[%s2505 + $0x54] sm:$0xff]
        %v2521 = vld [vmem:[%s2505 + $0x5c] sm:$0xf]
        %v2522 = vld [vmem:[%s2505 + $0x60] sm:$0xff]
        %v2523 = vld [vmem:[%s2505 + $0x68] sm:$0xf]
        %v2524 = vld [vmem:[%s2505 + $0x6c] sm:$0xff]
        %v2525 = vld [vmem:[%s2505 + $0x74] sm:$0xf]
        %v2526 = vld [vmem:[%s2505 + $0x78] sm:$0xff]
        %v2527 = vld [vmem:[%s2505 + $0x80] sm:$0xf]
        %v2528 = vld [vmem:[%s2505 + $0x84] sm:$0xff]
        %v2529 = vld [vmem:[%s2505 + $0x8c] sm:$0xf]
        %v2530 = vld [vmem:[%s2505 + $0x90] sm:$0xff]
        %v2531 = vld [vmem:[%s2505 + $0x98] sm:$0xf]
        %v2532 = vld [vmem:[%s2505 + $0x9c] sm:$0xff]
        %v2533 = vld [vmem:[%s2505 + $0xa4] sm:$0xf]
        %v2534 = vld [vmem:[%s2505 + $0xa8] sm:$0xff]
        %v2535 = vld [vmem:[%s2505 + $0xb0] sm:$0xf]
        %v2536 = vld [vmem:[%s2505 + $0xb4] sm:$0xff]
        %v2537 = vld [vmem:[%s2505 + $0xbc] sm:$0xf]
        %s2538 = sld [smem:[#allocation2 + $0x8]]
        %v2539 = vstv %s2538
        %v2572 = vunpack.c.l.b16 %v2506
        %v2573 = vunpack.c.h.b16 %v2506
        %v2574 = vunpack.c.l.b16 %v2507
        %v2575 = vunpack.c.l.b16 %v2508
        %v2576 = vunpack.c.h.b16 %v2508
        %v2577 = vunpack.c.l.b16 %v2509
        %v2578 = vunpack.c.l.b16 %v2510
        %v2579 = vunpack.c.h.b16 %v2510
        %v2580 = vunpack.c.l.b16 %v2511
        %v2581 = vunpack.c.l.b16 %v2512
        %v2582 = vunpack.c.h.b16 %v2512
        %v2583 = vunpack.c.l.b16 %v2513
        %v2584 = vunpack.c.l.b16 %v2514
        %v2585 = vunpack.c.h.b16 %v2514
        %v2586 = vunpack.c.l.b16 %v2515
        %v2587 = vunpack.c.l.b16 %v2516
        %v2588 = vunpack.c.h.b16 %v2516
        %v2589 = vunpack.c.l.b16 %v2517
        %v2590 = vunpack.c.l.b16 %v2518
        %v2591 = vunpack.c.h.b16 %v2518
        %v2592 = vunpack.c.l.b16 %v2519
        %v2593 = vunpack.c.l.b16 %v2520
        %v2594 = vunpack.c.h.b16 %v2520
        %v2595 = vunpack.c.l.b16 %v2521
        %v2596 = vunpack.c.l.b16 %v2522
        %v2597 = vunpack.c.h.b16 %v2522
        %v2598 = vunpack.c.l.b16 %v2523
        %v2599 = vunpack.c.l.b16 %v2524
        %v2600 = vunpack.c.h.b16 %v2524
        %v2601 = vunpack.c.l.b16 %v2525
        %v2602 = vunpack.c.l.b16 %v2526
        %v2603 = vunpack.c.h.b16 %v2526
        %v2604 = vunpack.c.l.b16 %v2527
        %v2605 = vunpack.c.l.b16 %v2528
        %v2606 = vunpack.c.h.b16 %v2528
        %v2607 = vunpack.c.l.b16 %v2529
        %v2608 = vunpack.c.l.b16 %v2530
        %v2609 = vunpack.c.h.b16 %v2530
        %v2610 = vunpack.c.l.b16 %v2531
        %v2611 = vunpack.c.l.b16 %v2532
        %v2612 = vunpack.c.h.b16 %v2532
        %v2613 = vunpack.c.l.b16 %v2533
        %v2614 = vunpack.c.l.b16 %v2534
        %v2615 = vunpack.c.h.b16 %v2534
        %v2616 = vunpack.c.l.b16 %v2535
        %v2617 = vunpack.c.l.b16 %v2536
        %v2618 = vunpack.c.h.b16 %v2536
        %v2619 = vunpack.c.l.b16 %v2537
        %v2620 = vpack.c.b16 %v2575, %v2572
        %v2621 = vpack.c.b16 %v2576, %v2573
        %v2622 = vpack.c.b16 %v2577, %v2574
        %v2623 = vpack.c.b16 %v2581, %v2578
        %v2624 = vpack.c.b16 %v2582, %v2579
        %v2625 = vpack.c.b16 %v2583, %v2580
        %v2626 = vpack.c.b16 %v2587, %v2584
        %v2627 = vpack.c.b16 %v2588, %v2585
        %v2628 = vpack.c.b16 %v2589, %v2586
        %v2629 = vpack.c.b16 %v2593, %v2590
        %v2630 = vpack.c.b16 %v2594, %v2591
        %v2631 = vpack.c.b16 %v2595, %v2592
        %v2632 = vpack.c.b16 %v2599, %v2596
        %v2633 = vpack.c.b16 %v2600, %v2597
        %v2634 = vpack.c.b16 %v2601, %v2598
        %v2635 = vpack.c.b16 %v2605, %v2602
        %v2636 = vpack.c.b16 %v2606, %v2603
        %v2637 = vpack.c.b16 %v2607, %v2604
        %v2638 = vpack.c.b16 %v2611, %v2608
        %v2639 = vpack.c.b16 %v2612, %v2609
        %v2640 = vpack.c.b16 %v2613, %v2610
        %v2641 = vpack.c.b16 %v2617, %v2614
        %v2642 = vpack.c.b16 %v2618, %v2615
        %v2643 = vpack.c.b16 %v2619, %v2616
        %2668 = vmatprep.subr.bf16.mxu0 %v2621
        %2669 = vmatpush1.bf16.msra.mxu0 %v2620
        %2670 = vmatprep.subr.bf16.mxu0 %v2624
        %2671 = vmatpush1.bf16.msra.mxu0 %v2623
        %2672 = vmatprep.subr.bf16.mxu0 %v2627
        %2673 = vmatpush1.bf16.msra.mxu0 %v2626
        %2674 = vmatprep.subr.bf16.mxu0 %v2630
        %2675 = vmatpush1.bf16.msra.mxu0 %v2629
        %2676 = vmatprep.subr.bf16.mxu0 %v2633
        %2677 = vmatpush1.bf16.msra.mxu0 %v2632
        %2678 = vmatprep.subr.bf16.mxu0 %v2636
        %2679 = vmatpush1.bf16.msra.mxu0 %v2635
        %2680 = vmatprep.subr.bf16.mxu0 %v2639
        %2681 = vmatpush1.bf16.msra.mxu0 %v2638
        %2682 = vmatprep.subr.bf16.mxu0 %v2642
        %2683 = vmatpush1.bf16.msra.mxu0 %v2641
        %2684 = vmatprep.subr.bf16.mxu0 0
        %2685 = vmatpush1.bf16.msra.mxu0 0
        %2686 = vmatprep.subr.bf16.mxu0 0
        %2687 = vmatpush1.bf16.msra.mxu0 0
        %2688 = vmatprep.subr.bf16.mxu0 0
        %2689 = vmatpush1.bf16.msra.mxu0 0
        %2690 = vmatprep.subr.bf16.mxu0 0
        %2691 = vmatpush1.bf16.msra.mxu0 0
        %2692 = vmatprep.subr.bf16.mxu0 0
        %2693 = vmatpush1.bf16.msra.mxu0 0
        %2694 = vmatprep.subr.bf16.mxu0 0
        %2695 = vmatpush1.bf16.msra.mxu0 0
        %2696 = vmatprep.subr.bf16.mxu0 0
        %2697 = vmatpush1.bf16.msra.mxu0 0
        %2698 = vmatprep.subr.bf16.mxu0 0
        %2699 = vmatpush1.bf16.msra.mxu0 0
        %2700 = vmatprep.mubr.bf16.mxu0 0
        %2701 = vmatmul.mubr.bf16.gmra.mrb[0].mxu0 %v298
        %v2702 = vpop.f32.mrb[0].mxu0
        %v2703 = vadd.f32 %v2539, %v2702
        %v2704 = vpop.f32.mrb[0].mxu0
        %v2705 = vadd.f32 %v2539, %v2704
        %v2706 = vpop.f32.mrb[0].mxu0
        %v2707 = vpop.f32.mrb[0].mxu0
        %2708 = vdwg.mxu0
        %2709 = vmatprep.subr.bf16.mxu0 0
        %2710 = vmatpush1.bf16.msra.mxu0 %v2622
        %2711 = vmatprep.subr.bf16.mxu0 0
        %2712 = vmatpush1.bf16.msra.mxu0 %v2625
        %2713 = vmatprep.subr.bf16.mxu0 0
        %2714 = vmatpush1.bf16.msra.mxu0 %v2628
        %2715 = vmatprep.subr.bf16.mxu0 0
        %2716 = vmatpush1.bf16.msra.mxu0 %v2631
        %2717 = vmatprep.subr.bf16.mxu0 0
        %2718 = vmatpush1.bf16.msra.mxu0 %v2634
        %2719 = vmatprep.subr.bf16.mxu0 0
        %2720 = vmatpush1.bf16.msra.mxu0 %v2637
        %2721 = vmatprep.subr.bf16.mxu0 0
        %2722 = vmatpush1.bf16.msra.mxu0 %v2640
        %2723 = vmatprep.subr.bf16.mxu0 0
        %2724 = vmatpush1.bf16.msra.mxu0 %v2643
        %2725 = vmatprep.subr.bf16.mxu0 0
        %2726 = vmatpush1.bf16.msra.mxu0 0
        %2727 = vmatprep.subr.bf16.mxu0 0
        %2728 = vmatpush1.bf16.msra.mxu0 0
        %2729 = vmatprep.subr.bf16.mxu0 0
        %2730 = vmatpush1.bf16.msra.mxu0 0
        %2731 = vmatprep.subr.bf16.mxu0 0
        %2732 = vmatpush1.bf16.msra.mxu0 0
        %2733 = vmatprep.subr.bf16.mxu0 0
        %2734 = vmatpush1.bf16.msra.mxu0 0
        %2735 = vmatprep.subr.bf16.mxu0 0
        %2736 = vmatpush1.bf16.msra.mxu0 0
        %2737 = vmatprep.subr.bf16.mxu0 0
        %2738 = vmatpush1.bf16.msra.mxu0 0
        %2739 = vmatprep.subr.bf16.mxu0 0
        %2740 = vmatpush1.bf16.msra.mxu0 0
        %2741 = vmatprep.mubr.bf16.mxu0 0
        %2742 = vmatmul.mubr.bf16.gmra.mrb[0].mxu0 %v298
        %v2743 = vpop.f32.mrb[0].mxu0
        %v2744 = vadd.f32 %v2539, %v2743
        %v2745 = vpop.f32.mrb[0].mxu0
        %v2746 = vpop.f32.mrb[0].mxu0
        %v2747 = vpop.f32.mrb[0].mxu0
        %2748 = vdwg.mxu0
        %v2749 = vmax.f32 %v2703, 0.0
        %v2750 = vmax.f32 %v2705, 0.0
        %v2751 = vmax.f32 %v2744, 0.0
        %v2752 = vld [vmem:[%s285] sm:$0xff]
        %v2753 = vld [vmem:[%s285 + $0x8] sm:$0xff]
        %v2754 = vld [vmem:[%s285 + $0x10] sm:$0xff]
        %s2755 = sld [smem:[#allocation5 + $0x8]]
        %v2756 = vstv %s2755
        %v2757 = vmul.f32 %v2756, %v2749
        %v2758 = vmul.f32 %v2756, %v2750
        %v2759 = vmul.f32 %v2756, %v2751
        %v2760 = vadd.f32 %v2752, %v2757
        %v2761 = vadd.f32 %v2753, %v2758
        %v2762 = vadd.f32 %v2754, %v2759
        %2763 = vst [vmem:[%s285] sm:$0xff] %v2760
        %2764 = vst [vmem:[%s285 + $0x8] sm:$0xff] %v2761
        %2765 = vst.msk [vmem:[%s285 + $0x10] sm:$0xff] %vm301, %v2762
        %v2766 = vld [vmem:[%s292] sm:$0xff]
        %v2767 = vld [vmem:[%s292 + $0x8] sm:$0xff]
        %v2768 = vld [vmem:[%s292 + $0x10] sm:$0xff]
        %s2769 = sld [smem:[#allocation5 + $0x88]]
        %v2770 = vstv %s2769
        %v2771 = vmul.f32 %v2770, %v2749
        %v2772 = vmul.f32 %v2770, %v2750
        %v2773 = vmul.f32 %v2770, %v2751
        %v2774 = vadd.f32 %v2766, %v2771
        %v2775 = vadd.f32 %v2767, %v2772
        %v2776 = vadd.f32 %v2768, %v2773
        %2777 = vst [vmem:[%s292] sm:$0xff] %v2774
        %2778 = vst [vmem:[%s292 + $0x8] sm:$0xff] %v2775
        %2779 = vst.msk [vmem:[%s292 + $0x10] sm:$0xff] %vm301, %v2776
        %s2780 = scalar_lea.vmem %s1, 1728
        %v2781 = vld [vmem:[%s2780] sm:$0xff]
        %v2782 = vld [vmem:[%s2780 + $0x8] sm:$0xf]
        %v2783 = vld [vmem:[%s2780 + $0xc] sm:$0xff]
        %v2784 = vld [vmem:[%s2780 + $0x14] sm:$0xf]
        %v2785 = vld [vmem:[%s2780 + $0x18] sm:$0xff]
        %v2786 = vld [vmem:[%s2780 + $0x20] sm:$0xf]
        %v2787 = vld [vmem:[%s2780 + $0x24] sm:$0xff]
        %v2788 = vld [vmem:[%s2780 + $0x2c] sm:$0xf]
        %v2789 = vld [vmem:[%s2780 + $0x30] sm:$0xff]
        %v2790 = vld [vmem:[%s2780 + $0x38] sm:$0xf]
        %v2791 = vld [vmem:[%s2780 + $0x3c] sm:$0xff]
        %v2792 = vld [vmem:[%s2780 + $0x44] sm:$0xf]
        %v2793 = vld [vmem:[%s2780 + $0x48] sm:$0xff]
        %v2794 = vld [vmem:[%s2780 + $0x50] sm:$0xf]
        %v2795 = vld [vmem:[%s2780 + $0x54] sm:$0xff]
        %v2796 = vld [vmem:[%s2780 + $0x5c] sm:$0xf]
        %v2797 = vld [vmem:[%s2780 + $0x60] sm:$0xff]
        %v2798 = vld [vmem:[%s2780 + $0x68] sm:$0xf]
        %v2799 = vld [vmem:[%s2780 + $0x6c] sm:$0xff]
        %v2800 = vld [vmem:[%s2780 + $0x74] sm:$0xf]
        %v2801 = vld [vmem:[%s2780 + $0x78] sm:$0xff]
        %v2802 = vld [vmem:[%s2780 + $0x80] sm:$0xf]
        %v2803 = vld [vmem:[%s2780 + $0x84] sm:$0xff]
        %v2804 = vld [vmem:[%s2780 + $0x8c] sm:$0xf]
        %v2805 = vld [vmem:[%s2780 + $0x90] sm:$0xff]
        %v2806 = vld [vmem:[%s2780 + $0x98] sm:$0xf]
        %v2807 = vld [vmem:[%s2780 + $0x9c] sm:$0xff]
        %v2808 = vld [vmem:[%s2780 + $0xa4] sm:$0xf]
        %v2809 = vld [vmem:[%s2780 + $0xa8] sm:$0xff]
        %v2810 = vld [vmem:[%s2780 + $0xb0] sm:$0xf]
        %v2811 = vld [vmem:[%s2780 + $0xb4] sm:$0xff]
        %v2812 = vld [vmem:[%s2780 + $0xbc] sm:$0xf]
        %s2813 = sld [smem:[#allocation2 + $0x9]]
        %v2814 = vstv %s2813
        %v2847 = vunpack.c.l.b16 %v2781
        %v2848 = vunpack.c.h.b16 %v2781
        %v2849 = vunpack.c.l.b16 %v2782
        %v2850 = vunpack.c.l.b16 %v2783
        %v2851 = vunpack.c.h.b16 %v2783
        %v2852 = vunpack.c.l.b16 %v2784
        %v2853 = vunpack.c.l.b16 %v2785
        %v2854 = vunpack.c.h.b16 %v2785
        %v2855 = vunpack.c.l.b16 %v2786
        %v2856 = vunpack.c.l.b16 %v2787
        %v2857 = vunpack.c.h.b16 %v2787
        %v2858 = vunpack.c.l.b16 %v2788
        %v2859 = vunpack.c.l.b16 %v2789
        %v2860 = vunpack.c.h.b16 %v2789
        %v2861 = vunpack.c.l.b16 %v2790
        %v2862 = vunpack.c.l.b16 %v2791
        %v2863 = vunpack.c.h.b16 %v2791
        %v2864 = vunpack.c.l.b16 %v2792
        %v2865 = vunpack.c.l.b16 %v2793
        %v2866 = vunpack.c.h.b16 %v2793
        %v2867 = vunpack.c.l.b16 %v2794
        %v2868 = vunpack.c.l.b16 %v2795
        %v2869 = vunpack.c.h.b16 %v2795
        %v2870 = vunpack.c.l.b16 %v2796
        %v2871 = vunpack.c.l.b16 %v2797
        %v2872 = vunpack.c.h.b16 %v2797
        %v2873 = vunpack.c.l.b16 %v2798
        %v2874 = vunpack.c.l.b16 %v2799
        %v2875 = vunpack.c.h.b16 %v2799
        %v2876 = vunpack.c.l.b16 %v2800
        %v2877 = vunpack.c.l.b16 %v2801
        %v2878 = vunpack.c.h.b16 %v2801
        %v2879 = vunpack.c.l.b16 %v2802
        %v2880 = vunpack.c.l.b16 %v2803
        %v2881 = vunpack.c.h.b16 %v2803
        %v2882 = vunpack.c.l.b16 %v2804
        %v2883 = vunpack.c.l.b16 %v2805
        %v2884 = vunpack.c.h.b16 %v2805
        %v2885 = vunpack.c.l.b16 %v2806
        %v2886 = vunpack.c.l.b16 %v2807
        %v2887 = vunpack.c.h.b16 %v2807
        %v2888 = vunpack.c.l.b16 %v2808
        %v2889 = vunpack.c.l.b16 %v2809
        %v2890 = vunpack.c.h.b16 %v2809
        %v2891 = vunpack.c.l.b16 %v2810
        %v2892 = vunpack.c.l.b16 %v2811
        %v2893 = vunpack.c.h.b16 %v2811
        %v2894 = vunpack.c.l.b16 %v2812
        %v2895 = vpack.c.b16 %v2850, %v2847
        %v2896 = vpack.c.b16 %v2851, %v2848
        %v2897 = vpack.c.b16 %v2852, %v2849
        %v2898 = vpack.c.b16 %v2856, %v2853
        %v2899 = vpack.c.b16 %v2857, %v2854
        %v2900 = vpack.c.b16 %v2858, %v2855
        %v2901 = vpack.c.b16 %v2862, %v2859
        %v2902 = vpack.c.b16 %v2863, %v2860
        %v2903 = vpack.c.b16 %v2864, %v2861
        %v2904 = vpack.c.b16 %v2868, %v2865
        %v2905 = vpack.c.b16 %v2869, %v2866
        %v2906 = vpack.c.b16 %v2870, %v2867
        %v2907 = vpack.c.b16 %v2874, %v2871
        %v2908 = vpack.c.b16 %v2875, %v2872
        %v2909 = vpack.c.b16 %v2876, %v2873
        %v2910 = vpack.c.b16 %v2880, %v2877
        %v2911 = vpack.c.b16 %v2881, %v2878
        %v2912 = vpack.c.b16 %v2882, %v2879
        %v2913 = vpack.c.b16 %v2886, %v2883
        %v2914 = vpack.c.b16 %v2887, %v2884
        %v2915 = vpack.c.b16 %v2888, %v2885
        %v2916 = vpack.c.b16 %v2892, %v2889
        %v2917 = vpack.c.b16 %v2893, %v2890
        %v2918 = vpack.c.b16 %v2894, %v2891
        %2943 = vmatprep.subr.bf16.mxu0 %v2896
        %2944 = vmatpush1.bf16.msra.mxu0 %v2895
        %2945 = vmatprep.subr.bf16.mxu0 %v2899
        %2946 = vmatpush1.bf16.msra.mxu0 %v2898
        %2947 = vmatprep.subr.bf16.mxu0 %v2902
        %2948 = vmatpush1.bf16.msra.mxu0 %v2901
        %2949 = vmatprep.subr.bf16.mxu0 %v2905
        %2950 = vmatpush1.bf16.msra.mxu0 %v2904
        %2951 = vmatprep.subr.bf16.mxu0 %v2908
        %2952 = vmatpush1.bf16.msra.mxu0 %v2907
        %2953 = vmatprep.subr.bf16.mxu0 %v2911
        %2954 = vmatpush1.bf16.msra.mxu0 %v2910
        %2955 = vmatprep.subr.bf16.mxu0 %v2914
        %2956 = vmatpush1.bf16.msra.mxu0 %v2913
        %2957 = vmatprep.subr.bf16.mxu0 %v2917
        %2958 = vmatpush1.bf16.msra.mxu0 %v2916
        %2959 = vmatprep.subr.bf16.mxu0 0
        %2960 = vmatpush1.bf16.msra.mxu0 0
        %2961 = vmatprep.subr.bf16.mxu0 0
        %2962 = vmatpush1.bf16.msra.mxu0 0
        %2963 = vmatprep.subr.bf16.mxu0 0
        %2964 = vmatpush1.bf16.msra.mxu0 0
        %2965 = vmatprep.subr.bf16.mxu0 0
        %2966 = vmatpush1.bf16.msra.mxu0 0
        %2967 = vmatprep.subr.bf16.mxu0 0
        %2968 = vmatpush1.bf16.msra.mxu0 0
        %2969 = vmatprep.subr.bf16.mxu0 0
        %2970 = vmatpush1.bf16.msra.mxu0 0
        %2971 = vmatprep.subr.bf16.mxu0 0
        %2972 = vmatpush1.bf16.msra.mxu0 0
        %2973 = vmatprep.subr.bf16.mxu0 0
        %2974 = vmatpush1.bf16.msra.mxu0 0
        %2975 = vmatprep.mubr.bf16.mxu0 0
        %2976 = vmatmul.mubr.bf16.gmra.mrb[0].mxu0 %v298
        %v2977 = vpop.f32.mrb[0].mxu0
        %v2978 = vadd.f32 %v2814, %v2977
        %v2979 = vpop.f32.mrb[0].mxu0
        %v2980 = vadd.f32 %v2814, %v2979
        %v2981 = vpop.f32.mrb[0].mxu0
        %v2982 = vpop.f32.mrb[0].mxu0
        %2983 = vdwg.mxu0
        %2984 = vmatprep.subr.bf16.mxu0 0
        %2985 = vmatpush1.bf16.msra.mxu0 %v2897
        %2986 = vmatprep.subr.bf16.mxu0 0
        %2987 = vmatpush1.bf16.msra.mxu0 %v2900
        %2988 = vmatprep.subr.bf16.mxu0 0
        %2989 = vmatpush1.bf16.msra.mxu0 %v2903
        %2990 = vmatprep.subr.bf16.mxu0 0
        %2991 = vmatpush1.bf16.msra.mxu0 %v2906
        %2992 = vmatprep.subr.bf16.mxu0 0
        %2993 = vmatpush1.bf16.msra.mxu0 %v2909
        %2994 = vmatprep.subr.bf16.mxu0 0
        %2995 = vmatpush1.bf16.msra.mxu0 %v2912
        %2996 = vmatprep.subr.bf16.mxu0 0
        %2997 = vmatpush1.bf16.msra.mxu0 %v2915
        %2998 = vmatprep.subr.bf16.mxu0 0
        %2999 = vmatpush1.bf16.msra.mxu0 %v2918
        %3000 = vmatprep.subr.bf16.mxu0 0
        %3001 = vmatpush1.bf16.msra.mxu0 0
        %3002 = vmatprep.subr.bf16.mxu0 0
        %3003 = vmatpush1.bf16.msra.mxu0 0
        %3004 = vmatprep.subr.bf16.mxu0 0
        %3005 = vmatpush1.bf16.msra.mxu0 0
        %3006 = vmatprep.subr.bf16.mxu0 0
        %3007 = vmatpush1.bf16.msra.mxu0 0
        %3008 = vmatprep.subr.bf16.mxu0 0
        %3009 = vmatpush1.bf16.msra.mxu0 0
        %3010 = vmatprep.subr.bf16.mxu0 0
        %3011 = vmatpush1.bf16.msra.mxu0 0
        %3012 = vmatprep.subr.bf16.mxu0 0
        %3013 = vmatpush1.bf16.msra.mxu0 0
        %3014 = vmatprep.subr.bf16.mxu0 0
        %3015 = vmatpush1.bf16.msra.mxu0 0
        %3016 = vmatprep.mubr.bf16.mxu0 0
        %3017 = vmatmul.mubr.bf16.gmra.mrb[0].mxu0 %v298
        %v3018 = vpop.f32.mrb[0].mxu0
        %v3019 = vadd.f32 %v2814, %v3018
        %v3020 = vpop.f32.mrb[0].mxu0
        %v3021 = vpop.f32.mrb[0].mxu0
        %v3022 = vpop.f32.mrb[0].mxu0
        %3023 = vdwg.mxu0
        %v3024 = vmax.f32 %v2978, 0.0
        %v3025 = vmax.f32 %v2980, 0.0
        %v3026 = vmax.f32 %v3019, 0.0
        %v3027 = vld [vmem:[%s285] sm:$0xff]
        %v3028 = vld [vmem:[%s285 + $0x8] sm:$0xff]
        %v3029 = vld [vmem:[%s285 + $0x10] sm:$0xff]
        %s3030 = sld [smem:[#allocation5 + $0x9]]
        %v3031 = vstv %s3030
        %v3032 = vmul.f32 %v3031, %v3024
        %v3033 = vmul.f32 %v3031, %v3025
        %v3034 = vmul.f32 %v3031, %v3026
        %v3035 = vadd.f32 %v3027, %v3032
        %v3036 = vadd.f32 %v3028, %v3033
        %v3037 = vadd.f32 %v3029, %v3034
        %3038 = vst [vmem:[%s285] sm:$0xff] %v3035
        %3039 = vst [vmem:[%s285 + $0x8] sm:$0xff] %v3036
        %3040 = vst.msk [vmem:[%s285 + $0x10] sm:$0xff] %vm301, %v3037
        %v3041 = vld [vmem:[%s292] sm:$0xff]
        %v3042 = vld [vmem:[%s292 + $0x8] sm:$0xff]
        %v3043 = vld [vmem:[%s292 + $0x10] sm:$0xff]
        %s3044 = sld [smem:[#allocation5 + $0x89]]
        %v3045 = vstv %s3044
        %v3046 = vmul.f32 %v3045, %v3024
        %v3047 = vmul.f32 %v3045, %v3025
        %v3048 = vmul.f32 %v3045, %v3026
        %v3049 = vadd.f32 %v3041, %v3046
        %v3050 = vadd.f32 %v3042, %v3047
        %v3051 = vadd.f32 %v3043, %v3048
        %3052 = vst [vmem:[%s292] sm:$0xff] %v3049
        %3053 = vst [vmem:[%s292 + $0x8] sm:$0xff] %v3050
        %3054 = vst.msk [vmem:[%s292 + $0x10] sm:$0xff] %vm301, %v3051
        %s3055 = scalar_lea.vmem %s1, 1920
        %v3056 = vld [vmem:[%s3055] sm:$0xff]
        %v3057 = vld [vmem:[%s3055 + $0x8] sm:$0xf]
        %v3058 = vld [vmem:[%s3055 + $0xc] sm:$0xff]
        %v3059 = vld [vmem:[%s3055 + $0x14] sm:$0xf]
        %v3060 = vld [vmem:[%s3055 + $0x18] sm:$0xff]
        %v3061 = vld [vmem:[%s3055 + $0x20] sm:$0xf]
        %v3062 = vld [vmem:[%s3055 + $0x24] sm:$0xff]
        %v3063 = vld [vmem:[%s3055 + $0x2c] sm:$0xf]
        %v3064 = vld [vmem:[%s3055 + $0x30] sm:$0xff]
        %v3065 = vld [vmem:[%s3055 + $0x38] sm:$0xf]
        %v3066 = vld [vmem:[%s3055 + $0x3c] sm:$0xff]
        %v3067 = vld [vmem:[%s3055 + $0x44] sm:$0xf]
        %v3068 = vld [vmem:[%s3055 + $0x48] sm:$0xff]
        %v3069 = vld [vmem:[%s3055 + $0x50] sm:$0xf]
        %v3070 = vld [vmem:[%s3055 + $0x54] sm:$0xff]
        %v3071 = vld [vmem:[%s3055 + $0x5c] sm:$0xf]
        %v3072 = vld [vmem:[%s3055 + $0x60] sm:$0xff]
        %v3073 = vld [vmem:[%s3055 + $0x68] sm:$0xf]
        %v3074 = vld [vmem:[%s3055 + $0x6c] sm:$0xff]
        %v3075 = vld [vmem:[%s3055 + $0x74] sm:$0xf]
        %v3076 = vld [vmem:[%s3055 + $0x78] sm:$0xff]
        %v3077 = vld [vmem:[%s3055 + $0x80] sm:$0xf]
        %v3078 = vld [vmem:[%s3055 + $0x84] sm:$0xff]
        %v3079 = vld [vmem:[%s3055 + $0x8c] sm:$0xf]
        %v3080 = vld [vmem:[%s3055 + $0x90] sm:$0xff]
        %v3081 = vld [vmem:[%s3055 + $0x98] sm:$0xf]
        %v3082 = vld [vmem:[%s3055 + $0x9c] sm:$0xff]
        %v3083 = vld [vmem:[%s3055 + $0xa4] sm:$0xf]
        %v3084 = vld [vmem:[%s3055 + $0xa8] sm:$0xff]
        %v3085 = vld [vmem:[%s3055 + $0xb0] sm:$0xf]
        %v3086 = vld [vmem:[%s3055 + $0xb4] sm:$0xff]
        %v3087 = vld [vmem:[%s3055 + $0xbc] sm:$0xf]
        %s3088 = sld [smem:[#allocation2 + $0xa]]
        %v3089 = vstv %s3088
        %v3122 = vunpack.c.l.b16 %v3056
        %v3123 = vunpack.c.h.b16 %v3056
        %v3124 = vunpack.c.l.b16 %v3057
        %v3125 = vunpack.c.l.b16 %v3058
        %v3126 = vunpack.c.h.b16 %v3058
        %v3127 = vunpack.c.l.b16 %v3059
        %v3128 = vunpack.c.l.b16 %v3060
        %v3129 = vunpack.c.h.b16 %v3060
        %v3130 = vunpack.c.l.b16 %v3061
        %v3131 = vunpack.c.l.b16 %v3062
        %v3132 = vunpack.c.h.b16 %v3062
        %v3133 = vunpack.c.l.b16 %v3063
        %v3134 = vunpack.c.l.b16 %v3064
        %v3135 = vunpack.c.h.b16 %v3064
        %v3136 = vunpack.c.l.b16 %v3065
        %v3137 = vunpack.c.l.b16 %v3066
        %v3138 = vunpack.c.h.b16 %v3066
        %v3139 = vunpack.c.l.b16 %v3067
        %v3140 = vunpack.c.l.b16 %v3068
        %v3141 = vunpack.c.h.b16 %v3068
        %v3142 = vunpack.c.l.b16 %v3069
        %v3143 = vunpack.c.l.b16 %v3070
        %v3144 = vunpack.c.h.b16 %v3070
        %v3145 = vunpack.c.l.b16 %v3071
        %v3146 = vunpack.c.l.b16 %v3072
        %v3147 = vunpack.c.h.b16 %v3072
        %v3148 = vunpack.c.l.b16 %v3073
        %v3149 = vunpack.c.l.b16 %v3074
        %v3150 = vunpack.c.h.b16 %v3074
        %v3151 = vunpack.c.l.b16 %v3075
        %v3152 = vunpack.c.l.b16 %v3076
        %v3153 = vunpack.c.h.b16 %v3076
        %v3154 = vunpack.c.l.b16 %v3077
        %v3155 = vunpack.c.l.b16 %v3078
        %v3156 = vunpack.c.h.b16 %v3078
        %v3157 = vunpack.c.l.b16 %v3079
        %v3158 = vunpack.c.l.b16 %v3080
        %v3159 = vunpack.c.h.b16 %v3080
        %v3160 = vunpack.c.l.b16 %v3081
        %v3161 = vunpack.c.l.b16 %v3082
        %v3162 = vunpack.c.h.b16 %v3082
        %v3163 = vunpack.c.l.b16 %v3083
        %v3164 = vunpack.c.l.b16 %v3084
        %v3165 = vunpack.c.h.b16 %v3084
        %v3166 = vunpack.c.l.b16 %v3085
        %v3167 = vunpack.c.l.b16 %v3086
        %v3168 = vunpack.c.h.b16 %v3086
        %v3169 = vunpack.c.l.b16 %v3087
        %v3170 = vpack.c.b16 %v3125, %v3122
        %v3171 = vpack.c.b16 %v3126, %v3123
        %v3172 = vpack.c.b16 %v3127, %v3124
        %v3173 = vpack.c.b16 %v3131, %v3128
        %v3174 = vpack.c.b16 %v3132, %v3129
        %v3175 = vpack.c.b16 %v3133, %v3130
        %v3176 = vpack.c.b16 %v3137, %v3134
        %v3177 = vpack.c.b16 %v3138, %v3135
        %v3178 = vpack.c.b16 %v3139, %v3136
        %v3179 = vpack.c.b16 %v3143, %v3140
        %v3180 = vpack.c.b16 %v3144, %v3141
        %v3181 = vpack.c.b16 %v3145, %v3142
        %v3182 = vpack.c.b16 %v3149, %v3146
        %v3183 = vpack.c.b16 %v3150, %v3147
        %v3184 = vpack.c.b16 %v3151, %v3148
        %v3185 = vpack.c.b16 %v3155, %v3152
        %v3186 = vpack.c.b16 %v3156, %v3153
        %v3187 = vpack.c.b16 %v3157, %v3154
        %v3188 = vpack.c.b16 %v3161, %v3158
        %v3189 = vpack.c.b16 %v3162, %v3159
        %v3190 = vpack.c.b16 %v3163, %v3160
        %v3191 = vpack.c.b16 %v3167, %v3164
        %v3192 = vpack.c.b16 %v3168, %v3165
        %v3193 = vpack.c.b16 %v3169, %v3166
        %3218 = vmatprep.subr.bf16.mxu0 %v3171
        %3219 = vmatpush1.bf16.msra.mxu0 %v3170
        %3220 = vmatprep.subr.bf16.mxu0 %v3174
        %3221 = vmatpush1.bf16.msra.mxu0 %v3173
        %3222 = vmatprep.subr.bf16.mxu0 %v3177
        %3223 = vmatpush1.bf16.msra.mxu0 %v3176
        %3224 = vmatprep.subr.bf16.mxu0 %v3180
        %3225 = vmatpush1.bf16.msra.mxu0 %v3179
        %3226 = vmatprep.subr.bf16.mxu0 %v3183
        %3227 = vmatpush1.bf16.msra.mxu0 %v3182
        %3228 = vmatprep.subr.bf16.mxu0 %v3186
        %3229 = vmatpush1.bf16.msra.mxu0 %v3185
        %3230 = vmatprep.subr.bf16.mxu0 %v3189
        %3231 = vmatpush1.bf16.msra.mxu0 %v3188
        %3232 = vmatprep.subr.bf16.mxu0 %v3192
        %3233 = vmatpush1.bf16.msra.mxu0 %v3191
        %3234 = vmatprep.subr.bf16.mxu0 0
        %3235 = vmatpush1.bf16.msra.mxu0 0
        %3236 = vmatprep.subr.bf16.mxu0 0
        %3237 = vmatpush1.bf16.msra.mxu0 0
        %3238 = vmatprep.subr.bf16.mxu0 0
        %3239 = vmatpush1.bf16.msra.mxu0 0
        %3240 = vmatprep.subr.bf16.mxu0 0
        %3241 = vmatpush1.bf16.msra.mxu0 0
        %3242 = vmatprep.subr.bf16.mxu0 0
        %3243 = vmatpush1.bf16.msra.mxu0 0
        %3244 = vmatprep.subr.bf16.mxu0 0
        %3245 = vmatpush1.bf16.msra.mxu0 0
        %3246 = vmatprep.subr.bf16.mxu0 0
        %3247 = vmatpush1.bf16.msra.mxu0 0
        %3248 = vmatprep.subr.bf16.mxu0 0
        %3249 = vmatpush1.bf16.msra.mxu0 0
        %3250 = vmatprep.mubr.bf16.mxu0 0
        %3251 = vmatmul.mubr.bf16.gmra.mrb[0].mxu0 %v298
        %v3252 = vpop.f32.mrb[0].mxu0
        %v3253 = vadd.f32 %v3089, %v3252
        %v3254 = vpop.f32.mrb[0].mxu0
        %v3255 = vadd.f32 %v3089, %v3254
        %v3256 = vpop.f32.mrb[0].mxu0
        %v3257 = vpop.f32.mrb[0].mxu0
        %3258 = vdwg.mxu0
        %3259 = vmatprep.subr.bf16.mxu0 0
        %3260 = vmatpush1.bf16.msra.mxu0 %v3172
        %3261 = vmatprep.subr.bf16.mxu0 0
        %3262 = vmatpush1.bf16.msra.mxu0 %v3175
        %3263 = vmatprep.subr.bf16.mxu0 0
        %3264 = vmatpush1.bf16.msra.mxu0 %v3178
        %3265 = vmatprep.subr.bf16.mxu0 0
        %3266 = vmatpush1.bf16.msra.mxu0 %v3181
        %3267 = vmatprep.subr.bf16.mxu0 0
        %3268 = vmatpush1.bf16.msra.mxu0 %v3184
        %3269 = vmatprep.subr.bf16.mxu0 0
        %3270 = vmatpush1.bf16.msra.mxu0 %v3187
        %3271 = vmatprep.subr.bf16.mxu0 0
        %3272 = vmatpush1.bf16.msra.mxu0 %v3190
        %3273 = vmatprep.subr.bf16.mxu0 0
        %3274 = vmatpush1.bf16.msra.mxu0 %v3193
        %3275 = vmatprep.subr.bf16.mxu0 0
        %3276 = vmatpush1.bf16.msra.mxu0 0
        %3277 = vmatprep.subr.bf16.mxu0 0
        %3278 = vmatpush1.bf16.msra.mxu0 0
        %3279 = vmatprep.subr.bf16.mxu0 0
        %3280 = vmatpush1.bf16.msra.mxu0 0
        %3281 = vmatprep.subr.bf16.mxu0 0
        %3282 = vmatpush1.bf16.msra.mxu0 0
        %3283 = vmatprep.subr.bf16.mxu0 0
        %3284 = vmatpush1.bf16.msra.mxu0 0
        %3285 = vmatprep.subr.bf16.mxu0 0
        %3286 = vmatpush1.bf16.msra.mxu0 0
        %3287 = vmatprep.subr.bf16.mxu0 0
        %3288 = vmatpush1.bf16.msra.mxu0 0
        %3289 = vmatprep.subr.bf16.mxu0 0
        %3290 = vmatpush1.bf16.msra.mxu0 0
        %3291 = vmatprep.mubr.bf16.mxu0 0
        %3292 = vmatmul.mubr.bf16.gmra.mrb[0].mxu0 %v298
        %v3293 = vpop.f32.mrb[0].mxu0
        %v3294 = vadd.f32 %v3089, %v3293
        %v3295 = vpop.f32.mrb[0].mxu0
        %v3296 = vpop.f32.mrb[0].mxu0
        %v3297 = vpop.f32.mrb[0].mxu0
        %3298 = vdwg.mxu0
        %v3299 = vmax.f32 %v3253, 0.0
        %v3300 = vmax.f32 %v3255, 0.0
        %v3301 = vmax.f32 %v3294, 0.0
        %v3302 = vld [vmem:[%s285] sm:$0xff]
        %v3303 = vld [vmem:[%s285 + $0x8] sm:$0xff]
        %v3304 = vld [vmem:[%s285 + $0x10] sm:$0xff]
        %s3305 = sld [smem:[#allocation5 + $0xa]]
        %v3306 = vstv %s3305
        %v3307 = vmul.f32 %v3306, %v3299
        %v3308 = vmul.f32 %v3306, %v3300
        %v3309 = vmul.f32 %v3306, %v3301
        %v3310 = vadd.f32 %v3302, %v3307
        %v3311 = vadd.f32 %v3303, %v3308
        %v3312 = vadd.f32 %v3304, %v3309
        %3313 = vst [vmem:[%s285] sm:$0xff] %v3310
        %3314 = vst [vmem:[%s285 + $0x8] sm:$0xff] %v3311
        %3315 = vst.msk [vmem:[%s285 + $0x10] sm:$0xff] %vm301, %v3312
        %v3316 = vld [vmem:[%s292] sm:$0xff]
        %v3317 = vld [vmem:[%s292 + $0x8] sm:$0xff]
        %v3318 = vld [vmem:[%s292 + $0x10] sm:$0xff]
        %s3319 = sld [smem:[#allocation5 + $0x8a]]
        %v3320 = vstv %s3319
        %v3321 = vmul.f32 %v3320, %v3299
        %v3322 = vmul.f32 %v3320, %v3300
        %v3323 = vmul.f32 %v3320, %v3301
        %v3324 = vadd.f32 %v3316, %v3321
        %v3325 = vadd.f32 %v3317, %v3322
        %v3326 = vadd.f32 %v3318, %v3323
        %3327 = vst [vmem:[%s292] sm:$0xff] %v3324
        %3328 = vst [vmem:[%s292 + $0x8] sm:$0xff] %v3325
        %3329 = vst.msk [vmem:[%s292 + $0x10] sm:$0xff] %vm301, %v3326
        %s3330 = scalar_lea.vmem %s1, 2112
        %v3331 = vld [vmem:[%s3330] sm:$0xff]
        %v3332 = vld [vmem:[%s3330 + $0x8] sm:$0xf]
        %v3333 = vld [vmem:[%s3330 + $0xc] sm:$0xff]
        %v3334 = vld [vmem:[%s3330 + $0x14] sm:$0xf]
        %v3335 = vld [vmem:[%s3330 + $0x18] sm:$0xff]
        %v3336 = vld [vmem:[%s3330 + $0x20] sm:$0xf]
        %v3337 = vld [vmem:[%s3330 + $0x24] sm:$0xff]
        %v3338 = vld [vmem:[%s3330 + $0x2c] sm:$0xf]
        %v3339 = vld [vmem:[%s3330 + $0x30] sm:$0xff]
        %v3340 = vld [vmem:[%s3330 + $0x38] sm:$0xf]
        %v3341 = vld [vmem:[%s3330 + $0x3c] sm:$0xff]
        %v3342 = vld [vmem:[%s3330 + $0x44] sm:$0xf]
        %v3343 = vld [vmem:[%s3330 + $0x48] sm:$0xff]
        %v3344 = vld [vmem:[%s3330 + $0x50] sm:$0xf]
        %v3345 = vld [vmem:[%s3330 + $0x54] sm:$0xff]
        %v3346 = vld [vmem:[%s3330 + $0x5c] sm:$0xf]
        %v3347 = vld [vmem:[%s3330 + $0x60] sm:$0xff]
        %v3348 = vld [vmem:[%s3330 + $0x68] sm:$0xf]
        %v3349 = vld [vmem:[%s3330 + $0x6c] sm:$0xff]
        %v3350 = vld [vmem:[%s3330 + $0x74] sm:$0xf]
        %v3351 = vld [vmem:[%s3330 + $0x78] sm:$0xff]
        %v3352 = vld [vmem:[%s3330 + $0x80] sm:$0xf]
        %v3353 = vld [vmem:[%s3330 + $0x84] sm:$0xff]
        %v3354 = vld [vmem:[%s3330 + $0x8c] sm:$0xf]
        %v3355 = vld [vmem:[%s3330 + $0x90] sm:$0xff]
        %v3356 = vld [vmem:[%s3330 + $0x98] sm:$0xf]
        %v3357 = vld [vmem:[%s3330 + $0x9c] sm:$0xff]
        %v3358 = vld [vmem:[%s3330 + $0xa4] sm:$0xf]
        %v3359 = vld [vmem:[%s3330 + $0xa8] sm:$0xff]
        %v3360 = vld [vmem:[%s3330 + $0xb0] sm:$0xf]
        %v3361 = vld [vmem:[%s3330 + $0xb4] sm:$0xff]
        %v3362 = vld [vmem:[%s3330 + $0xbc] sm:$0xf]
        %s3363 = sld [smem:[#allocation2 + $0xb]]
        %v3364 = vstv %s3363
        %v3397 = vunpack.c.l.b16 %v3331
        %v3398 = vunpack.c.h.b16 %v3331
        %v3399 = vunpack.c.l.b16 %v3332
        %v3400 = vunpack.c.l.b16 %v3333
        %v3401 = vunpack.c.h.b16 %v3333
        %v3402 = vunpack.c.l.b16 %v3334
        %v3403 = vunpack.c.l.b16 %v3335
        %v3404 = vunpack.c.h.b16 %v3335
        %v3405 = vunpack.c.l.b16 %v3336
        %v3406 = vunpack.c.l.b16 %v3337
        %v3407 = vunpack.c.h.b16 %v3337
        %v3408 = vunpack.c.l.b16 %v3338
        %v3409 = vunpack.c.l.b16 %v3339
        %v3410 = vunpack.c.h.b16 %v3339
        %v3411 = vunpack.c.l.b16 %v3340
        %v3412 = vunpack.c.l.b16 %v3341
        %v3413 = vunpack.c.h.b16 %v3341
        %v3414 = vunpack.c.l.b16 %v3342
        %v3415 = vunpack.c.l.b16 %v3343
        %v3416 = vunpack.c.h.b16 %v3343
        %v3417 = vunpack.c.l.b16 %v3344
        %v3418 = vunpack.c.l.b16 %v3345
        %v3419 = vunpack.c.h.b16 %v3345
        %v3420 = vunpack.c.l.b16 %v3346
        %v3421 = vunpack.c.l.b16 %v3347
        %v3422 = vunpack.c.h.b16 %v3347
        %v3423 = vunpack.c.l.b16 %v3348
        %v3424 = vunpack.c.l.b16 %v3349
        %v3425 = vunpack.c.h.b16 %v3349
        %v3426 = vunpack.c.l.b16 %v3350
        %v3427 = vunpack.c.l.b16 %v3351
        %v3428 = vunpack.c.h.b16 %v3351
        %v3429 = vunpack.c.l.b16 %v3352
        %v3430 = vunpack.c.l.b16 %v3353
        %v3431 = vunpack.c.h.b16 %v3353
        %v3432 = vunpack.c.l.b16 %v3354
        %v3433 = vunpack.c.l.b16 %v3355
        %v3434 = vunpack.c.h.b16 %v3355
        %v3435 = vunpack.c.l.b16 %v3356
        %v3436 = vunpack.c.l.b16 %v3357
        %v3437 = vunpack.c.h.b16 %v3357
        %v3438 = vunpack.c.l.b16 %v3358
        %v3439 = vunpack.c.l.b16 %v3359
        %v3440 = vunpack.c.h.b16 %v3359
        %v3441 = vunpack.c.l.b16 %v3360
        %v3442 = vunpack.c.l.b16 %v3361
        %v3443 = vunpack.c.h.b16 %v3361
        %v3444 = vunpack.c.l.b16 %v3362
        %v3445 = vpack.c.b16 %v3400, %v3397
        %v3446 = vpack.c.b16 %v3401, %v3398
        %v3447 = vpack.c.b16 %v3402, %v3399
        %v3448 = vpack.c.b16 %v3406, %v3403
        %v3449 = vpack.c.b16 %v3407, %v3404
        %v3450 = vpack.c.b16 %v3408, %v3405
        %v3451 = vpack.c.b16 %v3412, %v3409
        %v3452 = vpack.c.b16 %v3413, %v3410
        %v3453 = vpack.c.b16 %v3414, %v3411
        %v3454 = vpack.c.b16 %v3418, %v3415
        %v3455 = vpack.c.b16 %v3419, %v3416
        %v3456 = vpack.c.b16 %v3420, %v3417
        %v3457 = vpack.c.b16 %v3424, %v3421
        %v3458 = vpack.c.b16 %v3425, %v3422
        %v3459 = vpack.c.b16 %v3426, %v3423
        %v3460 = vpack.c.b16 %v3430, %v3427
        %v3461 = vpack.c.b16 %v3431, %v3428
        %v3462 = vpack.c.b16 %v3432, %v3429
        %v3463 = vpack.c.b16 %v3436, %v3433
        %v3464 = vpack.c.b16 %v3437, %v3434
        %v3465 = vpack.c.b16 %v3438, %v3435
        %v3466 = vpack.c.b16 %v3442, %v3439
        %v3467 = vpack.c.b16 %v3443, %v3440
        %v3468 = vpack.c.b16 %v3444, %v3441
        %3493 = vmatprep.subr.bf16.mxu0 %v3446
        %3494 = vmatpush1.bf16.msra.mxu0 %v3445
        %3495 = vmatprep.subr.bf16.mxu0 %v3449
        %3496 = vmatpush1.bf16.msra.mxu0 %v3448
        %3497 = vmatprep.subr.bf16.mxu0 %v3452
        %3498 = vmatpush1.bf16.msra.mxu0 %v3451
        %3499 = vmatprep.subr.bf16.mxu0 %v3455
        %3500 = vmatpush1.bf16.msra.mxu0 %v3454
        %3501 = vmatprep.subr.bf16.mxu0 %v3458
        %3502 = vmatpush1.bf16.msra.mxu0 %v3457
        %3503 = vmatprep.subr.bf16.mxu0 %v3461
        %3504 = vmatpush1.bf16.msra.mxu0 %v3460
        %3505 = vmatprep.subr.bf16.mxu0 %v3464
        %3506 = vmatpush1.bf16.msra.mxu0 %v3463
        %3507 = vmatprep.subr.bf16.mxu0 %v3467
        %3508 = vmatpush1.bf16.msra.mxu0 %v3466
        %3509 = vmatprep.subr.bf16.mxu0 0
        %3510 = vmatpush1.bf16.msra.mxu0 0
        %3511 = vmatprep.subr.bf16.mxu0 0
        %3512 = vmatpush1.bf16.msra.mxu0 0
        %3513 = vmatprep.subr.bf16.mxu0 0
        %3514 = vmatpush1.bf16.msra.mxu0 0
        %3515 = vmatprep.subr.bf16.mxu0 0
        %3516 = vmatpush1.bf16.msra.mxu0 0
        %3517 = vmatprep.subr.bf16.mxu0 0
        %3518 = vmatpush1.bf16.msra.mxu0 0
        %3519 = vmatprep.subr.bf16.mxu0 0
        %3520 = vmatpush1.bf16.msra.mxu0 0
        %3521 = vmatprep.subr.bf16.mxu0 0
        %3522 = vmatpush1.bf16.msra.mxu0 0
        %3523 = vmatprep.subr.bf16.mxu0 0
        %3524 = vmatpush1.bf16.msra.mxu0 0
        %3525 = vmatprep.mubr.bf16.mxu0 0
        %3526 = vmatmul.mubr.bf16.gmra.mrb[0].mxu0 %v298
        %v3527 = vpop.f32.mrb[0].mxu0
        %v3528 = vadd.f32 %v3364, %v3527
        %v3529 = vpop.f32.mrb[0].mxu0
        %v3530 = vadd.f32 %v3364, %v3529
        %v3531 = vpop.f32.mrb[0].mxu0
        %v3532 = vpop.f32.mrb[0].mxu0
        %3533 = vdwg.mxu0
        %3534 = vmatprep.subr.bf16.mxu0 0
        %3535 = vmatpush1.bf16.msra.mxu0 %v3447
        %3536 = vmatprep.subr.bf16.mxu0 0
        %3537 = vmatpush1.bf16.msra.mxu0 %v3450
        %3538 = vmatprep.subr.bf16.mxu0 0
        %3539 = vmatpush1.bf16.msra.mxu0 %v3453
        %3540 = vmatprep.subr.bf16.mxu0 0
        %3541 = vmatpush1.bf16.msra.mxu0 %v3456
        %3542 = vmatprep.subr.bf16.mxu0 0
        %3543 = vmatpush1.bf16.msra.mxu0 %v3459
        %3544 = vmatprep.subr.bf16.mxu0 0
        %3545 = vmatpush1.bf16.msra.mxu0 %v3462
        %3546 = vmatprep.subr.bf16.mxu0 0
        %3547 = vmatpush1.bf16.msra.mxu0 %v3465
        %3548 = vmatprep.subr.bf16.mxu0 0
        %3549 = vmatpush1.bf16.msra.mxu0 %v3468
        %3550 = vmatprep.subr.bf16.mxu0 0
        %3551 = vmatpush1.bf16.msra.mxu0 0
        %3552 = vmatprep.subr.bf16.mxu0 0
        %3553 = vmatpush1.bf16.msra.mxu0 0
        %3554 = vmatprep.subr.bf16.mxu0 0
        %3555 = vmatpush1.bf16.msra.mxu0 0
        %3556 = vmatprep.subr.bf16.mxu0 0
        %3557 = vmatpush1.bf16.msra.mxu0 0
        %3558 = vmatprep.subr.bf16.mxu0 0
        %3559 = vmatpush1.bf16.msra.mxu0 0
        %3560 = vmatprep.subr.bf16.mxu0 0
        %3561 = vmatpush1.bf16.msra.mxu0 0
        %3562 = vmatprep.subr.bf16.mxu0 0
        %3563 = vmatpush1.bf16.msra.mxu0 0
        %3564 = vmatprep.subr.bf16.mxu0 0
        %3565 = vmatpush1.bf16.msra.mxu0 0
        %3566 = vmatprep.mubr.bf16.mxu0 0
        %3567 = vmatmul.mubr.bf16.gmra.mrb[0].mxu0 %v298
        %v3568 = vpop.f32.mrb[0].mxu0
        %v3569 = vadd.f32 %v3364, %v3568
        %v3570 = vpop.f32.mrb[0].mxu0
        %v3571 = vpop.f32.mrb[0].mxu0
        %v3572 = vpop.f32.mrb[0].mxu0
        %3573 = vdwg.mxu0
        %v3574 = vmax.f32 %v3528, 0.0
        %v3575 = vmax.f32 %v3530, 0.0
        %v3576 = vmax.f32 %v3569, 0.0
        %v3577 = vld [vmem:[%s285] sm:$0xff]
        %v3578 = vld [vmem:[%s285 + $0x8] sm:$0xff]
        %v3579 = vld [vmem:[%s285 + $0x10] sm:$0xff]
        %s3580 = sld [smem:[#allocation5 + $0xb]]
        %v3581 = vstv %s3580
        %v3582 = vmul.f32 %v3581, %v3574
        %v3583 = vmul.f32 %v3581, %v3575
        %v3584 = vmul.f32 %v3581, %v3576
        %v3585 = vadd.f32 %v3577, %v3582
        %v3586 = vadd.f32 %v3578, %v3583
        %v3587 = vadd.f32 %v3579, %v3584
        %3588 = vst [vmem:[%s285] sm:$0xff] %v3585
        %3589 = vst [vmem:[%s285 + $0x8] sm:$0xff] %v3586
        %3590 = vst.msk [vmem:[%s285 + $0x10] sm:$0xff] %vm301, %v3587
        %v3591 = vld [vmem:[%s292] sm:$0xff]
        %v3592 = vld [vmem:[%s292 + $0x8] sm:$0xff]
        %v3593 = vld [vmem:[%s292 + $0x10] sm:$0xff]
        %s3594 = sld [smem:[#allocation5 + $0x8b]]
        %v3595 = vstv %s3594
        %v3596 = vmul.f32 %v3595, %v3574
        %v3597 = vmul.f32 %v3595, %v3575
        %v3598 = vmul.f32 %v3595, %v3576
        %v3599 = vadd.f32 %v3591, %v3596
        %v3600 = vadd.f32 %v3592, %v3597
        %v3601 = vadd.f32 %v3593, %v3598
        %3602 = vst [vmem:[%s292] sm:$0xff] %v3599
        %3603 = vst [vmem:[%s292 + $0x8] sm:$0xff] %v3600
        %3604 = vst.msk [vmem:[%s292 + $0x10] sm:$0xff] %vm301, %v3601
        %s3605 = scalar_lea.vmem %s1, 2304
        %v3606 = vld [vmem:[%s3605] sm:$0xff]
        %v3607 = vld [vmem:[%s3605 + $0x8] sm:$0xf]
        %v3608 = vld [vmem:[%s3605 + $0xc] sm:$0xff]
        %v3609 = vld [vmem:[%s3605 + $0x14] sm:$0xf]
        %v3610 = vld [vmem:[%s3605 + $0x18] sm:$0xff]
        %v3611 = vld [vmem:[%s3605 + $0x20] sm:$0xf]
        %v3612 = vld [vmem:[%s3605 + $0x24] sm:$0xff]
        %v3613 = vld [vmem:[%s3605 + $0x2c] sm:$0xf]
        %v3614 = vld [vmem:[%s3605 + $0x30] sm:$0xff]
        %v3615 = vld [vmem:[%s3605 + $0x38] sm:$0xf]
        %v3616 = vld [vmem:[%s3605 + $0x3c] sm:$0xff]
        %v3617 = vld [vmem:[%s3605 + $0x44] sm:$0xf]
        %v3618 = vld [vmem:[%s3605 + $0x48] sm:$0xff]
        %v3619 = vld [vmem:[%s3605 + $0x50] sm:$0xf]
        %v3620 = vld [vmem:[%s3605 + $0x54] sm:$0xff]
        %v3621 = vld [vmem:[%s3605 + $0x5c] sm:$0xf]
        %v3622 = vld [vmem:[%s3605 + $0x60] sm:$0xff]
        %v3623 = vld [vmem:[%s3605 + $0x68] sm:$0xf]
        %v3624 = vld [vmem:[%s3605 + $0x6c] sm:$0xff]
        %v3625 = vld [vmem:[%s3605 + $0x74] sm:$0xf]
        %v3626 = vld [vmem:[%s3605 + $0x78] sm:$0xff]
        %v3627 = vld [vmem:[%s3605 + $0x80] sm:$0xf]
        %v3628 = vld [vmem:[%s3605 + $0x84] sm:$0xff]
        %v3629 = vld [vmem:[%s3605 + $0x8c] sm:$0xf]
        %v3630 = vld [vmem:[%s3605 + $0x90] sm:$0xff]
        %v3631 = vld [vmem:[%s3605 + $0x98] sm:$0xf]
        %v3632 = vld [vmem:[%s3605 + $0x9c] sm:$0xff]
        %v3633 = vld [vmem:[%s3605 + $0xa4] sm:$0xf]
        %v3634 = vld [vmem:[%s3605 + $0xa8] sm:$0xff]
        %v3635 = vld [vmem:[%s3605 + $0xb0] sm:$0xf]
        %v3636 = vld [vmem:[%s3605 + $0xb4] sm:$0xff]
        %v3637 = vld [vmem:[%s3605 + $0xbc] sm:$0xf]
        %s3638 = sld [smem:[#allocation2 + $0xc]]
        %v3639 = vstv %s3638
        %v3672 = vunpack.c.l.b16 %v3606
        %v3673 = vunpack.c.h.b16 %v3606
        %v3674 = vunpack.c.l.b16 %v3607
        %v3675 = vunpack.c.l.b16 %v3608
        %v3676 = vunpack.c.h.b16 %v3608
        %v3677 = vunpack.c.l.b16 %v3609
        %v3678 = vunpack.c.l.b16 %v3610
        %v3679 = vunpack.c.h.b16 %v3610
        %v3680 = vunpack.c.l.b16 %v3611
        %v3681 = vunpack.c.l.b16 %v3612
        %v3682 = vunpack.c.h.b16 %v3612
        %v3683 = vunpack.c.l.b16 %v3613
        %v3684 = vunpack.c.l.b16 %v3614
        %v3685 = vunpack.c.h.b16 %v3614
        %v3686 = vunpack.c.l.b16 %v3615
        %v3687 = vunpack.c.l.b16 %v3616
        %v3688 = vunpack.c.h.b16 %v3616
        %v3689 = vunpack.c.l.b16 %v3617
        %v3690 = vunpack.c.l.b16 %v3618
        %v3691 = vunpack.c.h.b16 %v3618
        %v3692 = vunpack.c.l.b16 %v3619
        %v3693 = vunpack.c.l.b16 %v3620
        %v3694 = vunpack.c.h.b16 %v3620
        %v3695 = vunpack.c.l.b16 %v3621
        %v3696 = vunpack.c.l.b16 %v3622
        %v3697 = vunpack.c.h.b16 %v3622
        %v3698 = vunpack.c.l.b16 %v3623
        %v3699 = vunpack.c.l.b16 %v3624
        %v3700 = vunpack.c.h.b16 %v3624
        %v3701 = vunpack.c.l.b16 %v3625
        %v3702 = vunpack.c.l.b16 %v3626
        %v3703 = vunpack.c.h.b16 %v3626
        %v3704 = vunpack.c.l.b16 %v3627
        %v3705 = vunpack.c.l.b16 %v3628
        %v3706 = vunpack.c.h.b16 %v3628
        %v3707 = vunpack.c.l.b16 %v3629
        %v3708 = vunpack.c.l.b16 %v3630
        %v3709 = vunpack.c.h.b16 %v3630
        %v3710 = vunpack.c.l.b16 %v3631
        %v3711 = vunpack.c.l.b16 %v3632
        %v3712 = vunpack.c.h.b16 %v3632
        %v3713 = vunpack.c.l.b16 %v3633
        %v3714 = vunpack.c.l.b16 %v3634
        %v3715 = vunpack.c.h.b16 %v3634
        %v3716 = vunpack.c.l.b16 %v3635
        %v3717 = vunpack.c.l.b16 %v3636
        %v3718 = vunpack.c.h.b16 %v3636
        %v3719 = vunpack.c.l.b16 %v3637
        %v3720 = vpack.c.b16 %v3675, %v3672
        %v3721 = vpack.c.b16 %v3676, %v3673
        %v3722 = vpack.c.b16 %v3677, %v3674
        %v3723 = vpack.c.b16 %v3681, %v3678
        %v3724 = vpack.c.b16 %v3682, %v3679
        %v3725 = vpack.c.b16 %v3683, %v3680
        %v3726 = vpack.c.b16 %v3687, %v3684
        %v3727 = vpack.c.b16 %v3688, %v3685
        %v3728 = vpack.c.b16 %v3689, %v3686
        %v3729 = vpack.c.b16 %v3693, %v3690
        %v3730 = vpack.c.b16 %v3694, %v3691
        %v3731 = vpack.c.b16 %v3695, %v3692
        %v3732 = vpack.c.b16 %v3699, %v3696
        %v3733 = vpack.c.b16 %v3700, %v3697
        %v3734 = vpack.c.b16 %v3701, %v3698
        %v3735 = vpack.c.b16 %v3705, %v3702
        %v3736 = vpack.c.b16 %v3706, %v3703
        %v3737 = vpack.c.b16 %v3707, %v3704
        %v3738 = vpack.c.b16 %v3711, %v3708
        %v3739 = vpack.c.b16 %v3712, %v3709
        %v3740 = vpack.c.b16 %v3713, %v3710
        %v3741 = vpack.c.b16 %v3717, %v3714
        %v3742 = vpack.c.b16 %v3718, %v3715
        %v3743 = vpack.c.b16 %v3719, %v3716
        %3768 = vmatprep.subr.bf16.mxu0 %v3721
        %3769 = vmatpush1.bf16.msra.mxu0 %v3720
        %3770 = vmatprep.subr.bf16.mxu0 %v3724
        %3771 = vmatpush1.bf16.msra.mxu0 %v3723
        %3772 = vmatprep.subr.bf16.mxu0 %v3727
        %3773 = vmatpush1.bf16.msra.mxu0 %v3726
        %3774 = vmatprep.subr.bf16.mxu0 %v3730
        %3775 = vmatpush1.bf16.msra.mxu0 %v3729
        %3776 = vmatprep.subr.bf16.mxu0 %v3733
        %3777 = vmatpush1.bf16.msra.mxu0 %v3732
        %3778 = vmatprep.subr.bf16.mxu0 %v3736
        %3779 = vmatpush1.bf16.msra.mxu0 %v3735
        %3780 = vmatprep.subr.bf16.mxu0 %v3739
        %3781 = vmatpush1.bf16.msra.mxu0 %v3738
        %3782 = vmatprep.subr.bf16.mxu0 %v3742
        %3783 = vmatpush1.bf16.msra.mxu0 %v3741
        %3784 = vmatprep.subr.bf16.mxu0 0
        %3785 = vmatpush1.bf16.msra.mxu0 0
        %3786 = vmatprep.subr.bf16.mxu0 0
        %3787 = vmatpush1.bf16.msra.mxu0 0
        %3788 = vmatprep.subr.bf16.mxu0 0
        %3789 = vmatpush1.bf16.msra.mxu0 0
        %3790 = vmatprep.subr.bf16.mxu0 0
        %3791 = vmatpush1.bf16.msra.mxu0 0
        %3792 = vmatprep.subr.bf16.mxu0 0
        %3793 = vmatpush1.bf16.msra.mxu0 0
        %3794 = vmatprep.subr.bf16.mxu0 0
        %3795 = vmatpush1.bf16.msra.mxu0 0
        %3796 = vmatprep.subr.bf16.mxu0 0
        %3797 = vmatpush1.bf16.msra.mxu0 0
        %3798 = vmatprep.subr.bf16.mxu0 0
        %3799 = vmatpush1.bf16.msra.mxu0 0
        %3800 = vmatprep.mubr.bf16.mxu0 0
        %3801 = vmatmul.mubr.bf16.gmra.mrb[0].mxu0 %v298
        %v3802 = vpop.f32.mrb[0].mxu0
        %v3803 = vadd.f32 %v3639, %v3802
        %v3804 = vpop.f32.mrb[0].mxu0
        %v3805 = vadd.f32 %v3639, %v3804
        %v3806 = vpop.f32.mrb[0].mxu0
        %v3807 = vpop.f32.mrb[0].mxu0
        %3808 = vdwg.mxu0
        %3809 = vmatprep.subr.bf16.mxu0 0
        %3810 = vmatpush1.bf16.msra.mxu0 %v3722
        %3811 = vmatprep.subr.bf16.mxu0 0
        %3812 = vmatpush1.bf16.msra.mxu0 %v3725
        %3813 = vmatprep.subr.bf16.mxu0 0
        %3814 = vmatpush1.bf16.msra.mxu0 %v3728
        %3815 = vmatprep.subr.bf16.mxu0 0
        %3816 = vmatpush1.bf16.msra.mxu0 %v3731
        %3817 = vmatprep.subr.bf16.mxu0 0
        %3818 = vmatpush1.bf16.msra.mxu0 %v3734
        %3819 = vmatprep.subr.bf16.mxu0 0
        %3820 = vmatpush1.bf16.msra.mxu0 %v3737
        %3821 = vmatprep.subr.bf16.mxu0 0
        %3822 = vmatpush1.bf16.msra.mxu0 %v3740
        %3823 = vmatprep.subr.bf16.mxu0 0
        %3824 = vmatpush1.bf16.msra.mxu0 %v3743
        %3825 = vmatprep.subr.bf16.mxu0 0
        %3826 = vmatpush1.bf16.msra.mxu0 0
        %3827 = vmatprep.subr.bf16.mxu0 0
        %3828 = vmatpush1.bf16.msra.mxu0 0
        %3829 = vmatprep.subr.bf16.mxu0 0
        %3830 = vmatpush1.bf16.msra.mxu0 0
        %3831 = vmatprep.subr.bf16.mxu0 0
        %3832 = vmatpush1.bf16.msra.mxu0 0
        %3833 = vmatprep.subr.bf16.mxu0 0
        %3834 = vmatpush1.bf16.msra.mxu0 0
        %3835 = vmatprep.subr.bf16.mxu0 0
        %3836 = vmatpush1.bf16.msra.mxu0 0
        %3837 = vmatprep.subr.bf16.mxu0 0
        %3838 = vmatpush1.bf16.msra.mxu0 0
        %3839 = vmatprep.subr.bf16.mxu0 0
        %3840 = vmatpush1.bf16.msra.mxu0 0
        %3841 = vmatprep.mubr.bf16.mxu0 0
        %3842 = vmatmul.mubr.bf16.gmra.mrb[0].mxu0 %v298
        %v3843 = vpop.f32.mrb[0].mxu0
        %v3844 = vadd.f32 %v3639, %v3843
        %v3845 = vpop.f32.mrb[0].mxu0
        %v3846 = vpop.f32.mrb[0].mxu0
        %v3847 = vpop.f32.mrb[0].mxu0
        %3848 = vdwg.mxu0
        %v3849 = vmax.f32 %v3803, 0.0
        %v3850 = vmax.f32 %v3805, 0.0
        %v3851 = vmax.f32 %v3844, 0.0
        %v3852 = vld [vmem:[%s285] sm:$0xff]
        %v3853 = vld [vmem:[%s285 + $0x8] sm:$0xff]
        %v3854 = vld [vmem:[%s285 + $0x10] sm:$0xff]
        %s3855 = sld [smem:[#allocation5 + $0xc]]
        %v3856 = vstv %s3855
        %v3857 = vmul.f32 %v3856, %v3849
        %v3858 = vmul.f32 %v3856, %v3850
        %v3859 = vmul.f32 %v3856, %v3851
        %v3860 = vadd.f32 %v3852, %v3857
        %v3861 = vadd.f32 %v3853, %v3858
        %v3862 = vadd.f32 %v3854, %v3859
        %3863 = vst [vmem:[%s285] sm:$0xff] %v3860
        %3864 = vst [vmem:[%s285 + $0x8] sm:$0xff] %v3861
        %3865 = vst.msk [vmem:[%s285 + $0x10] sm:$0xff] %vm301, %v3862
        %v3866 = vld [vmem:[%s292] sm:$0xff]
        %v3867 = vld [vmem:[%s292 + $0x8] sm:$0xff]
        %v3868 = vld [vmem:[%s292 + $0x10] sm:$0xff]
        %s3869 = sld [smem:[#allocation5 + $0x8c]]
        %v3870 = vstv %s3869
        %v3871 = vmul.f32 %v3870, %v3849
        %v3872 = vmul.f32 %v3870, %v3850
        %v3873 = vmul.f32 %v3870, %v3851
        %v3874 = vadd.f32 %v3866, %v3871
        %v3875 = vadd.f32 %v3867, %v3872
        %v3876 = vadd.f32 %v3868, %v3873
        %3877 = vst [vmem:[%s292] sm:$0xff] %v3874
        %3878 = vst [vmem:[%s292 + $0x8] sm:$0xff] %v3875
        %3879 = vst.msk [vmem:[%s292 + $0x10] sm:$0xff] %vm301, %v3876
        %s3880 = scalar_lea.vmem %s1, 2496
        %v3881 = vld [vmem:[%s3880] sm:$0xff]
        %v3882 = vld [vmem:[%s3880 + $0x8] sm:$0xf]
        %v3883 = vld [vmem:[%s3880 + $0xc] sm:$0xff]
        %v3884 = vld [vmem:[%s3880 + $0x14] sm:$0xf]
        %v3885 = vld [vmem:[%s3880 + $0x18] sm:$0xff]
        %v3886 = vld [vmem:[%s3880 + $0x20] sm:$0xf]
        %v3887 = vld [vmem:[%s3880 + $0x24] sm:$0xff]
        %v3888 = vld [vmem:[%s3880 + $0x2c] sm:$0xf]
        %v3889 = vld [vmem:[%s3880 + $0x30] sm:$0xff]
        %v3890 = vld [vmem:[%s3880 + $0x38] sm:$0xf]
        %v3891 = vld [vmem:[%s3880 + $0x3c] sm:$0xff]
        %v3892 = vld [vmem:[%s3880 + $0x44] sm:$0xf]
        %v3893 = vld [vmem:[%s3880 + $0x48] sm:$0xff]
        %v3894 = vld [vmem:[%s3880 + $0x50] sm:$0xf]
        %v3895 = vld [vmem:[%s3880 + $0x54] sm:$0xff]
        %v3896 = vld [vmem:[%s3880 + $0x5c] sm:$0xf]
        %v3897 = vld [vmem:[%s3880 + $0x60] sm:$0xff]
        %v3898 = vld [vmem:[%s3880 + $0x68] sm:$0xf]
        %v3899 = vld [vmem:[%s3880 + $0x6c] sm:$0xff]
        %v3900 = vld [vmem:[%s3880 + $0x74] sm:$0xf]
        %v3901 = vld [vmem:[%s3880 + $0x78] sm:$0xff]
        %v3902 = vld [vmem:[%s3880 + $0x80] sm:$0xf]
        %v3903 = vld [vmem:[%s3880 + $0x84] sm:$0xff]
        %v3904 = vld [vmem:[%s3880 + $0x8c] sm:$0xf]
        %v3905 = vld [vmem:[%s3880 + $0x90] sm:$0xff]
        %v3906 = vld [vmem:[%s3880 + $0x98] sm:$0xf]
        %v3907 = vld [vmem:[%s3880 + $0x9c] sm:$0xff]
        %v3908 = vld [vmem:[%s3880 + $0xa4] sm:$0xf]
        %v3909 = vld [vmem:[%s3880 + $0xa8] sm:$0xff]
        %v3910 = vld [vmem:[%s3880 + $0xb0] sm:$0xf]
        %v3911 = vld [vmem:[%s3880 + $0xb4] sm:$0xff]
        %v3912 = vld [vmem:[%s3880 + $0xbc] sm:$0xf]
        %s3913 = sld [smem:[#allocation2 + $0xd]]
        %v3914 = vstv %s3913
        %v3947 = vunpack.c.l.b16 %v3881
        %v3948 = vunpack.c.h.b16 %v3881
        %v3949 = vunpack.c.l.b16 %v3882
        %v3950 = vunpack.c.l.b16 %v3883
        %v3951 = vunpack.c.h.b16 %v3883
        %v3952 = vunpack.c.l.b16 %v3884
        %v3953 = vunpack.c.l.b16 %v3885
        %v3954 = vunpack.c.h.b16 %v3885
        %v3955 = vunpack.c.l.b16 %v3886
        %v3956 = vunpack.c.l.b16 %v3887
        %v3957 = vunpack.c.h.b16 %v3887
        %v3958 = vunpack.c.l.b16 %v3888
        %v3959 = vunpack.c.l.b16 %v3889
        %v3960 = vunpack.c.h.b16 %v3889
        %v3961 = vunpack.c.l.b16 %v3890
        %v3962 = vunpack.c.l.b16 %v3891
        %v3963 = vunpack.c.h.b16 %v3891
        %v3964 = vunpack.c.l.b16 %v3892
        %v3965 = vunpack.c.l.b16 %v3893
        %v3966 = vunpack.c.h.b16 %v3893
        %v3967 = vunpack.c.l.b16 %v3894
        %v3968 = vunpack.c.l.b16 %v3895
        %v3969 = vunpack.c.h.b16 %v3895
        %v3970 = vunpack.c.l.b16 %v3896
        %v3971 = vunpack.c.l.b16 %v3897
        %v3972 = vunpack.c.h.b16 %v3897
        %v3973 = vunpack.c.l.b16 %v3898
        %v3974 = vunpack.c.l.b16 %v3899
        %v3975 = vunpack.c.h.b16 %v3899
        %v3976 = vunpack.c.l.b16 %v3900
        %v3977 = vunpack.c.l.b16 %v3901
        %v3978 = vunpack.c.h.b16 %v3901
        %v3979 = vunpack.c.l.b16 %v3902
        %v3980 = vunpack.c.l.b16 %v3903
        %v3981 = vunpack.c.h.b16 %v3903
        %v3982 = vunpack.c.l.b16 %v3904
        %v3983 = vunpack.c.l.b16 %v3905
        %v3984 = vunpack.c.h.b16 %v3905
        %v3985 = vunpack.c.l.b16 %v3906
        %v3986 = vunpack.c.l.b16 %v3907
        %v3987 = vunpack.c.h.b16 %v3907
        %v3988 = vunpack.c.l.b16 %v3908
        %v3989 = vunpack.c.l.b16 %v3909
        %v3990 = vunpack.c.h.b16 %v3909
        %v3991 = vunpack.c.l.b16 %v3910
        %v3992 = vunpack.c.l.b16 %v3911
        %v3993 = vunpack.c.h.b16 %v3911
        %v3994 = vunpack.c.l.b16 %v3912
        %v3995 = vpack.c.b16 %v3950, %v3947
        %v3996 = vpack.c.b16 %v3951, %v3948
        %v3997 = vpack.c.b16 %v3952, %v3949
        %v3998 = vpack.c.b16 %v3956, %v3953
        %v3999 = vpack.c.b16 %v3957, %v3954
        %v4000 = vpack.c.b16 %v3958, %v3955
        %v4001 = vpack.c.b16 %v3962, %v3959
        %v4002 = vpack.c.b16 %v3963, %v3960
        %v4003 = vpack.c.b16 %v3964, %v3961
        %v4004 = vpack.c.b16 %v3968, %v3965
        %v4005 = vpack.c.b16 %v3969, %v3966
        %v4006 = vpack.c.b16 %v3970, %v3967
        %v4007 = vpack.c.b16 %v3974, %v3971
        %v4008 = vpack.c.b16 %v3975, %v3972
        %v4009 = vpack.c.b16 %v3976, %v3973
        %v4010 = vpack.c.b16 %v3980, %v3977
        %v4011 = vpack.c.b16 %v3981, %v3978
        %v4012 = vpack.c.b16 %v3982, %v3979
        %v4013 = vpack.c.b16 %v3986, %v3983
        %v4014 = vpack.c.b16 %v3987, %v3984
        %v4015 = vpack.c.b16 %v3988, %v3985
        %v4016 = vpack.c.b16 %v3992, %v3989
        %v4017 = vpack.c.b16 %v3993, %v3990
        %v4018 = vpack.c.b16 %v3994, %v3991
        %4043 = vmatprep.subr.bf16.mxu0 %v3996
        %4044 = vmatpush1.bf16.msra.mxu0 %v3995
        %4045 = vmatprep.subr.bf16.mxu0 %v3999
        %4046 = vmatpush1.bf16.msra.mxu0 %v3998
        %4047 = vmatprep.subr.bf16.mxu0 %v4002
        %4048 = vmatpush1.bf16.msra.mxu0 %v4001
        %4049 = vmatprep.subr.bf16.mxu0 %v4005
        %4050 = vmatpush1.bf16.msra.mxu0 %v4004
        %4051 = vmatprep.subr.bf16.mxu0 %v4008
        %4052 = vmatpush1.bf16.msra.mxu0 %v4007
        %4053 = vmatprep.subr.bf16.mxu0 %v4011
        %4054 = vmatpush1.bf16.msra.mxu0 %v4010
        %4055 = vmatprep.subr.bf16.mxu0 %v4014
        %4056 = vmatpush1.bf16.msra.mxu0 %v4013
        %4057 = vmatprep.subr.bf16.mxu0 %v4017
        %4058 = vmatpush1.bf16.msra.mxu0 %v4016
        %4059 = vmatprep.subr.bf16.mxu0 0
        %4060 = vmatpush1.bf16.msra.mxu0 0
        %4061 = vmatprep.subr.bf16.mxu0 0
        %4062 = vmatpush1.bf16.msra.mxu0 0
        %4063 = vmatprep.subr.bf16.mxu0 0
        %4064 = vmatpush1.bf16.msra.mxu0 0
        %4065 = vmatprep.subr.bf16.mxu0 0
        %4066 = vmatpush1.bf16.msra.mxu0 0
        %4067 = vmatprep.subr.bf16.mxu0 0
        %4068 = vmatpush1.bf16.msra.mxu0 0
        %4069 = vmatprep.subr.bf16.mxu0 0
        %4070 = vmatpush1.bf16.msra.mxu0 0
        %4071 = vmatprep.subr.bf16.mxu0 0
        %4072 = vmatpush1.bf16.msra.mxu0 0
        %4073 = vmatprep.subr.bf16.mxu0 0
        %4074 = vmatpush1.bf16.msra.mxu0 0
        %4075 = vmatprep.mubr.bf16.mxu0 0
        %4076 = vmatmul.mubr.bf16.gmra.mrb[0].mxu0 %v298
        %v4077 = vpop.f32.mrb[0].mxu0
        %v4078 = vadd.f32 %v3914, %v4077
        %v4079 = vpop.f32.mrb[0].mxu0
        %v4080 = vadd.f32 %v3914, %v4079
        %v4081 = vpop.f32.mrb[0].mxu0
        %v4082 = vpop.f32.mrb[0].mxu0
        %4083 = vdwg.mxu0
        %4084 = vmatprep.subr.bf16.mxu0 0
        %4085 = vmatpush1.bf16.msra.mxu0 %v3997
        %4086 = vmatprep.subr.bf16.mxu0 0
        %4087 = vmatpush1.bf16.msra.mxu0 %v4000
        %4088 = vmatprep.subr.bf16.mxu0 0
        %4089 = vmatpush1.bf16.msra.mxu0 %v4003
        %4090 = vmatprep.subr.bf16.mxu0 0
        %4091 = vmatpush1.bf16.msra.mxu0 %v4006
        %4092 = vmatprep.subr.bf16.mxu0 0
        %4093 = vmatpush1.bf16.msra.mxu0 %v4009
        %4094 = vmatprep.subr.bf16.mxu0 0
        %4095 = vmatpush1.bf16.msra.mxu0 %v4012
        %4096 = vmatprep.subr.bf16.mxu0 0
        %4097 = vmatpush1.bf16.msra.mxu0 %v4015
        %4098 = vmatprep.subr.bf16.mxu0 0
        %4099 = vmatpush1.bf16.msra.mxu0 %v4018
        %4100 = vmatprep.subr.bf16.mxu0 0
        %4101 = vmatpush1.bf16.msra.mxu0 0
        %4102 = vmatprep.subr.bf16.mxu0 0
        %4103 = vmatpush1.bf16.msra.mxu0 0
        %4104 = vmatprep.subr.bf16.mxu0 0
        %4105 = vmatpush1.bf16.msra.mxu0 0
        %4106 = vmatprep.subr.bf16.mxu0 0
        %4107 = vmatpush1.bf16.msra.mxu0 0
        %4108 = vmatprep.subr.bf16.mxu0 0
        %4109 = vmatpush1.bf16.msra.mxu0 0
        %4110 = vmatprep.subr.bf16.mxu0 0
        %4111 = vmatpush1.bf16.msra.mxu0 0
        %4112 = vmatprep.subr.bf16.mxu0 0
        %4113 = vmatpush1.bf16.msra.mxu0 0
        %4114 = vmatprep.subr.bf16.mxu0 0
        %4115 = vmatpush1.bf16.msra.mxu0 0
        %4116 = vmatprep.mubr.bf16.mxu0 0
        %4117 = vmatmul.mubr.bf16.gmra.mrb[0].mxu0 %v298
        %v4118 = vpop.f32.mrb[0].mxu0
        %v4119 = vadd.f32 %v3914, %v4118
        %v4120 = vpop.f32.mrb[0].mxu0
        %v4121 = vpop.f32.mrb[0].mxu0
        %v4122 = vpop.f32.mrb[0].mxu0
        %4123 = vdwg.mxu0
        %v4124 = vmax.f32 %v4078, 0.0
        %v4125 = vmax.f32 %v4080, 0.0
        %v4126 = vmax.f32 %v4119, 0.0
        %v4127 = vld [vmem:[%s285] sm:$0xff]
        %v4128 = vld [vmem:[%s285 + $0x8] sm:$0xff]
        %v4129 = vld [vmem:[%s285 + $0x10] sm:$0xff]
        %s4130 = sld [smem:[#allocation5 + $0xd]]
        %v4131 = vstv %s4130
        %v4132 = vmul.f32 %v4131, %v4124
        %v4133 = vmul.f32 %v4131, %v4125
        %v4134 = vmul.f32 %v4131, %v4126
        %v4135 = vadd.f32 %v4127, %v4132
        %v4136 = vadd.f32 %v4128, %v4133
        %v4137 = vadd.f32 %v4129, %v4134
        %4138 = vst [vmem:[%s285] sm:$0xff] %v4135
        %4139 = vst [vmem:[%s285 + $0x8] sm:$0xff] %v4136
        %4140 = vst.msk [vmem:[%s285 + $0x10] sm:$0xff] %vm301, %v4137
        %v4141 = vld [vmem:[%s292] sm:$0xff]
        %v4142 = vld [vmem:[%s292 + $0x8] sm:$0xff]
        %v4143 = vld [vmem:[%s292 + $0x10] sm:$0xff]
        %s4144 = sld [smem:[#allocation5 + $0x8d]]
        %v4145 = vstv %s4144
        %v4146 = vmul.f32 %v4145, %v4124
        %v4147 = vmul.f32 %v4145, %v4125
        %v4148 = vmul.f32 %v4145, %v4126
        %v4149 = vadd.f32 %v4141, %v4146
        %v4150 = vadd.f32 %v4142, %v4147
        %v4151 = vadd.f32 %v4143, %v4148
        %4152 = vst [vmem:[%s292] sm:$0xff] %v4149
        %4153 = vst [vmem:[%s292 + $0x8] sm:$0xff] %v4150
        %4154 = vst.msk [vmem:[%s292 + $0x10] sm:$0xff] %vm301, %v4151
        %s4155 = scalar_lea.vmem %s1, 2688
        %v4156 = vld [vmem:[%s4155] sm:$0xff]
        %v4157 = vld [vmem:[%s4155 + $0x8] sm:$0xf]
        %v4158 = vld [vmem:[%s4155 + $0xc] sm:$0xff]
        %v4159 = vld [vmem:[%s4155 + $0x14] sm:$0xf]
        %v4160 = vld [vmem:[%s4155 + $0x18] sm:$0xff]
        %v4161 = vld [vmem:[%s4155 + $0x20] sm:$0xf]
        %v4162 = vld [vmem:[%s4155 + $0x24] sm:$0xff]
        %v4163 = vld [vmem:[%s4155 + $0x2c] sm:$0xf]
        %v4164 = vld [vmem:[%s4155 + $0x30] sm:$0xff]
        %v4165 = vld [vmem:[%s4155 + $0x38] sm:$0xf]
        %v4166 = vld [vmem:[%s4155 + $0x3c] sm:$0xff]
        %v4167 = vld [vmem:[%s4155 + $0x44] sm:$0xf]
        %v4168 = vld [vmem:[%s4155 + $0x48] sm:$0xff]
        %v4169 = vld [vmem:[%s4155 + $0x50] sm:$0xf]
        %v4170 = vld [vmem:[%s4155 + $0x54] sm:$0xff]
        %v4171 = vld [vmem:[%s4155 + $0x5c] sm:$0xf]
        %v4172 = vld [vmem:[%s4155 + $0x60] sm:$0xff]
        %v4173 = vld [vmem:[%s4155 + $0x68] sm:$0xf]
        %v4174 = vld [vmem:[%s4155 + $0x6c] sm:$0xff]
        %v4175 = vld [vmem:[%s4155 + $0x74] sm:$0xf]
        %v4176 = vld [vmem:[%s4155 + $0x78] sm:$0xff]
        %v4177 = vld [vmem:[%s4155 + $0x80] sm:$0xf]
        %v4178 = vld [vmem:[%s4155 + $0x84] sm:$0xff]
        %v4179 = vld [vmem:[%s4155 + $0x8c] sm:$0xf]
        %v4180 = vld [vmem:[%s4155 + $0x90] sm:$0xff]
        %v4181 = vld [vmem:[%s4155 + $0x98] sm:$0xf]
        %v4182 = vld [vmem:[%s4155 + $0x9c] sm:$0xff]
        %v4183 = vld [vmem:[%s4155 + $0xa4] sm:$0xf]
        %v4184 = vld [vmem:[%s4155 + $0xa8] sm:$0xff]
        %v4185 = vld [vmem:[%s4155 + $0xb0] sm:$0xf]
        %v4186 = vld [vmem:[%s4155 + $0xb4] sm:$0xff]
        %v4187 = vld [vmem:[%s4155 + $0xbc] sm:$0xf]
        %s4188 = sld [smem:[#allocation2 + $0xe]]
        %v4189 = vstv %s4188
        %v4222 = vunpack.c.l.b16 %v4156
        %v4223 = vunpack.c.h.b16 %v4156
        %v4224 = vunpack.c.l.b16 %v4157
        %v4225 = vunpack.c.l.b16 %v4158
        %v4226 = vunpack.c.h.b16 %v4158
        %v4227 = vunpack.c.l.b16 %v4159
        %v4228 = vunpack.c.l.b16 %v4160
        %v4229 = vunpack.c.h.b16 %v4160
        %v4230 = vunpack.c.l.b16 %v4161
        %v4231 = vunpack.c.l.b16 %v4162
        %v4232 = vunpack.c.h.b16 %v4162
        %v4233 = vunpack.c.l.b16 %v4163
        %v4234 = vunpack.c.l.b16 %v4164
        %v4235 = vunpack.c.h.b16 %v4164
        %v4236 = vunpack.c.l.b16 %v4165
        %v4237 = vunpack.c.l.b16 %v4166
        %v4238 = vunpack.c.h.b16 %v4166
        %v4239 = vunpack.c.l.b16 %v4167
        %v4240 = vunpack.c.l.b16 %v4168
        %v4241 = vunpack.c.h.b16 %v4168
        %v4242 = vunpack.c.l.b16 %v4169
        %v4243 = vunpack.c.l.b16 %v4170
        %v4244 = vunpack.c.h.b16 %v4170
        %v4245 = vunpack.c.l.b16 %v4171
        %v4246 = vunpack.c.l.b16 %v4172
        %v4247 = vunpack.c.h.b16 %v4172
        %v4248 = vunpack.c.l.b16 %v4173
        %v4249 = vunpack.c.l.b16 %v4174
        %v4250 = vunpack.c.h.b16 %v4174
        %v4251 = vunpack.c.l.b16 %v4175
        %v4252 = vunpack.c.l.b16 %v4176
        %v4253 = vunpack.c.h.b16 %v4176
        %v4254 = vunpack.c.l.b16 %v4177
        %v4255 = vunpack.c.l.b16 %v4178
        %v4256 = vunpack.c.h.b16 %v4178
        %v4257 = vunpack.c.l.b16 %v4179
        %v4258 = vunpack.c.l.b16 %v4180
        %v4259 = vunpack.c.h.b16 %v4180
        %v4260 = vunpack.c.l.b16 %v4181
        %v4261 = vunpack.c.l.b16 %v4182
        %v4262 = vunpack.c.h.b16 %v4182
        %v4263 = vunpack.c.l.b16 %v4183
        %v4264 = vunpack.c.l.b16 %v4184
        %v4265 = vunpack.c.h.b16 %v4184
        %v4266 = vunpack.c.l.b16 %v4185
        %v4267 = vunpack.c.l.b16 %v4186
        %v4268 = vunpack.c.h.b16 %v4186
        %v4269 = vunpack.c.l.b16 %v4187
        %v4270 = vpack.c.b16 %v4225, %v4222
        %v4271 = vpack.c.b16 %v4226, %v4223
        %v4272 = vpack.c.b16 %v4227, %v4224
        %v4273 = vpack.c.b16 %v4231, %v4228
        %v4274 = vpack.c.b16 %v4232, %v4229
        %v4275 = vpack.c.b16 %v4233, %v4230
        %v4276 = vpack.c.b16 %v4237, %v4234
        %v4277 = vpack.c.b16 %v4238, %v4235
        %v4278 = vpack.c.b16 %v4239, %v4236
        %v4279 = vpack.c.b16 %v4243, %v4240
        %v4280 = vpack.c.b16 %v4244, %v4241
        %v4281 = vpack.c.b16 %v4245, %v4242
        %v4282 = vpack.c.b16 %v4249, %v4246
        %v4283 = vpack.c.b16 %v4250, %v4247
        %v4284 = vpack.c.b16 %v4251, %v4248
        %v4285 = vpack.c.b16 %v4255, %v4252
        %v4286 = vpack.c.b16 %v4256, %v4253
        %v4287 = vpack.c.b16 %v4257, %v4254
        %v4288 = vpack.c.b16 %v4261, %v4258
        %v4289 = vpack.c.b16 %v4262, %v4259
        %v4290 = vpack.c.b16 %v4263, %v4260
        %v4291 = vpack.c.b16 %v4267, %v4264
        %v4292 = vpack.c.b16 %v4268, %v4265
        %v4293 = vpack.c.b16 %v4269, %v4266
        %4318 = vmatprep.subr.bf16.mxu0 %v4271
        %4319 = vmatpush1.bf16.msra.mxu0 %v4270
        %4320 = vmatprep.subr.bf16.mxu0 %v4274
        %4321 = vmatpush1.bf16.msra.mxu0 %v4273
        %4322 = vmatprep.subr.bf16.mxu0 %v4277
        %4323 = vmatpush1.bf16.msra.mxu0 %v4276
        %4324 = vmatprep.subr.bf16.mxu0 %v4280
        %4325 = vmatpush1.bf16.msra.mxu0 %v4279
        %4326 = vmatprep.subr.bf16.mxu0 %v4283
        %4327 = vmatpush1.bf16.msra.mxu0 %v4282
        %4328 = vmatprep.subr.bf16.mxu0 %v4286
        %4329 = vmatpush1.bf16.msra.mxu0 %v4285
        %4330 = vmatprep.subr.bf16.mxu0 %v4289
        %4331 = vmatpush1.bf16.msra.mxu0 %v4288
        %4332 = vmatprep.subr.bf16.mxu0 %v4292
        %4333 = vmatpush1.bf16.msra.mxu0 %v4291
        %4334 = vmatprep.subr.bf16.mxu0 0
        %4335 = vmatpush1.bf16.msra.mxu0 0
        %4336 = vmatprep.subr.bf16.mxu0 0
        %4337 = vmatpush1.bf16.msra.mxu0 0
        %4338 = vmatprep.subr.bf16.mxu0 0
        %4339 = vmatpush1.bf16.msra.mxu0 0
        %4340 = vmatprep.subr.bf16.mxu0 0
        %4341 = vmatpush1.bf16.msra.mxu0 0
        %4342 = vmatprep.subr.bf16.mxu0 0
        %4343 = vmatpush1.bf16.msra.mxu0 0
        %4344 = vmatprep.subr.bf16.mxu0 0
        %4345 = vmatpush1.bf16.msra.mxu0 0
        %4346 = vmatprep.subr.bf16.mxu0 0
        %4347 = vmatpush1.bf16.msra.mxu0 0
        %4348 = vmatprep.subr.bf16.mxu0 0
        %4349 = vmatpush1.bf16.msra.mxu0 0
        %4350 = vmatprep.mubr.bf16.mxu0 0
        %4351 = vmatmul.mubr.bf16.gmra.mrb[0].mxu0 %v298
        %v4352 = vpop.f32.mrb[0].mxu0
        %v4353 = vadd.f32 %v4189, %v4352
        %v4354 = vpop.f32.mrb[0].mxu0
        %v4355 = vadd.f32 %v4189, %v4354
        %v4356 = vpop.f32.mrb[0].mxu0
        %v4357 = vpop.f32.mrb[0].mxu0
        %4358 = vdwg.mxu0
        %4359 = vmatprep.subr.bf16.mxu0 0
        %4360 = vmatpush1.bf16.msra.mxu0 %v4272
        %4361 = vmatprep.subr.bf16.mxu0 0
        %4362 = vmatpush1.bf16.msra.mxu0 %v4275
        %4363 = vmatprep.subr.bf16.mxu0 0
        %4364 = vmatpush1.bf16.msra.mxu0 %v4278
        %4365 = vmatprep.subr.bf16.mxu0 0
        %4366 = vmatpush1.bf16.msra.mxu0 %v4281
        %4367 = vmatprep.subr.bf16.mxu0 0
        %4368 = vmatpush1.bf16.msra.mxu0 %v4284
        %4369 = vmatprep.subr.bf16.mxu0 0
        %4370 = vmatpush1.bf16.msra.mxu0 %v4287
        %4371 = vmatprep.subr.bf16.mxu0 0
        %4372 = vmatpush1.bf16.msra.mxu0 %v4290
        %4373 = vmatprep.subr.bf16.mxu0 0
        %4374 = vmatpush1.bf16.msra.mxu0 %v4293
        %4375 = vmatprep.subr.bf16.mxu0 0
        %4376 = vmatpush1.bf16.msra.mxu0 0
        %4377 = vmatprep.subr.bf16.mxu0 0
        %4378 = vmatpush1.bf16.msra.mxu0 0
        %4379 = vmatprep.subr.bf16.mxu0 0
        %4380 = vmatpush1.bf16.msra.mxu0 0
        %4381 = vmatprep.subr.bf16.mxu0 0
        %4382 = vmatpush1.bf16.msra.mxu0 0
        %4383 = vmatprep.subr.bf16.mxu0 0
        %4384 = vmatpush1.bf16.msra.mxu0 0
        %4385 = vmatprep.subr.bf16.mxu0 0
        %4386 = vmatpush1.bf16.msra.mxu0 0
        %4387 = vmatprep.subr.bf16.mxu0 0
        %4388 = vmatpush1.bf16.msra.mxu0 0
        %4389 = vmatprep.subr.bf16.mxu0 0
        %4390 = vmatpush1.bf16.msra.mxu0 0
        %4391 = vmatprep.mubr.bf16.mxu0 0
        %4392 = vmatmul.mubr.bf16.gmra.mrb[0].mxu0 %v298
        %v4393 = vpop.f32.mrb[0].mxu0
        %v4394 = vadd.f32 %v4189, %v4393
        %v4395 = vpop.f32.mrb[0].mxu0
        %v4396 = vpop.f32.mrb[0].mxu0
        %v4397 = vpop.f32.mrb[0].mxu0
        %4398 = vdwg.mxu0
        %v4399 = vmax.f32 %v4353, 0.0
        %v4400 = vmax.f32 %v4355, 0.0
        %v4401 = vmax.f32 %v4394, 0.0
        %v4402 = vld [vmem:[%s285] sm:$0xff]
        %v4403 = vld [vmem:[%s285 + $0x8] sm:$0xff]
        %v4404 = vld [vmem:[%s285 + $0x10] sm:$0xff]
        %s4405 = sld [smem:[#allocation5 + $0xe]]
        %v4406 = vstv %s4405
        %v4407 = vmul.f32 %v4406, %v4399
        %v4408 = vmul.f32 %v4406, %v4400
        %v4409 = vmul.f32 %v4406, %v4401
        %v4410 = vadd.f32 %v4402, %v4407
        %v4411 = vadd.f32 %v4403, %v4408
        %v4412 = vadd.f32 %v4404, %v4409
        %4413 = vst [vmem:[%s285] sm:$0xff] %v4410
        %4414 = vst [vmem:[%s285 + $0x8] sm:$0xff] %v4411
        %4415 = vst.msk [vmem:[%s285 + $0x10] sm:$0xff] %vm301, %v4412
        %v4416 = vld [vmem:[%s292] sm:$0xff]
        %v4417 = vld [vmem:[%s292 + $0x8] sm:$0xff]
        %v4418 = vld [vmem:[%s292 + $0x10] sm:$0xff]
        %s4419 = sld [smem:[#allocation5 + $0x8e]]
        %v4420 = vstv %s4419
        %v4421 = vmul.f32 %v4420, %v4399
        %v4422 = vmul.f32 %v4420, %v4400
        %v4423 = vmul.f32 %v4420, %v4401
        %v4424 = vadd.f32 %v4416, %v4421
        %v4425 = vadd.f32 %v4417, %v4422
        %v4426 = vadd.f32 %v4418, %v4423
        %4427 = vst [vmem:[%s292] sm:$0xff] %v4424
        %4428 = vst [vmem:[%s292 + $0x8] sm:$0xff] %v4425
        %4429 = vst.msk [vmem:[%s292 + $0x10] sm:$0xff] %vm301, %v4426
        %s4430 = scalar_lea.vmem %s1, 2880
        %v4431 = vld [vmem:[%s4430] sm:$0xff]
        %v4432 = vld [vmem:[%s4430 + $0x8] sm:$0xf]
        %v4433 = vld [vmem:[%s4430 + $0xc] sm:$0xff]
        %v4434 = vld [vmem:[%s4430 + $0x14] sm:$0xf]
        %v4435 = vld [vmem:[%s4430 + $0x18] sm:$0xff]
        %v4436 = vld [vmem:[%s4430 + $0x20] sm:$0xf]
        %v4437 = vld [vmem:[%s4430 + $0x24] sm:$0xff]
        %v4438 = vld [vmem:[%s4430 + $0x2c] sm:$0xf]
        %v4439 = vld [vmem:[%s4430 + $0x30] sm:$0xff]
        %v4440 = vld [vmem:[%s4430 + $0x38] sm:$0xf]
        %v4441 = vld [vmem:[%s4430 + $0x3c] sm:$0xff]
        %v4442 = vld [vmem:[%s4430 + $0x44] sm:$0xf]
        %v4443 = vld [vmem:[%s4430 + $0x48] sm:$0xff]
        %v4444 = vld [vmem:[%s4430 + $0x50] sm:$0xf]
        %v4445 = vld [vmem:[%s4430 + $0x54] sm:$0xff]
        %v4446 = vld [vmem:[%s4430 + $0x5c] sm:$0xf]
        %v4447 = vld [vmem:[%s4430 + $0x60] sm:$0xff]
        %v4448 = vld [vmem:[%s4430 + $0x68] sm:$0xf]
        %v4449 = vld [vmem:[%s4430 + $0x6c] sm:$0xff]
        %v4450 = vld [vmem:[%s4430 + $0x74] sm:$0xf]
        %v4451 = vld [vmem:[%s4430 + $0x78] sm:$0xff]
        %v4452 = vld [vmem:[%s4430 + $0x80] sm:$0xf]
        %v4453 = vld [vmem:[%s4430 + $0x84] sm:$0xff]
        %v4454 = vld [vmem:[%s4430 + $0x8c] sm:$0xf]
        %v4455 = vld [vmem:[%s4430 + $0x90] sm:$0xff]
        %v4456 = vld [vmem:[%s4430 + $0x98] sm:$0xf]
        %v4457 = vld [vmem:[%s4430 + $0x9c] sm:$0xff]
        %v4458 = vld [vmem:[%s4430 + $0xa4] sm:$0xf]
        %v4459 = vld [vmem:[%s4430 + $0xa8] sm:$0xff]
        %v4460 = vld [vmem:[%s4430 + $0xb0] sm:$0xf]
        %v4461 = vld [vmem:[%s4430 + $0xb4] sm:$0xff]
        %v4462 = vld [vmem:[%s4430 + $0xbc] sm:$0xf]
        %s4463 = sld [smem:[#allocation2 + $0xf]]
        %v4464 = vstv %s4463
        %v4497 = vunpack.c.l.b16 %v4431
        %v4498 = vunpack.c.h.b16 %v4431
        %v4499 = vunpack.c.l.b16 %v4432
        %v4500 = vunpack.c.l.b16 %v4433
        %v4501 = vunpack.c.h.b16 %v4433
        %v4502 = vunpack.c.l.b16 %v4434
        %v4503 = vunpack.c.l.b16 %v4435
        %v4504 = vunpack.c.h.b16 %v4435
        %v4505 = vunpack.c.l.b16 %v4436
        %v4506 = vunpack.c.l.b16 %v4437
        %v4507 = vunpack.c.h.b16 %v4437
        %v4508 = vunpack.c.l.b16 %v4438
        %v4509 = vunpack.c.l.b16 %v4439
        %v4510 = vunpack.c.h.b16 %v4439
        %v4511 = vunpack.c.l.b16 %v4440
        %v4512 = vunpack.c.l.b16 %v4441
        %v4513 = vunpack.c.h.b16 %v4441
        %v4514 = vunpack.c.l.b16 %v4442
        %v4515 = vunpack.c.l.b16 %v4443
        %v4516 = vunpack.c.h.b16 %v4443
        %v4517 = vunpack.c.l.b16 %v4444
        %v4518 = vunpack.c.l.b16 %v4445
        %v4519 = vunpack.c.h.b16 %v4445
        %v4520 = vunpack.c.l.b16 %v4446
        %v4521 = vunpack.c.l.b16 %v4447
        %v4522 = vunpack.c.h.b16 %v4447
        %v4523 = vunpack.c.l.b16 %v4448
        %v4524 = vunpack.c.l.b16 %v4449
        %v4525 = vunpack.c.h.b16 %v4449
        %v4526 = vunpack.c.l.b16 %v4450
        %v4527 = vunpack.c.l.b16 %v4451
        %v4528 = vunpack.c.h.b16 %v4451
        %v4529 = vunpack.c.l.b16 %v4452
        %v4530 = vunpack.c.l.b16 %v4453
        %v4531 = vunpack.c.h.b16 %v4453
        %v4532 = vunpack.c.l.b16 %v4454
        %v4533 = vunpack.c.l.b16 %v4455
        %v4534 = vunpack.c.h.b16 %v4455
        %v4535 = vunpack.c.l.b16 %v4456
        %v4536 = vunpack.c.l.b16 %v4457
        %v4537 = vunpack.c.h.b16 %v4457
        %v4538 = vunpack.c.l.b16 %v4458
        %v4539 = vunpack.c.l.b16 %v4459
        %v4540 = vunpack.c.h.b16 %v4459
        %v4541 = vunpack.c.l.b16 %v4460
        %v4542 = vunpack.c.l.b16 %v4461
        %v4543 = vunpack.c.h.b16 %v4461
        %v4544 = vunpack.c.l.b16 %v4462
        %v4545 = vpack.c.b16 %v4500, %v4497
        %v4546 = vpack.c.b16 %v4501, %v4498
        %v4547 = vpack.c.b16 %v4502, %v4499
        %v4548 = vpack.c.b16 %v4506, %v4503
        %v4549 = vpack.c.b16 %v4507, %v4504
        %v4550 = vpack.c.b16 %v4508, %v4505
        %v4551 = vpack.c.b16 %v4512, %v4509
        %v4552 = vpack.c.b16 %v4513, %v4510
        %v4553 = vpack.c.b16 %v4514, %v4511
        %v4554 = vpack.c.b16 %v4518, %v4515
        %v4555 = vpack.c.b16 %v4519, %v4516
        %v4556 = vpack.c.b16 %v4520, %v4517
        %v4557 = vpack.c.b16 %v4524, %v4521
        %v4558 = vpack.c.b16 %v4525, %v4522
        %v4559 = vpack.c.b16 %v4526, %v4523
        %v4560 = vpack.c.b16 %v4530, %v4527
        %v4561 = vpack.c.b16 %v4531, %v4528
        %v4562 = vpack.c.b16 %v4532, %v4529
        %v4563 = vpack.c.b16 %v4536, %v4533
        %v4564 = vpack.c.b16 %v4537, %v4534
        %v4565 = vpack.c.b16 %v4538, %v4535
        %v4566 = vpack.c.b16 %v4542, %v4539
        %v4567 = vpack.c.b16 %v4543, %v4540
        %v4568 = vpack.c.b16 %v4544, %v4541
        %4593 = vmatprep.subr.bf16.mxu0 %v4546
        %4594 = vmatpush1.bf16.msra.mxu0 %v4545
        %4595 = vmatprep.subr.bf16.mxu0 %v4549
        %4596 = vmatpush1.bf16.msra.mxu0 %v4548
        %4597 = vmatprep.subr.bf16.mxu0 %v4552
        %4598 = vmatpush1.bf16.msra.mxu0 %v4551
        %4599 = vmatprep.subr.bf16.mxu0 %v4555
        %4600 = vmatpush1.bf16.msra.mxu0 %v4554
        %4601 = vmatprep.subr.bf16.mxu0 %v4558
        %4602 = vmatpush1.bf16.msra.mxu0 %v4557
        %4603 = vmatprep.subr.bf16.mxu0 %v4561
        %4604 = vmatpush1.bf16.msra.mxu0 %v4560
        %4605 = vmatprep.subr.bf16.mxu0 %v4564
        %4606 = vmatpush1.bf16.msra.mxu0 %v4563
        %4607 = vmatprep.subr.bf16.mxu0 %v4567
        %4608 = vmatpush1.bf16.msra.mxu0 %v4566
        %4609 = vmatprep.subr.bf16.mxu0 0
        %4610 = vmatpush1.bf16.msra.mxu0 0
        %4611 = vmatprep.subr.bf16.mxu0 0
        %4612 = vmatpush1.bf16.msra.mxu0 0
        %4613 = vmatprep.subr.bf16.mxu0 0
        %4614 = vmatpush1.bf16.msra.mxu0 0
        %4615 = vmatprep.subr.bf16.mxu0 0
        %4616 = vmatpush1.bf16.msra.mxu0 0
        %4617 = vmatprep.subr.bf16.mxu0 0
        %4618 = vmatpush1.bf16.msra.mxu0 0
        %4619 = vmatprep.subr.bf16.mxu0 0
        %4620 = vmatpush1.bf16.msra.mxu0 0
        %4621 = vmatprep.subr.bf16.mxu0 0
        %4622 = vmatpush1.bf16.msra.mxu0 0
        %4623 = vmatprep.subr.bf16.mxu0 0
        %4624 = vmatpush1.bf16.msra.mxu0 0
        %4625 = vmatprep.mubr.bf16.mxu0 0
        %4626 = vmatmul.mubr.bf16.gmra.mrb[0].mxu0 %v298
        %v4627 = vpop.f32.mrb[0].mxu0
        %v4628 = vadd.f32 %v4464, %v4627
        %v4629 = vpop.f32.mrb[0].mxu0
        %v4630 = vadd.f32 %v4464, %v4629
        %v4631 = vpop.f32.mrb[0].mxu0
        %v4632 = vpop.f32.mrb[0].mxu0
        %4633 = vdwg.mxu0
        %4634 = vmatprep.subr.bf16.mxu0 0
        %4635 = vmatpush1.bf16.msra.mxu0 %v4547
        %4636 = vmatprep.subr.bf16.mxu0 0
        %4637 = vmatpush1.bf16.msra.mxu0 %v4550
        %4638 = vmatprep.subr.bf16.mxu0 0
        %4639 = vmatpush1.bf16.msra.mxu0 %v4553
        %4640 = vmatprep.subr.bf16.mxu0 0
        %4641 = vmatpush1.bf16.msra.mxu0 %v4556
        %4642 = vmatprep.subr.bf16.mxu0 0
        %4643 = vmatpush1.bf16.msra.mxu0 %v4559
        %4644 = vmatprep.subr.bf16.mxu0 0
        %4645 = vmatpush1.bf16.msra.mxu0 %v4562
        %4646 = vmatprep.subr.bf16.mxu0 0
        %4647 = vmatpush1.bf16.msra.mxu0 %v4565
        %4648 = vmatprep.subr.bf16.mxu0 0
        %4649 = vmatpush1.bf16.msra.mxu0 %v4568
        %4650 = vmatprep.subr.bf16.mxu0 0
        %4651 = vmatpush1.bf16.msra.mxu0 0
        %4652 = vmatprep.subr.bf16.mxu0 0
        %4653 = vmatpush1.bf16.msra.mxu0 0
        %4654 = vmatprep.subr.bf16.mxu0 0
        %4655 = vmatpush1.bf16.msra.mxu0 0
        %4656 = vmatprep.subr.bf16.mxu0 0
        %4657 = vmatpush1.bf16.msra.mxu0 0
        %4658 = vmatprep.subr.bf16.mxu0 0
        %4659 = vmatpush1.bf16.msra.mxu0 0
        %4660 = vmatprep.subr.bf16.mxu0 0
        %4661 = vmatpush1.bf16.msra.mxu0 0
        %4662 = vmatprep.subr.bf16.mxu0 0
        %4663 = vmatpush1.bf16.msra.mxu0 0
        %4664 = vmatprep.subr.bf16.mxu0 0
        %4665 = vmatpush1.bf16.msra.mxu0 0
        %4666 = vmatprep.mubr.bf16.mxu0 0
        %4667 = vmatmul.mubr.bf16.gmra.mrb[0].mxu0 %v298
        %v4668 = vpop.f32.mrb[0].mxu0
        %v4669 = vadd.f32 %v4464, %v4668
        %v4670 = vpop.f32.mrb[0].mxu0
        %v4671 = vpop.f32.mrb[0].mxu0
        %v4672 = vpop.f32.mrb[0].mxu0
        %4673 = vdwg.mxu0
        %v4674 = vmax.f32 %v4628, 0.0
        %v4675 = vmax.f32 %v4630, 0.0
        %v4676 = vmax.f32 %v4669, 0.0
        %v4677 = vld [vmem:[%s285] sm:$0xff]
        %v4678 = vld [vmem:[%s285 + $0x8] sm:$0xff]
        %v4679 = vld [vmem:[%s285 + $0x10] sm:$0xff]
        %s4680 = sld [smem:[#allocation5 + $0xf]]
        %v4681 = vstv %s4680
        %v4682 = vmul.f32 %v4681, %v4674
        %v4683 = vmul.f32 %v4681, %v4675
        %v4684 = vmul.f32 %v4681, %v4676
        %v4685 = vadd.f32 %v4677, %v4682
        %v4686 = vadd.f32 %v4678, %v4683
        %v4687 = vadd.f32 %v4679, %v4684
        %4688 = vst [vmem:[%s285] sm:$0xff] %v4685
        %4689 = vst [vmem:[%s285 + $0x8] sm:$0xff] %v4686
        %4690 = vst.msk [vmem:[%s285 + $0x10] sm:$0xff] %vm301, %v4687
        %v4691 = vld [vmem:[%s292] sm:$0xff]
        %v4692 = vld [vmem:[%s292 + $0x8] sm:$0xff]
        %v4693 = vld [vmem:[%s292 + $0x10] sm:$0xff]
        %s4694 = sld [smem:[#allocation5 + $0x8f]]
        %v4695 = vstv %s4694
        %v4696 = vmul.f32 %v4695, %v4674
        %v4697 = vmul.f32 %v4695, %v4675
        %v4698 = vmul.f32 %v4695, %v4676
        %v4699 = vadd.f32 %v4691, %v4696
        %v4700 = vadd.f32 %v4692, %v4697
        %v4701 = vadd.f32 %v4693, %v4698
        %4702 = vst [vmem:[%s292] sm:$0xff] %v4699
        %4703 = vst [vmem:[%s292 + $0x8] sm:$0xff] %v4700
        %4704 = vst.msk [vmem:[%s292 + $0x10] sm:$0xff] %vm301, %v4701
        %s4705 = scalar_lea.vmem %s1, 3072
        %v4706 = vld [vmem:[%s4705] sm:$0xff]
        %v4707 = vld [vmem:[%s4705 + $0x8] sm:$0xf]
        %v4708 = vld [vmem:[%s4705 + $0xc] sm:$0xff]
        %v4709 = vld [vmem:[%s4705 + $0x14] sm:$0xf]
        %v4710 = vld [vmem:[%s4705 + $0x18] sm:$0xff]
        %v4711 = vld [vmem:[%s4705 + $0x20] sm:$0xf]
        %v4712 = vld [vmem:[%s4705 + $0x24] sm:$0xff]
        %v4713 = vld [vmem:[%s4705 + $0x2c] sm:$0xf]
        %v4714 = vld [vmem:[%s4705 + $0x30] sm:$0xff]
        %v4715 = vld [vmem:[%s4705 + $0x38] sm:$0xf]
        %v4716 = vld [vmem:[%s4705 + $0x3c] sm:$0xff]
        %v4717 = vld [vmem:[%s4705 + $0x44] sm:$0xf]
        %v4718 = vld [vmem:[%s4705 + $0x48] sm:$0xff]
        %v4719 = vld [vmem:[%s4705 + $0x50] sm:$0xf]
        %v4720 = vld [vmem:[%s4705 + $0x54] sm:$0xff]
        %v4721 = vld [vmem:[%s4705 + $0x5c] sm:$0xf]
        %v4722 = vld [vmem:[%s4705 + $0x60] sm:$0xff]
        %v4723 = vld [vmem:[%s4705 + $0x68] sm:$0xf]
        %v4724 = vld [vmem:[%s4705 + $0x6c] sm:$0xff]
        %v4725 = vld [vmem:[%s4705 + $0x74] sm:$0xf]
        %v4726 = vld [vmem:[%s4705 + $0x78] sm:$0xff]
        %v4727 = vld [vmem:[%s4705 + $0x80] sm:$0xf]
        %v4728 = vld [vmem:[%s4705 + $0x84] sm:$0xff]
        %v4729 = vld [vmem:[%s4705 + $0x8c] sm:$0xf]
        %v4730 = vld [vmem:[%s4705 + $0x90] sm:$0xff]
        %v4731 = vld [vmem:[%s4705 + $0x98] sm:$0xf]
        %v4732 = vld [vmem:[%s4705 + $0x9c] sm:$0xff]
        %v4733 = vld [vmem:[%s4705 + $0xa4] sm:$0xf]
        %v4734 = vld [vmem:[%s4705 + $0xa8] sm:$0xff]
        %v4735 = vld [vmem:[%s4705 + $0xb0] sm:$0xf]
        %v4736 = vld [vmem:[%s4705 + $0xb4] sm:$0xff]
        %v4737 = vld [vmem:[%s4705 + $0xbc] sm:$0xf]
        %s4738 = sld [smem:[#allocation2 + $0x10]]
        %v4739 = vstv %s4738
        %v4772 = vunpack.c.l.b16 %v4706
        %v4773 = vunpack.c.h.b16 %v4706
        %v4774 = vunpack.c.l.b16 %v4707
        %v4775 = vunpack.c.l.b16 %v4708
        %v4776 = vunpack.c.h.b16 %v4708
        %v4777 = vunpack.c.l.b16 %v4709
        %v4778 = vunpack.c.l.b16 %v4710
        %v4779 = vunpack.c.h.b16 %v4710
        %v4780 = vunpack.c.l.b16 %v4711
        %v4781 = vunpack.c.l.b16 %v4712
        %v4782 = vunpack.c.h.b16 %v4712
        %v4783 = vunpack.c.l.b16 %v4713
        %v4784 = vunpack.c.l.b16 %v4714
        %v4785 = vunpack.c.h.b16 %v4714
        %v4786 = vunpack.c.l.b16 %v4715
        %v4787 = vunpack.c.l.b16 %v4716
        %v4788 = vunpack.c.h.b16 %v4716
        %v4789 = vunpack.c.l.b16 %v4717
        %v4790 = vunpack.c.l.b16 %v4718
        %v4791 = vunpack.c.h.b16 %v4718
        %v4792 = vunpack.c.l.b16 %v4719
        %v4793 = vunpack.c.l.b16 %v4720
        %v4794 = vunpack.c.h.b16 %v4720
        %v4795 = vunpack.c.l.b16 %v4721
        %v4796 = vunpack.c.l.b16 %v4722
        %v4797 = vunpack.c.h.b16 %v4722
        %v4798 = vunpack.c.l.b16 %v4723
        %v4799 = vunpack.c.l.b16 %v4724
        %v4800 = vunpack.c.h.b16 %v4724
        %v4801 = vunpack.c.l.b16 %v4725
        %v4802 = vunpack.c.l.b16 %v4726
        %v4803 = vunpack.c.h.b16 %v4726
        %v4804 = vunpack.c.l.b16 %v4727
        %v4805 = vunpack.c.l.b16 %v4728
        %v4806 = vunpack.c.h.b16 %v4728
        %v4807 = vunpack.c.l.b16 %v4729
        %v4808 = vunpack.c.l.b16 %v4730
        %v4809 = vunpack.c.h.b16 %v4730
        %v4810 = vunpack.c.l.b16 %v4731
        %v4811 = vunpack.c.l.b16 %v4732
        %v4812 = vunpack.c.h.b16 %v4732
        %v4813 = vunpack.c.l.b16 %v4733
        %v4814 = vunpack.c.l.b16 %v4734
        %v4815 = vunpack.c.h.b16 %v4734
        %v4816 = vunpack.c.l.b16 %v4735
        %v4817 = vunpack.c.l.b16 %v4736
        %v4818 = vunpack.c.h.b16 %v4736
        %v4819 = vunpack.c.l.b16 %v4737
        %v4820 = vpack.c.b16 %v4775, %v4772
        %v4821 = vpack.c.b16 %v4776, %v4773
        %v4822 = vpack.c.b16 %v4777, %v4774
        %v4823 = vpack.c.b16 %v4781, %v4778
        %v4824 = vpack.c.b16 %v4782, %v4779
        %v4825 = vpack.c.b16 %v4783, %v4780
        %v4826 = vpack.c.b16 %v4787, %v4784
        %v4827 = vpack.c.b16 %v4788, %v4785
        %v4828 = vpack.c.b16 %v4789, %v4786
        %v4829 = vpack.c.b16 %v4793, %v4790
        %v4830 = vpack.c.b16 %v4794, %v4791
        %v4831 = vpack.c.b16 %v4795, %v4792
        %v4832 = vpack.c.b16 %v4799, %v4796
        %v4833 = vpack.c.b16 %v4800, %v4797
        %v4834 = vpack.c.b16 %v4801, %v4798
        %v4835 = vpack.c.b16 %v4805, %v4802
        %v4836 = vpack.c.b16 %v4806, %v4803
        %v4837 = vpack.c.b16 %v4807, %v4804
        %v4838 = vpack.c.b16 %v4811, %v4808
        %v4839 = vpack.c.b16 %v4812, %v4809
        %v4840 = vpack.c.b16 %v4813, %v4810
        %v4841 = vpack.c.b16 %v4817, %v4814
        %v4842 = vpack.c.b16 %v4818, %v4815
        %v4843 = vpack.c.b16 %v4819, %v4816
        %4868 = vmatprep.subr.bf16.mxu0 %v4821
        %4869 = vmatpush1.bf16.msra.mxu0 %v4820
        %4870 = vmatprep.subr.bf16.mxu0 %v4824
        %4871 = vmatpush1.bf16.msra.mxu0 %v4823
        %4872 = vmatprep.subr.bf16.mxu0 %v4827
        %4873 = vmatpush1.bf16.msra.mxu0 %v4826
        %4874 = vmatprep.subr.bf16.mxu0 %v4830
        %4875 = vmatpush1.bf16.msra.mxu0 %v4829
        %4876 = vmatprep.subr.bf16.mxu0 %v4833
        %4877 = vmatpush1.bf16.msra.mxu0 %v4832
        %4878 = vmatprep.subr.bf16.mxu0 %v4836
        %4879 = vmatpush1.bf16.msra.mxu0 %v4835
        %4880 = vmatprep.subr.bf16.mxu0 %v4839
        %4881 = vmatpush1.bf16.msra.mxu0 %v4838
        %4882 = vmatprep.subr.bf16.mxu0 %v4842
        %4883 = vmatpush1.bf16.msra.mxu0 %v4841
        %4884 = vmatprep.subr.bf16.mxu0 0
        %4885 = vmatpush1.bf16.msra.mxu0 0
        %4886 = vmatprep.subr.bf16.mxu0 0
        %4887 = vmatpush1.bf16.msra.mxu0 0
        %4888 = vmatprep.subr.bf16.mxu0 0
        %4889 = vmatpush1.bf16.msra.mxu0 0
        %4890 = vmatprep.subr.bf16.mxu0 0
        %4891 = vmatpush1.bf16.msra.mxu0 0
        %4892 = vmatprep.subr.bf16.mxu0 0
        %4893 = vmatpush1.bf16.msra.mxu0 0
        %4894 = vmatprep.subr.bf16.mxu0 0
        %4895 = vmatpush1.bf16.msra.mxu0 0
        %4896 = vmatprep.subr.bf16.mxu0 0
        %4897 = vmatpush1.bf16.msra.mxu0 0
        %4898 = vmatprep.subr.bf16.mxu0 0
        %4899 = vmatpush1.bf16.msra.mxu0 0
        %4900 = vmatprep.mubr.bf16.mxu0 0
        %4901 = vmatmul.mubr.bf16.gmra.mrb[0].mxu0 %v298
        %v4902 = vpop.f32.mrb[0].mxu0
        %v4903 = vadd.f32 %v4739, %v4902
        %v4904 = vpop.f32.mrb[0].mxu0
        %v4905 = vadd.f32 %v4739, %v4904
        %v4906 = vpop.f32.mrb[0].mxu0
        %v4907 = vpop.f32.mrb[0].mxu0
        %4908 = vdwg.mxu0
        %4909 = vmatprep.subr.bf16.mxu0 0
        %4910 = vmatpush1.bf16.msra.mxu0 %v4822
        %4911 = vmatprep.subr.bf16.mxu0 0
        %4912 = vmatpush1.bf16.msra.mxu0 %v4825
        %4913 = vmatprep.subr.bf16.mxu0 0
        %4914 = vmatpush1.bf16.msra.mxu0 %v4828
        %4915 = vmatprep.subr.bf16.mxu0 0
        %4916 = vmatpush1.bf16.msra.mxu0 %v4831
        %4917 = vmatprep.subr.bf16.mxu0 0
        %4918 = vmatpush1.bf16.msra.mxu0 %v4834
        %4919 = vmatprep.subr.bf16.mxu0 0
        %4920 = vmatpush1.bf16.msra.mxu0 %v4837
        %4921 = vmatprep.subr.bf16.mxu0 0
        %4922 = vmatpush1.bf16.msra.mxu0 %v4840
        %4923 = vmatprep.subr.bf16.mxu0 0
        %4924 = vmatpush1.bf16.msra.mxu0 %v4843
        %4925 = vmatprep.subr.bf16.mxu0 0
        %4926 = vmatpush1.bf16.msra.mxu0 0
        %4927 = vmatprep.subr.bf16.mxu0 0
        %4928 = vmatpush1.bf16.msra.mxu0 0
        %4929 = vmatprep.subr.bf16.mxu0 0
        %4930 = vmatpush1.bf16.msra.mxu0 0
        %4931 = vmatprep.subr.bf16.mxu0 0
        %4932 = vmatpush1.bf16.msra.mxu0 0
        %4933 = vmatprep.subr.bf16.mxu0 0
        %4934 = vmatpush1.bf16.msra.mxu0 0
        %4935 = vmatprep.subr.bf16.mxu0 0
        %4936 = vmatpush1.bf16.msra.mxu0 0
        %4937 = vmatprep.subr.bf16.mxu0 0
        %4938 = vmatpush1.bf16.msra.mxu0 0
        %4939 = vmatprep.subr.bf16.mxu0 0
        %4940 = vmatpush1.bf16.msra.mxu0 0
        %4941 = vmatprep.mubr.bf16.mxu0 0
        %4942 = vmatmul.mubr.bf16.gmra.mrb[0].mxu0 %v298
        %v4943 = vpop.f32.mrb[0].mxu0
        %v4944 = vadd.f32 %v4739, %v4943
        %v4945 = vpop.f32.mrb[0].mxu0
        %v4946 = vpop.f32.mrb[0].mxu0
        %v4947 = vpop.f32.mrb[0].mxu0
        %4948 = vdwg.mxu0
        %v4949 = vmax.f32 %v4903, 0.0
        %v4950 = vmax.f32 %v4905, 0.0
        %v4951 = vmax.f32 %v4944, 0.0
        %v4952 = vld [vmem:[%s285] sm:$0xff]
        %v4953 = vld [vmem:[%s285 + $0x8] sm:$0xff]
        %v4954 = vld [vmem:[%s285 + $0x10] sm:$0xff]
        %s4955 = sld [smem:[#allocation5 + $0x10]]
        %v4956 = vstv %s4955
        %v4957 = vmul.f32 %v4956, %v4949
        %v4958 = vmul.f32 %v4956, %v4950
        %v4959 = vmul.f32 %v4956, %v4951
        %v4960 = vadd.f32 %v4952, %v4957
        %v4961 = vadd.f32 %v4953, %v4958
        %v4962 = vadd.f32 %v4954, %v4959
        %4963 = vst [vmem:[%s285] sm:$0xff] %v4960
        %4964 = vst [vmem:[%s285 + $0x8] sm:$0xff] %v4961
        %4965 = vst.msk [vmem:[%s285 + $0x10] sm:$0xff] %vm301, %v4962
        %v4966 = vld [vmem:[%s292] sm:$0xff]
        %v4967 = vld [vmem:[%s292 + $0x8] sm:$0xff]
        %v4968 = vld [vmem:[%s292 + $0x10] sm:$0xff]
        %s4969 = sld [smem:[#allocation5 + $0x90]]
        %v4970 = vstv %s4969
        %v4971 = vmul.f32 %v4970, %v4949
        %v4972 = vmul.f32 %v4970, %v4950
        %v4973 = vmul.f32 %v4970, %v4951
        %v4974 = vadd.f32 %v4966, %v4971
        %v4975 = vadd.f32 %v4967, %v4972
        %v4976 = vadd.f32 %v4968, %v4973
        %4977 = vst [vmem:[%s292] sm:$0xff] %v4974
        %4978 = vst [vmem:[%s292 + $0x8] sm:$0xff] %v4975
        %4979 = vst.msk [vmem:[%s292 + $0x10] sm:$0xff] %vm301, %v4976
        %s4980 = scalar_lea.vmem %s1, 3264
        %v4981 = vld [vmem:[%s4980] sm:$0xff]
        %v4982 = vld [vmem:[%s4980 + $0x8] sm:$0xf]
        %v4983 = vld [vmem:[%s4980 + $0xc] sm:$0xff]
        %v4984 = vld [vmem:[%s4980 + $0x14] sm:$0xf]
        %v4985 = vld [vmem:[%s4980 + $0x18] sm:$0xff]
        %v4986 = vld [vmem:[%s4980 + $0x20] sm:$0xf]
        %v4987 = vld [vmem:[%s4980 + $0x24] sm:$0xff]
        %v4988 = vld [vmem:[%s4980 + $0x2c] sm:$0xf]
        %v4989 = vld [vmem:[%s4980 + $0x30] sm:$0xff]
        %v4990 = vld [vmem:[%s4980 + $0x38] sm:$0xf]
        %v4991 = vld [vmem:[%s4980 + $0x3c] sm:$0xff]
        %v4992 = vld [vmem:[%s4980 + $0x44] sm:$0xf]
        %v4993 = vld [vmem:[%s4980 + $0x48] sm:$0xff]
        %v4994 = vld [vmem:[%s4980 + $0x50] sm:$0xf]
        %v4995 = vld [vmem:[%s4980 + $0x54] sm:$0xff]
        %v4996 = vld [vmem:[%s4980 + $0x5c] sm:$0xf]
        %v4997 = vld [vmem:[%s4980 + $0x60] sm:$0xff]
        %v4998 = vld [vmem:[%s4980 + $0x68] sm:$0xf]
        %v4999 = vld [vmem:[%s4980 + $0x6c] sm:$0xff]
        %v5000 = vld [vmem:[%s4980 + $0x74] sm:$0xf]
        %v5001 = vld [vmem:[%s4980 + $0x78] sm:$0xff]
        %v5002 = vld [vmem:[%s4980 + $0x80] sm:$0xf]
        %v5003 = vld [vmem:[%s4980 + $0x84] sm:$0xff]
        %v5004 = vld [vmem:[%s4980 + $0x8c] sm:$0xf]
        %v5005 = vld [vmem:[%s4980 + $0x90] sm:$0xff]
        %v5006 = vld [vmem:[%s4980 + $0x98] sm:$0xf]
        %v5007 = vld [vmem:[%s4980 + $0x9c] sm:$0xff]
        %v5008 = vld [vmem:[%s4980 + $0xa4] sm:$0xf]
        %v5009 = vld [vmem:[%s4980 + $0xa8] sm:$0xff]
        %v5010 = vld [vmem:[%s4980 + $0xb0] sm:$0xf]
        %v5011 = vld [vmem:[%s4980 + $0xb4] sm:$0xff]
        %v5012 = vld [vmem:[%s4980 + $0xbc] sm:$0xf]
        %s5013 = sld [smem:[#allocation2 + $0x11]]
        %v5014 = vstv %s5013
        %v5047 = vunpack.c.l.b16 %v4981
        %v5048 = vunpack.c.h.b16 %v4981
        %v5049 = vunpack.c.l.b16 %v4982
        %v5050 = vunpack.c.l.b16 %v4983
        %v5051 = vunpack.c.h.b16 %v4983
        %v5052 = vunpack.c.l.b16 %v4984
        %v5053 = vunpack.c.l.b16 %v4985
        %v5054 = vunpack.c.h.b16 %v4985
        %v5055 = vunpack.c.l.b16 %v4986
        %v5056 = vunpack.c.l.b16 %v4987
        %v5057 = vunpack.c.h.b16 %v4987
        %v5058 = vunpack.c.l.b16 %v4988
        %v5059 = vunpack.c.l.b16 %v4989
        %v5060 = vunpack.c.h.b16 %v4989
        %v5061 = vunpack.c.l.b16 %v4990
        %v5062 = vunpack.c.l.b16 %v4991
        %v5063 = vunpack.c.h.b16 %v4991
        %v5064 = vunpack.c.l.b16 %v4992
        %v5065 = vunpack.c.l.b16 %v4993
        %v5066 = vunpack.c.h.b16 %v4993
        %v5067 = vunpack.c.l.b16 %v4994
        %v5068 = vunpack.c.l.b16 %v4995
        %v5069 = vunpack.c.h.b16 %v4995
        %v5070 = vunpack.c.l.b16 %v4996
        %v5071 = vunpack.c.l.b16 %v4997
        %v5072 = vunpack.c.h.b16 %v4997
        %v5073 = vunpack.c.l.b16 %v4998
        %v5074 = vunpack.c.l.b16 %v4999
        %v5075 = vunpack.c.h.b16 %v4999
        %v5076 = vunpack.c.l.b16 %v5000
        %v5077 = vunpack.c.l.b16 %v5001
        %v5078 = vunpack.c.h.b16 %v5001
        %v5079 = vunpack.c.l.b16 %v5002
        %v5080 = vunpack.c.l.b16 %v5003
        %v5081 = vunpack.c.h.b16 %v5003
        %v5082 = vunpack.c.l.b16 %v5004
        %v5083 = vunpack.c.l.b16 %v5005
        %v5084 = vunpack.c.h.b16 %v5005
        %v5085 = vunpack.c.l.b16 %v5006
        %v5086 = vunpack.c.l.b16 %v5007
        %v5087 = vunpack.c.h.b16 %v5007
        %v5088 = vunpack.c.l.b16 %v5008
        %v5089 = vunpack.c.l.b16 %v5009
        %v5090 = vunpack.c.h.b16 %v5009
        %v5091 = vunpack.c.l.b16 %v5010
        %v5092 = vunpack.c.l.b16 %v5011
        %v5093 = vunpack.c.h.b16 %v5011
        %v5094 = vunpack.c.l.b16 %v5012
        %v5095 = vpack.c.b16 %v5050, %v5047
        %v5096 = vpack.c.b16 %v5051, %v5048
        %v5097 = vpack.c.b16 %v5052, %v5049
        %v5098 = vpack.c.b16 %v5056, %v5053
        %v5099 = vpack.c.b16 %v5057, %v5054
        %v5100 = vpack.c.b16 %v5058, %v5055
        %v5101 = vpack.c.b16 %v5062, %v5059
        %v5102 = vpack.c.b16 %v5063, %v5060
        %v5103 = vpack.c.b16 %v5064, %v5061
        %v5104 = vpack.c.b16 %v5068, %v5065
        %v5105 = vpack.c.b16 %v5069, %v5066
        %v5106 = vpack.c.b16 %v5070, %v5067
        %v5107 = vpack.c.b16 %v5074, %v5071
        %v5108 = vpack.c.b16 %v5075, %v5072
        %v5109 = vpack.c.b16 %v5076, %v5073
        %v5110 = vpack.c.b16 %v5080, %v5077
        %v5111 = vpack.c.b16 %v5081, %v5078
        %v5112 = vpack.c.b16 %v5082, %v5079
        %v5113 = vpack.c.b16 %v5086, %v5083
        %v5114 = vpack.c.b16 %v5087, %v5084
        %v5115 = vpack.c.b16 %v5088, %v5085
        %v5116 = vpack.c.b16 %v5092, %v5089
        %v5117 = vpack.c.b16 %v5093, %v5090
        %v5118 = vpack.c.b16 %v5094, %v5091
        %5143 = vmatprep.subr.bf16.mxu0 %v5096
        %5144 = vmatpush1.bf16.msra.mxu0 %v5095
        %5145 = vmatprep.subr.bf16.mxu0 %v5099
        %5146 = vmatpush1.bf16.msra.mxu0 %v5098
        %5147 = vmatprep.subr.bf16.mxu0 %v5102
        %5148 = vmatpush1.bf16.msra.mxu0 %v5101
        %5149 = vmatprep.subr.bf16.mxu0 %v5105
        %5150 = vmatpush1.bf16.msra.mxu0 %v5104
        %5151 = vmatprep.subr.bf16.mxu0 %v5108
        %5152 = vmatpush1.bf16.msra.mxu0 %v5107
        %5153 = vmatprep.subr.bf16.mxu0 %v5111
        %5154 = vmatpush1.bf16.msra.mxu0 %v5110
        %5155 = vmatprep.subr.bf16.mxu0 %v5114
        %5156 = vmatpush1.bf16.msra.mxu0 %v5113
        %5157 = vmatprep.subr.bf16.mxu0 %v5117
        %5158 = vmatpush1.bf16.msra.mxu0 %v5116
        %5159 = vmatprep.subr.bf16.mxu0 0
        %5160 = vmatpush1.bf16.msra.mxu0 0
        %5161 = vmatprep.subr.bf16.mxu0 0
        %5162 = vmatpush1.bf16.msra.mxu0 0
        %5163 = vmatprep.subr.bf16.mxu0 0
        %5164 = vmatpush1.bf16.msra.mxu0 0
        %5165 = vmatprep.subr.bf16.mxu0 0
        %5166 = vmatpush1.bf16.msra.mxu0 0
        %5167 = vmatprep.subr.bf16.mxu0 0
        %5168 = vmatpush1.bf16.msra.mxu0 0
        %5169 = vmatprep.subr.bf16.mxu0 0
        %5170 = vmatpush1.bf16.msra.mxu0 0
        %5171 = vmatprep.subr.bf16.mxu0 0
        %5172 = vmatpush1.bf16.msra.mxu0 0
        %5173 = vmatprep.subr.bf16.mxu0 0
        %5174 = vmatpush1.bf16.msra.mxu0 0
        %5175 = vmatprep.mubr.bf16.mxu0 0
        %5176 = vmatmul.mubr.bf16.gmra.mrb[0].mxu0 %v298
        %v5177 = vpop.f32.mrb[0].mxu0
        %v5178 = vadd.f32 %v5014, %v5177
        %v5179 = vpop.f32.mrb[0].mxu0
        %v5180 = vadd.f32 %v5014, %v5179
        %v5181 = vpop.f32.mrb[0].mxu0
        %v5182 = vpop.f32.mrb[0].mxu0
        %5183 = vdwg.mxu0
        %5184 = vmatprep.subr.bf16.mxu0 0
        %5185 = vmatpush1.bf16.msra.mxu0 %v5097
        %5186 = vmatprep.subr.bf16.mxu0 0
        %5187 = vmatpush1.bf16.msra.mxu0 %v5100
        %5188 = vmatprep.subr.bf16.mxu0 0
        %5189 = vmatpush1.bf16.msra.mxu0 %v5103
        %5190 = vmatprep.subr.bf16.mxu0 0
        %5191 = vmatpush1.bf16.msra.mxu0 %v5106
        %5192 = vmatprep.subr.bf16.mxu0 0
        %5193 = vmatpush1.bf16.msra.mxu0 %v5109
        %5194 = vmatprep.subr.bf16.mxu0 0
        %5195 = vmatpush1.bf16.msra.mxu0 %v5112
        %5196 = vmatprep.subr.bf16.mxu0 0
        %5197 = vmatpush1.bf16.msra.mxu0 %v5115
        %5198 = vmatprep.subr.bf16.mxu0 0
        %5199 = vmatpush1.bf16.msra.mxu0 %v5118
        %5200 = vmatprep.subr.bf16.mxu0 0
        %5201 = vmatpush1.bf16.msra.mxu0 0
        %5202 = vmatprep.subr.bf16.mxu0 0
        %5203 = vmatpush1.bf16.msra.mxu0 0
        %5204 = vmatprep.subr.bf16.mxu0 0
        %5205 = vmatpush1.bf16.msra.mxu0 0
        %5206 = vmatprep.subr.bf16.mxu0 0
        %5207 = vmatpush1.bf16.msra.mxu0 0
        %5208 = vmatprep.subr.bf16.mxu0 0
        %5209 = vmatpush1.bf16.msra.mxu0 0
        %5210 = vmatprep.subr.bf16.mxu0 0
        %5211 = vmatpush1.bf16.msra.mxu0 0
        %5212 = vmatprep.subr.bf16.mxu0 0
        %5213 = vmatpush1.bf16.msra.mxu0 0
        %5214 = vmatprep.subr.bf16.mxu0 0
        %5215 = vmatpush1.bf16.msra.mxu0 0
        %5216 = vmatprep.mubr.bf16.mxu0 0
        %5217 = vmatmul.mubr.bf16.gmra.mrb[0].mxu0 %v298
        %v5218 = vpop.f32.mrb[0].mxu0
        %v5219 = vadd.f32 %v5014, %v5218
        %v5220 = vpop.f32.mrb[0].mxu0
        %v5221 = vpop.f32.mrb[0].mxu0
        %v5222 = vpop.f32.mrb[0].mxu0
        %5223 = vdwg.mxu0
        %v5224 = vmax.f32 %v5178, 0.0
        %v5225 = vmax.f32 %v5180, 0.0
        %v5226 = vmax.f32 %v5219, 0.0
        %v5227 = vld [vmem:[%s285] sm:$0xff]
        %v5228 = vld [vmem:[%s285 + $0x8] sm:$0xff]
        %v5229 = vld [vmem:[%s285 + $0x10] sm:$0xff]
        %s5230 = sld [smem:[#allocation5 + $0x11]]
        %v5231 = vstv %s5230
        %v5232 = vmul.f32 %v5231, %v5224
        %v5233 = vmul.f32 %v5231, %v5225
        %v5234 = vmul.f32 %v5231, %v5226
        %v5235 = vadd.f32 %v5227, %v5232
        %v5236 = vadd.f32 %v5228, %v5233
        %v5237 = vadd.f32 %v5229, %v5234
        %5238 = vst [vmem:[%s285] sm:$0xff] %v5235
        %5239 = vst [vmem:[%s285 + $0x8] sm:$0xff] %v5236
        %5240 = vst.msk [vmem:[%s285 + $0x10] sm:$0xff] %vm301, %v5237
        %v5241 = vld [vmem:[%s292] sm:$0xff]
        %v5242 = vld [vmem:[%s292 + $0x8] sm:$0xff]
        %v5243 = vld [vmem:[%s292 + $0x10] sm:$0xff]
        %s5244 = sld [smem:[#allocation5 + $0x91]]
        %v5245 = vstv %s5244
        %v5246 = vmul.f32 %v5245, %v5224
        %v5247 = vmul.f32 %v5245, %v5225
        %v5248 = vmul.f32 %v5245, %v5226
        %v5249 = vadd.f32 %v5241, %v5246
        %v5250 = vadd.f32 %v5242, %v5247
        %v5251 = vadd.f32 %v5243, %v5248
        %5252 = vst [vmem:[%s292] sm:$0xff] %v5249
        %5253 = vst [vmem:[%s292 + $0x8] sm:$0xff] %v5250
        %5254 = vst.msk [vmem:[%s292 + $0x10] sm:$0xff] %vm301, %v5251
        %s5255 = scalar_lea.vmem %s1, 3456
        %v5256 = vld [vmem:[%s5255] sm:$0xff]
        %v5257 = vld [vmem:[%s5255 + $0x8] sm:$0xf]
        %v5258 = vld [vmem:[%s5255 + $0xc] sm:$0xff]
        %v5259 = vld [vmem:[%s5255 + $0x14] sm:$0xf]
        %v5260 = vld [vmem:[%s5255 + $0x18] sm:$0xff]
        %v5261 = vld [vmem:[%s5255 + $0x20] sm:$0xf]
        %v5262 = vld [vmem:[%s5255 + $0x24] sm:$0xff]
        %v5263 = vld [vmem:[%s5255 + $0x2c] sm:$0xf]
        %v5264 = vld [vmem:[%s5255 + $0x30] sm:$0xff]
        %v5265 = vld [vmem:[%s5255 + $0x38] sm:$0xf]
        %v5266 = vld [vmem:[%s5255 + $0x3c] sm:$0xff]
        %v5267 = vld [vmem:[%s5255 + $0x44] sm:$0xf]
        %v5268 = vld [vmem:[%s5255 + $0x48] sm:$0xff]
        %v5269 = vld [vmem:[%s5255 + $0x50] sm:$0xf]
        %v5270 = vld [vmem:[%s5255 + $0x54] sm:$0xff]
        %v5271 = vld [vmem:[%s5255 + $0x5c] sm:$0xf]
        %v5272 = vld [vmem:[%s5255 + $0x60] sm:$0xff]
        %v5273 = vld [vmem:[%s5255 + $0x68] sm:$0xf]
        %v5274 = vld [vmem:[%s5255 + $0x6c] sm:$0xff]
        %v5275 = vld [vmem:[%s5255 + $0x74] sm:$0xf]
        %v5276 = vld [vmem:[%s5255 + $0x78] sm:$0xff]
        %v5277 = vld [vmem:[%s5255 + $0x80] sm:$0xf]
        %v5278 = vld [vmem:[%s5255 + $0x84] sm:$0xff]
        %v5279 = vld [vmem:[%s5255 + $0x8c] sm:$0xf]
        %v5280 = vld [vmem:[%s5255 + $0x90] sm:$0xff]
        %v5281 = vld [vmem:[%s5255 + $0x98] sm:$0xf]
        %v5282 = vld [vmem:[%s5255 + $0x9c] sm:$0xff]
        %v5283 = vld [vmem:[%s5255 + $0xa4] sm:$0xf]
        %v5284 = vld [vmem:[%s5255 + $0xa8] sm:$0xff]
        %v5285 = vld [vmem:[%s5255 + $0xb0] sm:$0xf]
        %v5286 = vld [vmem:[%s5255 + $0xb4] sm:$0xff]
        %v5287 = vld [vmem:[%s5255 + $0xbc] sm:$0xf]
        %s5288 = sld [smem:[#allocation2 + $0x12]]
        %v5289 = vstv %s5288
        %v5322 = vunpack.c.l.b16 %v5256
        %v5323 = vunpack.c.h.b16 %v5256
        %v5324 = vunpack.c.l.b16 %v5257
        %v5325 = vunpack.c.l.b16 %v5258
        %v5326 = vunpack.c.h.b16 %v5258
        %v5327 = vunpack.c.l.b16 %v5259
        %v5328 = vunpack.c.l.b16 %v5260
        %v5329 = vunpack.c.h.b16 %v5260
        %v5330 = vunpack.c.l.b16 %v5261
        %v5331 = vunpack.c.l.b16 %v5262
        %v5332 = vunpack.c.h.b16 %v5262
        %v5333 = vunpack.c.l.b16 %v5263
        %v5334 = vunpack.c.l.b16 %v5264
        %v5335 = vunpack.c.h.b16 %v5264
        %v5336 = vunpack.c.l.b16 %v5265
        %v5337 = vunpack.c.l.b16 %v5266
        %v5338 = vunpack.c.h.b16 %v5266
        %v5339 = vunpack.c.l.b16 %v5267
        %v5340 = vunpack.c.l.b16 %v5268
        %v5341 = vunpack.c.h.b16 %v5268
        %v5342 = vunpack.c.l.b16 %v5269
        %v5343 = vunpack.c.l.b16 %v5270
        %v5344 = vunpack.c.h.b16 %v5270
        %v5345 = vunpack.c.l.b16 %v5271
        %v5346 = vunpack.c.l.b16 %v5272
        %v5347 = vunpack.c.h.b16 %v5272
        %v5348 = vunpack.c.l.b16 %v5273
        %v5349 = vunpack.c.l.b16 %v5274
        %v5350 = vunpack.c.h.b16 %v5274
        %v5351 = vunpack.c.l.b16 %v5275
        %v5352 = vunpack.c.l.b16 %v5276
        %v5353 = vunpack.c.h.b16 %v5276
        %v5354 = vunpack.c.l.b16 %v5277
        %v5355 = vunpack.c.l.b16 %v5278
        %v5356 = vunpack.c.h.b16 %v5278
        %v5357 = vunpack.c.l.b16 %v5279
        %v5358 = vunpack.c.l.b16 %v5280
        %v5359 = vunpack.c.h.b16 %v5280
        %v5360 = vunpack.c.l.b16 %v5281
        %v5361 = vunpack.c.l.b16 %v5282
        %v5362 = vunpack.c.h.b16 %v5282
        %v5363 = vunpack.c.l.b16 %v5283
        %v5364 = vunpack.c.l.b16 %v5284
        %v5365 = vunpack.c.h.b16 %v5284
        %v5366 = vunpack.c.l.b16 %v5285
        %v5367 = vunpack.c.l.b16 %v5286
        %v5368 = vunpack.c.h.b16 %v5286
        %v5369 = vunpack.c.l.b16 %v5287
        %v5370 = vpack.c.b16 %v5325, %v5322
        %v5371 = vpack.c.b16 %v5326, %v5323
        %v5372 = vpack.c.b16 %v5327, %v5324
        %v5373 = vpack.c.b16 %v5331, %v5328
        %v5374 = vpack.c.b16 %v5332, %v5329
        %v5375 = vpack.c.b16 %v5333, %v5330
        %v5376 = vpack.c.b16 %v5337, %v5334
        %v5377 = vpack.c.b16 %v5338, %v5335
        %v5378 = vpack.c.b16 %v5339, %v5336
        %v5379 = vpack.c.b16 %v5343, %v5340
        %v5380 = vpack.c.b16 %v5344, %v5341
        %v5381 = vpack.c.b16 %v5345, %v5342
        %v5382 = vpack.c.b16 %v5349, %v5346
        %v5383 = vpack.c.b16 %v5350, %v5347
        %v5384 = vpack.c.b16 %v5351, %v5348
        %v5385 = vpack.c.b16 %v5355, %v5352
        %v5386 = vpack.c.b16 %v5356, %v5353
        %v5387 = vpack.c.b16 %v5357, %v5354
        %v5388 = vpack.c.b16 %v5361, %v5358
        %v5389 = vpack.c.b16 %v5362, %v5359
        %v5390 = vpack.c.b16 %v5363, %v5360
        %v5391 = vpack.c.b16 %v5367, %v5364
        %v5392 = vpack.c.b16 %v5368, %v5365
        %v5393 = vpack.c.b16 %v5369, %v5366
        %5418 = vmatprep.subr.bf16.mxu0 %v5371
        %5419 = vmatpush1.bf16.msra.mxu0 %v5370
        %5420 = vmatprep.subr.bf16.mxu0 %v5374
        %5421 = vmatpush1.bf16.msra.mxu0 %v5373
        %5422 = vmatprep.subr.bf16.mxu0 %v5377
        %5423 = vmatpush1.bf16.msra.mxu0 %v5376
        %5424 = vmatprep.subr.bf16.mxu0 %v5380
        %5425 = vmatpush1.bf16.msra.mxu0 %v5379
        %5426 = vmatprep.subr.bf16.mxu0 %v5383
        %5427 = vmatpush1.bf16.msra.mxu0 %v5382
        %5428 = vmatprep.subr.bf16.mxu0 %v5386
        %5429 = vmatpush1.bf16.msra.mxu0 %v5385
        %5430 = vmatprep.subr.bf16.mxu0 %v5389
        %5431 = vmatpush1.bf16.msra.mxu0 %v5388
        %5432 = vmatprep.subr.bf16.mxu0 %v5392
        %5433 = vmatpush1.bf16.msra.mxu0 %v5391
        %5434 = vmatprep.subr.bf16.mxu0 0
        %5435 = vmatpush1.bf16.msra.mxu0 0
        %5436 = vmatprep.subr.bf16.mxu0 0
        %5437 = vmatpush1.bf16.msra.mxu0 0
        %5438 = vmatprep.subr.bf16.mxu0 0
        %5439 = vmatpush1.bf16.msra.mxu0 0
        %5440 = vmatprep.subr.bf16.mxu0 0
        %5441 = vmatpush1.bf16.msra.mxu0 0
        %5442 = vmatprep.subr.bf16.mxu0 0
        %5443 = vmatpush1.bf16.msra.mxu0 0
        %5444 = vmatprep.subr.bf16.mxu0 0
        %5445 = vmatpush1.bf16.msra.mxu0 0
        %5446 = vmatprep.subr.bf16.mxu0 0
        %5447 = vmatpush1.bf16.msra.mxu0 0
        %5448 = vmatprep.subr.bf16.mxu0 0
        %5449 = vmatpush1.bf16.msra.mxu0 0
        %5450 = vmatprep.mubr.bf16.mxu0 0
        %5451 = vmatmul.mubr.bf16.gmra.mrb[0].mxu0 %v298
        %v5452 = vpop.f32.mrb[0].mxu0
        %v5453 = vadd.f32 %v5289, %v5452
        %v5454 = vpop.f32.mrb[0].mxu0
        %v5455 = vadd.f32 %v5289, %v5454
        %v5456 = vpop.f32.mrb[0].mxu0
        %v5457 = vpop.f32.mrb[0].mxu0
        %5458 = vdwg.mxu0
        %5459 = vmatprep.subr.bf16.mxu0 0
        %5460 = vmatpush1.bf16.msra.mxu0 %v5372
        %5461 = vmatprep.subr.bf16.mxu0 0
        %5462 = vmatpush1.bf16.msra.mxu0 %v5375
        %5463 = vmatprep.subr.bf16.mxu0 0
        %5464 = vmatpush1.bf16.msra.mxu0 %v5378
        %5465 = vmatprep.subr.bf16.mxu0 0
        %5466 = vmatpush1.bf16.msra.mxu0 %v5381
        %5467 = vmatprep.subr.bf16.mxu0 0
        %5468 = vmatpush1.bf16.msra.mxu0 %v5384
        %5469 = vmatprep.subr.bf16.mxu0 0
        %5470 = vmatpush1.bf16.msra.mxu0 %v5387
        %5471 = vmatprep.subr.bf16.mxu0 0
        %5472 = vmatpush1.bf16.msra.mxu0 %v5390
        %5473 = vmatprep.subr.bf16.mxu0 0
        %5474 = vmatpush1.bf16.msra.mxu0 %v5393
        %5475 = vmatprep.subr.bf16.mxu0 0
        %5476 = vmatpush1.bf16.msra.mxu0 0
        %5477 = vmatprep.subr.bf16.mxu0 0
        %5478 = vmatpush1.bf16.msra.mxu0 0
        %5479 = vmatprep.subr.bf16.mxu0 0
        %5480 = vmatpush1.bf16.msra.mxu0 0
        %5481 = vmatprep.subr.bf16.mxu0 0
        %5482 = vmatpush1.bf16.msra.mxu0 0
        %5483 = vmatprep.subr.bf16.mxu0 0
        %5484 = vmatpush1.bf16.msra.mxu0 0
        %5485 = vmatprep.subr.bf16.mxu0 0
        %5486 = vmatpush1.bf16.msra.mxu0 0
        %5487 = vmatprep.subr.bf16.mxu0 0
        %5488 = vmatpush1.bf16.msra.mxu0 0
        %5489 = vmatprep.subr.bf16.mxu0 0
        %5490 = vmatpush1.bf16.msra.mxu0 0
        %5491 = vmatprep.mubr.bf16.mxu0 0
        %5492 = vmatmul.mubr.bf16.gmra.mrb[0].mxu0 %v298
        %v5493 = vpop.f32.mrb[0].mxu0
        %v5494 = vadd.f32 %v5289, %v5493
        %v5495 = vpop.f32.mrb[0].mxu0
        %v5496 = vpop.f32.mrb[0].mxu0
        %v5497 = vpop.f32.mrb[0].mxu0
        %5498 = vdwg.mxu0
        %v5499 = vmax.f32 %v5453, 0.0
        %v5500 = vmax.f32 %v5455, 0.0
        %v5501 = vmax.f32 %v5494, 0.0
        %v5502 = vld [vmem:[%s285] sm:$0xff]
        %v5503 = vld [vmem:[%s285 + $0x8] sm:$0xff]
        %v5504 = vld [vmem:[%s285 + $0x10] sm:$0xff]
        %s5505 = sld [smem:[#allocation5 + $0x12]]
        %v5506 = vstv %s5505
        %v5507 = vmul.f32 %v5506, %v5499
        %v5508 = vmul.f32 %v5506, %v5500
        %v5509 = vmul.f32 %v5506, %v5501
        %v5510 = vadd.f32 %v5502, %v5507
        %v5511 = vadd.f32 %v5503, %v5508
        %v5512 = vadd.f32 %v5504, %v5509
        %5513 = vst [vmem:[%s285] sm:$0xff] %v5510
        %5514 = vst [vmem:[%s285 + $0x8] sm:$0xff] %v5511
        %5515 = vst.msk [vmem:[%s285 + $0x10] sm:$0xff] %vm301, %v5512
        %v5516 = vld [vmem:[%s292] sm:$0xff]
        %v5517 = vld [vmem:[%s292 + $0x8] sm:$0xff]
        %v5518 = vld [vmem:[%s292 + $0x10] sm:$0xff]
        %s5519 = sld [smem:[#allocation5 + $0x92]]
        %v5520 = vstv %s5519
        %v5521 = vmul.f32 %v5520, %v5499
        %v5522 = vmul.f32 %v5520, %v5500
        %v5523 = vmul.f32 %v5520, %v5501
        %v5524 = vadd.f32 %v5516, %v5521
        %v5525 = vadd.f32 %v5517, %v5522
        %v5526 = vadd.f32 %v5518, %v5523
        %5527 = vst [vmem:[%s292] sm:$0xff] %v5524
        %5528 = vst [vmem:[%s292 + $0x8] sm:$0xff] %v5525
        %5529 = vst.msk [vmem:[%s292 + $0x10] sm:$0xff] %vm301, %v5526
        %s5530 = scalar_lea.vmem %s1, 3648
        %v5531 = vld [vmem:[%s5530] sm:$0xff]
        %v5532 = vld [vmem:[%s5530 + $0x8] sm:$0xf]
        %v5533 = vld [vmem:[%s5530 + $0xc] sm:$0xff]
        %v5534 = vld [vmem:[%s5530 + $0x14] sm:$0xf]
        %v5535 = vld [vmem:[%s5530 + $0x18] sm:$0xff]
        %v5536 = vld [vmem:[%s5530 + $0x20] sm:$0xf]
        %v5537 = vld [vmem:[%s5530 + $0x24] sm:$0xff]
        %v5538 = vld [vmem:[%s5530 + $0x2c] sm:$0xf]
        %v5539 = vld [vmem:[%s5530 + $0x30] sm:$0xff]
        %v5540 = vld [vmem:[%s5530 + $0x38] sm:$0xf]
        %v5541 = vld [vmem:[%s5530 + $0x3c] sm:$0xff]
        %v5542 = vld [vmem:[%s5530 + $0x44] sm:$0xf]
        %v5543 = vld [vmem:[%s5530 + $0x48] sm:$0xff]
        %v5544 = vld [vmem:[%s5530 + $0x50] sm:$0xf]
        %v5545 = vld [vmem:[%s5530 + $0x54] sm:$0xff]
        %v5546 = vld [vmem:[%s5530 + $0x5c] sm:$0xf]
        %v5547 = vld [vmem:[%s5530 + $0x60] sm:$0xff]
        %v5548 = vld [vmem:[%s5530 + $0x68] sm:$0xf]
        %v5549 = vld [vmem:[%s5530 + $0x6c] sm:$0xff]
        %v5550 = vld [vmem:[%s5530 + $0x74] sm:$0xf]
        %v5551 = vld [vmem:[%s5530 + $0x78] sm:$0xff]
        %v5552 = vld [vmem:[%s5530 + $0x80] sm:$0xf]
        %v5553 = vld [vmem:[%s5530 + $0x84] sm:$0xff]
        %v5554 = vld [vmem:[%s5530 + $0x8c] sm:$0xf]
        %v5555 = vld [vmem:[%s5530 + $0x90] sm:$0xff]
        %v5556 = vld [vmem:[%s5530 + $0x98] sm:$0xf]
        %v5557 = vld [vmem:[%s5530 + $0x9c] sm:$0xff]
        %v5558 = vld [vmem:[%s5530 + $0xa4] sm:$0xf]
        %v5559 = vld [vmem:[%s5530 + $0xa8] sm:$0xff]
        %v5560 = vld [vmem:[%s5530 + $0xb0] sm:$0xf]
        %v5561 = vld [vmem:[%s5530 + $0xb4] sm:$0xff]
        %v5562 = vld [vmem:[%s5530 + $0xbc] sm:$0xf]
        %s5563 = sld [smem:[#allocation2 + $0x13]]
        %v5564 = vstv %s5563
        %v5597 = vunpack.c.l.b16 %v5531
        %v5598 = vunpack.c.h.b16 %v5531
        %v5599 = vunpack.c.l.b16 %v5532
        %v5600 = vunpack.c.l.b16 %v5533
        %v5601 = vunpack.c.h.b16 %v5533
        %v5602 = vunpack.c.l.b16 %v5534
        %v5603 = vunpack.c.l.b16 %v5535
        %v5604 = vunpack.c.h.b16 %v5535
        %v5605 = vunpack.c.l.b16 %v5536
        %v5606 = vunpack.c.l.b16 %v5537
        %v5607 = vunpack.c.h.b16 %v5537
        %v5608 = vunpack.c.l.b16 %v5538
        %v5609 = vunpack.c.l.b16 %v5539
        %v5610 = vunpack.c.h.b16 %v5539
        %v5611 = vunpack.c.l.b16 %v5540
        %v5612 = vunpack.c.l.b16 %v5541
        %v5613 = vunpack.c.h.b16 %v5541
        %v5614 = vunpack.c.l.b16 %v5542
        %v5615 = vunpack.c.l.b16 %v5543
        %v5616 = vunpack.c.h.b16 %v5543
        %v5617 = vunpack.c.l.b16 %v5544
        %v5618 = vunpack.c.l.b16 %v5545
        %v5619 = vunpack.c.h.b16 %v5545
        %v5620 = vunpack.c.l.b16 %v5546
        %v5621 = vunpack.c.l.b16 %v5547
        %v5622 = vunpack.c.h.b16 %v5547
        %v5623 = vunpack.c.l.b16 %v5548
        %v5624 = vunpack.c.l.b16 %v5549
        %v5625 = vunpack.c.h.b16 %v5549
        %v5626 = vunpack.c.l.b16 %v5550
        %v5627 = vunpack.c.l.b16 %v5551
        %v5628 = vunpack.c.h.b16 %v5551
        %v5629 = vunpack.c.l.b16 %v5552
        %v5630 = vunpack.c.l.b16 %v5553
        %v5631 = vunpack.c.h.b16 %v5553
        %v5632 = vunpack.c.l.b16 %v5554
        %v5633 = vunpack.c.l.b16 %v5555
        %v5634 = vunpack.c.h.b16 %v5555
        %v5635 = vunpack.c.l.b16 %v5556
        %v5636 = vunpack.c.l.b16 %v5557
        %v5637 = vunpack.c.h.b16 %v5557
        %v5638 = vunpack.c.l.b16 %v5558
        %v5639 = vunpack.c.l.b16 %v5559
        %v5640 = vunpack.c.h.b16 %v5559
        %v5641 = vunpack.c.l.b16 %v5560
        %v5642 = vunpack.c.l.b16 %v5561
        %v5643 = vunpack.c.h.b16 %v5561
        %v5644 = vunpack.c.l.b16 %v5562
        %v5645 = vpack.c.b16 %v5600, %v5597
        %v5646 = vpack.c.b16 %v5601, %v5598
        %v5647 = vpack.c.b16 %v5602, %v5599
        %v5648 = vpack.c.b16 %v5606, %v5603
        %v5649 = vpack.c.b16 %v5607, %v5604
        %v5650 = vpack.c.b16 %v5608, %v5605
        %v5651 = vpack.c.b16 %v5612, %v5609
        %v5652 = vpack.c.b16 %v5613, %v5610
        %v5653 = vpack.c.b16 %v5614, %v5611
        %v5654 = vpack.c.b16 %v5618, %v5615
        %v5655 = vpack.c.b16 %v5619, %v5616
        %v5656 = vpack.c.b16 %v5620, %v5617
        %v5657 = vpack.c.b16 %v5624, %v5621
        %v5658 = vpack.c.b16 %v5625, %v5622
        %v5659 = vpack.c.b16 %v5626, %v5623
        %v5660 = vpack.c.b16 %v5630, %v5627
        %v5661 = vpack.c.b16 %v5631, %v5628
        %v5662 = vpack.c.b16 %v5632, %v5629
        %v5663 = vpack.c.b16 %v5636, %v5633
        %v5664 = vpack.c.b16 %v5637, %v5634
        %v5665 = vpack.c.b16 %v5638, %v5635
        %v5666 = vpack.c.b16 %v5642, %v5639
        %v5667 = vpack.c.b16 %v5643, %v5640
        %v5668 = vpack.c.b16 %v5644, %v5641
        %5693 = vmatprep.subr.bf16.mxu0 %v5646
        %5694 = vmatpush1.bf16.msra.mxu0 %v5645
        %5695 = vmatprep.subr.bf16.mxu0 %v5649
        %5696 = vmatpush1.bf16.msra.mxu0 %v5648
        %5697 = vmatprep.subr.bf16.mxu0 %v5652
        %5698 = vmatpush1.bf16.msra.mxu0 %v5651
        %5699 = vmatprep.subr.bf16.mxu0 %v5655
        %5700 = vmatpush1.bf16.msra.mxu0 %v5654
        %5701 = vmatprep.subr.bf16.mxu0 %v5658
        %5702 = vmatpush1.bf16.msra.mxu0 %v5657
        %5703 = vmatprep.subr.bf16.mxu0 %v5661
        %5704 = vmatpush1.bf16.msra.mxu0 %v5660
        %5705 = vmatprep.subr.bf16.mxu0 %v5664
        %5706 = vmatpush1.bf16.msra.mxu0 %v5663
        %5707 = vmatprep.subr.bf16.mxu0 %v5667
        %5708 = vmatpush1.bf16.msra.mxu0 %v5666
        %5709 = vmatprep.subr.bf16.mxu0 0
        %5710 = vmatpush1.bf16.msra.mxu0 0
        %5711 = vmatprep.subr.bf16.mxu0 0
        %5712 = vmatpush1.bf16.msra.mxu0 0
        %5713 = vmatprep.subr.bf16.mxu0 0
        %5714 = vmatpush1.bf16.msra.mxu0 0
        %5715 = vmatprep.subr.bf16.mxu0 0
        %5716 = vmatpush1.bf16.msra.mxu0 0
        %5717 = vmatprep.subr.bf16.mxu0 0
        %5718 = vmatpush1.bf16.msra.mxu0 0
        %5719 = vmatprep.subr.bf16.mxu0 0
        %5720 = vmatpush1.bf16.msra.mxu0 0
        %5721 = vmatprep.subr.bf16.mxu0 0
        %5722 = vmatpush1.bf16.msra.mxu0 0
        %5723 = vmatprep.subr.bf16.mxu0 0
        %5724 = vmatpush1.bf16.msra.mxu0 0
        %5725 = vmatprep.mubr.bf16.mxu0 0
        %5726 = vmatmul.mubr.bf16.gmra.mrb[0].mxu0 %v298
        %v5727 = vpop.f32.mrb[0].mxu0
        %v5728 = vadd.f32 %v5564, %v5727
        %v5729 = vpop.f32.mrb[0].mxu0
        %v5730 = vadd.f32 %v5564, %v5729
        %v5731 = vpop.f32.mrb[0].mxu0
        %v5732 = vpop.f32.mrb[0].mxu0
        %5733 = vdwg.mxu0
        %5734 = vmatprep.subr.bf16.mxu0 0
        %5735 = vmatpush1.bf16.msra.mxu0 %v5647
        %5736 = vmatprep.subr.bf16.mxu0 0
        %5737 = vmatpush1.bf16.msra.mxu0 %v5650
        %5738 = vmatprep.subr.bf16.mxu0 0
        %5739 = vmatpush1.bf16.msra.mxu0 %v5653
        %5740 = vmatprep.subr.bf16.mxu0 0
        %5741 = vmatpush1.bf16.msra.mxu0 %v5656
        %5742 = vmatprep.subr.bf16.mxu0 0
        %5743 = vmatpush1.bf16.msra.mxu0 %v5659
        %5744 = vmatprep.subr.bf16.mxu0 0
        %5745 = vmatpush1.bf16.msra.mxu0 %v5662
        %5746 = vmatprep.subr.bf16.mxu0 0
        %5747 = vmatpush1.bf16.msra.mxu0 %v5665
        %5748 = vmatprep.subr.bf16.mxu0 0
        %5749 = vmatpush1.bf16.msra.mxu0 %v5668
        %5750 = vmatprep.subr.bf16.mxu0 0
        %5751 = vmatpush1.bf16.msra.mxu0 0
        %5752 = vmatprep.subr.bf16.mxu0 0
        %5753 = vmatpush1.bf16.msra.mxu0 0
        %5754 = vmatprep.subr.bf16.mxu0 0
        %5755 = vmatpush1.bf16.msra.mxu0 0
        %5756 = vmatprep.subr.bf16.mxu0 0
        %5757 = vmatpush1.bf16.msra.mxu0 0
        %5758 = vmatprep.subr.bf16.mxu0 0
        %5759 = vmatpush1.bf16.msra.mxu0 0
        %5760 = vmatprep.subr.bf16.mxu0 0
        %5761 = vmatpush1.bf16.msra.mxu0 0
        %5762 = vmatprep.subr.bf16.mxu0 0
        %5763 = vmatpush1.bf16.msra.mxu0 0
        %5764 = vmatprep.subr.bf16.mxu0 0
        %5765 = vmatpush1.bf16.msra.mxu0 0
        %5766 = vmatprep.mubr.bf16.mxu0 0
        %5767 = vmatmul.mubr.bf16.gmra.mrb[0].mxu0 %v298
        %v5768 = vpop.f32.mrb[0].mxu0
        %v5769 = vadd.f32 %v5564, %v5768
        %v5770 = vpop.f32.mrb[0].mxu0
        %v5771 = vpop.f32.mrb[0].mxu0
        %v5772 = vpop.f32.mrb[0].mxu0
        %5773 = vdwg.mxu0
        %v5774 = vmax.f32 %v5728, 0.0
        %v5775 = vmax.f32 %v5730, 0.0
        %v5776 = vmax.f32 %v5769, 0.0
        %v5777 = vld [vmem:[%s285] sm:$0xff]
        %v5778 = vld [vmem:[%s285 + $0x8] sm:$0xff]
        %v5779 = vld [vmem:[%s285 + $0x10] sm:$0xff]
        %s5780 = sld [smem:[#allocation5 + $0x13]]
        %v5781 = vstv %s5780
        %v5782 = vmul.f32 %v5781, %v5774
        %v5783 = vmul.f32 %v5781, %v5775
        %v5784 = vmul.f32 %v5781, %v5776
        %v5785 = vadd.f32 %v5777, %v5782
        %v5786 = vadd.f32 %v5778, %v5783
        %v5787 = vadd.f32 %v5779, %v5784
        %5788 = vst [vmem:[%s285] sm:$0xff] %v5785
        %5789 = vst [vmem:[%s285 + $0x8] sm:$0xff] %v5786
        %5790 = vst.msk [vmem:[%s285 + $0x10] sm:$0xff] %vm301, %v5787
        %v5791 = vld [vmem:[%s292] sm:$0xff]
        %v5792 = vld [vmem:[%s292 + $0x8] sm:$0xff]
        %v5793 = vld [vmem:[%s292 + $0x10] sm:$0xff]
        %s5794 = sld [smem:[#allocation5 + $0x93]]
        %v5795 = vstv %s5794
        %v5796 = vmul.f32 %v5795, %v5774
        %v5797 = vmul.f32 %v5795, %v5775
        %v5798 = vmul.f32 %v5795, %v5776
        %v5799 = vadd.f32 %v5791, %v5796
        %v5800 = vadd.f32 %v5792, %v5797
        %v5801 = vadd.f32 %v5793, %v5798
        %5802 = vst [vmem:[%s292] sm:$0xff] %v5799
        %5803 = vst [vmem:[%s292 + $0x8] sm:$0xff] %v5800
        %5804 = vst.msk [vmem:[%s292 + $0x10] sm:$0xff] %vm301, %v5801
        %s5805 = scalar_lea.vmem %s1, 3840
        %v5806 = vld [vmem:[%s5805] sm:$0xff]
        %v5807 = vld [vmem:[%s5805 + $0x8] sm:$0xf]
        %v5808 = vld [vmem:[%s5805 + $0xc] sm:$0xff]
        %v5809 = vld [vmem:[%s5805 + $0x14] sm:$0xf]
        %v5810 = vld [vmem:[%s5805 + $0x18] sm:$0xff]
        %v5811 = vld [vmem:[%s5805 + $0x20] sm:$0xf]
        %v5812 = vld [vmem:[%s5805 + $0x24] sm:$0xff]
        %v5813 = vld [vmem:[%s5805 + $0x2c] sm:$0xf]
        %v5814 = vld [vmem:[%s5805 + $0x30] sm:$0xff]
        %v5815 = vld [vmem:[%s5805 + $0x38] sm:$0xf]
        %v5816 = vld [vmem:[%s5805 + $0x3c] sm:$0xff]
        %v5817 = vld [vmem:[%s5805 + $0x44] sm:$0xf]
        %v5818 = vld [vmem:[%s5805 + $0x48] sm:$0xff]
        %v5819 = vld [vmem:[%s5805 + $0x50] sm:$0xf]
        %v5820 = vld [vmem:[%s5805 + $0x54] sm:$0xff]
        %v5821 = vld [vmem:[%s5805 + $0x5c] sm:$0xf]
        %v5822 = vld [vmem:[%s5805 + $0x60] sm:$0xff]
        %v5823 = vld [vmem:[%s5805 + $0x68] sm:$0xf]
        %v5824 = vld [vmem:[%s5805 + $0x6c] sm:$0xff]
        %v5825 = vld [vmem:[%s5805 + $0x74] sm:$0xf]
        %v5826 = vld [vmem:[%s5805 + $0x78] sm:$0xff]
        %v5827 = vld [vmem:[%s5805 + $0x80] sm:$0xf]
        %v5828 = vld [vmem:[%s5805 + $0x84] sm:$0xff]
        %v5829 = vld [vmem:[%s5805 + $0x8c] sm:$0xf]
        %v5830 = vld [vmem:[%s5805 + $0x90] sm:$0xff]
        %v5831 = vld [vmem:[%s5805 + $0x98] sm:$0xf]
        %v5832 = vld [vmem:[%s5805 + $0x9c] sm:$0xff]
        %v5833 = vld [vmem:[%s5805 + $0xa4] sm:$0xf]
        %v5834 = vld [vmem:[%s5805 + $0xa8] sm:$0xff]
        %v5835 = vld [vmem:[%s5805 + $0xb0] sm:$0xf]
        %v5836 = vld [vmem:[%s5805 + $0xb4] sm:$0xff]
        %v5837 = vld [vmem:[%s5805 + $0xbc] sm:$0xf]
        %s5838 = sld [smem:[#allocation2 + $0x14]]
        %v5839 = vstv %s5838
        %v5872 = vunpack.c.l.b16 %v5806
        %v5873 = vunpack.c.h.b16 %v5806
        %v5874 = vunpack.c.l.b16 %v5807
        %v5875 = vunpack.c.l.b16 %v5808
        %v5876 = vunpack.c.h.b16 %v5808
        %v5877 = vunpack.c.l.b16 %v5809
        %v5878 = vunpack.c.l.b16 %v5810
        %v5879 = vunpack.c.h.b16 %v5810
        %v5880 = vunpack.c.l.b16 %v5811
        %v5881 = vunpack.c.l.b16 %v5812
        %v5882 = vunpack.c.h.b16 %v5812
        %v5883 = vunpack.c.l.b16 %v5813
        %v5884 = vunpack.c.l.b16 %v5814
        %v5885 = vunpack.c.h.b16 %v5814
        %v5886 = vunpack.c.l.b16 %v5815
        %v5887 = vunpack.c.l.b16 %v5816
        %v5888 = vunpack.c.h.b16 %v5816
        %v5889 = vunpack.c.l.b16 %v5817
        %v5890 = vunpack.c.l.b16 %v5818
        %v5891 = vunpack.c.h.b16 %v5818
        %v5892 = vunpack.c.l.b16 %v5819
        %v5893 = vunpack.c.l.b16 %v5820
        %v5894 = vunpack.c.h.b16 %v5820
        %v5895 = vunpack.c.l.b16 %v5821
        %v5896 = vunpack.c.l.b16 %v5822
        %v5897 = vunpack.c.h.b16 %v5822
        %v5898 = vunpack.c.l.b16 %v5823
        %v5899 = vunpack.c.l.b16 %v5824
        %v5900 = vunpack.c.h.b16 %v5824
        %v5901 = vunpack.c.l.b16 %v5825
        %v5902 = vunpack.c.l.b16 %v5826
        %v5903 = vunpack.c.h.b16 %v5826
        %v5904 = vunpack.c.l.b16 %v5827
        %v5905 = vunpack.c.l.b16 %v5828
        %v5906 = vunpack.c.h.b16 %v5828
        %v5907 = vunpack.c.l.b16 %v5829
        %v5908 = vunpack.c.l.b16 %v5830
        %v5909 = vunpack.c.h.b16 %v5830
        %v5910 = vunpack.c.l.b16 %v5831
        %v5911 = vunpack.c.l.b16 %v5832
        %v5912 = vunpack.c.h.b16 %v5832
        %v5913 = vunpack.c.l.b16 %v5833
        %v5914 = vunpack.c.l.b16 %v5834
        %v5915 = vunpack.c.h.b16 %v5834
        %v5916 = vunpack.c.l.b16 %v5835
        %v5917 = vunpack.c.l.b16 %v5836
        %v5918 = vunpack.c.h.b16 %v5836
        %v5919 = vunpack.c.l.b16 %v5837
        %v5920 = vpack.c.b16 %v5875, %v5872
        %v5921 = vpack.c.b16 %v5876, %v5873
        %v5922 = vpack.c.b16 %v5877, %v5874
        %v5923 = vpack.c.b16 %v5881, %v5878
        %v5924 = vpack.c.b16 %v5882, %v5879
        %v5925 = vpack.c.b16 %v5883, %v5880
        %v5926 = vpack.c.b16 %v5887, %v5884
        %v5927 = vpack.c.b16 %v5888, %v5885
        %v5928 = vpack.c.b16 %v5889, %v5886
        %v5929 = vpack.c.b16 %v5893, %v5890
        %v5930 = vpack.c.b16 %v5894, %v5891
        %v5931 = vpack.c.b16 %v5895, %v5892
        %v5932 = vpack.c.b16 %v5899, %v5896
        %v5933 = vpack.c.b16 %v5900, %v5897
        %v5934 = vpack.c.b16 %v5901, %v5898
        %v5935 = vpack.c.b16 %v5905, %v5902
        %v5936 = vpack.c.b16 %v5906, %v5903
        %v5937 = vpack.c.b16 %v5907, %v5904
        %v5938 = vpack.c.b16 %v5911, %v5908
        %v5939 = vpack.c.b16 %v5912, %v5909
        %v5940 = vpack.c.b16 %v5913, %v5910
        %v5941 = vpack.c.b16 %v5917, %v5914
        %v5942 = vpack.c.b16 %v5918, %v5915
        %v5943 = vpack.c.b16 %v5919, %v5916
        %5968 = vmatprep.subr.bf16.mxu0 %v5921
        %5969 = vmatpush1.bf16.msra.mxu0 %v5920
        %5970 = vmatprep.subr.bf16.mxu0 %v5924
        %5971 = vmatpush1.bf16.msra.mxu0 %v5923
        %5972 = vmatprep.subr.bf16.mxu0 %v5927
        %5973 = vmatpush1.bf16.msra.mxu0 %v5926
        %5974 = vmatprep.subr.bf16.mxu0 %v5930
        %5975 = vmatpush1.bf16.msra.mxu0 %v5929
        %5976 = vmatprep.subr.bf16.mxu0 %v5933
        %5977 = vmatpush1.bf16.msra.mxu0 %v5932
        %5978 = vmatprep.subr.bf16.mxu0 %v5936
        %5979 = vmatpush1.bf16.msra.mxu0 %v5935
        %5980 = vmatprep.subr.bf16.mxu0 %v5939
        %5981 = vmatpush1.bf16.msra.mxu0 %v5938
        %5982 = vmatprep.subr.bf16.mxu0 %v5942
        %5983 = vmatpush1.bf16.msra.mxu0 %v5941
        %5984 = vmatprep.subr.bf16.mxu0 0
        %5985 = vmatpush1.bf16.msra.mxu0 0
        %5986 = vmatprep.subr.bf16.mxu0 0
        %5987 = vmatpush1.bf16.msra.mxu0 0
        %5988 = vmatprep.subr.bf16.mxu0 0
        %5989 = vmatpush1.bf16.msra.mxu0 0
        %5990 = vmatprep.subr.bf16.mxu0 0
        %5991 = vmatpush1.bf16.msra.mxu0 0
        %5992 = vmatprep.subr.bf16.mxu0 0
        %5993 = vmatpush1.bf16.msra.mxu0 0
        %5994 = vmatprep.subr.bf16.mxu0 0
        %5995 = vmatpush1.bf16.msra.mxu0 0
        %5996 = vmatprep.subr.bf16.mxu0 0
        %5997 = vmatpush1.bf16.msra.mxu0 0
        %5998 = vmatprep.subr.bf16.mxu0 0
        %5999 = vmatpush1.bf16.msra.mxu0 0
        %6000 = vmatprep.mubr.bf16.mxu0 0
        %6001 = vmatmul.mubr.bf16.gmra.mrb[0].mxu0 %v298
        %v6002 = vpop.f32.mrb[0].mxu0
        %v6003 = vadd.f32 %v5839, %v6002
        %v6004 = vpop.f32.mrb[0].mxu0
        %v6005 = vadd.f32 %v5839, %v6004
        %v6006 = vpop.f32.mrb[0].mxu0
        %v6007 = vpop.f32.mrb[0].mxu0
        %6008 = vdwg.mxu0
        %6009 = vmatprep.subr.bf16.mxu0 0
        %6010 = vmatpush1.bf16.msra.mxu0 %v5922
        %6011 = vmatprep.subr.bf16.mxu0 0
        %6012 = vmatpush1.bf16.msra.mxu0 %v5925
        %6013 = vmatprep.subr.bf16.mxu0 0
        %6014 = vmatpush1.bf16.msra.mxu0 %v5928
        %6015 = vmatprep.subr.bf16.mxu0 0
        %6016 = vmatpush1.bf16.msra.mxu0 %v5931
        %6017 = vmatprep.subr.bf16.mxu0 0
        %6018 = vmatpush1.bf16.msra.mxu0 %v5934
        %6019 = vmatprep.subr.bf16.mxu0 0
        %6020 = vmatpush1.bf16.msra.mxu0 %v5937
        %6021 = vmatprep.subr.bf16.mxu0 0
        %6022 = vmatpush1.bf16.msra.mxu0 %v5940
        %6023 = vmatprep.subr.bf16.mxu0 0
        %6024 = vmatpush1.bf16.msra.mxu0 %v5943
        %6025 = vmatprep.subr.bf16.mxu0 0
        %6026 = vmatpush1.bf16.msra.mxu0 0
        %6027 = vmatprep.subr.bf16.mxu0 0
        %6028 = vmatpush1.bf16.msra.mxu0 0
        %6029 = vmatprep.subr.bf16.mxu0 0
        %6030 = vmatpush1.bf16.msra.mxu0 0
        %6031 = vmatprep.subr.bf16.mxu0 0
        %6032 = vmatpush1.bf16.msra.mxu0 0
        %6033 = vmatprep.subr.bf16.mxu0 0
        %6034 = vmatpush1.bf16.msra.mxu0 0
        %6035 = vmatprep.subr.bf16.mxu0 0
        %6036 = vmatpush1.bf16.msra.mxu0 0
        %6037 = vmatprep.subr.bf16.mxu0 0
        %6038 = vmatpush1.bf16.msra.mxu0 0
        %6039 = vmatprep.subr.bf16.mxu0 0
        %6040 = vmatpush1.bf16.msra.mxu0 0
        %6041 = vmatprep.mubr.bf16.mxu0 0
        %6042 = vmatmul.mubr.bf16.gmra.mrb[0].mxu0 %v298
        %v6043 = vpop.f32.mrb[0].mxu0
        %v6044 = vadd.f32 %v5839, %v6043
        %v6045 = vpop.f32.mrb[0].mxu0
        %v6046 = vpop.f32.mrb[0].mxu0
        %v6047 = vpop.f32.mrb[0].mxu0
        %6048 = vdwg.mxu0
        %v6049 = vmax.f32 %v6003, 0.0
        %v6050 = vmax.f32 %v6005, 0.0
        %v6051 = vmax.f32 %v6044, 0.0
        %v6052 = vld [vmem:[%s285] sm:$0xff]
        %v6053 = vld [vmem:[%s285 + $0x8] sm:$0xff]
        %v6054 = vld [vmem:[%s285 + $0x10] sm:$0xff]
        %s6055 = sld [smem:[#allocation5 + $0x14]]
        %v6056 = vstv %s6055
        %v6057 = vmul.f32 %v6056, %v6049
        %v6058 = vmul.f32 %v6056, %v6050
        %v6059 = vmul.f32 %v6056, %v6051
        %v6060 = vadd.f32 %v6052, %v6057
        %v6061 = vadd.f32 %v6053, %v6058
        %v6062 = vadd.f32 %v6054, %v6059
        %6063 = vst [vmem:[%s285] sm:$0xff] %v6060
        %6064 = vst [vmem:[%s285 + $0x8] sm:$0xff] %v6061
        %6065 = vst.msk [vmem:[%s285 + $0x10] sm:$0xff] %vm301, %v6062
        %v6066 = vld [vmem:[%s292] sm:$0xff]
        %v6067 = vld [vmem:[%s292 + $0x8] sm:$0xff]
        %v6068 = vld [vmem:[%s292 + $0x10] sm:$0xff]
        %s6069 = sld [smem:[#allocation5 + $0x94]]
        %v6070 = vstv %s6069
        %v6071 = vmul.f32 %v6070, %v6049
        %v6072 = vmul.f32 %v6070, %v6050
        %v6073 = vmul.f32 %v6070, %v6051
        %v6074 = vadd.f32 %v6066, %v6071
        %v6075 = vadd.f32 %v6067, %v6072
        %v6076 = vadd.f32 %v6068, %v6073
        %6077 = vst [vmem:[%s292] sm:$0xff] %v6074
        %6078 = vst [vmem:[%s292 + $0x8] sm:$0xff] %v6075
        %6079 = vst.msk [vmem:[%s292 + $0x10] sm:$0xff] %vm301, %v6076
        %s6080 = scalar_lea.vmem %s1, 4032
        %v6081 = vld [vmem:[%s6080] sm:$0xff]
        %v6082 = vld [vmem:[%s6080 + $0x8] sm:$0xf]
        %v6083 = vld [vmem:[%s6080 + $0xc] sm:$0xff]
        %v6084 = vld [vmem:[%s6080 + $0x14] sm:$0xf]
        %v6085 = vld [vmem:[%s6080 + $0x18] sm:$0xff]
        %v6086 = vld [vmem:[%s6080 + $0x20] sm:$0xf]
        %v6087 = vld [vmem:[%s6080 + $0x24] sm:$0xff]
        %v6088 = vld [vmem:[%s6080 + $0x2c] sm:$0xf]
        %v6089 = vld [vmem:[%s6080 + $0x30] sm:$0xff]
        %v6090 = vld [vmem:[%s6080 + $0x38] sm:$0xf]
        %v6091 = vld [vmem:[%s6080 + $0x3c] sm:$0xff]
        %v6092 = vld [vmem:[%s6080 + $0x44] sm:$0xf]
        %v6093 = vld [vmem:[%s6080 + $0x48] sm:$0xff]
        %v6094 = vld [vmem:[%s6080 + $0x50] sm:$0xf]
        %v6095 = vld [vmem:[%s6080 + $0x54] sm:$0xff]
        %v6096 = vld [vmem:[%s6080 + $0x5c] sm:$0xf]
        %v6097 = vld [vmem:[%s6080 + $0x60] sm:$0xff]
        %v6098 = vld [vmem:[%s6080 + $0x68] sm:$0xf]
        %v6099 = vld [vmem:[%s6080 + $0x6c] sm:$0xff]
        %v6100 = vld [vmem:[%s6080 + $0x74] sm:$0xf]
        %v6101 = vld [vmem:[%s6080 + $0x78] sm:$0xff]
        %v6102 = vld [vmem:[%s6080 + $0x80] sm:$0xf]
        %v6103 = vld [vmem:[%s6080 + $0x84] sm:$0xff]
        %v6104 = vld [vmem:[%s6080 + $0x8c] sm:$0xf]
        %v6105 = vld [vmem:[%s6080 + $0x90] sm:$0xff]
        %v6106 = vld [vmem:[%s6080 + $0x98] sm:$0xf]
        %v6107 = vld [vmem:[%s6080 + $0x9c] sm:$0xff]
        %v6108 = vld [vmem:[%s6080 + $0xa4] sm:$0xf]
        %v6109 = vld [vmem:[%s6080 + $0xa8] sm:$0xff]
        %v6110 = vld [vmem:[%s6080 + $0xb0] sm:$0xf]
        %v6111 = vld [vmem:[%s6080 + $0xb4] sm:$0xff]
        %v6112 = vld [vmem:[%s6080 + $0xbc] sm:$0xf]
        %s6113 = sld [smem:[#allocation2 + $0x15]]
        %v6114 = vstv %s6113
        %v6147 = vunpack.c.l.b16 %v6081
        %v6148 = vunpack.c.h.b16 %v6081
        %v6149 = vunpack.c.l.b16 %v6082
        %v6150 = vunpack.c.l.b16 %v6083
        %v6151 = vunpack.c.h.b16 %v6083
        %v6152 = vunpack.c.l.b16 %v6084
        %v6153 = vunpack.c.l.b16 %v6085
        %v6154 = vunpack.c.h.b16 %v6085
        %v6155 = vunpack.c.l.b16 %v6086
        %v6156 = vunpack.c.l.b16 %v6087
        %v6157 = vunpack.c.h.b16 %v6087
        %v6158 = vunpack.c.l.b16 %v6088
        %v6159 = vunpack.c.l.b16 %v6089
        %v6160 = vunpack.c.h.b16 %v6089
        %v6161 = vunpack.c.l.b16 %v6090
        %v6162 = vunpack.c.l.b16 %v6091
        %v6163 = vunpack.c.h.b16 %v6091
        %v6164 = vunpack.c.l.b16 %v6092
        %v6165 = vunpack.c.l.b16 %v6093
        %v6166 = vunpack.c.h.b16 %v6093
        %v6167 = vunpack.c.l.b16 %v6094
        %v6168 = vunpack.c.l.b16 %v6095
        %v6169 = vunpack.c.h.b16 %v6095
        %v6170 = vunpack.c.l.b16 %v6096
        %v6171 = vunpack.c.l.b16 %v6097
        %v6172 = vunpack.c.h.b16 %v6097
        %v6173 = vunpack.c.l.b16 %v6098
        %v6174 = vunpack.c.l.b16 %v6099
        %v6175 = vunpack.c.h.b16 %v6099
        %v6176 = vunpack.c.l.b16 %v6100
        %v6177 = vunpack.c.l.b16 %v6101
        %v6178 = vunpack.c.h.b16 %v6101
        %v6179 = vunpack.c.l.b16 %v6102
        %v6180 = vunpack.c.l.b16 %v6103
        %v6181 = vunpack.c.h.b16 %v6103
        %v6182 = vunpack.c.l.b16 %v6104
        %v6183 = vunpack.c.l.b16 %v6105
        %v6184 = vunpack.c.h.b16 %v6105
        %v6185 = vunpack.c.l.b16 %v6106
        %v6186 = vunpack.c.l.b16 %v6107
        %v6187 = vunpack.c.h.b16 %v6107
        %v6188 = vunpack.c.l.b16 %v6108
        %v6189 = vunpack.c.l.b16 %v6109
        %v6190 = vunpack.c.h.b16 %v6109
        %v6191 = vunpack.c.l.b16 %v6110
        %v6192 = vunpack.c.l.b16 %v6111
        %v6193 = vunpack.c.h.b16 %v6111
        %v6194 = vunpack.c.l.b16 %v6112
        %v6195 = vpack.c.b16 %v6150, %v6147
        %v6196 = vpack.c.b16 %v6151, %v6148
        %v6197 = vpack.c.b16 %v6152, %v6149
        %v6198 = vpack.c.b16 %v6156, %v6153
        %v6199 = vpack.c.b16 %v6157, %v6154
        %v6200 = vpack.c.b16 %v6158, %v6155
        %v6201 = vpack.c.b16 %v6162, %v6159
        %v6202 = vpack.c.b16 %v6163, %v6160
        %v6203 = vpack.c.b16 %v6164, %v6161
        %v6204 = vpack.c.b16 %v6168, %v6165
        %v6205 = vpack.c.b16 %v6169, %v6166
        %v6206 = vpack.c.b16 %v6170, %v6167
        %v6207 = vpack.c.b16 %v6174, %v6171
        %v6208 = vpack.c.b16 %v6175, %v6172
        %v6209 = vpack.c.b16 %v6176, %v6173
        %v6210 = vpack.c.b16 %v6180, %v6177
        %v6211 = vpack.c.b16 %v6181, %v6178
        %v6212 = vpack.c.b16 %v6182, %v6179
        %v6213 = vpack.c.b16 %v6186, %v6183
        %v6214 = vpack.c.b16 %v6187, %v6184
        %v6215 = vpack.c.b16 %v6188, %v6185
        %v6216 = vpack.c.b16 %v6192, %v6189
        %v6217 = vpack.c.b16 %v6193, %v6190
        %v6218 = vpack.c.b16 %v6194, %v6191
        %6243 = vmatprep.subr.bf16.mxu0 %v6196
        %6244 = vmatpush1.bf16.msra.mxu0 %v6195
        %6245 = vmatprep.subr.bf16.mxu0 %v6199
        %6246 = vmatpush1.bf16.msra.mxu0 %v6198
        %6247 = vmatprep.subr.bf16.mxu0 %v6202
        %6248 = vmatpush1.bf16.msra.mxu0 %v6201
        %6249 = vmatprep.subr.bf16.mxu0 %v6205
        %6250 = vmatpush1.bf16.msra.mxu0 %v6204
        %6251 = vmatprep.subr.bf16.mxu0 %v6208
        %6252 = vmatpush1.bf16.msra.mxu0 %v6207
        %6253 = vmatprep.subr.bf16.mxu0 %v6211
        %6254 = vmatpush1.bf16.msra.mxu0 %v6210
        %6255 = vmatprep.subr.bf16.mxu0 %v6214
        %6256 = vmatpush1.bf16.msra.mxu0 %v6213
        %6257 = vmatprep.subr.bf16.mxu0 %v6217
        %6258 = vmatpush1.bf16.msra.mxu0 %v6216
        %6259 = vmatprep.subr.bf16.mxu0 0
        %6260 = vmatpush1.bf16.msra.mxu0 0
        %6261 = vmatprep.subr.bf16.mxu0 0
        %6262 = vmatpush1.bf16.msra.mxu0 0
        %6263 = vmatprep.subr.bf16.mxu0 0
        %6264 = vmatpush1.bf16.msra.mxu0 0
        %6265 = vmatprep.subr.bf16.mxu0 0
        %6266 = vmatpush1.bf16.msra.mxu0 0
        %6267 = vmatprep.subr.bf16.mxu0 0
        %6268 = vmatpush1.bf16.msra.mxu0 0
        %6269 = vmatprep.subr.bf16.mxu0 0
        %6270 = vmatpush1.bf16.msra.mxu0 0
        %6271 = vmatprep.subr.bf16.mxu0 0
        %6272 = vmatpush1.bf16.msra.mxu0 0
        %6273 = vmatprep.subr.bf16.mxu0 0
        %6274 = vmatpush1.bf16.msra.mxu0 0
        %6275 = vmatprep.mubr.bf16.mxu0 0
        %6276 = vmatmul.mubr.bf16.gmra.mrb[0].mxu0 %v298
        %v6277 = vpop.f32.mrb[0].mxu0
        %v6278 = vadd.f32 %v6114, %v6277
        %v6279 = vpop.f32.mrb[0].mxu0
        %v6280 = vadd.f32 %v6114, %v6279
        %v6281 = vpop.f32.mrb[0].mxu0
        %v6282 = vpop.f32.mrb[0].mxu0
        %6283 = vdwg.mxu0
        %6284 = vmatprep.subr.bf16.mxu0 0
        %6285 = vmatpush1.bf16.msra.mxu0 %v6197
        %6286 = vmatprep.subr.bf16.mxu0 0
        %6287 = vmatpush1.bf16.msra.mxu0 %v6200
        %6288 = vmatprep.subr.bf16.mxu0 0
        %6289 = vmatpush1.bf16.msra.mxu0 %v6203
        %6290 = vmatprep.subr.bf16.mxu0 0
        %6291 = vmatpush1.bf16.msra.mxu0 %v6206
        %6292 = vmatprep.subr.bf16.mxu0 0
        %6293 = vmatpush1.bf16.msra.mxu0 %v6209
        %6294 = vmatprep.subr.bf16.mxu0 0
        %6295 = vmatpush1.bf16.msra.mxu0 %v6212
        %6296 = vmatprep.subr.bf16.mxu0 0
        %6297 = vmatpush1.bf16.msra.mxu0 %v6215
        %6298 = vmatprep.subr.bf16.mxu0 0
        %6299 = vmatpush1.bf16.msra.mxu0 %v6218
        %6300 = vmatprep.subr.bf16.mxu0 0
        %6301 = vmatpush1.bf16.msra.mxu0 0
        %6302 = vmatprep.subr.bf16.mxu0 0
        %6303 = vmatpush1.bf16.msra.mxu0 0
        %6304 = vmatprep.subr.bf16.mxu0 0
        %6305 = vmatpush1.bf16.msra.mxu0 0
        %6306 = vmatprep.subr.bf16.mxu0 0
        %6307 = vmatpush1.bf16.msra.mxu0 0
        %6308 = vmatprep.subr.bf16.mxu0 0
        %6309 = vmatpush1.bf16.msra.mxu0 0
        %6310 = vmatprep.subr.bf16.mxu0 0
        %6311 = vmatpush1.bf16.msra.mxu0 0
        %6312 = vmatprep.subr.bf16.mxu0 0
        %6313 = vmatpush1.bf16.msra.mxu0 0
        %6314 = vmatprep.subr.bf16.mxu0 0
        %6315 = vmatpush1.bf16.msra.mxu0 0
        %6316 = vmatprep.mubr.bf16.mxu0 0
        %6317 = vmatmul.mubr.bf16.gmra.mrb[0].mxu0 %v298
        %v6318 = vpop.f32.mrb[0].mxu0
        %v6319 = vadd.f32 %v6114, %v6318
        %v6320 = vpop.f32.mrb[0].mxu0
        %v6321 = vpop.f32.mrb[0].mxu0
        %v6322 = vpop.f32.mrb[0].mxu0
        %6323 = vdwg.mxu0
        %v6324 = vmax.f32 %v6278, 0.0
        %v6325 = vmax.f32 %v6280, 0.0
        %v6326 = vmax.f32 %v6319, 0.0
        %v6327 = vld [vmem:[%s285] sm:$0xff]
        %v6328 = vld [vmem:[%s285 + $0x8] sm:$0xff]
        %v6329 = vld [vmem:[%s285 + $0x10] sm:$0xff]
        %s6330 = sld [smem:[#allocation5 + $0x15]]
        %v6331 = vstv %s6330
        %v6332 = vmul.f32 %v6331, %v6324
        %v6333 = vmul.f32 %v6331, %v6325
        %v6334 = vmul.f32 %v6331, %v6326
        %v6335 = vadd.f32 %v6327, %v6332
        %v6336 = vadd.f32 %v6328, %v6333
        %v6337 = vadd.f32 %v6329, %v6334
        %6338 = vst [vmem:[%s285] sm:$0xff] %v6335
        %6339 = vst [vmem:[%s285 + $0x8] sm:$0xff] %v6336
        %6340 = vst.msk [vmem:[%s285 + $0x10] sm:$0xff] %vm301, %v6337
        %v6341 = vld [vmem:[%s292] sm:$0xff]
        %v6342 = vld [vmem:[%s292 + $0x8] sm:$0xff]
        %v6343 = vld [vmem:[%s292 + $0x10] sm:$0xff]
        %s6344 = sld [smem:[#allocation5 + $0x95]]
        %v6345 = vstv %s6344
        %v6346 = vmul.f32 %v6345, %v6324
        %v6347 = vmul.f32 %v6345, %v6325
        %v6348 = vmul.f32 %v6345, %v6326
        %v6349 = vadd.f32 %v6341, %v6346
        %v6350 = vadd.f32 %v6342, %v6347
        %v6351 = vadd.f32 %v6343, %v6348
        %6352 = vst [vmem:[%s292] sm:$0xff] %v6349
        %6353 = vst [vmem:[%s292 + $0x8] sm:$0xff] %v6350
        %6354 = vst.msk [vmem:[%s292 + $0x10] sm:$0xff] %vm301, %v6351
        %s6355 = scalar_lea.vmem %s1, 4224
        %v6356 = vld [vmem:[%s6355] sm:$0xff]
        %v6357 = vld [vmem:[%s6355 + $0x8] sm:$0xf]
        %v6358 = vld [vmem:[%s6355 + $0xc] sm:$0xff]
        %v6359 = vld [vmem:[%s6355 + $0x14] sm:$0xf]
        %v6360 = vld [vmem:[%s6355 + $0x18] sm:$0xff]
        %v6361 = vld [vmem:[%s6355 + $0x20] sm:$0xf]
        %v6362 = vld [vmem:[%s6355 + $0x24] sm:$0xff]
        %v6363 = vld [vmem:[%s6355 + $0x2c] sm:$0xf]
        %v6364 = vld [vmem:[%s6355 + $0x30] sm:$0xff]
        %v6365 = vld [vmem:[%s6355 + $0x38] sm:$0xf]
        %v6366 = vld [vmem:[%s6355 + $0x3c] sm:$0xff]
        %v6367 = vld [vmem:[%s6355 + $0x44] sm:$0xf]
        %v6368 = vld [vmem:[%s6355 + $0x48] sm:$0xff]
        %v6369 = vld [vmem:[%s6355 + $0x50] sm:$0xf]
        %v6370 = vld [vmem:[%s6355 + $0x54] sm:$0xff]
        %v6371 = vld [vmem:[%s6355 + $0x5c] sm:$0xf]
        %v6372 = vld [vmem:[%s6355 + $0x60] sm:$0xff]
        %v6373 = vld [vmem:[%s6355 + $0x68] sm:$0xf]
        %v6374 = vld [vmem:[%s6355 + $0x6c] sm:$0xff]
        %v6375 = vld [vmem:[%s6355 + $0x74] sm:$0xf]
        %v6376 = vld [vmem:[%s6355 + $0x78] sm:$0xff]
        %v6377 = vld [vmem:[%s6355 + $0x80] sm:$0xf]
        %v6378 = vld [vmem:[%s6355 + $0x84] sm:$0xff]
        %v6379 = vld [vmem:[%s6355 + $0x8c] sm:$0xf]
        %v6380 = vld [vmem:[%s6355 + $0x90] sm:$0xff]
        %v6381 = vld [vmem:[%s6355 + $0x98] sm:$0xf]
        %v6382 = vld [vmem:[%s6355 + $0x9c] sm:$0xff]
        %v6383 = vld [vmem:[%s6355 + $0xa4] sm:$0xf]
        %v6384 = vld [vmem:[%s6355 + $0xa8] sm:$0xff]
        %v6385 = vld [vmem:[%s6355 + $0xb0] sm:$0xf]
        %v6386 = vld [vmem:[%s6355 + $0xb4] sm:$0xff]
        %v6387 = vld [vmem:[%s6355 + $0xbc] sm:$0xf]
        %s6388 = sld [smem:[#allocation2 + $0x16]]
        %v6389 = vstv %s6388
        %v6422 = vunpack.c.l.b16 %v6356
        %v6423 = vunpack.c.h.b16 %v6356
        %v6424 = vunpack.c.l.b16 %v6357
        %v6425 = vunpack.c.l.b16 %v6358
        %v6426 = vunpack.c.h.b16 %v6358
        %v6427 = vunpack.c.l.b16 %v6359
        %v6428 = vunpack.c.l.b16 %v6360
        %v6429 = vunpack.c.h.b16 %v6360
        %v6430 = vunpack.c.l.b16 %v6361
        %v6431 = vunpack.c.l.b16 %v6362
        %v6432 = vunpack.c.h.b16 %v6362
        %v6433 = vunpack.c.l.b16 %v6363
        %v6434 = vunpack.c.l.b16 %v6364
        %v6435 = vunpack.c.h.b16 %v6364
        %v6436 = vunpack.c.l.b16 %v6365
        %v6437 = vunpack.c.l.b16 %v6366
        %v6438 = vunpack.c.h.b16 %v6366
        %v6439 = vunpack.c.l.b16 %v6367
        %v6440 = vunpack.c.l.b16 %v6368
        %v6441 = vunpack.c.h.b16 %v6368
        %v6442 = vunpack.c.l.b16 %v6369
        %v6443 = vunpack.c.l.b16 %v6370
        %v6444 = vunpack.c.h.b16 %v6370
        %v6445 = vunpack.c.l.b16 %v6371
        %v6446 = vunpack.c.l.b16 %v6372
        %v6447 = vunpack.c.h.b16 %v6372
        %v6448 = vunpack.c.l.b16 %v6373
        %v6449 = vunpack.c.l.b16 %v6374
        %v6450 = vunpack.c.h.b16 %v6374
        %v6451 = vunpack.c.l.b16 %v6375
        %v6452 = vunpack.c.l.b16 %v6376
        %v6453 = vunpack.c.h.b16 %v6376
        %v6454 = vunpack.c.l.b16 %v6377
        %v6455 = vunpack.c.l.b16 %v6378
        %v6456 = vunpack.c.h.b16 %v6378
        %v6457 = vunpack.c.l.b16 %v6379
        %v6458 = vunpack.c.l.b16 %v6380
        %v6459 = vunpack.c.h.b16 %v6380
        %v6460 = vunpack.c.l.b16 %v6381
        %v6461 = vunpack.c.l.b16 %v6382
        %v6462 = vunpack.c.h.b16 %v6382
        %v6463 = vunpack.c.l.b16 %v6383
        %v6464 = vunpack.c.l.b16 %v6384
        %v6465 = vunpack.c.h.b16 %v6384
        %v6466 = vunpack.c.l.b16 %v6385
        %v6467 = vunpack.c.l.b16 %v6386
        %v6468 = vunpack.c.h.b16 %v6386
        %v6469 = vunpack.c.l.b16 %v6387
        %v6470 = vpack.c.b16 %v6425, %v6422
        %v6471 = vpack.c.b16 %v6426, %v6423
        %v6472 = vpack.c.b16 %v6427, %v6424
        %v6473 = vpack.c.b16 %v6431, %v6428
        %v6474 = vpack.c.b16 %v6432, %v6429
        %v6475 = vpack.c.b16 %v6433, %v6430
        %v6476 = vpack.c.b16 %v6437, %v6434
        %v6477 = vpack.c.b16 %v6438, %v6435
        %v6478 = vpack.c.b16 %v6439, %v6436
        %v6479 = vpack.c.b16 %v6443, %v6440
        %v6480 = vpack.c.b16 %v6444, %v6441
        %v6481 = vpack.c.b16 %v6445, %v6442
        %v6482 = vpack.c.b16 %v6449, %v6446
        %v6483 = vpack.c.b16 %v6450, %v6447
        %v6484 = vpack.c.b16 %v6451, %v6448
        %v6485 = vpack.c.b16 %v6455, %v6452
        %v6486 = vpack.c.b16 %v6456, %v6453
        %v6487 = vpack.c.b16 %v6457, %v6454
        %v6488 = vpack.c.b16 %v6461, %v6458
        %v6489 = vpack.c.b16 %v6462, %v6459
        %v6490 = vpack.c.b16 %v6463, %v6460
        %v6491 = vpack.c.b16 %v6467, %v6464
        %v6492 = vpack.c.b16 %v6468, %v6465
        %v6493 = vpack.c.b16 %v6469, %v6466
        %6518 = vmatprep.subr.bf16.mxu0 %v6471
        %6519 = vmatpush1.bf16.msra.mxu0 %v6470
        %6520 = vmatprep.subr.bf16.mxu0 %v6474
        %6521 = vmatpush1.bf16.msra.mxu0 %v6473
        %6522 = vmatprep.subr.bf16.mxu0 %v6477
        %6523 = vmatpush1.bf16.msra.mxu0 %v6476
        %6524 = vmatprep.subr.bf16.mxu0 %v6480
        %6525 = vmatpush1.bf16.msra.mxu0 %v6479
        %6526 = vmatprep.subr.bf16.mxu0 %v6483
        %6527 = vmatpush1.bf16.msra.mxu0 %v6482
        %6528 = vmatprep.subr.bf16.mxu0 %v6486
        %6529 = vmatpush1.bf16.msra.mxu0 %v6485
        %6530 = vmatprep.subr.bf16.mxu0 %v6489
        %6531 = vmatpush1.bf16.msra.mxu0 %v6488
        %6532 = vmatprep.subr.bf16.mxu0 %v6492
        %6533 = vmatpush1.bf16.msra.mxu0 %v6491
        %6534 = vmatprep.subr.bf16.mxu0 0
        %6535 = vmatpush1.bf16.msra.mxu0 0
        %6536 = vmatprep.subr.bf16.mxu0 0
        %6537 = vmatpush1.bf16.msra.mxu0 0
        %6538 = vmatprep.subr.bf16.mxu0 0
        %6539 = vmatpush1.bf16.msra.mxu0 0
        %6540 = vmatprep.subr.bf16.mxu0 0
        %6541 = vmatpush1.bf16.msra.mxu0 0
        %6542 = vmatprep.subr.bf16.mxu0 0
        %6543 = vmatpush1.bf16.msra.mxu0 0
        %6544 = vmatprep.subr.bf16.mxu0 0
        %6545 = vmatpush1.bf16.msra.mxu0 0
        %6546 = vmatprep.subr.bf16.mxu0 0
        %6547 = vmatpush1.bf16.msra.mxu0 0
        %6548 = vmatprep.subr.bf16.mxu0 0
        %6549 = vmatpush1.bf16.msra.mxu0 0
        %6550 = vmatprep.mubr.bf16.mxu0 0
        %6551 = vmatmul.mubr.bf16.gmra.mrb[0].mxu0 %v298
        %v6552 = vpop.f32.mrb[0].mxu0
        %v6553 = vadd.f32 %v6389, %v6552
        %v6554 = vpop.f32.mrb[0].mxu0
        %v6555 = vadd.f32 %v6389, %v6554
        %v6556 = vpop.f32.mrb[0].mxu0
        %v6557 = vpop.f32.mrb[0].mxu0
        %6558 = vdwg.mxu0
        %6559 = vmatprep.subr.bf16.mxu0 0
        %6560 = vmatpush1.bf16.msra.mxu0 %v6472
        %6561 = vmatprep.subr.bf16.mxu0 0
        %6562 = vmatpush1.bf16.msra.mxu0 %v6475
        %6563 = vmatprep.subr.bf16.mxu0 0
        %6564 = vmatpush1.bf16.msra.mxu0 %v6478
        %6565 = vmatprep.subr.bf16.mxu0 0
        %6566 = vmatpush1.bf16.msra.mxu0 %v6481
        %6567 = vmatprep.subr.bf16.mxu0 0
        %6568 = vmatpush1.bf16.msra.mxu0 %v6484
        %6569 = vmatprep.subr.bf16.mxu0 0
        %6570 = vmatpush1.bf16.msra.mxu0 %v6487
        %6571 = vmatprep.subr.bf16.mxu0 0
        %6572 = vmatpush1.bf16.msra.mxu0 %v6490
        %6573 = vmatprep.subr.bf16.mxu0 0
        %6574 = vmatpush1.bf16.msra.mxu0 %v6493
        %6575 = vmatprep.subr.bf16.mxu0 0
        %6576 = vmatpush1.bf16.msra.mxu0 0
        %6577 = vmatprep.subr.bf16.mxu0 0
        %6578 = vmatpush1.bf16.msra.mxu0 0
        %6579 = vmatprep.subr.bf16.mxu0 0
        %6580 = vmatpush1.bf16.msra.mxu0 0
        %6581 = vmatprep.subr.bf16.mxu0 0
        %6582 = vmatpush1.bf16.msra.mxu0 0
        %6583 = vmatprep.subr.bf16.mxu0 0
        %6584 = vmatpush1.bf16.msra.mxu0 0
        %6585 = vmatprep.subr.bf16.mxu0 0
        %6586 = vmatpush1.bf16.msra.mxu0 0
        %6587 = vmatprep.subr.bf16.mxu0 0
        %6588 = vmatpush1.bf16.msra.mxu0 0
        %6589 = vmatprep.subr.bf16.mxu0 0
        %6590 = vmatpush1.bf16.msra.mxu0 0
        %6591 = vmatprep.mubr.bf16.mxu0 0
        %6592 = vmatmul.mubr.bf16.gmra.mrb[0].mxu0 %v298
        %v6593 = vpop.f32.mrb[0].mxu0
        %v6594 = vadd.f32 %v6389, %v6593
        %v6595 = vpop.f32.mrb[0].mxu0
        %v6596 = vpop.f32.mrb[0].mxu0
        %v6597 = vpop.f32.mrb[0].mxu0
        %6598 = vdwg.mxu0
        %v6599 = vmax.f32 %v6553, 0.0
        %v6600 = vmax.f32 %v6555, 0.0
        %v6601 = vmax.f32 %v6594, 0.0
        %v6602 = vld [vmem:[%s285] sm:$0xff]
        %v6603 = vld [vmem:[%s285 + $0x8] sm:$0xff]
        %v6604 = vld [vmem:[%s285 + $0x10] sm:$0xff]
        %s6605 = sld [smem:[#allocation5 + $0x16]]
        %v6606 = vstv %s6605
        %v6607 = vmul.f32 %v6606, %v6599
        %v6608 = vmul.f32 %v6606, %v6600
        %v6609 = vmul.f32 %v6606, %v6601
        %v6610 = vadd.f32 %v6602, %v6607
        %v6611 = vadd.f32 %v6603, %v6608
        %v6612 = vadd.f32 %v6604, %v6609
        %6613 = vst [vmem:[%s285] sm:$0xff] %v6610
        %6614 = vst [vmem:[%s285 + $0x8] sm:$0xff] %v6611
        %6615 = vst.msk [vmem:[%s285 + $0x10] sm:$0xff] %vm301, %v6612
        %v6616 = vld [vmem:[%s292] sm:$0xff]
        %v6617 = vld [vmem:[%s292 + $0x8] sm:$0xff]
        %v6618 = vld [vmem:[%s292 + $0x10] sm:$0xff]
        %s6619 = sld [smem:[#allocation5 + $0x96]]
        %v6620 = vstv %s6619
        %v6621 = vmul.f32 %v6620, %v6599
        %v6622 = vmul.f32 %v6620, %v6600
        %v6623 = vmul.f32 %v6620, %v6601
        %v6624 = vadd.f32 %v6616, %v6621
        %v6625 = vadd.f32 %v6617, %v6622
        %v6626 = vadd.f32 %v6618, %v6623
        %6627 = vst [vmem:[%s292] sm:$0xff] %v6624
        %6628 = vst [vmem:[%s292 + $0x8] sm:$0xff] %v6625
        %6629 = vst.msk [vmem:[%s292 + $0x10] sm:$0xff] %vm301, %v6626
        %s6630 = scalar_lea.vmem %s1, 4416
        %v6631 = vld [vmem:[%s6630] sm:$0xff]
        %v6632 = vld [vmem:[%s6630 + $0x8] sm:$0xf]
        %v6633 = vld [vmem:[%s6630 + $0xc] sm:$0xff]
        %v6634 = vld [vmem:[%s6630 + $0x14] sm:$0xf]
        %v6635 = vld [vmem:[%s6630 + $0x18] sm:$0xff]
        %v6636 = vld [vmem:[%s6630 + $0x20] sm:$0xf]
        %v6637 = vld [vmem:[%s6630 + $0x24] sm:$0xff]
        %v6638 = vld [vmem:[%s6630 + $0x2c] sm:$0xf]
        %v6639 = vld [vmem:[%s6630 + $0x30] sm:$0xff]
        %v6640 = vld [vmem:[%s6630 + $0x38] sm:$0xf]
        %v6641 = vld [vmem:[%s6630 + $0x3c] sm:$0xff]
        %v6642 = vld [vmem:[%s6630 + $0x44] sm:$0xf]
        %v6643 = vld [vmem:[%s6630 + $0x48] sm:$0xff]
        %v6644 = vld [vmem:[%s6630 + $0x50] sm:$0xf]
        %v6645 = vld [vmem:[%s6630 + $0x54] sm:$0xff]
        %v6646 = vld [vmem:[%s6630 + $0x5c] sm:$0xf]
        %v6647 = vld [vmem:[%s6630 + $0x60] sm:$0xff]
        %v6648 = vld [vmem:[%s6630 + $0x68] sm:$0xf]
        %v6649 = vld [vmem:[%s6630 + $0x6c] sm:$0xff]
        %v6650 = vld [vmem:[%s6630 + $0x74] sm:$0xf]
        %v6651 = vld [vmem:[%s6630 + $0x78] sm:$0xff]
        %v6652 = vld [vmem:[%s6630 + $0x80] sm:$0xf]
        %v6653 = vld [vmem:[%s6630 + $0x84] sm:$0xff]
        %v6654 = vld [vmem:[%s6630 + $0x8c] sm:$0xf]
        %v6655 = vld [vmem:[%s6630 + $0x90] sm:$0xff]
        %v6656 = vld [vmem:[%s6630 + $0x98] sm:$0xf]
        %v6657 = vld [vmem:[%s6630 + $0x9c] sm:$0xff]
        %v6658 = vld [vmem:[%s6630 + $0xa4] sm:$0xf]
        %v6659 = vld [vmem:[%s6630 + $0xa8] sm:$0xff]
        %v6660 = vld [vmem:[%s6630 + $0xb0] sm:$0xf]
        %v6661 = vld [vmem:[%s6630 + $0xb4] sm:$0xff]
        %v6662 = vld [vmem:[%s6630 + $0xbc] sm:$0xf]
        %s6663 = sld [smem:[#allocation2 + $0x17]]
        %v6664 = vstv %s6663
        %v6697 = vunpack.c.l.b16 %v6631
        %v6698 = vunpack.c.h.b16 %v6631
        %v6699 = vunpack.c.l.b16 %v6632
        %v6700 = vunpack.c.l.b16 %v6633
        %v6701 = vunpack.c.h.b16 %v6633
        %v6702 = vunpack.c.l.b16 %v6634
        %v6703 = vunpack.c.l.b16 %v6635
        %v6704 = vunpack.c.h.b16 %v6635
        %v6705 = vunpack.c.l.b16 %v6636
        %v6706 = vunpack.c.l.b16 %v6637
        %v6707 = vunpack.c.h.b16 %v6637
        %v6708 = vunpack.c.l.b16 %v6638
        %v6709 = vunpack.c.l.b16 %v6639
        %v6710 = vunpack.c.h.b16 %v6639
        %v6711 = vunpack.c.l.b16 %v6640
        %v6712 = vunpack.c.l.b16 %v6641
        %v6713 = vunpack.c.h.b16 %v6641
        %v6714 = vunpack.c.l.b16 %v6642
        %v6715 = vunpack.c.l.b16 %v6643
        %v6716 = vunpack.c.h.b16 %v6643
        %v6717 = vunpack.c.l.b16 %v6644
        %v6718 = vunpack.c.l.b16 %v6645
        %v6719 = vunpack.c.h.b16 %v6645
        %v6720 = vunpack.c.l.b16 %v6646
        %v6721 = vunpack.c.l.b16 %v6647
        %v6722 = vunpack.c.h.b16 %v6647
        %v6723 = vunpack.c.l.b16 %v6648
        %v6724 = vunpack.c.l.b16 %v6649
        %v6725 = vunpack.c.h.b16 %v6649
        %v6726 = vunpack.c.l.b16 %v6650
        %v6727 = vunpack.c.l.b16 %v6651
        %v6728 = vunpack.c.h.b16 %v6651
        %v6729 = vunpack.c.l.b16 %v6652
        %v6730 = vunpack.c.l.b16 %v6653
        %v6731 = vunpack.c.h.b16 %v6653
        %v6732 = vunpack.c.l.b16 %v6654
        %v6733 = vunpack.c.l.b16 %v6655
        %v6734 = vunpack.c.h.b16 %v6655
        %v6735 = vunpack.c.l.b16 %v6656
        %v6736 = vunpack.c.l.b16 %v6657
        %v6737 = vunpack.c.h.b16 %v6657
        %v6738 = vunpack.c.l.b16 %v6658
        %v6739 = vunpack.c.l.b16 %v6659
        %v6740 = vunpack.c.h.b16 %v6659
        %v6741 = vunpack.c.l.b16 %v6660
        %v6742 = vunpack.c.l.b16 %v6661
        %v6743 = vunpack.c.h.b16 %v6661
        %v6744 = vunpack.c.l.b16 %v6662
        %v6745 = vpack.c.b16 %v6700, %v6697
        %v6746 = vpack.c.b16 %v6701, %v6698
        %v6747 = vpack.c.b16 %v6702, %v6699
        %v6748 = vpack.c.b16 %v6706, %v6703
        %v6749 = vpack.c.b16 %v6707, %v6704
        %v6750 = vpack.c.b16 %v6708, %v6705
        %v6751 = vpack.c.b16 %v6712, %v6709
        %v6752 = vpack.c.b16 %v6713, %v6710
        %v6753 = vpack.c.b16 %v6714, %v6711
        %v6754 = vpack.c.b16 %v6718, %v6715
        %v6755 = vpack.c.b16 %v6719, %v6716
        %v6756 = vpack.c.b16 %v6720, %v6717
        %v6757 = vpack.c.b16 %v6724, %v6721
        %v6758 = vpack.c.b16 %v6725, %v6722
        %v6759 = vpack.c.b16 %v6726, %v6723
        %v6760 = vpack.c.b16 %v6730, %v6727
        %v6761 = vpack.c.b16 %v6731, %v6728
        %v6762 = vpack.c.b16 %v6732, %v6729
        %v6763 = vpack.c.b16 %v6736, %v6733
        %v6764 = vpack.c.b16 %v6737, %v6734
        %v6765 = vpack.c.b16 %v6738, %v6735
        %v6766 = vpack.c.b16 %v6742, %v6739
        %v6767 = vpack.c.b16 %v6743, %v6740
        %v6768 = vpack.c.b16 %v6744, %v6741
        %6793 = vmatprep.subr.bf16.mxu0 %v6746
        %6794 = vmatpush1.bf16.msra.mxu0 %v6745
        %6795 = vmatprep.subr.bf16.mxu0 %v6749
        %6796 = vmatpush1.bf16.msra.mxu0 %v6748
        %6797 = vmatprep.subr.bf16.mxu0 %v6752
        %6798 = vmatpush1.bf16.msra.mxu0 %v6751
        %6799 = vmatprep.subr.bf16.mxu0 %v6755
        %6800 = vmatpush1.bf16.msra.mxu0 %v6754
        %6801 = vmatprep.subr.bf16.mxu0 %v6758
        %6802 = vmatpush1.bf16.msra.mxu0 %v6757
        %6803 = vmatprep.subr.bf16.mxu0 %v6761
        %6804 = vmatpush1.bf16.msra.mxu0 %v6760
        %6805 = vmatprep.subr.bf16.mxu0 %v6764
        %6806 = vmatpush1.bf16.msra.mxu0 %v6763
        %6807 = vmatprep.subr.bf16.mxu0 %v6767
        %6808 = vmatpush1.bf16.msra.mxu0 %v6766
        %6809 = vmatprep.subr.bf16.mxu0 0
        %6810 = vmatpush1.bf16.msra.mxu0 0
        %6811 = vmatprep.subr.bf16.mxu0 0
        %6812 = vmatpush1.bf16.msra.mxu0 0
        %6813 = vmatprep.subr.bf16.mxu0 0
        %6814 = vmatpush1.bf16.msra.mxu0 0
        %6815 = vmatprep.subr.bf16.mxu0 0
        %6816 = vmatpush1.bf16.msra.mxu0 0
        %6817 = vmatprep.subr.bf16.mxu0 0
        %6818 = vmatpush1.bf16.msra.mxu0 0
        %6819 = vmatprep.subr.bf16.mxu0 0
        %6820 = vmatpush1.bf16.msra.mxu0 0
        %6821 = vmatprep.subr.bf16.mxu0 0
        %6822 = vmatpush1.bf16.msra.mxu0 0
        %6823 = vmatprep.subr.bf16.mxu0 0
        %6824 = vmatpush1.bf16.msra.mxu0 0
        %6825 = vmatprep.mubr.bf16.mxu0 0
        %6826 = vmatmul.mubr.bf16.gmra.mrb[0].mxu0 %v298
        %v6827 = vpop.f32.mrb[0].mxu0
        %v6828 = vadd.f32 %v6664, %v6827
        %v6829 = vpop.f32.mrb[0].mxu0
        %v6830 = vadd.f32 %v6664, %v6829
        %v6831 = vpop.f32.mrb[0].mxu0
        %v6832 = vpop.f32.mrb[0].mxu0
        %6833 = vdwg.mxu0
        %6834 = vmatprep.subr.bf16.mxu0 0
        %6835 = vmatpush1.bf16.msra.mxu0 %v6747
        %6836 = vmatprep.subr.bf16.mxu0 0
        %6837 = vmatpush1.bf16.msra.mxu0 %v6750
        %6838 = vmatprep.subr.bf16.mxu0 0
        %6839 = vmatpush1.bf16.msra.mxu0 %v6753
        %6840 = vmatprep.subr.bf16.mxu0 0
        %6841 = vmatpush1.bf16.msra.mxu0 %v6756
        %6842 = vmatprep.subr.bf16.mxu0 0
        %6843 = vmatpush1.bf16.msra.mxu0 %v6759
        %6844 = vmatprep.subr.bf16.mxu0 0
        %6845 = vmatpush1.bf16.msra.mxu0 %v6762
        %6846 = vmatprep.subr.bf16.mxu0 0
        %6847 = vmatpush1.bf16.msra.mxu0 %v6765
        %6848 = vmatprep.subr.bf16.mxu0 0
        %6849 = vmatpush1.bf16.msra.mxu0 %v6768
        %6850 = vmatprep.subr.bf16.mxu0 0
        %6851 = vmatpush1.bf16.msra.mxu0 0
        %6852 = vmatprep.subr.bf16.mxu0 0
        %6853 = vmatpush1.bf16.msra.mxu0 0
        %6854 = vmatprep.subr.bf16.mxu0 0
        %6855 = vmatpush1.bf16.msra.mxu0 0
        %6856 = vmatprep.subr.bf16.mxu0 0
        %6857 = vmatpush1.bf16.msra.mxu0 0
        %6858 = vmatprep.subr.bf16.mxu0 0
        %6859 = vmatpush1.bf16.msra.mxu0 0
        %6860 = vmatprep.subr.bf16.mxu0 0
        %6861 = vmatpush1.bf16.msra.mxu0 0
        %6862 = vmatprep.subr.bf16.mxu0 0
        %6863 = vmatpush1.bf16.msra.mxu0 0
        %6864 = vmatprep.subr.bf16.mxu0 0
        %6865 = vmatpush1.bf16.msra.mxu0 0
        %6866 = vmatprep.mubr.bf16.mxu0 0
        %6867 = vmatmul.mubr.bf16.gmra.mrb[0].mxu0 %v298
        %v6868 = vpop.f32.mrb[0].mxu0
        %v6869 = vadd.f32 %v6664, %v6868
        %v6870 = vpop.f32.mrb[0].mxu0
        %v6871 = vpop.f32.mrb[0].mxu0
        %v6872 = vpop.f32.mrb[0].mxu0
        %6873 = vdwg.mxu0
        %v6874 = vmax.f32 %v6828, 0.0
        %v6875 = vmax.f32 %v6830, 0.0
        %v6876 = vmax.f32 %v6869, 0.0
        %v6877 = vld [vmem:[%s285] sm:$0xff]
        %v6878 = vld [vmem:[%s285 + $0x8] sm:$0xff]
        %v6879 = vld [vmem:[%s285 + $0x10] sm:$0xff]
        %s6880 = sld [smem:[#allocation5 + $0x17]]
        %v6881 = vstv %s6880
        %v6882 = vmul.f32 %v6881, %v6874
        %v6883 = vmul.f32 %v6881, %v6875
        %v6884 = vmul.f32 %v6881, %v6876
        %v6885 = vadd.f32 %v6877, %v6882
        %v6886 = vadd.f32 %v6878, %v6883
        %v6887 = vadd.f32 %v6879, %v6884
        %6888 = vst [vmem:[%s285] sm:$0xff] %v6885
        %6889 = vst [vmem:[%s285 + $0x8] sm:$0xff] %v6886
        %6890 = vst.msk [vmem:[%s285 + $0x10] sm:$0xff] %vm301, %v6887
        %v6891 = vld [vmem:[%s292] sm:$0xff]
        %v6892 = vld [vmem:[%s292 + $0x8] sm:$0xff]
        %v6893 = vld [vmem:[%s292 + $0x10] sm:$0xff]
        %s6894 = sld [smem:[#allocation5 + $0x97]]
        %v6895 = vstv %s6894
        %v6896 = vmul.f32 %v6895, %v6874
        %v6897 = vmul.f32 %v6895, %v6875
        %v6898 = vmul.f32 %v6895, %v6876
        %v6899 = vadd.f32 %v6891, %v6896
        %v6900 = vadd.f32 %v6892, %v6897
        %v6901 = vadd.f32 %v6893, %v6898
        %6902 = vst [vmem:[%s292] sm:$0xff] %v6899
        %6903 = vst [vmem:[%s292 + $0x8] sm:$0xff] %v6900
        %6904 = vst.msk [vmem:[%s292 + $0x10] sm:$0xff] %vm301, %v6901
        %s6905 = scalar_lea.vmem %s1, 4608
        %v6906 = vld [vmem:[%s6905] sm:$0xff]
        %v6907 = vld [vmem:[%s6905 + $0x8] sm:$0xf]
        %v6908 = vld [vmem:[%s6905 + $0xc] sm:$0xff]
        %v6909 = vld [vmem:[%s6905 + $0x14] sm:$0xf]
        %v6910 = vld [vmem:[%s6905 + $0x18] sm:$0xff]
        %v6911 = vld [vmem:[%s6905 + $0x20] sm:$0xf]
        %v6912 = vld [vmem:[%s6905 + $0x24] sm:$0xff]
        %v6913 = vld [vmem:[%s6905 + $0x2c] sm:$0xf]
        %v6914 = vld [vmem:[%s6905 + $0x30] sm:$0xff]
        %v6915 = vld [vmem:[%s6905 + $0x38] sm:$0xf]
        %v6916 = vld [vmem:[%s6905 + $0x3c] sm:$0xff]
        %v6917 = vld [vmem:[%s6905 + $0x44] sm:$0xf]
        %v6918 = vld [vmem:[%s6905 + $0x48] sm:$0xff]
        %v6919 = vld [vmem:[%s6905 + $0x50] sm:$0xf]
        %v6920 = vld [vmem:[%s6905 + $0x54] sm:$0xff]
        %v6921 = vld [vmem:[%s6905 + $0x5c] sm:$0xf]
        %v6922 = vld [vmem:[%s6905 + $0x60] sm:$0xff]
        %v6923 = vld [vmem:[%s6905 + $0x68] sm:$0xf]
        %v6924 = vld [vmem:[%s6905 + $0x6c] sm:$0xff]
        %v6925 = vld [vmem:[%s6905 + $0x74] sm:$0xf]
        %v6926 = vld [vmem:[%s6905 + $0x78] sm:$0xff]
        %v6927 = vld [vmem:[%s6905 + $0x80] sm:$0xf]
        %v6928 = vld [vmem:[%s6905 + $0x84] sm:$0xff]
        %v6929 = vld [vmem:[%s6905 + $0x8c] sm:$0xf]
        %v6930 = vld [vmem:[%s6905 + $0x90] sm:$0xff]
        %v6931 = vld [vmem:[%s6905 + $0x98] sm:$0xf]
        %v6932 = vld [vmem:[%s6905 + $0x9c] sm:$0xff]
        %v6933 = vld [vmem:[%s6905 + $0xa4] sm:$0xf]
        %v6934 = vld [vmem:[%s6905 + $0xa8] sm:$0xff]
        %v6935 = vld [vmem:[%s6905 + $0xb0] sm:$0xf]
        %v6936 = vld [vmem:[%s6905 + $0xb4] sm:$0xff]
        %v6937 = vld [vmem:[%s6905 + $0xbc] sm:$0xf]
        %s6938 = sld [smem:[#allocation2 + $0x18]]
        %v6939 = vstv %s6938
        %v6972 = vunpack.c.l.b16 %v6906
        %v6973 = vunpack.c.h.b16 %v6906
        %v6974 = vunpack.c.l.b16 %v6907
        %v6975 = vunpack.c.l.b16 %v6908
        %v6976 = vunpack.c.h.b16 %v6908
        %v6977 = vunpack.c.l.b16 %v6909
        %v6978 = vunpack.c.l.b16 %v6910
        %v6979 = vunpack.c.h.b16 %v6910
        %v6980 = vunpack.c.l.b16 %v6911
        %v6981 = vunpack.c.l.b16 %v6912
        %v6982 = vunpack.c.h.b16 %v6912
        %v6983 = vunpack.c.l.b16 %v6913
        %v6984 = vunpack.c.l.b16 %v6914
        %v6985 = vunpack.c.h.b16 %v6914
        %v6986 = vunpack.c.l.b16 %v6915
        %v6987 = vunpack.c.l.b16 %v6916
        %v6988 = vunpack.c.h.b16 %v6916
        %v6989 = vunpack.c.l.b16 %v6917
        %v6990 = vunpack.c.l.b16 %v6918
        %v6991 = vunpack.c.h.b16 %v6918
        %v6992 = vunpack.c.l.b16 %v6919
        %v6993 = vunpack.c.l.b16 %v6920
        %v6994 = vunpack.c.h.b16 %v6920
        %v6995 = vunpack.c.l.b16 %v6921
        %v6996 = vunpack.c.l.b16 %v6922
        %v6997 = vunpack.c.h.b16 %v6922
        %v6998 = vunpack.c.l.b16 %v6923
        %v6999 = vunpack.c.l.b16 %v6924
        %v7000 = vunpack.c.h.b16 %v6924
        %v7001 = vunpack.c.l.b16 %v6925
        %v7002 = vunpack.c.l.b16 %v6926
        %v7003 = vunpack.c.h.b16 %v6926
        %v7004 = vunpack.c.l.b16 %v6927
        %v7005 = vunpack.c.l.b16 %v6928
        %v7006 = vunpack.c.h.b16 %v6928
        %v7007 = vunpack.c.l.b16 %v6929
        %v7008 = vunpack.c.l.b16 %v6930
        %v7009 = vunpack.c.h.b16 %v6930
        %v7010 = vunpack.c.l.b16 %v6931
        %v7011 = vunpack.c.l.b16 %v6932
        %v7012 = vunpack.c.h.b16 %v6932
        %v7013 = vunpack.c.l.b16 %v6933
        %v7014 = vunpack.c.l.b16 %v6934
        %v7015 = vunpack.c.h.b16 %v6934
        %v7016 = vunpack.c.l.b16 %v6935
        %v7017 = vunpack.c.l.b16 %v6936
        %v7018 = vunpack.c.h.b16 %v6936
        %v7019 = vunpack.c.l.b16 %v6937
        %v7020 = vpack.c.b16 %v6975, %v6972
        %v7021 = vpack.c.b16 %v6976, %v6973
        %v7022 = vpack.c.b16 %v6977, %v6974
        %v7023 = vpack.c.b16 %v6981, %v6978
        %v7024 = vpack.c.b16 %v6982, %v6979
        %v7025 = vpack.c.b16 %v6983, %v6980
        %v7026 = vpack.c.b16 %v6987, %v6984
        %v7027 = vpack.c.b16 %v6988, %v6985
        %v7028 = vpack.c.b16 %v6989, %v6986
        %v7029 = vpack.c.b16 %v6993, %v6990
        %v7030 = vpack.c.b16 %v6994, %v6991
        %v7031 = vpack.c.b16 %v6995, %v6992
        %v7032 = vpack.c.b16 %v6999, %v6996
        %v7033 = vpack.c.b16 %v7000, %v6997
        %v7034 = vpack.c.b16 %v7001, %v6998
        %v7035 = vpack.c.b16 %v7005, %v7002
        %v7036 = vpack.c.b16 %v7006, %v7003
        %v7037 = vpack.c.b16 %v7007, %v7004
        %v7038 = vpack.c.b16 %v7011, %v7008
        %v7039 = vpack.c.b16 %v7012, %v7009
        %v7040 = vpack.c.b16 %v7013, %v7010
        %v7041 = vpack.c.b16 %v7017, %v7014
        %v7042 = vpack.c.b16 %v7018, %v7015
        %v7043 = vpack.c.b16 %v7019, %v7016
        %7068 = vmatprep.subr.bf16.mxu0 %v7021
        %7069 = vmatpush1.bf16.msra.mxu0 %v7020
        %7070 = vmatprep.subr.bf16.mxu0 %v7024
        %7071 = vmatpush1.bf16.msra.mxu0 %v7023
        %7072 = vmatprep.subr.bf16.mxu0 %v7027
        %7073 = vmatpush1.bf16.msra.mxu0 %v7026
        %7074 = vmatprep.subr.bf16.mxu0 %v7030
        %7075 = vmatpush1.bf16.msra.mxu0 %v7029
        %7076 = vmatprep.subr.bf16.mxu0 %v7033
        %7077 = vmatpush1.bf16.msra.mxu0 %v7032
        %7078 = vmatprep.subr.bf16.mxu0 %v7036
        %7079 = vmatpush1.bf16.msra.mxu0 %v7035
        %7080 = vmatprep.subr.bf16.mxu0 %v7039
        %7081 = vmatpush1.bf16.msra.mxu0 %v7038
        %7082 = vmatprep.subr.bf16.mxu0 %v7042
        %7083 = vmatpush1.bf16.msra.mxu0 %v7041
        %7084 = vmatprep.subr.bf16.mxu0 0
        %7085 = vmatpush1.bf16.msra.mxu0 0
        %7086 = vmatprep.subr.bf16.mxu0 0
        %7087 = vmatpush1.bf16.msra.mxu0 0
        %7088 = vmatprep.subr.bf16.mxu0 0
        %7089 = vmatpush1.bf16.msra.mxu0 0
        %7090 = vmatprep.subr.bf16.mxu0 0
        %7091 = vmatpush1.bf16.msra.mxu0 0
        %7092 = vmatprep.subr.bf16.mxu0 0
        %7093 = vmatpush1.bf16.msra.mxu0 0
        %7094 = vmatprep.subr.bf16.mxu0 0
        %7095 = vmatpush1.bf16.msra.mxu0 0
        %7096 = vmatprep.subr.bf16.mxu0 0
        %7097 = vmatpush1.bf16.msra.mxu0 0
        %7098 = vmatprep.subr.bf16.mxu0 0
        %7099 = vmatpush1.bf16.msra.mxu0 0
        %7100 = vmatprep.mubr.bf16.mxu0 0
        %7101 = vmatmul.mubr.bf16.gmra.mrb[0].mxu0 %v298
        %v7102 = vpop.f32.mrb[0].mxu0
        %v7103 = vadd.f32 %v6939, %v7102
        %v7104 = vpop.f32.mrb[0].mxu0
        %v7105 = vadd.f32 %v6939, %v7104
        %v7106 = vpop.f32.mrb[0].mxu0
        %v7107 = vpop.f32.mrb[0].mxu0
        %7108 = vdwg.mxu0
        %7109 = vmatprep.subr.bf16.mxu0 0
        %7110 = vmatpush1.bf16.msra.mxu0 %v7022
        %7111 = vmatprep.subr.bf16.mxu0 0
        %7112 = vmatpush1.bf16.msra.mxu0 %v7025
        %7113 = vmatprep.subr.bf16.mxu0 0
        %7114 = vmatpush1.bf16.msra.mxu0 %v7028
        %7115 = vmatprep.subr.bf16.mxu0 0
        %7116 = vmatpush1.bf16.msra.mxu0 %v7031
        %7117 = vmatprep.subr.bf16.mxu0 0
        %7118 = vmatpush1.bf16.msra.mxu0 %v7034
        %7119 = vmatprep.subr.bf16.mxu0 0
        %7120 = vmatpush1.bf16.msra.mxu0 %v7037
        %7121 = vmatprep.subr.bf16.mxu0 0
        %7122 = vmatpush1.bf16.msra.mxu0 %v7040
        %7123 = vmatprep.subr.bf16.mxu0 0
        %7124 = vmatpush1.bf16.msra.mxu0 %v7043
        %7125 = vmatprep.subr.bf16.mxu0 0
        %7126 = vmatpush1.bf16.msra.mxu0 0
        %7127 = vmatprep.subr.bf16.mxu0 0
        %7128 = vmatpush1.bf16.msra.mxu0 0
        %7129 = vmatprep.subr.bf16.mxu0 0
        %7130 = vmatpush1.bf16.msra.mxu0 0
        %7131 = vmatprep.subr.bf16.mxu0 0
        %7132 = vmatpush1.bf16.msra.mxu0 0
        %7133 = vmatprep.subr.bf16.mxu0 0
        %7134 = vmatpush1.bf16.msra.mxu0 0
        %7135 = vmatprep.subr.bf16.mxu0 0
        %7136 = vmatpush1.bf16.msra.mxu0 0
        %7137 = vmatprep.subr.bf16.mxu0 0
        %7138 = vmatpush1.bf16.msra.mxu0 0
        %7139 = vmatprep.subr.bf16.mxu0 0
        %7140 = vmatpush1.bf16.msra.mxu0 0
        %7141 = vmatprep.mubr.bf16.mxu0 0
        %7142 = vmatmul.mubr.bf16.gmra.mrb[0].mxu0 %v298
        %v7143 = vpop.f32.mrb[0].mxu0
        %v7144 = vadd.f32 %v6939, %v7143
        %v7145 = vpop.f32.mrb[0].mxu0
        %v7146 = vpop.f32.mrb[0].mxu0
        %v7147 = vpop.f32.mrb[0].mxu0
        %7148 = vdwg.mxu0
        %v7149 = vmax.f32 %v7103, 0.0
        %v7150 = vmax.f32 %v7105, 0.0
        %v7151 = vmax.f32 %v7144, 0.0
        %v7152 = vld [vmem:[%s285] sm:$0xff]
        %v7153 = vld [vmem:[%s285 + $0x8] sm:$0xff]
        %v7154 = vld [vmem:[%s285 + $0x10] sm:$0xff]
        %s7155 = sld [smem:[#allocation5 + $0x18]]
        %v7156 = vstv %s7155
        %v7157 = vmul.f32 %v7156, %v7149
        %v7158 = vmul.f32 %v7156, %v7150
        %v7159 = vmul.f32 %v7156, %v7151
        %v7160 = vadd.f32 %v7152, %v7157
        %v7161 = vadd.f32 %v7153, %v7158
        %v7162 = vadd.f32 %v7154, %v7159
        %7163 = vst [vmem:[%s285] sm:$0xff] %v7160
        %7164 = vst [vmem:[%s285 + $0x8] sm:$0xff] %v7161
        %7165 = vst.msk [vmem:[%s285 + $0x10] sm:$0xff] %vm301, %v7162
        %v7166 = vld [vmem:[%s292] sm:$0xff]
        %v7167 = vld [vmem:[%s292 + $0x8] sm:$0xff]
        %v7168 = vld [vmem:[%s292 + $0x10] sm:$0xff]
        %s7169 = sld [smem:[#allocation5 + $0x98]]
        %v7170 = vstv %s7169
        %v7171 = vmul.f32 %v7170, %v7149
        %v7172 = vmul.f32 %v7170, %v7150
        %v7173 = vmul.f32 %v7170, %v7151
        %v7174 = vadd.f32 %v7166, %v7171
        %v7175 = vadd.f32 %v7167, %v7172
        %v7176 = vadd.f32 %v7168, %v7173
        %7177 = vst [vmem:[%s292] sm:$0xff] %v7174
        %7178 = vst [vmem:[%s292 + $0x8] sm:$0xff] %v7175
        %7179 = vst.msk [vmem:[%s292 + $0x10] sm:$0xff] %vm301, %v7176
        %s7180 = scalar_lea.vmem %s1, 4800
        %v7181 = vld [vmem:[%s7180] sm:$0xff]
        %v7182 = vld [vmem:[%s7180 + $0x8] sm:$0xf]
        %v7183 = vld [vmem:[%s7180 + $0xc] sm:$0xff]
        %v7184 = vld [vmem:[%s7180 + $0x14] sm:$0xf]
        %v7185 = vld [vmem:[%s7180 + $0x18] sm:$0xff]
        %v7186 = vld [vmem:[%s7180 + $0x20] sm:$0xf]
        %v7187 = vld [vmem:[%s7180 + $0x24] sm:$0xff]
        %v7188 = vld [vmem:[%s7180 + $0x2c] sm:$0xf]
        %v7189 = vld [vmem:[%s7180 + $0x30] sm:$0xff]
        %v7190 = vld [vmem:[%s7180 + $0x38] sm:$0xf]
        %v7191 = vld [vmem:[%s7180 + $0x3c] sm:$0xff]
        %v7192 = vld [vmem:[%s7180 + $0x44] sm:$0xf]
        %v7193 = vld [vmem:[%s7180 + $0x48] sm:$0xff]
        %v7194 = vld [vmem:[%s7180 + $0x50] sm:$0xf]
        %v7195 = vld [vmem:[%s7180 + $0x54] sm:$0xff]
        %v7196 = vld [vmem:[%s7180 + $0x5c] sm:$0xf]
        %v7197 = vld [vmem:[%s7180 + $0x60] sm:$0xff]
        %v7198 = vld [vmem:[%s7180 + $0x68] sm:$0xf]
        %v7199 = vld [vmem:[%s7180 + $0x6c] sm:$0xff]
        %v7200 = vld [vmem:[%s7180 + $0x74] sm:$0xf]
        %v7201 = vld [vmem:[%s7180 + $0x78] sm:$0xff]
        %v7202 = vld [vmem:[%s7180 + $0x80] sm:$0xf]
        %v7203 = vld [vmem:[%s7180 + $0x84] sm:$0xff]
        %v7204 = vld [vmem:[%s7180 + $0x8c] sm:$0xf]
        %v7205 = vld [vmem:[%s7180 + $0x90] sm:$0xff]
        %v7206 = vld [vmem:[%s7180 + $0x98] sm:$0xf]
        %v7207 = vld [vmem:[%s7180 + $0x9c] sm:$0xff]
        %v7208 = vld [vmem:[%s7180 + $0xa4] sm:$0xf]
        %v7209 = vld [vmem:[%s7180 + $0xa8] sm:$0xff]
        %v7210 = vld [vmem:[%s7180 + $0xb0] sm:$0xf]
        %v7211 = vld [vmem:[%s7180 + $0xb4] sm:$0xff]
        %v7212 = vld [vmem:[%s7180 + $0xbc] sm:$0xf]
        %s7213 = sld [smem:[#allocation2 + $0x19]]
        %v7214 = vstv %s7213
        %v7247 = vunpack.c.l.b16 %v7181
        %v7248 = vunpack.c.h.b16 %v7181
        %v7249 = vunpack.c.l.b16 %v7182
        %v7250 = vunpack.c.l.b16 %v7183
        %v7251 = vunpack.c.h.b16 %v7183
        %v7252 = vunpack.c.l.b16 %v7184
        %v7253 = vunpack.c.l.b16 %v7185
        %v7254 = vunpack.c.h.b16 %v7185
        %v7255 = vunpack.c.l.b16 %v7186
        %v7256 = vunpack.c.l.b16 %v7187
        %v7257 = vunpack.c.h.b16 %v7187
        %v7258 = vunpack.c.l.b16 %v7188
        %v7259 = vunpack.c.l.b16 %v7189
        %v7260 = vunpack.c.h.b16 %v7189
        %v7261 = vunpack.c.l.b16 %v7190
        %v7262 = vunpack.c.l.b16 %v7191
        %v7263 = vunpack.c.h.b16 %v7191
        %v7264 = vunpack.c.l.b16 %v7192
        %v7265 = vunpack.c.l.b16 %v7193
        %v7266 = vunpack.c.h.b16 %v7193
        %v7267 = vunpack.c.l.b16 %v7194
        %v7268 = vunpack.c.l.b16 %v7195
        %v7269 = vunpack.c.h.b16 %v7195
        %v7270 = vunpack.c.l.b16 %v7196
        %v7271 = vunpack.c.l.b16 %v7197
        %v7272 = vunpack.c.h.b16 %v7197
        %v7273 = vunpack.c.l.b16 %v7198
        %v7274 = vunpack.c.l.b16 %v7199
        %v7275 = vunpack.c.h.b16 %v7199
        %v7276 = vunpack.c.l.b16 %v7200
        %v7277 = vunpack.c.l.b16 %v7201
        %v7278 = vunpack.c.h.b16 %v7201
        %v7279 = vunpack.c.l.b16 %v7202
        %v7280 = vunpack.c.l.b16 %v7203
        %v7281 = vunpack.c.h.b16 %v7203
        %v7282 = vunpack.c.l.b16 %v7204
        %v7283 = vunpack.c.l.b16 %v7205
        %v7284 = vunpack.c.h.b16 %v7205
        %v7285 = vunpack.c.l.b16 %v7206
        %v7286 = vunpack.c.l.b16 %v7207
        %v7287 = vunpack.c.h.b16 %v7207
        %v7288 = vunpack.c.l.b16 %v7208
        %v7289 = vunpack.c.l.b16 %v7209
        %v7290 = vunpack.c.h.b16 %v7209
        %v7291 = vunpack.c.l.b16 %v7210
        %v7292 = vunpack.c.l.b16 %v7211
        %v7293 = vunpack.c.h.b16 %v7211
        %v7294 = vunpack.c.l.b16 %v7212
        %v7295 = vpack.c.b16 %v7250, %v7247
        %v7296 = vpack.c.b16 %v7251, %v7248
        %v7297 = vpack.c.b16 %v7252, %v7249
        %v7298 = vpack.c.b16 %v7256, %v7253
        %v7299 = vpack.c.b16 %v7257, %v7254
        %v7300 = vpack.c.b16 %v7258, %v7255
        %v7301 = vpack.c.b16 %v7262, %v7259
        %v7302 = vpack.c.b16 %v7263, %v7260
        %v7303 = vpack.c.b16 %v7264, %v7261
        %v7304 = vpack.c.b16 %v7268, %v7265
        %v7305 = vpack.c.b16 %v7269, %v7266
        %v7306 = vpack.c.b16 %v7270, %v7267
        %v7307 = vpack.c.b16 %v7274, %v7271
        %v7308 = vpack.c.b16 %v7275, %v7272
        %v7309 = vpack.c.b16 %v7276, %v7273
        %v7310 = vpack.c.b16 %v7280, %v7277
        %v7311 = vpack.c.b16 %v7281, %v7278
        %v7312 = vpack.c.b16 %v7282, %v7279
        %v7313 = vpack.c.b16 %v7286, %v7283
        %v7314 = vpack.c.b16 %v7287, %v7284
        %v7315 = vpack.c.b16 %v7288, %v7285
        %v7316 = vpack.c.b16 %v7292, %v7289
        %v7317 = vpack.c.b16 %v7293, %v7290
        %v7318 = vpack.c.b16 %v7294, %v7291
        %7343 = vmatprep.subr.bf16.mxu0 %v7296
        %7344 = vmatpush1.bf16.msra.mxu0 %v7295
        %7345 = vmatprep.subr.bf16.mxu0 %v7299
        %7346 = vmatpush1.bf16.msra.mxu0 %v7298
        %7347 = vmatprep.subr.bf16.mxu0 %v7302
        %7348 = vmatpush1.bf16.msra.mxu0 %v7301
        %7349 = vmatprep.subr.bf16.mxu0 %v7305
        %7350 = vmatpush1.bf16.msra.mxu0 %v7304
        %7351 = vmatprep.subr.bf16.mxu0 %v7308
        %7352 = vmatpush1.bf16.msra.mxu0 %v7307
        %7353 = vmatprep.subr.bf16.mxu0 %v7311
        %7354 = vmatpush1.bf16.msra.mxu0 %v7310
        %7355 = vmatprep.subr.bf16.mxu0 %v7314
        %7356 = vmatpush1.bf16.msra.mxu0 %v7313
        %7357 = vmatprep.subr.bf16.mxu0 %v7317
        %7358 = vmatpush1.bf16.msra.mxu0 %v7316
        %7359 = vmatprep.subr.bf16.mxu0 0
        %7360 = vmatpush1.bf16.msra.mxu0 0
        %7361 = vmatprep.subr.bf16.mxu0 0
        %7362 = vmatpush1.bf16.msra.mxu0 0
        %7363 = vmatprep.subr.bf16.mxu0 0
        %7364 = vmatpush1.bf16.msra.mxu0 0
        %7365 = vmatprep.subr.bf16.mxu0 0
        %7366 = vmatpush1.bf16.msra.mxu0 0
        %7367 = vmatprep.subr.bf16.mxu0 0
        %7368 = vmatpush1.bf16.msra.mxu0 0
        %7369 = vmatprep.subr.bf16.mxu0 0
        %7370 = vmatpush1.bf16.msra.mxu0 0
        %7371 = vmatprep.subr.bf16.mxu0 0
        %7372 = vmatpush1.bf16.msra.mxu0 0
        %7373 = vmatprep.subr.bf16.mxu0 0
        %7374 = vmatpush1.bf16.msra.mxu0 0
        %7375 = vmatprep.mubr.bf16.mxu0 0
        %7376 = vmatmul.mubr.bf16.gmra.mrb[0].mxu0 %v298
        %v7377 = vpop.f32.mrb[0].mxu0
        %v7378 = vadd.f32 %v7214, %v7377
        %v7379 = vpop.f32.mrb[0].mxu0
        %v7380 = vadd.f32 %v7214, %v7379
        %v7381 = vpop.f32.mrb[0].mxu0
        %v7382 = vpop.f32.mrb[0].mxu0
        %7383 = vdwg.mxu0
        %7384 = vmatprep.subr.bf16.mxu0 0
        %7385 = vmatpush1.bf16.msra.mxu0 %v7297
        %7386 = vmatprep.subr.bf16.mxu0 0
        %7387 = vmatpush1.bf16.msra.mxu0 %v7300
        %7388 = vmatprep.subr.bf16.mxu0 0
        %7389 = vmatpush1.bf16.msra.mxu0 %v7303
        %7390 = vmatprep.subr.bf16.mxu0 0
        %7391 = vmatpush1.bf16.msra.mxu0 %v7306
        %7392 = vmatprep.subr.bf16.mxu0 0
        %7393 = vmatpush1.bf16.msra.mxu0 %v7309
        %7394 = vmatprep.subr.bf16.mxu0 0
        %7395 = vmatpush1.bf16.msra.mxu0 %v7312
        %7396 = vmatprep.subr.bf16.mxu0 0
        %7397 = vmatpush1.bf16.msra.mxu0 %v7315
        %7398 = vmatprep.subr.bf16.mxu0 0
        %7399 = vmatpush1.bf16.msra.mxu0 %v7318
        %7400 = vmatprep.subr.bf16.mxu0 0
        %7401 = vmatpush1.bf16.msra.mxu0 0
        %7402 = vmatprep.subr.bf16.mxu0 0
        %7403 = vmatpush1.bf16.msra.mxu0 0
        %7404 = vmatprep.subr.bf16.mxu0 0
        %7405 = vmatpush1.bf16.msra.mxu0 0
        %7406 = vmatprep.subr.bf16.mxu0 0
        %7407 = vmatpush1.bf16.msra.mxu0 0
        %7408 = vmatprep.subr.bf16.mxu0 0
        %7409 = vmatpush1.bf16.msra.mxu0 0
        %7410 = vmatprep.subr.bf16.mxu0 0
        %7411 = vmatpush1.bf16.msra.mxu0 0
        %7412 = vmatprep.subr.bf16.mxu0 0
        %7413 = vmatpush1.bf16.msra.mxu0 0
        %7414 = vmatprep.subr.bf16.mxu0 0
        %7415 = vmatpush1.bf16.msra.mxu0 0
        %7416 = vmatprep.mubr.bf16.mxu0 0
        %7417 = vmatmul.mubr.bf16.gmra.mrb[0].mxu0 %v298
        %v7418 = vpop.f32.mrb[0].mxu0
        %v7419 = vadd.f32 %v7214, %v7418
        %v7420 = vpop.f32.mrb[0].mxu0
        %v7421 = vpop.f32.mrb[0].mxu0
        %v7422 = vpop.f32.mrb[0].mxu0
        %7423 = vdwg.mxu0
        %v7424 = vmax.f32 %v7378, 0.0
        %v7425 = vmax.f32 %v7380, 0.0
        %v7426 = vmax.f32 %v7419, 0.0
        %v7427 = vld [vmem:[%s285] sm:$0xff]
        %v7428 = vld [vmem:[%s285 + $0x8] sm:$0xff]
        %v7429 = vld [vmem:[%s285 + $0x10] sm:$0xff]
        %s7430 = sld [smem:[#allocation5 + $0x19]]
        %v7431 = vstv %s7430
        %v7432 = vmul.f32 %v7431, %v7424
        %v7433 = vmul.f32 %v7431, %v7425
        %v7434 = vmul.f32 %v7431, %v7426
        %v7435 = vadd.f32 %v7427, %v7432
        %v7436 = vadd.f32 %v7428, %v7433
        %v7437 = vadd.f32 %v7429, %v7434
        %7438 = vst [vmem:[%s285] sm:$0xff] %v7435
        %7439 = vst [vmem:[%s285 + $0x8] sm:$0xff] %v7436
        %7440 = vst.msk [vmem:[%s285 + $0x10] sm:$0xff] %vm301, %v7437
        %v7441 = vld [vmem:[%s292] sm:$0xff]
        %v7442 = vld [vmem:[%s292 + $0x8] sm:$0xff]
        %v7443 = vld [vmem:[%s292 + $0x10] sm:$0xff]
        %s7444 = sld [smem:[#allocation5 + $0x99]]
        %v7445 = vstv %s7444
        %v7446 = vmul.f32 %v7445, %v7424
        %v7447 = vmul.f32 %v7445, %v7425
        %v7448 = vmul.f32 %v7445, %v7426
        %v7449 = vadd.f32 %v7441, %v7446
        %v7450 = vadd.f32 %v7442, %v7447
        %v7451 = vadd.f32 %v7443, %v7448
        %7452 = vst [vmem:[%s292] sm:$0xff] %v7449
        %7453 = vst [vmem:[%s292 + $0x8] sm:$0xff] %v7450
        %7454 = vst.msk [vmem:[%s292 + $0x10] sm:$0xff] %vm301, %v7451
        %s7455 = scalar_lea.vmem %s1, 4992
        %v7456 = vld [vmem:[%s7455] sm:$0xff]
        %v7457 = vld [vmem:[%s7455 + $0x8] sm:$0xf]
        %v7458 = vld [vmem:[%s7455 + $0xc] sm:$0xff]
        %v7459 = vld [vmem:[%s7455 + $0x14] sm:$0xf]
        %v7460 = vld [vmem:[%s7455 + $0x18] sm:$0xff]
        %v7461 = vld [vmem:[%s7455 + $0x20] sm:$0xf]
        %v7462 = vld [vmem:[%s7455 + $0x24] sm:$0xff]
        %v7463 = vld [vmem:[%s7455 + $0x2c] sm:$0xf]
        %v7464 = vld [vmem:[%s7455 + $0x30] sm:$0xff]
        %v7465 = vld [vmem:[%s7455 + $0x38] sm:$0xf]
        %v7466 = vld [vmem:[%s7455 + $0x3c] sm:$0xff]
        %v7467 = vld [vmem:[%s7455 + $0x44] sm:$0xf]
        %v7468 = vld [vmem:[%s7455 + $0x48] sm:$0xff]
        %v7469 = vld [vmem:[%s7455 + $0x50] sm:$0xf]
        %v7470 = vld [vmem:[%s7455 + $0x54] sm:$0xff]
        %v7471 = vld [vmem:[%s7455 + $0x5c] sm:$0xf]
        %v7472 = vld [vmem:[%s7455 + $0x60] sm:$0xff]
        %v7473 = vld [vmem:[%s7455 + $0x68] sm:$0xf]
        %v7474 = vld [vmem:[%s7455 + $0x6c] sm:$0xff]
        %v7475 = vld [vmem:[%s7455 + $0x74] sm:$0xf]
        %v7476 = vld [vmem:[%s7455 + $0x78] sm:$0xff]
        %v7477 = vld [vmem:[%s7455 + $0x80] sm:$0xf]
        %v7478 = vld [vmem:[%s7455 + $0x84] sm:$0xff]
        %v7479 = vld [vmem:[%s7455 + $0x8c] sm:$0xf]
        %v7480 = vld [vmem:[%s7455 + $0x90] sm:$0xff]
        %v7481 = vld [vmem:[%s7455 + $0x98] sm:$0xf]
        %v7482 = vld [vmem:[%s7455 + $0x9c] sm:$0xff]
        %v7483 = vld [vmem:[%s7455 + $0xa4] sm:$0xf]
        %v7484 = vld [vmem:[%s7455 + $0xa8] sm:$0xff]
        %v7485 = vld [vmem:[%s7455 + $0xb0] sm:$0xf]
        %v7486 = vld [vmem:[%s7455 + $0xb4] sm:$0xff]
        %v7487 = vld [vmem:[%s7455 + $0xbc] sm:$0xf]
        %s7488 = sld [smem:[#allocation2 + $0x1a]]
        %v7489 = vstv %s7488
        %v7522 = vunpack.c.l.b16 %v7456
        %v7523 = vunpack.c.h.b16 %v7456
        %v7524 = vunpack.c.l.b16 %v7457
        %v7525 = vunpack.c.l.b16 %v7458
        %v7526 = vunpack.c.h.b16 %v7458
        %v7527 = vunpack.c.l.b16 %v7459
        %v7528 = vunpack.c.l.b16 %v7460
        %v7529 = vunpack.c.h.b16 %v7460
        %v7530 = vunpack.c.l.b16 %v7461
        %v7531 = vunpack.c.l.b16 %v7462
        %v7532 = vunpack.c.h.b16 %v7462
        %v7533 = vunpack.c.l.b16 %v7463
        %v7534 = vunpack.c.l.b16 %v7464
        %v7535 = vunpack.c.h.b16 %v7464
        %v7536 = vunpack.c.l.b16 %v7465
        %v7537 = vunpack.c.l.b16 %v7466
        %v7538 = vunpack.c.h.b16 %v7466
        %v7539 = vunpack.c.l.b16 %v7467
        %v7540 = vunpack.c.l.b16 %v7468
        %v7541 = vunpack.c.h.b16 %v7468
        %v7542 = vunpack.c.l.b16 %v7469
        %v7543 = vunpack.c.l.b16 %v7470
        %v7544 = vunpack.c.h.b16 %v7470
        %v7545 = vunpack.c.l.b16 %v7471
        %v7546 = vunpack.c.l.b16 %v7472
        %v7547 = vunpack.c.h.b16 %v7472
        %v7548 = vunpack.c.l.b16 %v7473
        %v7549 = vunpack.c.l.b16 %v7474
        %v7550 = vunpack.c.h.b16 %v7474
        %v7551 = vunpack.c.l.b16 %v7475
        %v7552 = vunpack.c.l.b16 %v7476
        %v7553 = vunpack.c.h.b16 %v7476
        %v7554 = vunpack.c.l.b16 %v7477
        %v7555 = vunpack.c.l.b16 %v7478
        %v7556 = vunpack.c.h.b16 %v7478
        %v7557 = vunpack.c.l.b16 %v7479
        %v7558 = vunpack.c.l.b16 %v7480
        %v7559 = vunpack.c.h.b16 %v7480
        %v7560 = vunpack.c.l.b16 %v7481
        %v7561 = vunpack.c.l.b16 %v7482
        %v7562 = vunpack.c.h.b16 %v7482
        %v7563 = vunpack.c.l.b16 %v7483
        %v7564 = vunpack.c.l.b16 %v7484
        %v7565 = vunpack.c.h.b16 %v7484
        %v7566 = vunpack.c.l.b16 %v7485
        %v7567 = vunpack.c.l.b16 %v7486
        %v7568 = vunpack.c.h.b16 %v7486
        %v7569 = vunpack.c.l.b16 %v7487
        %v7570 = vpack.c.b16 %v7525, %v7522
        %v7571 = vpack.c.b16 %v7526, %v7523
        %v7572 = vpack.c.b16 %v7527, %v7524
        %v7573 = vpack.c.b16 %v7531, %v7528
        %v7574 = vpack.c.b16 %v7532, %v7529
        %v7575 = vpack.c.b16 %v7533, %v7530
        %v7576 = vpack.c.b16 %v7537, %v7534
        %v7577 = vpack.c.b16 %v7538, %v7535
        %v7578 = vpack.c.b16 %v7539, %v7536
        %v7579 = vpack.c.b16 %v7543, %v7540
        %v7580 = vpack.c.b16 %v7544, %v7541
        %v7581 = vpack.c.b16 %v7545, %v7542
        %v7582 = vpack.c.b16 %v7549, %v7546
        %v7583 = vpack.c.b16 %v7550, %v7547
        %v7584 = vpack.c.b16 %v7551, %v7548
        %v7585 = vpack.c.b16 %v7555, %v7552
        %v7586 = vpack.c.b16 %v7556, %v7553
        %v7587 = vpack.c.b16 %v7557, %v7554
        %v7588 = vpack.c.b16 %v7561, %v7558
        %v7589 = vpack.c.b16 %v7562, %v7559
        %v7590 = vpack.c.b16 %v7563, %v7560
        %v7591 = vpack.c.b16 %v7567, %v7564
        %v7592 = vpack.c.b16 %v7568, %v7565
        %v7593 = vpack.c.b16 %v7569, %v7566
        %7618 = vmatprep.subr.bf16.mxu0 %v7571
        %7619 = vmatpush1.bf16.msra.mxu0 %v7570
        %7620 = vmatprep.subr.bf16.mxu0 %v7574
        %7621 = vmatpush1.bf16.msra.mxu0 %v7573
        %7622 = vmatprep.subr.bf16.mxu0 %v7577
        %7623 = vmatpush1.bf16.msra.mxu0 %v7576
        %7624 = vmatprep.subr.bf16.mxu0 %v7580
        %7625 = vmatpush1.bf16.msra.mxu0 %v7579
        %7626 = vmatprep.subr.bf16.mxu0 %v7583
        %7627 = vmatpush1.bf16.msra.mxu0 %v7582
        %7628 = vmatprep.subr.bf16.mxu0 %v7586
        %7629 = vmatpush1.bf16.msra.mxu0 %v7585
        %7630 = vmatprep.subr.bf16.mxu0 %v7589
        %7631 = vmatpush1.bf16.msra.mxu0 %v7588
        %7632 = vmatprep.subr.bf16.mxu0 %v7592
        %7633 = vmatpush1.bf16.msra.mxu0 %v7591
        %7634 = vmatprep.subr.bf16.mxu0 0
        %7635 = vmatpush1.bf16.msra.mxu0 0
        %7636 = vmatprep.subr.bf16.mxu0 0
        %7637 = vmatpush1.bf16.msra.mxu0 0
        %7638 = vmatprep.subr.bf16.mxu0 0
        %7639 = vmatpush1.bf16.msra.mxu0 0
        %7640 = vmatprep.subr.bf16.mxu0 0
        %7641 = vmatpush1.bf16.msra.mxu0 0
        %7642 = vmatprep.subr.bf16.mxu0 0
        %7643 = vmatpush1.bf16.msra.mxu0 0
        %7644 = vmatprep.subr.bf16.mxu0 0
        %7645 = vmatpush1.bf16.msra.mxu0 0
        %7646 = vmatprep.subr.bf16.mxu0 0
        %7647 = vmatpush1.bf16.msra.mxu0 0
        %7648 = vmatprep.subr.bf16.mxu0 0
        %7649 = vmatpush1.bf16.msra.mxu0 0
        %7650 = vmatprep.mubr.bf16.mxu0 0
        %7651 = vmatmul.mubr.bf16.gmra.mrb[0].mxu0 %v298
        %v7652 = vpop.f32.mrb[0].mxu0
        %v7653 = vadd.f32 %v7489, %v7652
        %v7654 = vpop.f32.mrb[0].mxu0
        %v7655 = vadd.f32 %v7489, %v7654
        %v7656 = vpop.f32.mrb[0].mxu0
        %v7657 = vpop.f32.mrb[0].mxu0
        %7658 = vdwg.mxu0
        %7659 = vmatprep.subr.bf16.mxu0 0
        %7660 = vmatpush1.bf16.msra.mxu0 %v7572
        %7661 = vmatprep.subr.bf16.mxu0 0
        %7662 = vmatpush1.bf16.msra.mxu0 %v7575
        %7663 = vmatprep.subr.bf16.mxu0 0
        %7664 = vmatpush1.bf16.msra.mxu0 %v7578
        %7665 = vmatprep.subr.bf16.mxu0 0
        %7666 = vmatpush1.bf16.msra.mxu0 %v7581
        %7667 = vmatprep.subr.bf16.mxu0 0
        %7668 = vmatpush1.bf16.msra.mxu0 %v7584
        %7669 = vmatprep.subr.bf16.mxu0 0
        %7670 = vmatpush1.bf16.msra.mxu0 %v7587
        %7671 = vmatprep.subr.bf16.mxu0 0
        %7672 = vmatpush1.bf16.msra.mxu0 %v7590
        %7673 = vmatprep.subr.bf16.mxu0 0
        %7674 = vmatpush1.bf16.msra.mxu0 %v7593
        %7675 = vmatprep.subr.bf16.mxu0 0
        %7676 = vmatpush1.bf16.msra.mxu0 0
        %7677 = vmatprep.subr.bf16.mxu0 0
        %7678 = vmatpush1.bf16.msra.mxu0 0
        %7679 = vmatprep.subr.bf16.mxu0 0
        %7680 = vmatpush1.bf16.msra.mxu0 0
        %7681 = vmatprep.subr.bf16.mxu0 0
        %7682 = vmatpush1.bf16.msra.mxu0 0
        %7683 = vmatprep.subr.bf16.mxu0 0
        %7684 = vmatpush1.bf16.msra.mxu0 0
        %7685 = vmatprep.subr.bf16.mxu0 0
        %7686 = vmatpush1.bf16.msra.mxu0 0
        %7687 = vmatprep.subr.bf16.mxu0 0
        %7688 = vmatpush1.bf16.msra.mxu0 0
        %7689 = vmatprep.subr.bf16.mxu0 0
        %7690 = vmatpush1.bf16.msra.mxu0 0
        %7691 = vmatprep.mubr.bf16.mxu0 0
        %7692 = vmatmul.mubr.bf16.gmra.mrb[0].mxu0 %v298
        %v7693 = vpop.f32.mrb[0].mxu0
        %v7694 = vadd.f32 %v7489, %v7693
        %v7695 = vpop.f32.mrb[0].mxu0
        %v7696 = vpop.f32.mrb[0].mxu0
        %v7697 = vpop.f32.mrb[0].mxu0
        %7698 = vdwg.mxu0
        %v7699 = vmax.f32 %v7653, 0.0
        %v7700 = vmax.f32 %v7655, 0.0
        %v7701 = vmax.f32 %v7694, 0.0
        %v7702 = vld [vmem:[%s285] sm:$0xff]
        %v7703 = vld [vmem:[%s285 + $0x8] sm:$0xff]
        %v7704 = vld [vmem:[%s285 + $0x10] sm:$0xff]
        %s7705 = sld [smem:[#allocation5 + $0x1a]]
        %v7706 = vstv %s7705
        %v7707 = vmul.f32 %v7706, %v7699
        %v7708 = vmul.f32 %v7706, %v7700
        %v7709 = vmul.f32 %v7706, %v7701
        %v7710 = vadd.f32 %v7702, %v7707
        %v7711 = vadd.f32 %v7703, %v7708
        %v7712 = vadd.f32 %v7704, %v7709
        %7713 = vst [vmem:[%s285] sm:$0xff] %v7710
        %7714 = vst [vmem:[%s285 + $0x8] sm:$0xff] %v7711
        %7715 = vst.msk [vmem:[%s285 + $0x10] sm:$0xff] %vm301, %v7712
        %v7716 = vld [vmem:[%s292] sm:$0xff]
        %v7717 = vld [vmem:[%s292 + $0x8] sm:$0xff]
        %v7718 = vld [vmem:[%s292 + $0x10] sm:$0xff]
        %s7719 = sld [smem:[#allocation5 + $0x9a]]
        %v7720 = vstv %s7719
        %v7721 = vmul.f32 %v7720, %v7699
        %v7722 = vmul.f32 %v7720, %v7700
        %v7723 = vmul.f32 %v7720, %v7701
        %v7724 = vadd.f32 %v7716, %v7721
        %v7725 = vadd.f32 %v7717, %v7722
        %v7726 = vadd.f32 %v7718, %v7723
        %7727 = vst [vmem:[%s292] sm:$0xff] %v7724
        %7728 = vst [vmem:[%s292 + $0x8] sm:$0xff] %v7725
        %7729 = vst.msk [vmem:[%s292 + $0x10] sm:$0xff] %vm301, %v7726
        %s7730 = scalar_lea.vmem %s1, 5184
        %v7731 = vld [vmem:[%s7730] sm:$0xff]
        %v7732 = vld [vmem:[%s7730 + $0x8] sm:$0xf]
        %v7733 = vld [vmem:[%s7730 + $0xc] sm:$0xff]
        %v7734 = vld [vmem:[%s7730 + $0x14] sm:$0xf]
        %v7735 = vld [vmem:[%s7730 + $0x18] sm:$0xff]
        %v7736 = vld [vmem:[%s7730 + $0x20] sm:$0xf]
        %v7737 = vld [vmem:[%s7730 + $0x24] sm:$0xff]
        %v7738 = vld [vmem:[%s7730 + $0x2c] sm:$0xf]
        %v7739 = vld [vmem:[%s7730 + $0x30] sm:$0xff]
        %v7740 = vld [vmem:[%s7730 + $0x38] sm:$0xf]
        %v7741 = vld [vmem:[%s7730 + $0x3c] sm:$0xff]
        %v7742 = vld [vmem:[%s7730 + $0x44] sm:$0xf]
        %v7743 = vld [vmem:[%s7730 + $0x48] sm:$0xff]
        %v7744 = vld [vmem:[%s7730 + $0x50] sm:$0xf]
        %v7745 = vld [vmem:[%s7730 + $0x54] sm:$0xff]
        %v7746 = vld [vmem:[%s7730 + $0x5c] sm:$0xf]
        %v7747 = vld [vmem:[%s7730 + $0x60] sm:$0xff]
        %v7748 = vld [vmem:[%s7730 + $0x68] sm:$0xf]
        %v7749 = vld [vmem:[%s7730 + $0x6c] sm:$0xff]
        %v7750 = vld [vmem:[%s7730 + $0x74] sm:$0xf]
        %v7751 = vld [vmem:[%s7730 + $0x78] sm:$0xff]
        %v7752 = vld [vmem:[%s7730 + $0x80] sm:$0xf]
        %v7753 = vld [vmem:[%s7730 + $0x84] sm:$0xff]
        %v7754 = vld [vmem:[%s7730 + $0x8c] sm:$0xf]
        %v7755 = vld [vmem:[%s7730 + $0x90] sm:$0xff]
        %v7756 = vld [vmem:[%s7730 + $0x98] sm:$0xf]
        %v7757 = vld [vmem:[%s7730 + $0x9c] sm:$0xff]
        %v7758 = vld [vmem:[%s7730 + $0xa4] sm:$0xf]
        %v7759 = vld [vmem:[%s7730 + $0xa8] sm:$0xff]
        %v7760 = vld [vmem:[%s7730 + $0xb0] sm:$0xf]
        %v7761 = vld [vmem:[%s7730 + $0xb4] sm:$0xff]
        %v7762 = vld [vmem:[%s7730 + $0xbc] sm:$0xf]
        %s7763 = sld [smem:[#allocation2 + $0x1b]]
        %v7764 = vstv %s7763
        %v7797 = vunpack.c.l.b16 %v7731
        %v7798 = vunpack.c.h.b16 %v7731
        %v7799 = vunpack.c.l.b16 %v7732
        %v7800 = vunpack.c.l.b16 %v7733
        %v7801 = vunpack.c.h.b16 %v7733
        %v7802 = vunpack.c.l.b16 %v7734
        %v7803 = vunpack.c.l.b16 %v7735
        %v7804 = vunpack.c.h.b16 %v7735
        %v7805 = vunpack.c.l.b16 %v7736
        %v7806 = vunpack.c.l.b16 %v7737
        %v7807 = vunpack.c.h.b16 %v7737
        %v7808 = vunpack.c.l.b16 %v7738
        %v7809 = vunpack.c.l.b16 %v7739
        %v7810 = vunpack.c.h.b16 %v7739
        %v7811 = vunpack.c.l.b16 %v7740
        %v7812 = vunpack.c.l.b16 %v7741
        %v7813 = vunpack.c.h.b16 %v7741
        %v7814 = vunpack.c.l.b16 %v7742
        %v7815 = vunpack.c.l.b16 %v7743
        %v7816 = vunpack.c.h.b16 %v7743
        %v7817 = vunpack.c.l.b16 %v7744
        %v7818 = vunpack.c.l.b16 %v7745
        %v7819 = vunpack.c.h.b16 %v7745
        %v7820 = vunpack.c.l.b16 %v7746
        %v7821 = vunpack.c.l.b16 %v7747
        %v7822 = vunpack.c.h.b16 %v7747
        %v7823 = vunpack.c.l.b16 %v7748
        %v7824 = vunpack.c.l.b16 %v7749
        %v7825 = vunpack.c.h.b16 %v7749
        %v7826 = vunpack.c.l.b16 %v7750
        %v7827 = vunpack.c.l.b16 %v7751
        %v7828 = vunpack.c.h.b16 %v7751
        %v7829 = vunpack.c.l.b16 %v7752
        %v7830 = vunpack.c.l.b16 %v7753
        %v7831 = vunpack.c.h.b16 %v7753
        %v7832 = vunpack.c.l.b16 %v7754
        %v7833 = vunpack.c.l.b16 %v7755
        %v7834 = vunpack.c.h.b16 %v7755
        %v7835 = vunpack.c.l.b16 %v7756
        %v7836 = vunpack.c.l.b16 %v7757
        %v7837 = vunpack.c.h.b16 %v7757
        %v7838 = vunpack.c.l.b16 %v7758
        %v7839 = vunpack.c.l.b16 %v7759
        %v7840 = vunpack.c.h.b16 %v7759
        %v7841 = vunpack.c.l.b16 %v7760
        %v7842 = vunpack.c.l.b16 %v7761
        %v7843 = vunpack.c.h.b16 %v7761
        %v7844 = vunpack.c.l.b16 %v7762
        %v7845 = vpack.c.b16 %v7800, %v7797
        %v7846 = vpack.c.b16 %v7801, %v7798
        %v7847 = vpack.c.b16 %v7802, %v7799
        %v7848 = vpack.c.b16 %v7806, %v7803
        %v7849 = vpack.c.b16 %v7807, %v7804
        %v7850 = vpack.c.b16 %v7808, %v7805
        %v7851 = vpack.c.b16 %v7812, %v7809
        %v7852 = vpack.c.b16 %v7813, %v7810
        %v7853 = vpack.c.b16 %v7814, %v7811
        %v7854 = vpack.c.b16 %v7818, %v7815
        %v7855 = vpack.c.b16 %v7819, %v7816
        %v7856 = vpack.c.b16 %v7820, %v7817
        %v7857 = vpack.c.b16 %v7824, %v7821
        %v7858 = vpack.c.b16 %v7825, %v7822
        %v7859 = vpack.c.b16 %v7826, %v7823
        %v7860 = vpack.c.b16 %v7830, %v7827
        %v7861 = vpack.c.b16 %v7831, %v7828
        %v7862 = vpack.c.b16 %v7832, %v7829
        %v7863 = vpack.c.b16 %v7836, %v7833
        %v7864 = vpack.c.b16 %v7837, %v7834
        %v7865 = vpack.c.b16 %v7838, %v7835
        %v7866 = vpack.c.b16 %v7842, %v7839
        %v7867 = vpack.c.b16 %v7843, %v7840
        %v7868 = vpack.c.b16 %v7844, %v7841
        %7893 = vmatprep.subr.bf16.mxu0 %v7846
        %7894 = vmatpush1.bf16.msra.mxu0 %v7845
        %7895 = vmatprep.subr.bf16.mxu0 %v7849
        %7896 = vmatpush1.bf16.msra.mxu0 %v7848
        %7897 = vmatprep.subr.bf16.mxu0 %v7852
        %7898 = vmatpush1.bf16.msra.mxu0 %v7851
        %7899 = vmatprep.subr.bf16.mxu0 %v7855
        %7900 = vmatpush1.bf16.msra.mxu0 %v7854
        %7901 = vmatprep.subr.bf16.mxu0 %v7858
        %7902 = vmatpush1.bf16.msra.mxu0 %v7857
        %7903 = vmatprep.subr.bf16.mxu0 %v7861
        %7904 = vmatpush1.bf16.msra.mxu0 %v7860
        %7905 = vmatprep.subr.bf16.mxu0 %v7864
        %7906 = vmatpush1.bf16.msra.mxu0 %v7863
        %7907 = vmatprep.subr.bf16.mxu0 %v7867
        %7908 = vmatpush1.bf16.msra.mxu0 %v7866
        %7909 = vmatprep.subr.bf16.mxu0 0
        %7910 = vmatpush1.bf16.msra.mxu0 0
        %7911 = vmatprep.subr.bf16.mxu0 0
        %7912 = vmatpush1.bf16.msra.mxu0 0
        %7913 = vmatprep.subr.bf16.mxu0 0
        %7914 = vmatpush1.bf16.msra.mxu0 0
        %7915 = vmatprep.subr.bf16.mxu0 0
        %7916 = vmatpush1.bf16.msra.mxu0 0
        %7917 = vmatprep.subr.bf16.mxu0 0
        %7918 = vmatpush1.bf16.msra.mxu0 0
        %7919 = vmatprep.subr.bf16.mxu0 0
        %7920 = vmatpush1.bf16.msra.mxu0 0
        %7921 = vmatprep.subr.bf16.mxu0 0
        %7922 = vmatpush1.bf16.msra.mxu0 0
        %7923 = vmatprep.subr.bf16.mxu0 0
        %7924 = vmatpush1.bf16.msra.mxu0 0
        %7925 = vmatprep.mubr.bf16.mxu0 0
        %7926 = vmatmul.mubr.bf16.gmra.mrb[0].mxu0 %v298
        %v7927 = vpop.f32.mrb[0].mxu0
        %v7928 = vadd.f32 %v7764, %v7927
        %v7929 = vpop.f32.mrb[0].mxu0
        %v7930 = vadd.f32 %v7764, %v7929
        %v7931 = vpop.f32.mrb[0].mxu0
        %v7932 = vpop.f32.mrb[0].mxu0
        %7933 = vdwg.mxu0
        %7934 = vmatprep.subr.bf16.mxu0 0
        %7935 = vmatpush1.bf16.msra.mxu0 %v7847
        %7936 = vmatprep.subr.bf16.mxu0 0
        %7937 = vmatpush1.bf16.msra.mxu0 %v7850
        %7938 = vmatprep.subr.bf16.mxu0 0
        %7939 = vmatpush1.bf16.msra.mxu0 %v7853
        %7940 = vmatprep.subr.bf16.mxu0 0
        %7941 = vmatpush1.bf16.msra.mxu0 %v7856
        %7942 = vmatprep.subr.bf16.mxu0 0
        %7943 = vmatpush1.bf16.msra.mxu0 %v7859
        %7944 = vmatprep.subr.bf16.mxu0 0
        %7945 = vmatpush1.bf16.msra.mxu0 %v7862
        %7946 = vmatprep.subr.bf16.mxu0 0
        %7947 = vmatpush1.bf16.msra.mxu0 %v7865
        %7948 = vmatprep.subr.bf16.mxu0 0
        %7949 = vmatpush1.bf16.msra.mxu0 %v7868
        %7950 = vmatprep.subr.bf16.mxu0 0
        %7951 = vmatpush1.bf16.msra.mxu0 0
        %7952 = vmatprep.subr.bf16.mxu0 0
        %7953 = vmatpush1.bf16.msra.mxu0 0
        %7954 = vmatprep.subr.bf16.mxu0 0
        %7955 = vmatpush1.bf16.msra.mxu0 0
        %7956 = vmatprep.subr.bf16.mxu0 0
        %7957 = vmatpush1.bf16.msra.mxu0 0
        %7958 = vmatprep.subr.bf16.mxu0 0
        %7959 = vmatpush1.bf16.msra.mxu0 0
        %7960 = vmatprep.subr.bf16.mxu0 0
        %7961 = vmatpush1.bf16.msra.mxu0 0
        %7962 = vmatprep.subr.bf16.mxu0 0
        %7963 = vmatpush1.bf16.msra.mxu0 0
        %7964 = vmatprep.subr.bf16.mxu0 0
        %7965 = vmatpush1.bf16.msra.mxu0 0
        %7966 = vmatprep.mubr.bf16.mxu0 0
        %7967 = vmatmul.mubr.bf16.gmra.mrb[0].mxu0 %v298
        %v7968 = vpop.f32.mrb[0].mxu0
        %v7969 = vadd.f32 %v7764, %v7968
        %v7970 = vpop.f32.mrb[0].mxu0
        %v7971 = vpop.f32.mrb[0].mxu0
        %v7972 = vpop.f32.mrb[0].mxu0
        %7973 = vdwg.mxu0
        %v7974 = vmax.f32 %v7928, 0.0
        %v7975 = vmax.f32 %v7930, 0.0
        %v7976 = vmax.f32 %v7969, 0.0
        %v7977 = vld [vmem:[%s285] sm:$0xff]
        %v7978 = vld [vmem:[%s285 + $0x8] sm:$0xff]
        %v7979 = vld [vmem:[%s285 + $0x10] sm:$0xff]
        %s7980 = sld [smem:[#allocation5 + $0x1b]]
        %v7981 = vstv %s7980
        %v7982 = vmul.f32 %v7981, %v7974
        %v7983 = vmul.f32 %v7981, %v7975
        %v7984 = vmul.f32 %v7981, %v7976
        %v7985 = vadd.f32 %v7977, %v7982
        %v7986 = vadd.f32 %v7978, %v7983
        %v7987 = vadd.f32 %v7979, %v7984
        %7988 = vst [vmem:[%s285] sm:$0xff] %v7985
        %7989 = vst [vmem:[%s285 + $0x8] sm:$0xff] %v7986
        %7990 = vst.msk [vmem:[%s285 + $0x10] sm:$0xff] %vm301, %v7987
        %v7991 = vld [vmem:[%s292] sm:$0xff]
        %v7992 = vld [vmem:[%s292 + $0x8] sm:$0xff]
        %v7993 = vld [vmem:[%s292 + $0x10] sm:$0xff]
        %s7994 = sld [smem:[#allocation5 + $0x9b]]
        %v7995 = vstv %s7994
        %v7996 = vmul.f32 %v7995, %v7974
        %v7997 = vmul.f32 %v7995, %v7975
        %v7998 = vmul.f32 %v7995, %v7976
        %v7999 = vadd.f32 %v7991, %v7996
        %v8000 = vadd.f32 %v7992, %v7997
        %v8001 = vadd.f32 %v7993, %v7998
        %8002 = vst [vmem:[%s292] sm:$0xff] %v7999
        %8003 = vst [vmem:[%s292 + $0x8] sm:$0xff] %v8000
        %8004 = vst.msk [vmem:[%s292 + $0x10] sm:$0xff] %vm301, %v8001
        %s8005 = scalar_lea.vmem %s1, 5376
        %v8006 = vld [vmem:[%s8005] sm:$0xff]
        %v8007 = vld [vmem:[%s8005 + $0x8] sm:$0xf]
        %v8008 = vld [vmem:[%s8005 + $0xc] sm:$0xff]
        %v8009 = vld [vmem:[%s8005 + $0x14] sm:$0xf]
        %v8010 = vld [vmem:[%s8005 + $0x18] sm:$0xff]
        %v8011 = vld [vmem:[%s8005 + $0x20] sm:$0xf]
        %v8012 = vld [vmem:[%s8005 + $0x24] sm:$0xff]
        %v8013 = vld [vmem:[%s8005 + $0x2c] sm:$0xf]
        %v8014 = vld [vmem:[%s8005 + $0x30] sm:$0xff]
        %v8015 = vld [vmem:[%s8005 + $0x38] sm:$0xf]
        %v8016 = vld [vmem:[%s8005 + $0x3c] sm:$0xff]
        %v8017 = vld [vmem:[%s8005 + $0x44] sm:$0xf]
        %v8018 = vld [vmem:[%s8005 + $0x48] sm:$0xff]
        %v8019 = vld [vmem:[%s8005 + $0x50] sm:$0xf]
        %v8020 = vld [vmem:[%s8005 + $0x54] sm:$0xff]
        %v8021 = vld [vmem:[%s8005 + $0x5c] sm:$0xf]
        %v8022 = vld [vmem:[%s8005 + $0x60] sm:$0xff]
        %v8023 = vld [vmem:[%s8005 + $0x68] sm:$0xf]
        %v8024 = vld [vmem:[%s8005 + $0x6c] sm:$0xff]
        %v8025 = vld [vmem:[%s8005 + $0x74] sm:$0xf]
        %v8026 = vld [vmem:[%s8005 + $0x78] sm:$0xff]
        %v8027 = vld [vmem:[%s8005 + $0x80] sm:$0xf]
        %v8028 = vld [vmem:[%s8005 + $0x84] sm:$0xff]
        %v8029 = vld [vmem:[%s8005 + $0x8c] sm:$0xf]
        %v8030 = vld [vmem:[%s8005 + $0x90] sm:$0xff]
        %v8031 = vld [vmem:[%s8005 + $0x98] sm:$0xf]
        %v8032 = vld [vmem:[%s8005 + $0x9c] sm:$0xff]
        %v8033 = vld [vmem:[%s8005 + $0xa4] sm:$0xf]
        %v8034 = vld [vmem:[%s8005 + $0xa8] sm:$0xff]
        %v8035 = vld [vmem:[%s8005 + $0xb0] sm:$0xf]
        %v8036 = vld [vmem:[%s8005 + $0xb4] sm:$0xff]
        %v8037 = vld [vmem:[%s8005 + $0xbc] sm:$0xf]
        %s8038 = sld [smem:[#allocation2 + $0x1c]]
        %v8039 = vstv %s8038
        %v8072 = vunpack.c.l.b16 %v8006
        %v8073 = vunpack.c.h.b16 %v8006
        %v8074 = vunpack.c.l.b16 %v8007
        %v8075 = vunpack.c.l.b16 %v8008
        %v8076 = vunpack.c.h.b16 %v8008
        %v8077 = vunpack.c.l.b16 %v8009
        %v8078 = vunpack.c.l.b16 %v8010
        %v8079 = vunpack.c.h.b16 %v8010
        %v8080 = vunpack.c.l.b16 %v8011
        %v8081 = vunpack.c.l.b16 %v8012
        %v8082 = vunpack.c.h.b16 %v8012
        %v8083 = vunpack.c.l.b16 %v8013
        %v8084 = vunpack.c.l.b16 %v8014
        %v8085 = vunpack.c.h.b16 %v8014
        %v8086 = vunpack.c.l.b16 %v8015
        %v8087 = vunpack.c.l.b16 %v8016
        %v8088 = vunpack.c.h.b16 %v8016
        %v8089 = vunpack.c.l.b16 %v8017
        %v8090 = vunpack.c.l.b16 %v8018
        %v8091 = vunpack.c.h.b16 %v8018
        %v8092 = vunpack.c.l.b16 %v8019
        %v8093 = vunpack.c.l.b16 %v8020
        %v8094 = vunpack.c.h.b16 %v8020
        %v8095 = vunpack.c.l.b16 %v8021
        %v8096 = vunpack.c.l.b16 %v8022
        %v8097 = vunpack.c.h.b16 %v8022
        %v8098 = vunpack.c.l.b16 %v8023
        %v8099 = vunpack.c.l.b16 %v8024
        %v8100 = vunpack.c.h.b16 %v8024
        %v8101 = vunpack.c.l.b16 %v8025
        %v8102 = vunpack.c.l.b16 %v8026
        %v8103 = vunpack.c.h.b16 %v8026
        %v8104 = vunpack.c.l.b16 %v8027
        %v8105 = vunpack.c.l.b16 %v8028
        %v8106 = vunpack.c.h.b16 %v8028
        %v8107 = vunpack.c.l.b16 %v8029
        %v8108 = vunpack.c.l.b16 %v8030
        %v8109 = vunpack.c.h.b16 %v8030
        %v8110 = vunpack.c.l.b16 %v8031
        %v8111 = vunpack.c.l.b16 %v8032
        %v8112 = vunpack.c.h.b16 %v8032
        %v8113 = vunpack.c.l.b16 %v8033
        %v8114 = vunpack.c.l.b16 %v8034
        %v8115 = vunpack.c.h.b16 %v8034
        %v8116 = vunpack.c.l.b16 %v8035
        %v8117 = vunpack.c.l.b16 %v8036
        %v8118 = vunpack.c.h.b16 %v8036
        %v8119 = vunpack.c.l.b16 %v8037
        %v8120 = vpack.c.b16 %v8075, %v8072
        %v8121 = vpack.c.b16 %v8076, %v8073
        %v8122 = vpack.c.b16 %v8077, %v8074
        %v8123 = vpack.c.b16 %v8081, %v8078
        %v8124 = vpack.c.b16 %v8082, %v8079
        %v8125 = vpack.c.b16 %v8083, %v8080
        %v8126 = vpack.c.b16 %v8087, %v8084
        %v8127 = vpack.c.b16 %v8088, %v8085
        %v8128 = vpack.c.b16 %v8089, %v8086
        %v8129 = vpack.c.b16 %v8093, %v8090
        %v8130 = vpack.c.b16 %v8094, %v8091
        %v8131 = vpack.c.b16 %v8095, %v8092
        %v8132 = vpack.c.b16 %v8099, %v8096
        %v8133 = vpack.c.b16 %v8100, %v8097
        %v8134 = vpack.c.b16 %v8101, %v8098
        %v8135 = vpack.c.b16 %v8105, %v8102
        %v8136 = vpack.c.b16 %v8106, %v8103
        %v8137 = vpack.c.b16 %v8107, %v8104
        %v8138 = vpack.c.b16 %v8111, %v8108
        %v8139 = vpack.c.b16 %v8112, %v8109
        %v8140 = vpack.c.b16 %v8113, %v8110
        %v8141 = vpack.c.b16 %v8117, %v8114
        %v8142 = vpack.c.b16 %v8118, %v8115
        %v8143 = vpack.c.b16 %v8119, %v8116
        %8168 = vmatprep.subr.bf16.mxu0 %v8121
        %8169 = vmatpush1.bf16.msra.mxu0 %v8120
        %8170 = vmatprep.subr.bf16.mxu0 %v8124
        %8171 = vmatpush1.bf16.msra.mxu0 %v8123
        %8172 = vmatprep.subr.bf16.mxu0 %v8127
        %8173 = vmatpush1.bf16.msra.mxu0 %v8126
        %8174 = vmatprep.subr.bf16.mxu0 %v8130
        %8175 = vmatpush1.bf16.msra.mxu0 %v8129
        %8176 = vmatprep.subr.bf16.mxu0 %v8133
        %8177 = vmatpush1.bf16.msra.mxu0 %v8132
        %8178 = vmatprep.subr.bf16.mxu0 %v8136
        %8179 = vmatpush1.bf16.msra.mxu0 %v8135
        %8180 = vmatprep.subr.bf16.mxu0 %v8139
        %8181 = vmatpush1.bf16.msra.mxu0 %v8138
        %8182 = vmatprep.subr.bf16.mxu0 %v8142
        %8183 = vmatpush1.bf16.msra.mxu0 %v8141
        %8184 = vmatprep.subr.bf16.mxu0 0
        %8185 = vmatpush1.bf16.msra.mxu0 0
        %8186 = vmatprep.subr.bf16.mxu0 0
        %8187 = vmatpush1.bf16.msra.mxu0 0
        %8188 = vmatprep.subr.bf16.mxu0 0
        %8189 = vmatpush1.bf16.msra.mxu0 0
        %8190 = vmatprep.subr.bf16.mxu0 0
        %8191 = vmatpush1.bf16.msra.mxu0 0
        %8192 = vmatprep.subr.bf16.mxu0 0
        %8193 = vmatpush1.bf16.msra.mxu0 0
        %8194 = vmatprep.subr.bf16.mxu0 0
        %8195 = vmatpush1.bf16.msra.mxu0 0
        %8196 = vmatprep.subr.bf16.mxu0 0
        %8197 = vmatpush1.bf16.msra.mxu0 0
        %8198 = vmatprep.subr.bf16.mxu0 0
        %8199 = vmatpush1.bf16.msra.mxu0 0
        %8200 = vmatprep.mubr.bf16.mxu0 0
        %8201 = vmatmul.mubr.bf16.gmra.mrb[0].mxu0 %v298
        %v8202 = vpop.f32.mrb[0].mxu0
        %v8203 = vadd.f32 %v8039, %v8202
        %v8204 = vpop.f32.mrb[0].mxu0
        %v8205 = vadd.f32 %v8039, %v8204
        %v8206 = vpop.f32.mrb[0].mxu0
        %v8207 = vpop.f32.mrb[0].mxu0
        %8208 = vdwg.mxu0
        %8209 = vmatprep.subr.bf16.mxu0 0
        %8210 = vmatpush1.bf16.msra.mxu0 %v8122
        %8211 = vmatprep.subr.bf16.mxu0 0
        %8212 = vmatpush1.bf16.msra.mxu0 %v8125
        %8213 = vmatprep.subr.bf16.mxu0 0
        %8214 = vmatpush1.bf16.msra.mxu0 %v8128
        %8215 = vmatprep.subr.bf16.mxu0 0
        %8216 = vmatpush1.bf16.msra.mxu0 %v8131
        %8217 = vmatprep.subr.bf16.mxu0 0
        %8218 = vmatpush1.bf16.msra.mxu0 %v8134
        %8219 = vmatprep.subr.bf16.mxu0 0
        %8220 = vmatpush1.bf16.msra.mxu0 %v8137
        %8221 = vmatprep.subr.bf16.mxu0 0
        %8222 = vmatpush1.bf16.msra.mxu0 %v8140
        %8223 = vmatprep.subr.bf16.mxu0 0
        %8224 = vmatpush1.bf16.msra.mxu0 %v8143
        %8225 = vmatprep.subr.bf16.mxu0 0
        %8226 = vmatpush1.bf16.msra.mxu0 0
        %8227 = vmatprep.subr.bf16.mxu0 0
        %8228 = vmatpush1.bf16.msra.mxu0 0
        %8229 = vmatprep.subr.bf16.mxu0 0
        %8230 = vmatpush1.bf16.msra.mxu0 0
        %8231 = vmatprep.subr.bf16.mxu0 0
        %8232 = vmatpush1.bf16.msra.mxu0 0
        %8233 = vmatprep.subr.bf16.mxu0 0
        %8234 = vmatpush1.bf16.msra.mxu0 0
        %8235 = vmatprep.subr.bf16.mxu0 0
        %8236 = vmatpush1.bf16.msra.mxu0 0
        %8237 = vmatprep.subr.bf16.mxu0 0
        %8238 = vmatpush1.bf16.msra.mxu0 0
        %8239 = vmatprep.subr.bf16.mxu0 0
        %8240 = vmatpush1.bf16.msra.mxu0 0
        %8241 = vmatprep.mubr.bf16.mxu0 0
        %8242 = vmatmul.mubr.bf16.gmra.mrb[0].mxu0 %v298
        %v8243 = vpop.f32.mrb[0].mxu0
        %v8244 = vadd.f32 %v8039, %v8243
        %v8245 = vpop.f32.mrb[0].mxu0
        %v8246 = vpop.f32.mrb[0].mxu0
        %v8247 = vpop.f32.mrb[0].mxu0
        %8248 = vdwg.mxu0
        %v8249 = vmax.f32 %v8203, 0.0
        %v8250 = vmax.f32 %v8205, 0.0
        %v8251 = vmax.f32 %v8244, 0.0
        %v8252 = vld [vmem:[%s285] sm:$0xff]
        %v8253 = vld [vmem:[%s285 + $0x8] sm:$0xff]
        %v8254 = vld [vmem:[%s285 + $0x10] sm:$0xff]
        %s8255 = sld [smem:[#allocation5 + $0x1c]]
        %v8256 = vstv %s8255
        %v8257 = vmul.f32 %v8256, %v8249
        %v8258 = vmul.f32 %v8256, %v8250
        %v8259 = vmul.f32 %v8256, %v8251
        %v8260 = vadd.f32 %v8252, %v8257
        %v8261 = vadd.f32 %v8253, %v8258
        %v8262 = vadd.f32 %v8254, %v8259
        %8263 = vst [vmem:[%s285] sm:$0xff] %v8260
        %8264 = vst [vmem:[%s285 + $0x8] sm:$0xff] %v8261
        %8265 = vst.msk [vmem:[%s285 + $0x10] sm:$0xff] %vm301, %v8262
        %v8266 = vld [vmem:[%s292] sm:$0xff]
        %v8267 = vld [vmem:[%s292 + $0x8] sm:$0xff]
        %v8268 = vld [vmem:[%s292 + $0x10] sm:$0xff]
        %s8269 = sld [smem:[#allocation5 + $0x9c]]
        %v8270 = vstv %s8269
        %v8271 = vmul.f32 %v8270, %v8249
        %v8272 = vmul.f32 %v8270, %v8250
        %v8273 = vmul.f32 %v8270, %v8251
        %v8274 = vadd.f32 %v8266, %v8271
        %v8275 = vadd.f32 %v8267, %v8272
        %v8276 = vadd.f32 %v8268, %v8273
        %8277 = vst [vmem:[%s292] sm:$0xff] %v8274
        %8278 = vst [vmem:[%s292 + $0x8] sm:$0xff] %v8275
        %8279 = vst.msk [vmem:[%s292 + $0x10] sm:$0xff] %vm301, %v8276
        %s8280 = scalar_lea.vmem %s1, 5568
        %v8281 = vld [vmem:[%s8280] sm:$0xff]
        %v8282 = vld [vmem:[%s8280 + $0x8] sm:$0xf]
        %v8283 = vld [vmem:[%s8280 + $0xc] sm:$0xff]
        %v8284 = vld [vmem:[%s8280 + $0x14] sm:$0xf]
        %v8285 = vld [vmem:[%s8280 + $0x18] sm:$0xff]
        %v8286 = vld [vmem:[%s8280 + $0x20] sm:$0xf]
        %v8287 = vld [vmem:[%s8280 + $0x24] sm:$0xff]
        %v8288 = vld [vmem:[%s8280 + $0x2c] sm:$0xf]
        %v8289 = vld [vmem:[%s8280 + $0x30] sm:$0xff]
        %v8290 = vld [vmem:[%s8280 + $0x38] sm:$0xf]
        %v8291 = vld [vmem:[%s8280 + $0x3c] sm:$0xff]
        %v8292 = vld [vmem:[%s8280 + $0x44] sm:$0xf]
        %v8293 = vld [vmem:[%s8280 + $0x48] sm:$0xff]
        %v8294 = vld [vmem:[%s8280 + $0x50] sm:$0xf]
        %v8295 = vld [vmem:[%s8280 + $0x54] sm:$0xff]
        %v8296 = vld [vmem:[%s8280 + $0x5c] sm:$0xf]
        %v8297 = vld [vmem:[%s8280 + $0x60] sm:$0xff]
        %v8298 = vld [vmem:[%s8280 + $0x68] sm:$0xf]
        %v8299 = vld [vmem:[%s8280 + $0x6c] sm:$0xff]
        %v8300 = vld [vmem:[%s8280 + $0x74] sm:$0xf]
        %v8301 = vld [vmem:[%s8280 + $0x78] sm:$0xff]
        %v8302 = vld [vmem:[%s8280 + $0x80] sm:$0xf]
        %v8303 = vld [vmem:[%s8280 + $0x84] sm:$0xff]
        %v8304 = vld [vmem:[%s8280 + $0x8c] sm:$0xf]
        %v8305 = vld [vmem:[%s8280 + $0x90] sm:$0xff]
        %v8306 = vld [vmem:[%s8280 + $0x98] sm:$0xf]
        %v8307 = vld [vmem:[%s8280 + $0x9c] sm:$0xff]
        %v8308 = vld [vmem:[%s8280 + $0xa4] sm:$0xf]
        %v8309 = vld [vmem:[%s8280 + $0xa8] sm:$0xff]
        %v8310 = vld [vmem:[%s8280 + $0xb0] sm:$0xf]
        %v8311 = vld [vmem:[%s8280 + $0xb4] sm:$0xff]
        %v8312 = vld [vmem:[%s8280 + $0xbc] sm:$0xf]
        %s8313 = sld [smem:[#allocation2 + $0x1d]]
        %v8314 = vstv %s8313
        %v8347 = vunpack.c.l.b16 %v8281
        %v8348 = vunpack.c.h.b16 %v8281
        %v8349 = vunpack.c.l.b16 %v8282
        %v8350 = vunpack.c.l.b16 %v8283
        %v8351 = vunpack.c.h.b16 %v8283
        %v8352 = vunpack.c.l.b16 %v8284
        %v8353 = vunpack.c.l.b16 %v8285
        %v8354 = vunpack.c.h.b16 %v8285
        %v8355 = vunpack.c.l.b16 %v8286
        %v8356 = vunpack.c.l.b16 %v8287
        %v8357 = vunpack.c.h.b16 %v8287
        %v8358 = vunpack.c.l.b16 %v8288
        %v8359 = vunpack.c.l.b16 %v8289
        %v8360 = vunpack.c.h.b16 %v8289
        %v8361 = vunpack.c.l.b16 %v8290
        %v8362 = vunpack.c.l.b16 %v8291
        %v8363 = vunpack.c.h.b16 %v8291
        %v8364 = vunpack.c.l.b16 %v8292
        %v8365 = vunpack.c.l.b16 %v8293
        %v8366 = vunpack.c.h.b16 %v8293
        %v8367 = vunpack.c.l.b16 %v8294
        %v8368 = vunpack.c.l.b16 %v8295
        %v8369 = vunpack.c.h.b16 %v8295
        %v8370 = vunpack.c.l.b16 %v8296
        %v8371 = vunpack.c.l.b16 %v8297
        %v8372 = vunpack.c.h.b16 %v8297
        %v8373 = vunpack.c.l.b16 %v8298
        %v8374 = vunpack.c.l.b16 %v8299
        %v8375 = vunpack.c.h.b16 %v8299
        %v8376 = vunpack.c.l.b16 %v8300
        %v8377 = vunpack.c.l.b16 %v8301
        %v8378 = vunpack.c.h.b16 %v8301
        %v8379 = vunpack.c.l.b16 %v8302
        %v8380 = vunpack.c.l.b16 %v8303
        %v8381 = vunpack.c.h.b16 %v8303
        %v8382 = vunpack.c.l.b16 %v8304
        %v8383 = vunpack.c.l.b16 %v8305
        %v8384 = vunpack.c.h.b16 %v8305
        %v8385 = vunpack.c.l.b16 %v8306
        %v8386 = vunpack.c.l.b16 %v8307
        %v8387 = vunpack.c.h.b16 %v8307
        %v8388 = vunpack.c.l.b16 %v8308
        %v8389 = vunpack.c.l.b16 %v8309
        %v8390 = vunpack.c.h.b16 %v8309
        %v8391 = vunpack.c.l.b16 %v8310
        %v8392 = vunpack.c.l.b16 %v8311
        %v8393 = vunpack.c.h.b16 %v8311
        %v8394 = vunpack.c.l.b16 %v8312
        %v8395 = vpack.c.b16 %v8350, %v8347
        %v8396 = vpack.c.b16 %v8351, %v8348
        %v8397 = vpack.c.b16 %v8352, %v8349
        %v8398 = vpack.c.b16 %v8356, %v8353
        %v8399 = vpack.c.b16 %v8357, %v8354
        %v8400 = vpack.c.b16 %v8358, %v8355
        %v8401 = vpack.c.b16 %v8362, %v8359
        %v8402 = vpack.c.b16 %v8363, %v8360
        %v8403 = vpack.c.b16 %v8364, %v8361
        %v8404 = vpack.c.b16 %v8368, %v8365
        %v8405 = vpack.c.b16 %v8369, %v8366
        %v8406 = vpack.c.b16 %v8370, %v8367
        %v8407 = vpack.c.b16 %v8374, %v8371
        %v8408 = vpack.c.b16 %v8375, %v8372
        %v8409 = vpack.c.b16 %v8376, %v8373
        %v8410 = vpack.c.b16 %v8380, %v8377
        %v8411 = vpack.c.b16 %v8381, %v8378
        %v8412 = vpack.c.b16 %v8382, %v8379
        %v8413 = vpack.c.b16 %v8386, %v8383
        %v8414 = vpack.c.b16 %v8387, %v8384
        %v8415 = vpack.c.b16 %v8388, %v8385
        %v8416 = vpack.c.b16 %v8392, %v8389
        %v8417 = vpack.c.b16 %v8393, %v8390
        %v8418 = vpack.c.b16 %v8394, %v8391
        %8443 = vmatprep.subr.bf16.mxu0 %v8396
        %8444 = vmatpush1.bf16.msra.mxu0 %v8395
        %8445 = vmatprep.subr.bf16.mxu0 %v8399
        %8446 = vmatpush1.bf16.msra.mxu0 %v8398
        %8447 = vmatprep.subr.bf16.mxu0 %v8402
        %8448 = vmatpush1.bf16.msra.mxu0 %v8401
        %8449 = vmatprep.subr.bf16.mxu0 %v8405
        %8450 = vmatpush1.bf16.msra.mxu0 %v8404
        %8451 = vmatprep.subr.bf16.mxu0 %v8408
        %8452 = vmatpush1.bf16.msra.mxu0 %v8407
        %8453 = vmatprep.subr.bf16.mxu0 %v8411
        %8454 = vmatpush1.bf16.msra.mxu0 %v8410
        %8455 = vmatprep.subr.bf16.mxu0 %v8414
        %8456 = vmatpush1.bf16.msra.mxu0 %v8413
        %8457 = vmatprep.subr.bf16.mxu0 %v8417
        %8458 = vmatpush1.bf16.msra.mxu0 %v8416
        %8459 = vmatprep.subr.bf16.mxu0 0
        %8460 = vmatpush1.bf16.msra.mxu0 0
        %8461 = vmatprep.subr.bf16.mxu0 0
        %8462 = vmatpush1.bf16.msra.mxu0 0
        %8463 = vmatprep.subr.bf16.mxu0 0
        %8464 = vmatpush1.bf16.msra.mxu0 0
        %8465 = vmatprep.subr.bf16.mxu0 0
        %8466 = vmatpush1.bf16.msra.mxu0 0
        %8467 = vmatprep.subr.bf16.mxu0 0
        %8468 = vmatpush1.bf16.msra.mxu0 0
        %8469 = vmatprep.subr.bf16.mxu0 0
        %8470 = vmatpush1.bf16.msra.mxu0 0
        %8471 = vmatprep.subr.bf16.mxu0 0
        %8472 = vmatpush1.bf16.msra.mxu0 0
        %8473 = vmatprep.subr.bf16.mxu0 0
        %8474 = vmatpush1.bf16.msra.mxu0 0
        %8475 = vmatprep.mubr.bf16.mxu0 0
        %8476 = vmatmul.mubr.bf16.gmra.mrb[0].mxu0 %v298
        %v8477 = vpop.f32.mrb[0].mxu0
        %v8478 = vadd.f32 %v8314, %v8477
        %v8479 = vpop.f32.mrb[0].mxu0
        %v8480 = vadd.f32 %v8314, %v8479
        %v8481 = vpop.f32.mrb[0].mxu0
        %v8482 = vpop.f32.mrb[0].mxu0
        %8483 = vdwg.mxu0
        %8484 = vmatprep.subr.bf16.mxu0 0
        %8485 = vmatpush1.bf16.msra.mxu0 %v8397
        %8486 = vmatprep.subr.bf16.mxu0 0
        %8487 = vmatpush1.bf16.msra.mxu0 %v8400
        %8488 = vmatprep.subr.bf16.mxu0 0
        %8489 = vmatpush1.bf16.msra.mxu0 %v8403
        %8490 = vmatprep.subr.bf16.mxu0 0
        %8491 = vmatpush1.bf16.msra.mxu0 %v8406
        %8492 = vmatprep.subr.bf16.mxu0 0
        %8493 = vmatpush1.bf16.msra.mxu0 %v8409
        %8494 = vmatprep.subr.bf16.mxu0 0
        %8495 = vmatpush1.bf16.msra.mxu0 %v8412
        %8496 = vmatprep.subr.bf16.mxu0 0
        %8497 = vmatpush1.bf16.msra.mxu0 %v8415
        %8498 = vmatprep.subr.bf16.mxu0 0
        %8499 = vmatpush1.bf16.msra.mxu0 %v8418
        %8500 = vmatprep.subr.bf16.mxu0 0
        %8501 = vmatpush1.bf16.msra.mxu0 0
        %8502 = vmatprep.subr.bf16.mxu0 0
        %8503 = vmatpush1.bf16.msra.mxu0 0
        %8504 = vmatprep.subr.bf16.mxu0 0
        %8505 = vmatpush1.bf16.msra.mxu0 0
        %8506 = vmatprep.subr.bf16.mxu0 0
        %8507 = vmatpush1.bf16.msra.mxu0 0
        %8508 = vmatprep.subr.bf16.mxu0 0
        %8509 = vmatpush1.bf16.msra.mxu0 0
        %8510 = vmatprep.subr.bf16.mxu0 0
        %8511 = vmatpush1.bf16.msra.mxu0 0
        %8512 = vmatprep.subr.bf16.mxu0 0
        %8513 = vmatpush1.bf16.msra.mxu0 0
        %8514 = vmatprep.subr.bf16.mxu0 0
        %8515 = vmatpush1.bf16.msra.mxu0 0
        %8516 = vmatprep.mubr.bf16.mxu0 0
        %8517 = vmatmul.mubr.bf16.gmra.mrb[0].mxu0 %v298
        %v8518 = vpop.f32.mrb[0].mxu0
        %v8519 = vadd.f32 %v8314, %v8518
        %v8520 = vpop.f32.mrb[0].mxu0
        %v8521 = vpop.f32.mrb[0].mxu0
        %v8522 = vpop.f32.mrb[0].mxu0
        %8523 = vdwg.mxu0
        %v8524 = vmax.f32 %v8478, 0.0
        %v8525 = vmax.f32 %v8480, 0.0
        %v8526 = vmax.f32 %v8519, 0.0
        %v8527 = vld [vmem:[%s285] sm:$0xff]
        %v8528 = vld [vmem:[%s285 + $0x8] sm:$0xff]
        %v8529 = vld [vmem:[%s285 + $0x10] sm:$0xff]
        %s8530 = sld [smem:[#allocation5 + $0x1d]]
        %v8531 = vstv %s8530
        %v8532 = vmul.f32 %v8531, %v8524
        %v8533 = vmul.f32 %v8531, %v8525
        %v8534 = vmul.f32 %v8531, %v8526
        %v8535 = vadd.f32 %v8527, %v8532
        %v8536 = vadd.f32 %v8528, %v8533
        %v8537 = vadd.f32 %v8529, %v8534
        %8538 = vst [vmem:[%s285] sm:$0xff] %v8535
        %8539 = vst [vmem:[%s285 + $0x8] sm:$0xff] %v8536
        %8540 = vst.msk [vmem:[%s285 + $0x10] sm:$0xff] %vm301, %v8537
        %v8541 = vld [vmem:[%s292] sm:$0xff]
        %v8542 = vld [vmem:[%s292 + $0x8] sm:$0xff]
        %v8543 = vld [vmem:[%s292 + $0x10] sm:$0xff]
        %s8544 = sld [smem:[#allocation5 + $0x9d]]
        %v8545 = vstv %s8544
        %v8546 = vmul.f32 %v8545, %v8524
        %v8547 = vmul.f32 %v8545, %v8525
        %v8548 = vmul.f32 %v8545, %v8526
        %v8549 = vadd.f32 %v8541, %v8546
        %v8550 = vadd.f32 %v8542, %v8547
        %v8551 = vadd.f32 %v8543, %v8548
        %8552 = vst [vmem:[%s292] sm:$0xff] %v8549
        %8553 = vst [vmem:[%s292 + $0x8] sm:$0xff] %v8550
        %8554 = vst.msk [vmem:[%s292 + $0x10] sm:$0xff] %vm301, %v8551
        %s8555 = scalar_lea.vmem %s1, 5760
        %v8556 = vld [vmem:[%s8555] sm:$0xff]
        %v8557 = vld [vmem:[%s8555 + $0x8] sm:$0xf]
        %v8558 = vld [vmem:[%s8555 + $0xc] sm:$0xff]
        %v8559 = vld [vmem:[%s8555 + $0x14] sm:$0xf]
        %v8560 = vld [vmem:[%s8555 + $0x18] sm:$0xff]
        %v8561 = vld [vmem:[%s8555 + $0x20] sm:$0xf]
        %v8562 = vld [vmem:[%s8555 + $0x24] sm:$0xff]
        %v8563 = vld [vmem:[%s8555 + $0x2c] sm:$0xf]
        %v8564 = vld [vmem:[%s8555 + $0x30] sm:$0xff]
        %v8565 = vld [vmem:[%s8555 + $0x38] sm:$0xf]
        %v8566 = vld [vmem:[%s8555 + $0x3c] sm:$0xff]
        %v8567 = vld [vmem:[%s8555 + $0x44] sm:$0xf]
        %v8568 = vld [vmem:[%s8555 + $0x48] sm:$0xff]
        %v8569 = vld [vmem:[%s8555 + $0x50] sm:$0xf]
        %v8570 = vld [vmem:[%s8555 + $0x54] sm:$0xff]
        %v8571 = vld [vmem:[%s8555 + $0x5c] sm:$0xf]
        %v8572 = vld [vmem:[%s8555 + $0x60] sm:$0xff]
        %v8573 = vld [vmem:[%s8555 + $0x68] sm:$0xf]
        %v8574 = vld [vmem:[%s8555 + $0x6c] sm:$0xff]
        %v8575 = vld [vmem:[%s8555 + $0x74] sm:$0xf]
        %v8576 = vld [vmem:[%s8555 + $0x78] sm:$0xff]
        %v8577 = vld [vmem:[%s8555 + $0x80] sm:$0xf]
        %v8578 = vld [vmem:[%s8555 + $0x84] sm:$0xff]
        %v8579 = vld [vmem:[%s8555 + $0x8c] sm:$0xf]
        %v8580 = vld [vmem:[%s8555 + $0x90] sm:$0xff]
        %v8581 = vld [vmem:[%s8555 + $0x98] sm:$0xf]
        %v8582 = vld [vmem:[%s8555 + $0x9c] sm:$0xff]
        %v8583 = vld [vmem:[%s8555 + $0xa4] sm:$0xf]
        %v8584 = vld [vmem:[%s8555 + $0xa8] sm:$0xff]
        %v8585 = vld [vmem:[%s8555 + $0xb0] sm:$0xf]
        %v8586 = vld [vmem:[%s8555 + $0xb4] sm:$0xff]
        %v8587 = vld [vmem:[%s8555 + $0xbc] sm:$0xf]
        %s8588 = sld [smem:[#allocation2 + $0x1e]]
        %v8589 = vstv %s8588
        %v8622 = vunpack.c.l.b16 %v8556
        %v8623 = vunpack.c.h.b16 %v8556
        %v8624 = vunpack.c.l.b16 %v8557
        %v8625 = vunpack.c.l.b16 %v8558
        %v8626 = vunpack.c.h.b16 %v8558
        %v8627 = vunpack.c.l.b16 %v8559
        %v8628 = vunpack.c.l.b16 %v8560
        %v8629 = vunpack.c.h.b16 %v8560
        %v8630 = vunpack.c.l.b16 %v8561
        %v8631 = vunpack.c.l.b16 %v8562
        %v8632 = vunpack.c.h.b16 %v8562
        %v8633 = vunpack.c.l.b16 %v8563
        %v8634 = vunpack.c.l.b16 %v8564
        %v8635 = vunpack.c.h.b16 %v8564
        %v8636 = vunpack.c.l.b16 %v8565
        %v8637 = vunpack.c.l.b16 %v8566
        %v8638 = vunpack.c.h.b16 %v8566
        %v8639 = vunpack.c.l.b16 %v8567
        %v8640 = vunpack.c.l.b16 %v8568
        %v8641 = vunpack.c.h.b16 %v8568
        %v8642 = vunpack.c.l.b16 %v8569
        %v8643 = vunpack.c.l.b16 %v8570
        %v8644 = vunpack.c.h.b16 %v8570
        %v8645 = vunpack.c.l.b16 %v8571
        %v8646 = vunpack.c.l.b16 %v8572
        %v8647 = vunpack.c.h.b16 %v8572
        %v8648 = vunpack.c.l.b16 %v8573
        %v8649 = vunpack.c.l.b16 %v8574
        %v8650 = vunpack.c.h.b16 %v8574
        %v8651 = vunpack.c.l.b16 %v8575
        %v8652 = vunpack.c.l.b16 %v8576
        %v8653 = vunpack.c.h.b16 %v8576
        %v8654 = vunpack.c.l.b16 %v8577
        %v8655 = vunpack.c.l.b16 %v8578
        %v8656 = vunpack.c.h.b16 %v8578
        %v8657 = vunpack.c.l.b16 %v8579
        %v8658 = vunpack.c.l.b16 %v8580
        %v8659 = vunpack.c.h.b16 %v8580
        %v8660 = vunpack.c.l.b16 %v8581
        %v8661 = vunpack.c.l.b16 %v8582
        %v8662 = vunpack.c.h.b16 %v8582
        %v8663 = vunpack.c.l.b16 %v8583
        %v8664 = vunpack.c.l.b16 %v8584
        %v8665 = vunpack.c.h.b16 %v8584
        %v8666 = vunpack.c.l.b16 %v8585
        %v8667 = vunpack.c.l.b16 %v8586
        %v8668 = vunpack.c.h.b16 %v8586
        %v8669 = vunpack.c.l.b16 %v8587
        %v8670 = vpack.c.b16 %v8625, %v8622
        %v8671 = vpack.c.b16 %v8626, %v8623
        %v8672 = vpack.c.b16 %v8627, %v8624
        %v8673 = vpack.c.b16 %v8631, %v8628
        %v8674 = vpack.c.b16 %v8632, %v8629
        %v8675 = vpack.c.b16 %v8633, %v8630
        %v8676 = vpack.c.b16 %v8637, %v8634
        %v8677 = vpack.c.b16 %v8638, %v8635
        %v8678 = vpack.c.b16 %v8639, %v8636
        %v8679 = vpack.c.b16 %v8643, %v8640
        %v8680 = vpack.c.b16 %v8644, %v8641
        %v8681 = vpack.c.b16 %v8645, %v8642
        %v8682 = vpack.c.b16 %v8649, %v8646
        %v8683 = vpack.c.b16 %v8650, %v8647
        %v8684 = vpack.c.b16 %v8651, %v8648
        %v8685 = vpack.c.b16 %v8655, %v8652
        %v8686 = vpack.c.b16 %v8656, %v8653
        %v8687 = vpack.c.b16 %v8657, %v8654
        %v8688 = vpack.c.b16 %v8661, %v8658
        %v8689 = vpack.c.b16 %v8662, %v8659
        %v8690 = vpack.c.b16 %v8663, %v8660
        %v8691 = vpack.c.b16 %v8667, %v8664
        %v8692 = vpack.c.b16 %v8668, %v8665
        %v8693 = vpack.c.b16 %v8669, %v8666
        %8718 = vmatprep.subr.bf16.mxu0 %v8671
        %8719 = vmatpush1.bf16.msra.mxu0 %v8670
        %8720 = vmatprep.subr.bf16.mxu0 %v8674
        %8721 = vmatpush1.bf16.msra.mxu0 %v8673
        %8722 = vmatprep.subr.bf16.mxu0 %v8677
        %8723 = vmatpush1.bf16.msra.mxu0 %v8676
        %8724 = vmatprep.subr.bf16.mxu0 %v8680
        %8725 = vmatpush1.bf16.msra.mxu0 %v8679
        %8726 = vmatprep.subr.bf16.mxu0 %v8683
        %8727 = vmatpush1.bf16.msra.mxu0 %v8682
        %8728 = vmatprep.subr.bf16.mxu0 %v8686
        %8729 = vmatpush1.bf16.msra.mxu0 %v8685
        %8730 = vmatprep.subr.bf16.mxu0 %v8689
        %8731 = vmatpush1.bf16.msra.mxu0 %v8688
        %8732 = vmatprep.subr.bf16.mxu0 %v8692
        %8733 = vmatpush1.bf16.msra.mxu0 %v8691
        %8734 = vmatprep.subr.bf16.mxu0 0
        %8735 = vmatpush1.bf16.msra.mxu0 0
        %8736 = vmatprep.subr.bf16.mxu0 0
        %8737 = vmatpush1.bf16.msra.mxu0 0
        %8738 = vmatprep.subr.bf16.mxu0 0
        %8739 = vmatpush1.bf16.msra.mxu0 0
        %8740 = vmatprep.subr.bf16.mxu0 0
        %8741 = vmatpush1.bf16.msra.mxu0 0
        %8742 = vmatprep.subr.bf16.mxu0 0
        %8743 = vmatpush1.bf16.msra.mxu0 0
        %8744 = vmatprep.subr.bf16.mxu0 0
        %8745 = vmatpush1.bf16.msra.mxu0 0
        %8746 = vmatprep.subr.bf16.mxu0 0
        %8747 = vmatpush1.bf16.msra.mxu0 0
        %8748 = vmatprep.subr.bf16.mxu0 0
        %8749 = vmatpush1.bf16.msra.mxu0 0
        %8750 = vmatprep.mubr.bf16.mxu0 0
        %8751 = vmatmul.mubr.bf16.gmra.mrb[0].mxu0 %v298
        %v8752 = vpop.f32.mrb[0].mxu0
        %v8753 = vadd.f32 %v8589, %v8752
        %v8754 = vpop.f32.mrb[0].mxu0
        %v8755 = vadd.f32 %v8589, %v8754
        %v8756 = vpop.f32.mrb[0].mxu0
        %v8757 = vpop.f32.mrb[0].mxu0
        %8758 = vdwg.mxu0
        %8759 = vmatprep.subr.bf16.mxu0 0
        %8760 = vmatpush1.bf16.msra.mxu0 %v8672
        %8761 = vmatprep.subr.bf16.mxu0 0
        %8762 = vmatpush1.bf16.msra.mxu0 %v8675
        %8763 = vmatprep.subr.bf16.mxu0 0
        %8764 = vmatpush1.bf16.msra.mxu0 %v8678
        %8765 = vmatprep.subr.bf16.mxu0 0
        %8766 = vmatpush1.bf16.msra.mxu0 %v8681
        %8767 = vmatprep.subr.bf16.mxu0 0
        %8768 = vmatpush1.bf16.msra.mxu0 %v8684
        %8769 = vmatprep.subr.bf16.mxu0 0
        %8770 = vmatpush1.bf16.msra.mxu0 %v8687
        %8771 = vmatprep.subr.bf16.mxu0 0
        %8772 = vmatpush1.bf16.msra.mxu0 %v8690
        %8773 = vmatprep.subr.bf16.mxu0 0
        %8774 = vmatpush1.bf16.msra.mxu0 %v8693
        %8775 = vmatprep.subr.bf16.mxu0 0
        %8776 = vmatpush1.bf16.msra.mxu0 0
        %8777 = vmatprep.subr.bf16.mxu0 0
        %8778 = vmatpush1.bf16.msra.mxu0 0
        %8779 = vmatprep.subr.bf16.mxu0 0
        %8780 = vmatpush1.bf16.msra.mxu0 0
        %8781 = vmatprep.subr.bf16.mxu0 0
        %8782 = vmatpush1.bf16.msra.mxu0 0
        %8783 = vmatprep.subr.bf16.mxu0 0
        %8784 = vmatpush1.bf16.msra.mxu0 0
        %8785 = vmatprep.subr.bf16.mxu0 0
        %8786 = vmatpush1.bf16.msra.mxu0 0
        %8787 = vmatprep.subr.bf16.mxu0 0
        %8788 = vmatpush1.bf16.msra.mxu0 0
        %8789 = vmatprep.subr.bf16.mxu0 0
        %8790 = vmatpush1.bf16.msra.mxu0 0
        %8791 = vmatprep.mubr.bf16.mxu0 0
        %8792 = vmatmul.mubr.bf16.gmra.mrb[0].mxu0 %v298
        %v8793 = vpop.f32.mrb[0].mxu0
        %v8794 = vadd.f32 %v8589, %v8793
        %v8795 = vpop.f32.mrb[0].mxu0
        %v8796 = vpop.f32.mrb[0].mxu0
        %v8797 = vpop.f32.mrb[0].mxu0
        %8798 = vdwg.mxu0
        %v8799 = vmax.f32 %v8753, 0.0
        %v8800 = vmax.f32 %v8755, 0.0
        %v8801 = vmax.f32 %v8794, 0.0
        %v8802 = vld [vmem:[%s285] sm:$0xff]
        %v8803 = vld [vmem:[%s285 + $0x8] sm:$0xff]
        %v8804 = vld [vmem:[%s285 + $0x10] sm:$0xff]
        %s8805 = sld [smem:[#allocation5 + $0x1e]]
        %v8806 = vstv %s8805
        %v8807 = vmul.f32 %v8806, %v8799
        %v8808 = vmul.f32 %v8806, %v8800
        %v8809 = vmul.f32 %v8806, %v8801
        %v8810 = vadd.f32 %v8802, %v8807
        %v8811 = vadd.f32 %v8803, %v8808
        %v8812 = vadd.f32 %v8804, %v8809
        %8813 = vst [vmem:[%s285] sm:$0xff] %v8810
        %8814 = vst [vmem:[%s285 + $0x8] sm:$0xff] %v8811
        %8815 = vst.msk [vmem:[%s285 + $0x10] sm:$0xff] %vm301, %v8812
        %v8816 = vld [vmem:[%s292] sm:$0xff]
        %v8817 = vld [vmem:[%s292 + $0x8] sm:$0xff]
        %v8818 = vld [vmem:[%s292 + $0x10] sm:$0xff]
        %s8819 = sld [smem:[#allocation5 + $0x9e]]
        %v8820 = vstv %s8819
        %v8821 = vmul.f32 %v8820, %v8799
        %v8822 = vmul.f32 %v8820, %v8800
        %v8823 = vmul.f32 %v8820, %v8801
        %v8824 = vadd.f32 %v8816, %v8821
        %v8825 = vadd.f32 %v8817, %v8822
        %v8826 = vadd.f32 %v8818, %v8823
        %8827 = vst [vmem:[%s292] sm:$0xff] %v8824
        %8828 = vst [vmem:[%s292 + $0x8] sm:$0xff] %v8825
        %8829 = vst.msk [vmem:[%s292 + $0x10] sm:$0xff] %vm301, %v8826
        %s8830 = scalar_lea.vmem %s1, 5952
        %v8831 = vld [vmem:[%s8830] sm:$0xff]
        %v8832 = vld [vmem:[%s8830 + $0x8] sm:$0xf]
        %v8833 = vld [vmem:[%s8830 + $0xc] sm:$0xff]
        %v8834 = vld [vmem:[%s8830 + $0x14] sm:$0xf]
        %v8835 = vld [vmem:[%s8830 + $0x18] sm:$0xff]
        %v8836 = vld [vmem:[%s8830 + $0x20] sm:$0xf]
        %v8837 = vld [vmem:[%s8830 + $0x24] sm:$0xff]
        %v8838 = vld [vmem:[%s8830 + $0x2c] sm:$0xf]
        %v8839 = vld [vmem:[%s8830 + $0x30] sm:$0xff]
        %v8840 = vld [vmem:[%s8830 + $0x38] sm:$0xf]
        %v8841 = vld [vmem:[%s8830 + $0x3c] sm:$0xff]
        %v8842 = vld [vmem:[%s8830 + $0x44] sm:$0xf]
        %v8843 = vld [vmem:[%s8830 + $0x48] sm:$0xff]
        %v8844 = vld [vmem:[%s8830 + $0x50] sm:$0xf]
        %v8845 = vld [vmem:[%s8830 + $0x54] sm:$0xff]
        %v8846 = vld [vmem:[%s8830 + $0x5c] sm:$0xf]
        %v8847 = vld [vmem:[%s8830 + $0x60] sm:$0xff]
        %v8848 = vld [vmem:[%s8830 + $0x68] sm:$0xf]
        %v8849 = vld [vmem:[%s8830 + $0x6c] sm:$0xff]
        %v8850 = vld [vmem:[%s8830 + $0x74] sm:$0xf]
        %v8851 = vld [vmem:[%s8830 + $0x78] sm:$0xff]
        %v8852 = vld [vmem:[%s8830 + $0x80] sm:$0xf]
        %v8853 = vld [vmem:[%s8830 + $0x84] sm:$0xff]
        %v8854 = vld [vmem:[%s8830 + $0x8c] sm:$0xf]
        %v8855 = vld [vmem:[%s8830 + $0x90] sm:$0xff]
        %v8856 = vld [vmem:[%s8830 + $0x98] sm:$0xf]
        %v8857 = vld [vmem:[%s8830 + $0x9c] sm:$0xff]
        %v8858 = vld [vmem:[%s8830 + $0xa4] sm:$0xf]
        %v8859 = vld [vmem:[%s8830 + $0xa8] sm:$0xff]
        %v8860 = vld [vmem:[%s8830 + $0xb0] sm:$0xf]
        %v8861 = vld [vmem:[%s8830 + $0xb4] sm:$0xff]
        %v8862 = vld [vmem:[%s8830 + $0xbc] sm:$0xf]
        %s8863 = sld [smem:[#allocation2 + $0x1f]]
        %v8864 = vstv %s8863
        %v8897 = vunpack.c.l.b16 %v8831
        %v8898 = vunpack.c.h.b16 %v8831
        %v8899 = vunpack.c.l.b16 %v8832
        %v8900 = vunpack.c.l.b16 %v8833
        %v8901 = vunpack.c.h.b16 %v8833
        %v8902 = vunpack.c.l.b16 %v8834
        %v8903 = vunpack.c.l.b16 %v8835
        %v8904 = vunpack.c.h.b16 %v8835
        %v8905 = vunpack.c.l.b16 %v8836
        %v8906 = vunpack.c.l.b16 %v8837
        %v8907 = vunpack.c.h.b16 %v8837
        %v8908 = vunpack.c.l.b16 %v8838
        %v8909 = vunpack.c.l.b16 %v8839
        %v8910 = vunpack.c.h.b16 %v8839
        %v8911 = vunpack.c.l.b16 %v8840
        %v8912 = vunpack.c.l.b16 %v8841
        %v8913 = vunpack.c.h.b16 %v8841
        %v8914 = vunpack.c.l.b16 %v8842
        %v8915 = vunpack.c.l.b16 %v8843
        %v8916 = vunpack.c.h.b16 %v8843
        %v8917 = vunpack.c.l.b16 %v8844
        %v8918 = vunpack.c.l.b16 %v8845
        %v8919 = vunpack.c.h.b16 %v8845
        %v8920 = vunpack.c.l.b16 %v8846
        %v8921 = vunpack.c.l.b16 %v8847
        %v8922 = vunpack.c.h.b16 %v8847
        %v8923 = vunpack.c.l.b16 %v8848
        %v8924 = vunpack.c.l.b16 %v8849
        %v8925 = vunpack.c.h.b16 %v8849
        %v8926 = vunpack.c.l.b16 %v8850
        %v8927 = vunpack.c.l.b16 %v8851
        %v8928 = vunpack.c.h.b16 %v8851
        %v8929 = vunpack.c.l.b16 %v8852
        %v8930 = vunpack.c.l.b16 %v8853
        %v8931 = vunpack.c.h.b16 %v8853
        %v8932 = vunpack.c.l.b16 %v8854
        %v8933 = vunpack.c.l.b16 %v8855
        %v8934 = vunpack.c.h.b16 %v8855
        %v8935 = vunpack.c.l.b16 %v8856
        %v8936 = vunpack.c.l.b16 %v8857
        %v8937 = vunpack.c.h.b16 %v8857
        %v8938 = vunpack.c.l.b16 %v8858
        %v8939 = vunpack.c.l.b16 %v8859
        %v8940 = vunpack.c.h.b16 %v8859
        %v8941 = vunpack.c.l.b16 %v8860
        %v8942 = vunpack.c.l.b16 %v8861
        %v8943 = vunpack.c.h.b16 %v8861
        %v8944 = vunpack.c.l.b16 %v8862
        %v8945 = vpack.c.b16 %v8900, %v8897
        %v8946 = vpack.c.b16 %v8901, %v8898
        %v8947 = vpack.c.b16 %v8902, %v8899
        %v8948 = vpack.c.b16 %v8906, %v8903
        %v8949 = vpack.c.b16 %v8907, %v8904
        %v8950 = vpack.c.b16 %v8908, %v8905
        %v8951 = vpack.c.b16 %v8912, %v8909
        %v8952 = vpack.c.b16 %v8913, %v8910
        %v8953 = vpack.c.b16 %v8914, %v8911
        %v8954 = vpack.c.b16 %v8918, %v8915
        %v8955 = vpack.c.b16 %v8919, %v8916
        %v8956 = vpack.c.b16 %v8920, %v8917
        %v8957 = vpack.c.b16 %v8924, %v8921
        %v8958 = vpack.c.b16 %v8925, %v8922
        %v8959 = vpack.c.b16 %v8926, %v8923
        %v8960 = vpack.c.b16 %v8930, %v8927
        %v8961 = vpack.c.b16 %v8931, %v8928
        %v8962 = vpack.c.b16 %v8932, %v8929
        %v8963 = vpack.c.b16 %v8936, %v8933
        %v8964 = vpack.c.b16 %v8937, %v8934
        %v8965 = vpack.c.b16 %v8938, %v8935
        %v8966 = vpack.c.b16 %v8942, %v8939
        %v8967 = vpack.c.b16 %v8943, %v8940
        %v8968 = vpack.c.b16 %v8944, %v8941
        %8993 = vmatprep.subr.bf16.mxu0 %v8946
        %8994 = vmatpush1.bf16.msra.mxu0 %v8945
        %8995 = vmatprep.subr.bf16.mxu0 %v8949
        %8996 = vmatpush1.bf16.msra.mxu0 %v8948
        %8997 = vmatprep.subr.bf16.mxu0 %v8952
        %8998 = vmatpush1.bf16.msra.mxu0 %v8951
        %8999 = vmatprep.subr.bf16.mxu0 %v8955
        %9000 = vmatpush1.bf16.msra.mxu0 %v8954
        %9001 = vmatprep.subr.bf16.mxu0 %v8958
        %9002 = vmatpush1.bf16.msra.mxu0 %v8957
        %9003 = vmatprep.subr.bf16.mxu0 %v8961
        %9004 = vmatpush1.bf16.msra.mxu0 %v8960
        %9005 = vmatprep.subr.bf16.mxu0 %v8964
        %9006 = vmatpush1.bf16.msra.mxu0 %v8963
        %9007 = vmatprep.subr.bf16.mxu0 %v8967
        %9008 = vmatpush1.bf16.msra.mxu0 %v8966
        %9009 = vmatprep.subr.bf16.mxu0 0
        %9010 = vmatpush1.bf16.msra.mxu0 0
        %9011 = vmatprep.subr.bf16.mxu0 0
        %9012 = vmatpush1.bf16.msra.mxu0 0
        %9013 = vmatprep.subr.bf16.mxu0 0
        %9014 = vmatpush1.bf16.msra.mxu0 0
        %9015 = vmatprep.subr.bf16.mxu0 0
        %9016 = vmatpush1.bf16.msra.mxu0 0
        %9017 = vmatprep.subr.bf16.mxu0 0
        %9018 = vmatpush1.bf16.msra.mxu0 0
        %9019 = vmatprep.subr.bf16.mxu0 0
        %9020 = vmatpush1.bf16.msra.mxu0 0
        %9021 = vmatprep.subr.bf16.mxu0 0
        %9022 = vmatpush1.bf16.msra.mxu0 0
        %9023 = vmatprep.subr.bf16.mxu0 0
        %9024 = vmatpush1.bf16.msra.mxu0 0
        %9025 = vmatprep.mubr.bf16.mxu0 0
        %9026 = vmatmul.mubr.bf16.gmra.mrb[0].mxu0 %v298
        %v9027 = vpop.f32.mrb[0].mxu0
        %v9028 = vadd.f32 %v8864, %v9027
        %v9029 = vpop.f32.mrb[0].mxu0
        %v9030 = vadd.f32 %v8864, %v9029
        %v9031 = vpop.f32.mrb[0].mxu0
        %v9032 = vpop.f32.mrb[0].mxu0
        %9033 = vdwg.mxu0
        %9034 = vmatprep.subr.bf16.mxu0 0
        %9035 = vmatpush1.bf16.msra.mxu0 %v8947
        %9036 = vmatprep.subr.bf16.mxu0 0
        %9037 = vmatpush1.bf16.msra.mxu0 %v8950
        %9038 = vmatprep.subr.bf16.mxu0 0
        %9039 = vmatpush1.bf16.msra.mxu0 %v8953
        %9040 = vmatprep.subr.bf16.mxu0 0
        %9041 = vmatpush1.bf16.msra.mxu0 %v8956
        %9042 = vmatprep.subr.bf16.mxu0 0
        %9043 = vmatpush1.bf16.msra.mxu0 %v8959
        %9044 = vmatprep.subr.bf16.mxu0 0
        %9045 = vmatpush1.bf16.msra.mxu0 %v8962
        %9046 = vmatprep.subr.bf16.mxu0 0
        %9047 = vmatpush1.bf16.msra.mxu0 %v8965
        %9048 = vmatprep.subr.bf16.mxu0 0
        %9049 = vmatpush1.bf16.msra.mxu0 %v8968
        %9050 = vmatprep.subr.bf16.mxu0 0
        %9051 = vmatpush1.bf16.msra.mxu0 0
        %9052 = vmatprep.subr.bf16.mxu0 0
        %9053 = vmatpush1.bf16.msra.mxu0 0
        %9054 = vmatprep.subr.bf16.mxu0 0
        %9055 = vmatpush1.bf16.msra.mxu0 0
        %9056 = vmatprep.subr.bf16.mxu0 0
        %9057 = vmatpush1.bf16.msra.mxu0 0
        %9058 = vmatprep.subr.bf16.mxu0 0
        %9059 = vmatpush1.bf16.msra.mxu0 0
        %9060 = vmatprep.subr.bf16.mxu0 0
        %9061 = vmatpush1.bf16.msra.mxu0 0
        %9062 = vmatprep.subr.bf16.mxu0 0
        %9063 = vmatpush1.bf16.msra.mxu0 0
        %9064 = vmatprep.subr.bf16.mxu0 0
        %9065 = vmatpush1.bf16.msra.mxu0 0
        %9066 = vmatprep.mubr.bf16.mxu0 0
        %9067 = vmatmul.mubr.bf16.gmra.mrb[0].mxu0 %v298
        %v9068 = vpop.f32.mrb[0].mxu0
        %v9069 = vadd.f32 %v8864, %v9068
        %v9070 = vpop.f32.mrb[0].mxu0
        %v9071 = vpop.f32.mrb[0].mxu0
        %v9072 = vpop.f32.mrb[0].mxu0
        %9073 = vdwg.mxu0
        %v9074 = vmax.f32 %v9028, 0.0
        %v9075 = vmax.f32 %v9030, 0.0
        %v9076 = vmax.f32 %v9069, 0.0
        %v9077 = vld [vmem:[%s285] sm:$0xff]
        %v9078 = vld [vmem:[%s285 + $0x8] sm:$0xff]
        %v9079 = vld [vmem:[%s285 + $0x10] sm:$0xff]
        %s9080 = sld [smem:[#allocation5 + $0x1f]]
        %v9081 = vstv %s9080
        %v9082 = vmul.f32 %v9081, %v9074
        %v9083 = vmul.f32 %v9081, %v9075
        %v9084 = vmul.f32 %v9081, %v9076
        %v9085 = vadd.f32 %v9077, %v9082
        %v9086 = vadd.f32 %v9078, %v9083
        %v9087 = vadd.f32 %v9079, %v9084
        %9088 = vst [vmem:[%s285] sm:$0xff] %v9085
        %9089 = vst [vmem:[%s285 + $0x8] sm:$0xff] %v9086
        %9090 = vst.msk [vmem:[%s285 + $0x10] sm:$0xff] %vm301, %v9087
        %v9091 = vld [vmem:[%s292] sm:$0xff]
        %v9092 = vld [vmem:[%s292 + $0x8] sm:$0xff]
        %v9093 = vld [vmem:[%s292 + $0x10] sm:$0xff]
        %s9094 = sld [smem:[#allocation5 + $0x9f]]
        %v9095 = vstv %s9094
        %v9096 = vmul.f32 %v9095, %v9074
        %v9097 = vmul.f32 %v9095, %v9075
        %v9098 = vmul.f32 %v9095, %v9076
        %v9099 = vadd.f32 %v9091, %v9096
        %v9100 = vadd.f32 %v9092, %v9097
        %v9101 = vadd.f32 %v9093, %v9098
        %9102 = vst [vmem:[%s292] sm:$0xff] %v9099
        %9103 = vst [vmem:[%s292 + $0x8] sm:$0xff] %v9100
        %9104 = vst.msk [vmem:[%s292 + $0x10] sm:$0xff] %vm301, %v9101
        %v9105 = vld [vmem:[%s285] sm:$0xff]
        %v9106 = vld [vmem:[%s285 + $0x8] sm:$0xff]
        %v9107 = vld [vmem:[%s285 + $0x10] sm:$0xff]
        %s9108 = sld [smem:[#allocation7]]
        %v9109 = vstv %s9108
        %v9110 = vadd.f32 %v9105, %v9109
        %v9111 = vadd.f32 %v9106, %v9109
        %v9112 = vadd.f32 %v9107, %v9109
        %9113 = vst [vmem:[%s285] sm:$0xff] %v9110
        %9114 = vst [vmem:[%s285 + $0x8] sm:$0xff] %v9111
        %9115 = vst.msk [vmem:[%s285 + $0x10] sm:$0xff] %vm301, %v9112
        %v9116 = vld [vmem:[%s292] sm:$0xff]
        %v9117 = vld [vmem:[%s292 + $0x8] sm:$0xff]
        %v9118 = vld [vmem:[%s292 + $0x10] sm:$0xff]
        %s9119 = sld [smem:[#allocation7 + $0x1]]
        %v9120 = vstv %s9119
        %v9121 = vadd.f32 %v9116, %v9120
        %v9122 = vadd.f32 %v9117, %v9120
        %v9123 = vadd.f32 %v9118, %v9120
        %9124 = vst [vmem:[%s292] sm:$0xff] %v9121
        %9125 = vst [vmem:[%s292 + $0x8] sm:$0xff] %v9122
        %9126 = vst.msk [vmem:[%s292 + $0x10] sm:$0xff] %vm301, %v9123
        %s9127 = sand.u32 %s144, 1
        %s9128 = scalar_lea.sflag [#allocation3], %s9127
        %s9129 = sand.u32 %s144, 1
        %s9130 = smul.addr %s9129, 24
        %s9131 = scalar_lea.vmem [#allocation8], %s9130
        %s9132 = sand.u32 %s170, 1
        %s9133 = scalar_lea.sflag [#allocation10], %s9132
        %s9134 = sand.u32 %s170, 1
        %s9135 = smul.addr %s9134, 24
        %s9136 = scalar_lea.vmem [#allocation9], %s9135
        // Predicated region
        $region53: #{onvelnet_forward.1} parent=39 // pred_check
          %p9137 = pneg %p154
        $region54: #{onvelnet_forward.1} parent=39 // pred_check_branch
          %9139 = sbr.rel (%p9137) target = $region56
        $region55: #{onvelnet_forward.1} parent=39 // pred_region
          %s9141 = ssub.s32 384, 384
          %9142 = vsyncadd %s9128, %s9141
          %s9143 = smul.addr %s26, 3
          %s9144 = smul.addr %s9143, 128
          %s9145 = scalar_lea.hbm %s5, %s9144
          %s9147 = sshll.u32 %s9131, 4
          %s9148 = int_to_ptr.vmem [resolvable:$true] %s9147
          %9150 = dma.vmem_to_hbm [thread:$0]  %s9148, 384, %s9145, %s9128
        $region56: #{onvelnet_forward.1} parent=39 // pred_fallthru
          _
        // Predicated region
        $region57: #{onvelnet_forward.1} parent=39 // pred_check
          %p9151 = pneg %p180
        $region58: #{onvelnet_forward.1} parent=39 // pred_check_branch
          %9153 = sbr.rel (%p9151) target = $region60
        $region59: #{onvelnet_forward.1} parent=39 // pred_region
          %s9155 = ssub.s32 384, 384
          %9156 = vsyncadd %s9133, %s9155
          %s9157 = smul.addr %s26, 3
          %s9158 = smul.addr %s9157, 128
          %s9159 = scalar_lea.hbm %s6, %s9158
          %s9161 = sshll.u32 %s9136, 4
          %s9162 = int_to_ptr.vmem [resolvable:$true] %s9161
          %9164 = dma.vmem_to_hbm [thread:$0]  %s9162, 384, %s9159, %s9133
        $region60: #{onvelnet_forward.1} parent=39 // pred_fallthru
          _
      $region40: #{onvelnet_forward.1} parent=5 // pred_fallthru
        _
      %p9165 = scmp.le.s32.totalorder 2, %s21
      // Predicated region
      $region61: #{onvelnet_forward.1} parent=5 // pred_check
        %p9166 = pneg %p9165
      $region62: #{onvelnet_forward.1} parent=5 // pred_check_branch
        %9168 = sbr.rel (%p9166) target = $region64
      $region63: #{onvelnet_forward.1} parent=5 // pred_region
        %s9169 = ssub.s32 %s21, 2
        // Predicated region
        $region65: #{onvelnet_forward.1} parent=63 // pred_check
          %p9170 = pneg %p160
        $region66: #{onvelnet_forward.1} parent=63 // pred_check_branch
          %9172 = sbr.rel (%p9170) target = $region68
        $region67: #{onvelnet_forward.1} parent=63 // pred_region
          %s9173 = sand.u32 %s145, 1
          %s9174 = scalar_lea.sflag [#allocation3], %s9173
          %s9175 = sand.u32 %s145, 1
          %s9176 = smul.addr %s9175, 24
          %s9177 = scalar_lea.vmem [#allocation8], %s9176
          %9178 = dma.done %s9174, 384
        $region68: #{onvelnet_forward.1} parent=63 // pred_fallthru
          _
        // Predicated region
        $region69: #{onvelnet_forward.1} parent=63 // pred_check
          %p9179 = pneg %p186
        $region70: #{onvelnet_forward.1} parent=63 // pred_check_branch
          %9181 = sbr.rel (%p9179) target = $region72
        $region71: #{onvelnet_forward.1} parent=63 // pred_region
          %s9182 = sand.u32 %s171, 1
          %s9183 = scalar_lea.sflag [#allocation10], %s9182
          %s9184 = sand.u32 %s171, 1
          %s9185 = smul.addr %s9184, 24
          %s9186 = scalar_lea.vmem [#allocation9], %s9185
          %9187 = dma.done %s9183, 384
        $region72: #{onvelnet_forward.1} parent=63 // pred_fallthru
          _
      $region64: #{onvelnet_forward.1} parent=5 // pred_fallthru
        _
    $region6: #{onvelnet_forward.1} parent=1 // loop_footer
      %s25 = sadd.s32 1, %s21
    $region7: #{onvelnet_forward.1} parent=1 // loop_footer_branch
      %20 = sbr.rel target = $region3
    $region8: #{onvelnet_forward.1} parent=1 // loop_exit
      _
    %9188 = vsyncpa [#allocation3], 1
    %s9189 = scalar_lea.sflag [#allocation3], 1
    %9190 = vsyncpa %s9189, 1
    %9191 = vsyncpa [#allocation10], 1
    %s9192 = scalar_lea.sflag [#allocation10], 1
    %9193 = vsyncpa %s9192, 1
    %9194 = vsyncpa [#allocation4], 1
    %s9195 = scalar_lea.sflag [#allocation4], 1
    %9196 = vsyncpa %s9195, 1
    %9197 = vsyncpa [#allocation6], 1

</llo_original>
